<compile_context>
chip_gen: v6e
topology: v6e:2x2x1
jax: 0.10.0
libtpu: 0.0.40
codegen_flags: <defaults>
</compile_context>

<pallas_src>
import jax
import jax.numpy as jnp
from jax.experimental import pallas as pl
from jax.experimental.pallas import tpu as pltpu

HIST_LEN = 4
STATE = 42
CH = 32
HIDDEN = 32
ACTIONS = 4
GATES = 4 * HIDDEN          # 128


def _dims(s_in, pad):
    hp = s_in + 2 * pad              # padded input side
    ho = (hp - 3) // 2 + 1           # stride-2 output side
    return hp, (hp + 1) // 2, ho     # (padded side, #even rows, out side)


HP1, HPE1, HO1 = _dims(STATE, 0)     # 42, 21, 20
HP2, HPE2, HO2 = _dims(HO1, 1)       # 22, 11, 10
HP3, HPE3, HO3 = _dims(HO2, 1)       # 12,  6,  5
HP4, HPE4, HO4 = _dims(HO3, 1)       #  7,  4,  3
assert HO4 == 3 and HO4 * HO4 * CH == 288
SMAX = HO1 * HP1                     # 840 = largest per-layer map


# -----------------------------------------------------------------------------
# Fused kernel
# -----------------------------------------------------------------------------
def _a3c_kernel(x_ref, hc_ref, w1_ref, wc_ref, wm_ref, b_ref,
                out_ref, p_ref, s_ref, x2p, x3p, x4p):
    f32 = jnp.float32
    bf16 = jnp.bfloat16
    C = CH

    def conv_even_rows(read, wk, hp, hpe, n_out):
        # 3x3 stride-2 conv producing only the rows that are actually used.
        # Inputs are stored even-spatial-rows-first, so each ki tap is ONE
        # contiguous (n_out*hp, Cin) slice.  The 3 kj taps are packed along
        # lanes of the weights; they are recombined once per layer below.
        # Result: s_ref[ho*hp + 2*wo, :] = conv output (ho, wo).
        m = n_out * hp
        starts = (0, hpe * hp, hp)           # ki = 0 (even), 1 (odd), 2 (even+1)
        for ki in range(3):
            lhs = read(starts[ki], m)                                   # (m, Cin) bf16
            p = jnp.dot(lhs, wk(ki), preferred_element_type=f32)        # (m, 3C)
            if ki == 0:
                p_ref[0:m, :] = p
            else:
                p_ref[0:m, :] = p_ref[0:m, :] + p
        s_ref[0:m - 2, :] = (p_ref[pl.ds(0, m - 2), 0:C]
                             + p_ref[pl.ds(1, m - 2), C:2 * C]
                             + p_ref[pl.ds(2, m - 2), 2 * C:3 * C])

    def pool_store(hp, n_out, b_row, dst, hp_n, hpe_n):
        # bias + ReLU + stride-2 column subsample of s_ref, written into the
        # next layer's zero-padded, even/odd-row-split input scratch.
        bias = b_ref[b_row:b_row + 1, 0:C]                              # (1, C)
        for ho in range(n_out):
            rows = s_ref[pl.ds(ho * hp, n_out, stride=2), :]            # (n_out, C)
            act = jnp.maximum(rows + bias, 0.0).astype(dst.dtype)
            r = ho + 1                                                  # spatial row in dst
            blk = (r // 2) if r % 2 == 0 else (hpe_n + r // 2)
            dst[pl.ds(blk * hp_n + 1, n_out), :] = act

    # zero the padded scratches (borders must stay 0)
    x2p[...] = jnp.zeros(x2p.shape, x2p.dtype)
    x3p[...] = jnp.zeros(x3p.shape, x3p.dtype)
    x4p[...] = jnp.zeros(x4p.shape, x4p.dtype)

    conv_even_rows(lambda st, m: x_ref[0, pl.ds(st, m), :],
                   lambda ki: w1_ref[ki], HP1, HPE1, HO1)
    pool_store(HP1, HO1, 0, x2p, HP2, HPE2)
    conv_even_rows(lambda st, m: x2p[pl.ds(st, m), :],
                   lambda ki: wc_ref[0, ki], HP2, HPE2, HO2)
    pool_store(HP2, HO2, 1, x3p, HP3, HPE3)
    conv_even_rows(lambda st, m: x3p[pl.ds(st, m), :],
                   lambda ki: wc_ref[1, ki], HP3, HPE3, HO3)
    pool_store(HP3, HO3, 2, x4p, HP4, HPE4)
    conv_even_rows(lambda st, m: x4p[pl.ds(st, m), :],
                   lambda ki: wc_ref[2, ki], HP4, HPE4, HO4)

    # conv4 bias + ReLU; the 3x3x32 features live at rows ho*7 + 2*wo
    m4 = HO4 * HP4
    a4 = jnp.maximum(s_ref[0:m4 - 2, :] + b_ref[3:4, 0:C], 0.0).astype(bf16)   # (19, 32)

    # LSTMCell input projection as ONE matmul: the 9 per-position (C, 4H)
    # blocks of W_ih are packed along lanes of wm[:, :9*4H]; slab k is read
    # at the row holding feature position k and summed.
    p_in = jnp.dot(a4, wm_ref[:, 0:9 * GATES], preferred_element_type=f32)     # (19, 1152)
    gates = b_ref[4:5, 0:GATES]
    for k in range(9):
        ho, wo = divmod(k, 3)
        r = ho * HP4 + 2 * wo
        gates = gates + p_in[r:r + 1, k * GATES:(k + 1) * GATES]
    h0 = hc_ref[0, :, 0:HIDDEN]
    c0 = hc_ref[0, :, HIDDEN:2 * HIDDEN]
    gates = gates + jnp.dot(h0.astype(bf16), wm_ref[:, 9 * GATES:10 * GATES],
                            preferred_element_type=f32)
    H = HIDDEN
    i_g = jax.nn.sigmoid(gates[:, 0:H])
    f_g = jax.nn.sigmoid(gates[:, H:2 * H])
    g_g = jnp.tanh(gates[:, 2 * H:3 * H])
    o_g = jax.nn.sigmoid(gates[:, 3 * H:4 * H])
    c_new = f_g * c0 + i_g * g_g
    h_new = o_g * jnp.tanh(c_new)

    # fused policy (softmax, exact divide) + value head: one (1,H)@(H,A+1) matmul
    z = jnp.dot(h_new.astype(bf16),
                wm_ref[:, 10 * GATES:10 * GATES + ACTIONS + 1],
                preferred_element_type=f32) + b_ref[5:6, 0:ACTIONS + 1]        # (1, 5)
    logits = z[:, 0:ACTIONS]
    e = jnp.exp(logits - jnp.max(logits, axis=-1, keepdims=True))
    pol = e / jnp.sum(e, axis=-1, keepdims=True)

    # single lane-dense (1, 128) output row: [policy | value | pad | h | c | pad]
    out_ref[0] = jnp.zeros((1, 128), f32)
    out_ref[0, :, 0:ACTIONS] = pol
    out_ref[0, :, ACTIONS:ACTIONS + 1] = z[:, ACTIONS:ACTIONS + 1]
    out_ref[0, :, 32:32 + HIDDEN] = h_new
    out_ref[0, :, 64:64 + HIDDEN] = c_new


# -----------------------------------------------------------------------------
# Wrapper
# -----------------------------------------------------------------------------
def _resident(shape):
    nd = len(shape)
    return pl.BlockSpec(tuple(shape), lambda b, _n=nd: (0,) * _n)


def _per_batch(shape):
    nd = len(shape)
    return pl.BlockSpec((1,) + tuple(shape[1:]),
                        lambda b, _n=nd: (b,) + (0,) * (_n - 1))


def a3c_cnn_forward(params, x_flat, lstm_hidden):
    B = x_flat.shape[0]
    # NCHW -> NHWC -> even/odd spatial-row split -> (B, H*W, C) bf16
    x = x_flat.reshape(B, HIST_LEN, STATE, STATE).transpose(0, 2, 3, 1)
    x = jnp.concatenate([x[:, 0::2], x[:, 1::2]], axis=1)
    x = x.reshape(B, STATE * STATE, HIST_LEN).astype(jnp.bfloat16)
    h0, c0 = lstm_hidden
    hc = jnp.concatenate([h0, c0], axis=-1).reshape(B, 1, 2 * HIDDEN)

    w1, wc, wm, bias = params["w1"], params["wc"], params["wm"], params["bias"]

    grid_spec = pltpu.PrefetchScalarGridSpec(
        num_scalar_prefetch=0,
        grid=(B,),
        in_specs=[_per_batch(x.shape), _per_batch(hc.shape),
                  _resident(w1.shape), _resident(wc.shape),
                  _resident(wm.shape), _resident(bias.shape)],
        out_specs=_per_batch((B, 1, 128)),
        scratch_shapes=[
            pltpu.VMEM((SMAX, 3 * CH), jnp.float32),     # per-ki matmul accumulator
            pltpu.VMEM((SMAX, CH), jnp.float32),         # recombined wide map
            pltpu.VMEM((HP2 * HP2, CH), jnp.bfloat16),   # padded conv2 input
            pltpu.VMEM((HP3 * HP3, CH), jnp.bfloat16),   # padded conv3 input
            pltpu.VMEM((HP4 * HP4, CH), jnp.bfloat16),   # padded conv4 input
        ],
    )
    out = pl.pallas_call(
        _a3c_kernel,
        out_shape=jax.ShapeDtypeStruct((B, 1, 128), jnp.float32),
        grid_spec=grid_spec,
        compiler_params=pltpu.CompilerParams(dimension_semantics=("parallel",)),
    )(x, hc, w1, wc, wm, bias)

    pol = out[:, 0, 0:ACTIONS]
    val = out[:, 0, ACTIONS:ACTIONS + 1]
    h_out = out[:, 0, 32:32 + HIDDEN]
    c_out = out[:, 0, 64:64 + HIDDEN]
    return pol, val, (h_out, c_out)


# -----------------------------------------------------------------------------
# Parameters (PyTorch layouts) + one-time re-layout into kernel layouts
# -----------------------------------------------------------------------------
def normalized_columns_init(key, shape, std):
    w = jax.random.normal(key, shape, dtype=jnp.float32)
    return w * (std / jnp.sqrt(jnp.sum(w * w, axis=1, keepdims=True)))


def init_raw_params(key):
    ks = jax.random.split(key, 12)

    def conv_w(k, c_out, c_in):
        return (jax.random.normal(k, (c_out, c_in, 3, 3), jnp.float32)
                / float((c_in * 9) ** 0.5))

    def conv_b(k, c_in):
        bound = 1.0 / float((c_in * 9) ** 0.5)
        return jax.random.uniform(k, (CH,), jnp.float32, -bound, bound)

    feat = HO4 * HO4 * CH
    return {
        "conv1_w": conv_w(ks[0], CH, HIST_LEN), "conv1_b": conv_b(ks[1], HIST_LEN),
        "conv2_w": conv_w(ks[2], CH, CH), "conv2_b": conv_b(ks[3], CH),
        "conv3_w": conv_w(ks[4], CH, CH), "conv3_b": conv_b(ks[5], CH),
        "conv4_w": conv_w(ks[6], CH, CH), "conv4_b": conv_b(ks[7], CH),
        "lstm_w_ih": jax.random.normal(ks[8], (4 * HIDDEN, feat), jnp.float32)
                     / float(feat ** 0.5),
        "lstm_w_hh": jax.random.normal(ks[9], (4 * HIDDEN, HIDDEN), jnp.float32)
                     / float(HIDDEN ** 0.5),
        # _init_weights zero-fills both LSTMCell biases (kernel uses b_ih + b_hh)
        "lstm_b_ih": jnp.zeros((4 * HIDDEN,), jnp.float32),
        "lstm_b_hh": jnp.zeros((4 * HIDDEN,), jnp.float32),
        "policy_w": normalized_columns_init(ks[10], (ACTIONS, HIDDEN), 0.01),
        "policy_b": jnp.zeros((ACTIONS,), jnp.float32),
        "value_w": normalized_columns_init(ks[11], (1, HIDDEN), 1.0),
        "value_b": jnp.zeros((1,), jnp.float32),
    }


def prep_params(raw):
    """One-time (outside jit) re-layout of PyTorch-style weights into the
    layouts the fused kernel consumes (bf16 matmul operands, f32 biases)."""
    bf16 = jnp.bfloat16

    def pack_conv(w):                        # (Cout, Cin, 3, 3) -> (3, Cin, 3*Cout)
        c_out, c_in = w.shape[0], w.shape[1]
        t = jnp.transpose(w, (2, 1, 3, 0))   # (ki, Cin, kj, Cout)
        return t.reshape(3, c_in, 3 * c_out).astype(bf16)

    # W_ih: feature index = c*9 + k (k = ho*3 + wo); slab k of lanes holds the
    # (C, 4H) block acting on conv4 feature position k.
    wih = raw["lstm_w_ih"]                                          # (4H, 288)
    wbig = jnp.transpose(wih.reshape(4 * HIDDEN, CH, 9),
                         (1, 2, 0)).reshape(CH, 9 * 4 * HIDDEN)     # (32, 1152)
    whh_t = raw["lstm_w_hh"].T                                      # (32, 128)
    wpv = jnp.concatenate([raw["policy_w"].T, raw["value_w"].T], axis=1)  # (32, 5)
    wpv = jnp.pad(wpv, ((0, 0), (0, 128 - (ACTIONS + 1))))
    wm = jnp.concatenate([wbig, whh_t, wpv], axis=1).astype(bf16)   # (32, 1408)

    bias = jnp.zeros((8, 128), jnp.float32)
    bias = bias.at[0, :CH].set(raw["conv1_b"])
    bias = bias.at[1, :CH].set(raw["conv2_b"])
    bias = bias.at[2, :CH].set(raw["conv3_b"])
    bias = bias.at[3, :CH].set(raw["conv4_b"])
    bias = bias.at[4, :4 * HIDDEN].set(raw["lstm_b_ih"] + raw["lstm_b_hh"])
    bias = bias.at[5, :ACTIONS + 1].set(
        jnp.concatenate([raw["policy_b"], raw["value_b"]]))

    return {
        "w1": pack_conv(raw["conv1_w"]),                             # (3, 4, 96)
        "wc": jnp.stack([pack_conv(raw["conv2_w"]),
                         pack_conv(raw["conv3_w"]),
                         pack_conv(raw["conv4_w"])], axis=0),        # (3, 3, 32, 96)
        "wm": wm,                                                    # (32, 1408)
        "bias": bias,                                                # (8, 128)
    }


# -----------------------------------------------------------------------------
# Plain-JAX reference (mirrors the PyTorch forward) for validation
# -----------------------------------------------------------------------------
def reference_forward(raw, x_flat, h0, c0):
    with jax.default_matmul_precision("float32"):
        B = x_flat.shape[0]
        x = x_flat.reshape(B, HIST_LEN, STATE, STATE)

        def conv(x, w, b, pad):
            y = jax.lax.conv_general_dilated(
                x, w, window_strides=(2, 2), padding=[(pad, pad), (pad, pad)],
                dimension_numbers=("NCHW", "OIHW", "NCHW"))
            return jax.nn.relu(y + b.reshape(1, -1, 1, 1))

        x = conv(x, raw["conv1_w"], raw["conv1_b"], 0)
        x = conv(x, raw["conv2_w"], raw["conv2_b"], 1)
        x = conv(x, raw["conv3_w"], raw["conv3_b"], 1)
        x = conv(x, raw["conv4_w"], raw["conv4_b"], 1)
        feat = x.reshape(B, HO4 * HO4 * CH)
        gates = (feat @ raw["lstm_w_ih"].T + raw["lstm_b_ih"]
                 + h0 @ raw["lstm_w_hh"].T + raw["lstm_b_hh"])
        i_g, f_g, g_g, o_g = jnp.split(gates, 4, axis=1)
        c_new = jax.nn.sigmoid(f_g) * c0 + jax.nn.sigmoid(i_g) * jnp.tanh(g_g)
        h_new = jax.nn.sigmoid(o_g) * jnp.tanh(c_new)
        p = jax.nn.softmax(h_new @ raw["policy_w"].T + raw["policy_b"], axis=-1)
        v = h_new @ raw["value_w"].T + raw["value_b"]
        return p, v, h_new, c_new


if __name__ == "__main__":
    batch = 2
    key = jax.random.PRNGKey(0)
    k_in, k_par = jax.random.split(key)

    raw = init_raw_params(k_par)
    params = prep_params(raw)               # one-time weight re-layout

    x = jax.random.normal(k_in, (batch, HIST_LEN * STATE * STATE), jnp.float32)
    h0 = jnp.zeros((batch, HIDDEN), jnp.float32)
    c0 = jnp.zeros((batch, HIDDEN), jnp.float32)

    fwd = jax.jit(a3c_cnn_forward)
    policy, value, (h_out, c_out) = fwd(params, x, (h0, c0))
    jax.block_until_ready((policy, value, h_out, c_out))

    # validate against a plain-JAX (f32) version of the PyTorch forward
    p_ref, v_ref, h_ref, c_ref = reference_forward(raw, x, h0, c0)
    assert policy.shape == (batch, ACTIONS) and value.shape == (batch, 1)
    assert h_out.shape == (batch, HIDDEN) and c_out.shape == (batch, HIDDEN)
    # bf16 (MXU-native) matmul operands vs f32 reference -> loose tolerances
    assert bool(jnp.allclose(value, v_ref, rtol=2e-2, atol=2e-2))
    assert bool(jnp.allclose(h_out, h_ref, rtol=2e-2, atol=2e-2))
    assert bool(jnp.allclose(c_out, c_ref, rtol=2e-2, atol=2e-2))
    assert bool(jnp.allclose(policy, p_ref, atol=1e-2))
    assert bool(jnp.allclose(jnp.sum(policy, axis=-1), 1.0, atol=1e-3))
    print("KERNEL_OK")
</pallas_src>

<mosaic_0001>
module attributes {stable_mosaic.version = 11 : i64} {
  func.func @_a3c_kernel(%arg0: i32, %arg1: memref<1x1764x4xbf16, #tpu.memory_space<vmem>>, %arg2: memref<1x1x64xf32, #tpu.memory_space<vmem>>, %arg3: memref<3x4x96xbf16, #tpu.memory_space<vmem>>, %arg4: memref<3x3x32x96xbf16, #tpu.memory_space<vmem>>, %arg5: memref<32x1408xbf16, #tpu.memory_space<vmem>>, %arg6: memref<8x128xf32, #tpu.memory_space<vmem>>, %arg7: memref<1x1x128xf32, #tpu.memory_space<vmem>>, %arg8: memref<840x96xf32, #tpu.memory_space<vmem>>, %arg9: memref<840x32xf32, #tpu.memory_space<vmem>>, %arg10: memref<484x32xbf16, #tpu.memory_space<vmem>>, %arg11: memref<144x32xbf16, #tpu.memory_space<vmem>>, %arg12: memref<49x32xbf16, #tpu.memory_space<vmem>>) attributes {dimension_semantics = [#tpu.dimension_semantics<parallel>], iteration_bounds = array<i64: 2>, scalar_prefetch = 0 : i64, scratch_operands = 5 : i64, tpu.core_type = #tpu.core_type<tc>, window_params = [{transform_indices = @transform_0, window_bounds = array<i64: 1, 1764, 4>}, {transform_indices = @transform_1, window_bounds = array<i64: 1, 1, 64>}, {pipeline_mode = #tpu.pipeline_mode<synchronous>, transform_indices = @transform_2, window_bounds = array<i64: 3, 4, 96>}, {pipeline_mode = #tpu.pipeline_mode<synchronous>, transform_indices = @transform_3, window_bounds = array<i64: 3, 3, 32, 96>}, {pipeline_mode = #tpu.pipeline_mode<synchronous>, transform_indices = @transform_4, window_bounds = array<i64: 32, 1408>}, {pipeline_mode = #tpu.pipeline_mode<synchronous>, transform_indices = @transform_5, window_bounds = array<i64: 8, 128>}, {transform_indices = @transform_6, window_bounds = array<i64: 1, 1, 128>}]} {
    %cst = arith.constant 0.000000e+00 : bf16
    %0 = vector.broadcast %cst : bf16 to vector<484x32xbf16>
    %c0 = arith.constant 0 : index
    %c0_0 = arith.constant 0 : index
    %1 = vector.load %arg10[%c0, %c0_0] : memref<484x32xbf16, #tpu.memory_space<vmem>>, vector<484x32xbf16>
    tpu.vector_store %arg10[%c0, %c0_0], %0 {strides = array<i32>} : memref<484x32xbf16, #tpu.memory_space<vmem>>, vector<484x32xbf16>,
    %cst_1 = arith.constant 0.000000e+00 : bf16
    %2 = vector.broadcast %cst_1 : bf16 to vector<144x32xbf16>
    %c0_2 = arith.constant 0 : index
    %c0_3 = arith.constant 0 : index
    %3 = vector.load %arg11[%c0_2, %c0_3] : memref<144x32xbf16, #tpu.memory_space<vmem>>, vector<144x32xbf16>
    tpu.vector_store %arg11[%c0_2, %c0_3], %2 {strides = array<i32>} : memref<144x32xbf16, #tpu.memory_space<vmem>>, vector<144x32xbf16>,
    %cst_4 = arith.constant 0.000000e+00 : bf16
    %4 = vector.broadcast %cst_4 : bf16 to vector<49x32xbf16>
    %c0_5 = arith.constant 0 : index
    %c0_6 = arith.constant 0 : index
    %5 = vector.load %arg12[%c0_5, %c0_6] : memref<49x32xbf16, #tpu.memory_space<vmem>>, vector<49x32xbf16>
    tpu.vector_store %arg12[%c0_5, %c0_6], %4 {strides = array<i32>} : memref<49x32xbf16, #tpu.memory_space<vmem>>, vector<49x32xbf16>,
    %c0_7 = arith.constant 0 : index
    %c0_8 = arith.constant 0 : index
    %c0_9 = arith.constant 0 : index
    %6 = vector.load %arg1[%c0_7, %c0_8, %c0_9] : memref<1x1764x4xbf16, #tpu.memory_space<vmem>>, vector<1x840x4xbf16>
    %7 = vector.shape_cast %6 : vector<1x840x4xbf16> to vector<840x4xbf16>
    %c0_10 = arith.constant 0 : index
    %c0_11 = arith.constant 0 : index
    %c0_12 = arith.constant 0 : index
    %8 = vector.load %arg3[%c0_10, %c0_11, %c0_12] : memref<3x4x96xbf16, #tpu.memory_space<vmem>>, vector<1x4x96xbf16>
    %9 = vector.shape_cast %8 : vector<1x4x96xbf16> to vector<4x96xbf16>
    %cst_13 = arith.constant dense<0.000000e+00> : vector<840x96xf32>
    %10 = tpu.matmul %7, %9, %cst_13 {dimension_numbers = #tpu.dot_dimension_numbers<[1], [0], [0], [1], [0, 0, 1, 1], [], []>} : vector<840x4xbf16>, vector<4x96xbf16>, vector<840x96xf32> -> vector<840x96xf32>
    %c0_14 = arith.constant 0 : index
    %c0_15 = arith.constant 0 : index
    %11 = vector.load %arg8[%c0_14, %c0_15] : memref<840x96xf32, #tpu.memory_space<vmem>>, vector<840x96xf32>
    tpu.vector_store %arg8[%c0_14, %c0_15], %10 {strides = array<i32>} : memref<840x96xf32, #tpu.memory_space<vmem>>, vector<840x96xf32>,
    %c0_16 = arith.constant 0 : index
    %c882 = arith.constant 882 : index
    %c0_17 = arith.constant 0 : index
    %12 = vector.load %arg1[%c0_16, %c882, %c0_17] : memref<1x1764x4xbf16, #tpu.memory_space<vmem>>, vector<1x840x4xbf16>
    %13 = vector.shape_cast %12 : vector<1x840x4xbf16> to vector<840x4xbf16>
    %c1 = arith.constant 1 : index
    %c0_18 = arith.constant 0 : index
    %c0_19 = arith.constant 0 : index
    %14 = vector.load %arg3[%c1, %c0_18, %c0_19] : memref<3x4x96xbf16, #tpu.memory_space<vmem>>, vector<1x4x96xbf16>
    %15 = vector.shape_cast %14 : vector<1x4x96xbf16> to vector<4x96xbf16>
    %cst_20 = arith.constant dense<0.000000e+00> : vector<840x96xf32>
    %16 = tpu.matmul %13, %15, %cst_20 {dimension_numbers = #tpu.dot_dimension_numbers<[1], [0], [0], [1], [0, 0, 1, 1], [], []>} : vector<840x4xbf16>, vector<4x96xbf16>, vector<840x96xf32> -> vector<840x96xf32>
    %c0_21 = arith.constant 0 : index
    %c0_22 = arith.constant 0 : index
    %17 = vector.load %arg8[%c0_21, %c0_22] : memref<840x96xf32, #tpu.memory_space<vmem>>, vector<840x96xf32>
    %18 = arith.addf %17, %16 : vector<840x96xf32>
    %c0_23 = arith.constant 0 : index
    %c0_24 = arith.constant 0 : index
    %19 = vector.load %arg8[%c0_23, %c0_24] : memref<840x96xf32, #tpu.memory_space<vmem>>, vector<840x96xf32>
    tpu.vector_store %arg8[%c0_23, %c0_24], %18 {strides = array<i32>} : memref<840x96xf32, #tpu.memory_space<vmem>>, vector<840x96xf32>,
    %c0_25 = arith.constant 0 : index
    %c42 = arith.constant 42 : index
    %c0_26 = arith.constant 0 : index
    %20 = vector.load %arg1[%c0_25, %c42, %c0_26] : memref<1x1764x4xbf16, #tpu.memory_space<vmem>>, vector<1x840x4xbf16>
    %21 = vector.shape_cast %20 : vector<1x840x4xbf16> to vector<840x4xbf16>
    %c2 = arith.constant 2 : index
    %c0_27 = arith.constant 0 : index
    %c0_28 = arith.constant 0 : index
    %22 = vector.load %arg3[%c2, %c0_27, %c0_28] : memref<3x4x96xbf16, #tpu.memory_space<vmem>>, vector<1x4x96xbf16>
    %23 = vector.shape_cast %22 : vector<1x4x96xbf16> to vector<4x96xbf16>
    %cst_29 = arith.constant dense<0.000000e+00> : vector<840x96xf32>
    %24 = tpu.matmul %21, %23, %cst_29 {dimension_numbers = #tpu.dot_dimension_numbers<[1], [0], [0], [1], [0, 0, 1, 1], [], []>} : vector<840x4xbf16>, vector<4x96xbf16>, vector<840x96xf32> -> vector<840x96xf32>
    %c0_30 = arith.constant 0 : index
    %c0_31 = arith.constant 0 : index
    %25 = vector.load %arg8[%c0_30, %c0_31] : memref<840x96xf32, #tpu.memory_space<vmem>>, vector<840x96xf32>
    %26 = arith.addf %25, %24 : vector<840x96xf32>
    %c0_32 = arith.constant 0 : index
    %c0_33 = arith.constant 0 : index
    %27 = vector.load %arg8[%c0_32, %c0_33] : memref<840x96xf32, #tpu.memory_space<vmem>>, vector<840x96xf32>
    tpu.vector_store %arg8[%c0_32, %c0_33], %26 {strides = array<i32>} : memref<840x96xf32, #tpu.memory_space<vmem>>, vector<840x96xf32>,
    %c0_34 = arith.constant 0 : index
    %c0_35 = arith.constant 0 : index
    %28 = vector.load %arg8[%c0_34, %c0_35] : memref<840x96xf32, #tpu.memory_space<vmem>>, vector<838x32xf32>
    %c1_36 = arith.constant 1 : index
    %c32 = arith.constant 32 : index
    %29 = vector.load %arg8[%c1_36, %c32] : memref<840x96xf32, #tpu.memory_space<vmem>>, vector<838x32xf32>
    %30 = arith.addf %28, %29 : vector<838x32xf32>
    %c2_37 = arith.constant 2 : index
    %c64 = arith.constant 64 : index
    %31 = vector.load %arg8[%c2_37, %c64] : memref<840x96xf32, #tpu.memory_space<vmem>>, vector<838x32xf32>
    %32 = arith.addf %30, %31 : vector<838x32xf32>
    %c0_38 = arith.constant 0 : index
    %c0_39 = arith.constant 0 : index
    %33 = vector.load %arg9[%c0_38, %c0_39] : memref<840x32xf32, #tpu.memory_space<vmem>>, vector<838x32xf32>
    tpu.vector_store %arg9[%c0_38, %c0_39], %32 {strides = array<i32>} : memref<840x32xf32, #tpu.memory_space<vmem>>, vector<838x32xf32>,
    %c0_40 = arith.constant 0 : index
    %c0_41 = arith.constant 0 : index
    %34 = vector.load %arg6[%c0_40, %c0_41] : memref<8x128xf32, #tpu.memory_space<vmem>>, vector<1x32xf32>
    %c0_42 = arith.constant 0 : index
    %c0_43 = arith.constant 0 : index
    %35 = tpu.strided_load %arg9[%c0_42, %c0_43] {strides = array<i32: 2, 1>} : memref<840x32xf32, #tpu.memory_space<vmem>>, vector<20x32xf32>
    %36 = vector.broadcast %34 : vector<1x32xf32> to vector<20x32xf32>
    %37 = arith.addf %35, %36 : vector<20x32xf32>
    %cst_44 = arith.constant 0.000000e+00 : f32
    %38 = vector.broadcast %cst_44 : f32 to vector<20x32xf32>
    %39 = arith.maximumf %37, %38 : vector<20x32xf32>
    %40 = arith.truncf %39 : vector<20x32xf32> to vector<20x32xbf16>
    %c243 = arith.constant 243 : index
    %c0_45 = arith.constant 0 : index
    %41 = vector.load %arg10[%c243, %c0_45] : memref<484x32xbf16, #tpu.memory_space<vmem>>, vector<20x32xbf16>
    tpu.vector_store %arg10[%c243, %c0_45], %40 {strides = array<i32>} : memref<484x32xbf16, #tpu.memory_space<vmem>>, vector<20x32xbf16>,
    %c42_46 = arith.constant 42 : index
    %c0_47 = arith.constant 0 : index
    %42 = tpu.strided_load %arg9[%c42_46, %c0_47] {strides = array<i32: 2, 1>} : memref<840x32xf32, #tpu.memory_space<vmem>>, vector<20x32xf32>
    %43 = vector.broadcast %34 : vector<1x32xf32> to vector<20x32xf32>
    %44 = arith.addf %42, %43 : vector<20x32xf32>
    %cst_48 = arith.constant 0.000000e+00 : f32
    %45 = vector.broadcast %cst_48 : f32 to vector<20x32xf32>
    %46 = arith.maximumf %44, %45 : vector<20x32xf32>
    %47 = arith.truncf %46 : vector<20x32xf32> to vector<20x32xbf16>
    %c23 = arith.constant 23 : index
    %c0_49 = arith.constant 0 : index
    %48 = vector.load %arg10[%c23, %c0_49] : memref<484x32xbf16, #tpu.memory_space<vmem>>, vector<20x32xbf16>
    tpu.vector_store %arg10[%c23, %c0_49], %47 {strides = array<i32>} : memref<484x32xbf16, #tpu.memory_space<vmem>>, vector<20x32xbf16>,
    %c84 = arith.constant 84 : index
    %c0_50 = arith.constant 0 : index
    %49 = tpu.strided_load %arg9[%c84, %c0_50] {strides = array<i32: 2, 1>} : memref<840x32xf32, #tpu.memory_space<vmem>>, vector<20x32xf32>
    %50 = vector.broadcast %34 : vector<1x32xf32> to vector<20x32xf32>
    %51 = arith.addf %49, %50 : vector<20x32xf32>
    %cst_51 = arith.constant 0.000000e+00 : f32
    %52 = vector.broadcast %cst_51 : f32 to vector<20x32xf32>
    %53 = arith.maximumf %51, %52 : vector<20x32xf32>
    %54 = arith.truncf %53 : vector<20x32xf32> to vector<20x32xbf16>
    %c265 = arith.constant 265 : index
    %c0_52 = arith.constant 0 : index
    %55 = vector.load %arg10[%c265, %c0_52] : memref<484x32xbf16, #tpu.memory_space<vmem>>, vector<20x32xbf16>
    tpu.vector_store %arg10[%c265, %c0_52], %54 {strides = array<i32>} : memref<484x32xbf16, #tpu.memory_space<vmem>>, vector<20x32xbf16>,
    %c126 = arith.constant 126 : index
    %c0_53 = arith.constant 0 : index
    %56 = tpu.strided_load %arg9[%c126, %c0_53] {strides = array<i32: 2, 1>} : memref<840x32xf32, #tpu.memory_space<vmem>>, vector<20x32xf32>
    %57 = vector.broadcast %34 : vector<1x32xf32> to vector<20x32xf32>
    %58 = arith.addf %56, %57 : vector<20x32xf32>
    %cst_54 = arith.constant 0.000000e+00 : f32
    %59 = vector.broadcast %cst_54 : f32 to vector<20x32xf32>
    %60 = arith.maximumf %58, %59 : vector<20x32xf32>
    %61 = arith.truncf %60 : vector<20x32xf32> to vector<20x32xbf16>
    %c45 = arith.constant 45 : index
    %c0_55 = arith.constant 0 : index
    %62 = vector.load %arg10[%c45, %c0_55] : memref<484x32xbf16, #tpu.memory_space<vmem>>, vector<20x32xbf16>
    tpu.vector_store %arg10[%c45, %c0_55], %61 {strides = array<i32>} : memref<484x32xbf16, #tpu.memory_space<vmem>>, vector<20x32xbf16>,
    %c168 = arith.constant 168 : index
    %c0_56 = arith.constant 0 : index
    %63 = tpu.strided_load %arg9[%c168, %c0_56] {strides = array<i32: 2, 1>} : memref<840x32xf32, #tpu.memory_space<vmem>>, vector<20x32xf32>
    %64 = vector.broadcast %34 : vector<1x32xf32> to vector<20x32xf32>
    %65 = arith.addf %63, %64 : vector<20x32xf32>
    %cst_57 = arith.constant 0.000000e+00 : f32
    %66 = vector.broadcast %cst_57 : f32 to vector<20x32xf32>
    %67 = arith.maximumf %65, %66 : vector<20x32xf32>
    %68 = arith.truncf %67 : vector<20x32xf32> to vector<20x32xbf16>
    %c287 = arith.constant 287 : index
    %c0_58 = arith.constant 0 : index
    %69 = vector.load %arg10[%c287, %c0_58] : memref<484x32xbf16, #tpu.memory_space<vmem>>, vector<20x32xbf16>
    tpu.vector_store %arg10[%c287, %c0_58], %68 {strides = array<i32>} : memref<484x32xbf16, #tpu.memory_space<vmem>>, vector<20x32xbf16>,
    %c210 = arith.constant 210 : index
    %c0_59 = arith.constant 0 : index
    %70 = tpu.strided_load %arg9[%c210, %c0_59] {strides = array<i32: 2, 1>} : memref<840x32xf32, #tpu.memory_space<vmem>>, vector<20x32xf32>
    %71 = vector.broadcast %34 : vector<1x32xf32> to vector<20x32xf32>
    %72 = arith.addf %70, %71 : vector<20x32xf32>
    %cst_60 = arith.constant 0.000000e+00 : f32
    %73 = vector.broadcast %cst_60 : f32 to vector<20x32xf32>
    %74 = arith.maximumf %72, %73 : vector<20x32xf32>
    %75 = arith.truncf %74 : vector<20x32xf32> to vector<20x32xbf16>
    %c67 = arith.constant 67 : index
    %c0_61 = arith.constant 0 : index
    %76 = vector.load %arg10[%c67, %c0_61] : memref<484x32xbf16, #tpu.memory_space<vmem>>, vector<20x32xbf16>
    tpu.vector_store %arg10[%c67, %c0_61], %75 {strides = array<i32>} : memref<484x32xbf16, #tpu.memory_space<vmem>>, vector<20x32xbf16>,
    %c252 = arith.constant 252 : index
    %c0_62 = arith.constant 0 : index
    %77 = tpu.strided_load %arg9[%c252, %c0_62] {strides = array<i32: 2, 1>} : memref<840x32xf32, #tpu.memory_space<vmem>>, vector<20x32xf32>
    %78 = vector.broadcast %34 : vector<1x32xf32> to vector<20x32xf32>
    %79 = arith.addf %77, %78 : vector<20x32xf32>
    %cst_63 = arith.constant 0.000000e+00 : f32
    %80 = vector.broadcast %cst_63 : f32 to vector<20x32xf32>
    %81 = arith.maximumf %79, %80 : vector<20x32xf32>
    %82 = arith.truncf %81 : vector<20x32xf32> to vector<20x32xbf16>
    %c309 = arith.constant 309 : index
    %c0_64 = arith.constant 0 : index
    %83 = vector.load %arg10[%c309, %c0_64] : memref<484x32xbf16, #tpu.memory_space<vmem>>, vector<20x32xbf16>
    tpu.vector_store %arg10[%c309, %c0_64], %82 {strides = array<i32>} : memref<484x32xbf16, #tpu.memory_space<vmem>>, vector<20x32xbf16>,
    %c294 = arith.constant 294 : index
    %c0_65 = arith.constant 0 : index
    %84 = tpu.strided_load %arg9[%c294, %c0_65] {strides = array<i32: 2, 1>} : memref<840x32xf32, #tpu.memory_space<vmem>>, vector<20x32xf32>
    %85 = vector.broadcast %34 : vector<1x32xf32> to vector<20x32xf32>
    %86 = arith.addf %84, %85 : vector<20x32xf32>
    %cst_66 = arith.constant 0.000000e+00 : f32
    %87 = vector.broadcast %cst_66 : f32 to vector<20x32xf32>
    %88 = arith.maximumf %86, %87 : vector<20x32xf32>
    %89 = arith.truncf %88 : vector<20x32xf32> to vector<20x32xbf16>
    %c89 = arith.constant 89 : index
    %c0_67 = arith.constant 0 : index
    %90 = vector.load %arg10[%c89, %c0_67] : memref<484x32xbf16, #tpu.memory_space<vmem>>, vector<20x32xbf16>
    tpu.vector_store %arg10[%c89, %c0_67], %89 {strides = array<i32>} : memref<484x32xbf16, #tpu.memory_space<vmem>>, vector<20x32xbf16>,
    %c336 = arith.constant 336 : index
    %c0_68 = arith.constant 0 : index
    %91 = tpu.strided_load %arg9[%c336, %c0_68] {strides = array<i32: 2, 1>} : memref<840x32xf32, #tpu.memory_space<vmem>>, vector<20x32xf32>
    %92 = vector.broadcast %34 : vector<1x32xf32> to vector<20x32xf32>
    %93 = arith.addf %91, %92 : vector<20x32xf32>
    %cst_69 = arith.constant 0.000000e+00 : f32
    %94 = vector.broadcast %cst_69 : f32 to vector<20x32xf32>
    %95 = arith.maximumf %93, %94 : vector<20x32xf32>
    %96 = arith.truncf %95 : vector<20x32xf32> to vector<20x32xbf16>
    %c331 = arith.constant 331 : index
    %c0_70 = arith.constant 0 : index
    %97 = vector.load %arg10[%c331, %c0_70] : memref<484x32xbf16, #tpu.memory_space<vmem>>, vector<20x32xbf16>
    tpu.vector_store %arg10[%c331, %c0_70], %96 {strides = array<i32>} : memref<484x32xbf16, #tpu.memory_space<vmem>>, vector<20x32xbf16>,
    %c378 = arith.constant 378 : index
    %c0_71 = arith.constant 0 : index
    %98 = tpu.strided_load %arg9[%c378, %c0_71] {strides = array<i32: 2, 1>} : memref<840x32xf32, #tpu.memory_space<vmem>>, vector<20x32xf32>
    %99 = vector.broadcast %34 : vector<1x32xf32> to vector<20x32xf32>
    %100 = arith.addf %98, %99 : vector<20x32xf32>
    %cst_72 = arith.constant 0.000000e+00 : f32
    %101 = vector.broadcast %cst_72 : f32 to vector<20x32xf32>
    %102 = arith.maximumf %100, %101 : vector<20x32xf32>
    %103 = arith.truncf %102 : vector<20x32xf32> to vector<20x32xbf16>
    %c111 = arith.constant 111 : index
    %c0_73 = arith.constant 0 : index
    %104 = vector.load %arg10[%c111, %c0_73] : memref<484x32xbf16, #tpu.memory_space<vmem>>, vector<20x32xbf16>
    tpu.vector_store %arg10[%c111, %c0_73], %103 {strides = array<i32>} : memref<484x32xbf16, #tpu.memory_space<vmem>>, vector<20x32xbf16>,
    %c420 = arith.constant 420 : index
    %c0_74 = arith.constant 0 : index
    %105 = tpu.strided_load %arg9[%c420, %c0_74] {strides = array<i32: 2, 1>} : memref<840x32xf32, #tpu.memory_space<vmem>>, vector<20x32xf32>
    %106 = vector.broadcast %34 : vector<1x32xf32> to vector<20x32xf32>
    %107 = arith.addf %105, %106 : vector<20x32xf32>
    %cst_75 = arith.constant 0.000000e+00 : f32
    %108 = vector.broadcast %cst_75 : f32 to vector<20x32xf32>
    %109 = arith.maximumf %107, %108 : vector<20x32xf32>
    %110 = arith.truncf %109 : vector<20x32xf32> to vector<20x32xbf16>
    %c353 = arith.constant 353 : index
    %c0_76 = arith.constant 0 : index
    %111 = vector.load %arg10[%c353, %c0_76] : memref<484x32xbf16, #tpu.memory_space<vmem>>, vector<20x32xbf16>
    tpu.vector_store %arg10[%c353, %c0_76], %110 {strides = array<i32>} : memref<484x32xbf16, #tpu.memory_space<vmem>>, vector<20x32xbf16>,
    %c462 = arith.constant 462 : index
    %c0_77 = arith.constant 0 : index
    %112 = tpu.strided_load %arg9[%c462, %c0_77] {strides = array<i32: 2, 1>} : memref<840x32xf32, #tpu.memory_space<vmem>>, vector<20x32xf32>
    %113 = vector.broadcast %34 : vector<1x32xf32> to vector<20x32xf32>
    %114 = arith.addf %112, %113 : vector<20x32xf32>
    %cst_78 = arith.constant 0.000000e+00 : f32
    %115 = vector.broadcast %cst_78 : f32 to vector<20x32xf32>
    %116 = arith.maximumf %114, %115 : vector<20x32xf32>
    %117 = arith.truncf %116 : vector<20x32xf32> to vector<20x32xbf16>
    %c133 = arith.constant 133 : index
    %c0_79 = arith.constant 0 : index
    %118 = vector.load %arg10[%c133, %c0_79] : memref<484x32xbf16, #tpu.memory_space<vmem>>, vector<20x32xbf16>
    tpu.vector_store %arg10[%c133, %c0_79], %117 {strides = array<i32>} : memref<484x32xbf16, #tpu.memory_space<vmem>>, vector<20x32xbf16>,
    %c504 = arith.constant 504 : index
    %c0_80 = arith.constant 0 : index
    %119 = tpu.strided_load %arg9[%c504, %c0_80] {strides = array<i32: 2, 1>} : memref<840x32xf32, #tpu.memory_space<vmem>>, vector<20x32xf32>
    %120 = vector.broadcast %34 : vector<1x32xf32> to vector<20x32xf32>
    %121 = arith.addf %119, %120 : vector<20x32xf32>
    %cst_81 = arith.constant 0.000000e+00 : f32
    %122 = vector.broadcast %cst_81 : f32 to vector<20x32xf32>
    %123 = arith.maximumf %121, %122 : vector<20x32xf32>
    %124 = arith.truncf %123 : vector<20x32xf32> to vector<20x32xbf16>
    %c375 = arith.constant 375 : index
    %c0_82 = arith.constant 0 : index
    %125 = vector.load %arg10[%c375, %c0_82] : memref<484x32xbf16, #tpu.memory_space<vmem>>, vector<20x32xbf16>
    tpu.vector_store %arg10[%c375, %c0_82], %124 {strides = array<i32>} : memref<484x32xbf16, #tpu.memory_space<vmem>>, vector<20x32xbf16>,
    %c546 = arith.constant 546 : index
    %c0_83 = arith.constant 0 : index
    %126 = tpu.strided_load %arg9[%c546, %c0_83] {strides = array<i32: 2, 1>} : memref<840x32xf32, #tpu.memory_space<vmem>>, vector<20x32xf32>
    %127 = vector.broadcast %34 : vector<1x32xf32> to vector<20x32xf32>
    %128 = arith.addf %126, %127 : vector<20x32xf32>
    %cst_84 = arith.constant 0.000000e+00 : f32
    %129 = vector.broadcast %cst_84 : f32 to vector<20x32xf32>
    %130 = arith.maximumf %128, %129 : vector<20x32xf32>
    %131 = arith.truncf %130 : vector<20x32xf32> to vector<20x32xbf16>
    %c155 = arith.constant 155 : index
    %c0_85 = arith.constant 0 : index
    %132 = vector.load %arg10[%c155, %c0_85] : memref<484x32xbf16, #tpu.memory_space<vmem>>, vector<20x32xbf16>
    tpu.vector_store %arg10[%c155, %c0_85], %131 {strides = array<i32>} : memref<484x32xbf16, #tpu.memory_space<vmem>>, vector<20x32xbf16>,
    %c588 = arith.constant 588 : index
    %c0_86 = arith.constant 0 : index
    %133 = tpu.strided_load %arg9[%c588, %c0_86] {strides = array<i32: 2, 1>} : memref<840x32xf32, #tpu.memory_space<vmem>>, vector<20x32xf32>
    %134 = vector.broadcast %34 : vector<1x32xf32> to vector<20x32xf32>
    %135 = arith.addf %133, %134 : vector<20x32xf32>
    %cst_87 = arith.constant 0.000000e+00 : f32
    %136 = vector.broadcast %cst_87 : f32 to vector<20x32xf32>
    %137 = arith.maximumf %135, %136 : vector<20x32xf32>
    %138 = arith.truncf %137 : vector<20x32xf32> to vector<20x32xbf16>
    %c397 = arith.constant 397 : index
    %c0_88 = arith.constant 0 : index
    %139 = vector.load %arg10[%c397, %c0_88] : memref<484x32xbf16, #tpu.memory_space<vmem>>, vector<20x32xbf16>
    tpu.vector_store %arg10[%c397, %c0_88], %138 {strides = array<i32>} : memref<484x32xbf16, #tpu.memory_space<vmem>>, vector<20x32xbf16>,
    %c630 = arith.constant 630 : index
    %c0_89 = arith.constant 0 : index
    %140 = tpu.strided_load %arg9[%c630, %c0_89] {strides = array<i32: 2, 1>} : memref<840x32xf32, #tpu.memory_space<vmem>>, vector<20x32xf32>
    %141 = vector.broadcast %34 : vector<1x32xf32> to vector<20x32xf32>
    %142 = arith.addf %140, %141 : vector<20x32xf32>
    %cst_90 = arith.constant 0.000000e+00 : f32
    %143 = vector.broadcast %cst_90 : f32 to vector<20x32xf32>
    %144 = arith.maximumf %142, %143 : vector<20x32xf32>
    %145 = arith.truncf %144 : vector<20x32xf32> to vector<20x32xbf16>
    %c177 = arith.constant 177 : index
    %c0_91 = arith.constant 0 : index
    %146 = vector.load %arg10[%c177, %c0_91] : memref<484x32xbf16, #tpu.memory_space<vmem>>, vector<20x32xbf16>
    tpu.vector_store %arg10[%c177, %c0_91], %145 {strides = array<i32>} : memref<484x32xbf16, #tpu.memory_space<vmem>>, vector<20x32xbf16>,
    %c672 = arith.constant 672 : index
    %c0_92 = arith.constant 0 : index
    %147 = tpu.strided_load %arg9[%c672, %c0_92] {strides = array<i32: 2, 1>} : memref<840x32xf32, #tpu.memory_space<vmem>>, vector<20x32xf32>
    %148 = vector.broadcast %34 : vector<1x32xf32> to vector<20x32xf32>
    %149 = arith.addf %147, %148 : vector<20x32xf32>
    %cst_93 = arith.constant 0.000000e+00 : f32
    %150 = vector.broadcast %cst_93 : f32 to vector<20x32xf32>
    %151 = arith.maximumf %149, %150 : vector<20x32xf32>
    %152 = arith.truncf %151 : vector<20x32xf32> to vector<20x32xbf16>
    %c419 = arith.constant 419 : index
    %c0_94 = arith.constant 0 : index
    %153 = vector.load %arg10[%c419, %c0_94] : memref<484x32xbf16, #tpu.memory_space<vmem>>, vector<20x32xbf16>
    tpu.vector_store %arg10[%c419, %c0_94], %152 {strides = array<i32>} : memref<484x32xbf16, #tpu.memory_space<vmem>>, vector<20x32xbf16>,
    %c714 = arith.constant 714 : index
    %c0_95 = arith.constant 0 : index
    %154 = tpu.strided_load %arg9[%c714, %c0_95] {strides = array<i32: 2, 1>} : memref<840x32xf32, #tpu.memory_space<vmem>>, vector<20x32xf32>
    %155 = vector.broadcast %34 : vector<1x32xf32> to vector<20x32xf32>
    %156 = arith.addf %154, %155 : vector<20x32xf32>
    %cst_96 = arith.constant 0.000000e+00 : f32
    %157 = vector.broadcast %cst_96 : f32 to vector<20x32xf32>
    %158 = arith.maximumf %156, %157 : vector<20x32xf32>
    %159 = arith.truncf %158 : vector<20x32xf32> to vector<20x32xbf16>
    %c199 = arith.constant 199 : index
    %c0_97 = arith.constant 0 : index
    %160 = vector.load %arg10[%c199, %c0_97] : memref<484x32xbf16, #tpu.memory_space<vmem>>, vector<20x32xbf16>
    tpu.vector_store %arg10[%c199, %c0_97], %159 {strides = array<i32>} : memref<484x32xbf16, #tpu.memory_space<vmem>>, vector<20x32xbf16>,
    %c756 = arith.constant 756 : index
    %c0_98 = arith.constant 0 : index
    %161 = tpu.strided_load %arg9[%c756, %c0_98] {strides = array<i32: 2, 1>} : memref<840x32xf32, #tpu.memory_space<vmem>>, vector<20x32xf32>
    %162 = vector.broadcast %34 : vector<1x32xf32> to vector<20x32xf32>
    %163 = arith.addf %161, %162 : vector<20x32xf32>
    %cst_99 = arith.constant 0.000000e+00 : f32
    %164 = vector.broadcast %cst_99 : f32 to vector<20x32xf32>
    %165 = arith.maximumf %163, %164 : vector<20x32xf32>
    %166 = arith.truncf %165 : vector<20x32xf32> to vector<20x32xbf16>
    %c441 = arith.constant 441 : index
    %c0_100 = arith.constant 0 : index
    %167 = vector.load %arg10[%c441, %c0_100] : memref<484x32xbf16, #tpu.memory_space<vmem>>, vector<20x32xbf16>
    tpu.vector_store %arg10[%c441, %c0_100], %166 {strides = array<i32>} : memref<484x32xbf16, #tpu.memory_space<vmem>>, vector<20x32xbf16>,
    %c798 = arith.constant 798 : index
    %c0_101 = arith.constant 0 : index
    %168 = tpu.strided_load %arg9[%c798, %c0_101] {strides = array<i32: 2, 1>} : memref<840x32xf32, #tpu.memory_space<vmem>>, vector<20x32xf32>
    %169 = vector.broadcast %34 : vector<1x32xf32> to vector<20x32xf32>
    %170 = arith.addf %168, %169 : vector<20x32xf32>
    %cst_102 = arith.constant 0.000000e+00 : f32
    %171 = vector.broadcast %cst_102 : f32 to vector<20x32xf32>
    %172 = arith.maximumf %170, %171 : vector<20x32xf32>
    %173 = arith.truncf %172 : vector<20x32xf32> to vector<20x32xbf16>
    %c221 = arith.constant 221 : index
    %c0_103 = arith.constant 0 : index
    %174 = vector.load %arg10[%c221, %c0_103] : memref<484x32xbf16, #tpu.memory_space<vmem>>, vector<20x32xbf16>
    tpu.vector_store %arg10[%c221, %c0_103], %173 {strides = array<i32>} : memref<484x32xbf16, #tpu.memory_space<vmem>>, vector<20x32xbf16>,
    %c0_104 = arith.constant 0 : index
    %c0_105 = arith.constant 0 : index
    %175 = vector.load %arg10[%c0_104, %c0_105] : memref<484x32xbf16, #tpu.memory_space<vmem>>, vector<220x32xbf16>
    %c0_106 = arith.constant 0 : index
    %c0_107 = arith.constant 0 : index
    %c0_108 = arith.constant 0 : index
    %c0_109 = arith.constant 0 : index
    %176 = vector.load %arg4[%c0_106, %c0_107, %c0_108, %c0_109] : memref<3x3x32x96xbf16, #tpu.memory_space<vmem>>, vector<1x1x32x96xbf16>
    %177 = vector.shape_cast %176 : vector<1x1x32x96xbf16> to vector<32x96xbf16>
    %cst_110 = arith.constant dense<0.000000e+00> : vector<220x96xf32>
    %178 = tpu.matmul %175, %177, %cst_110 {dimension_numbers = #tpu.dot_dimension_numbers<[1], [0], [0], [1], [0, 0, 1, 1], [], []>} : vector<220x32xbf16>, vector<32x96xbf16>, vector<220x96xf32> -> vector<220x96xf32>
    %c0_111 = arith.constant 0 : index
    %c0_112 = arith.constant 0 : index
    %179 = vector.load %arg8[%c0_111, %c0_112] : memref<840x96xf32, #tpu.memory_space<vmem>>, vector<220x96xf32>
    tpu.vector_store %arg8[%c0_111, %c0_112], %178 {strides = array<i32>} : memref<840x96xf32, #tpu.memory_space<vmem>>, vector<220x96xf32>,
    %c242 = arith.constant 242 : index
    %c0_113 = arith.constant 0 : index
    %180 = vector.load %arg10[%c242, %c0_113] : memref<484x32xbf16, #tpu.memory_space<vmem>>, vector<220x32xbf16>
    %c0_114 = arith.constant 0 : index
    %c1_115 = arith.constant 1 : index
    %c0_116 = arith.constant 0 : index
    %c0_117 = arith.constant 0 : index
    %181 = vector.load %arg4[%c0_114, %c1_115, %c0_116, %c0_117] : memref<3x3x32x96xbf16, #tpu.memory_space<vmem>>, vector<1x1x32x96xbf16>
    %182 = vector.shape_cast %181 : vector<1x1x32x96xbf16> to vector<32x96xbf16>
    %cst_118 = arith.constant dense<0.000000e+00> : vector<220x96xf32>
    %183 = tpu.matmul %180, %182, %cst_118 {dimension_numbers = #tpu.dot_dimension_numbers<[1], [0], [0], [1], [0, 0, 1, 1], [], []>} : vector<220x32xbf16>, vector<32x96xbf16>, vector<220x96xf32> -> vector<220x96xf32>
    %c0_119 = arith.constant 0 : index
    %c0_120 = arith.constant 0 : index
    %184 = vector.load %arg8[%c0_119, %c0_120] : memref<840x96xf32, #tpu.memory_space<vmem>>, vector<220x96xf32>
    %185 = arith.addf %184, %183 : vector<220x96xf32>
    %c0_121 = arith.constant 0 : index
    %c0_122 = arith.constant 0 : index
    %186 = vector.load %arg8[%c0_121, %c0_122] : memref<840x96xf32, #tpu.memory_space<vmem>>, vector<220x96xf32>
    tpu.vector_store %arg8[%c0_121, %c0_122], %185 {strides = array<i32>} : memref<840x96xf32, #tpu.memory_space<vmem>>, vector<220x96xf32>,
    %c22 = arith.constant 22 : index
    %c0_123 = arith.constant 0 : index
    %187 = vector.load %arg10[%c22, %c0_123] : memref<484x32xbf16, #tpu.memory_space<vmem>>, vector<220x32xbf16>
    %c0_124 = arith.constant 0 : index
    %c2_125 = arith.constant 2 : index
    %c0_126 = arith.constant 0 : index
    %c0_127 = arith.constant 0 : index
    %188 = vector.load %arg4[%c0_124, %c2_125, %c0_126, %c0_127] : memref<3x3x32x96xbf16, #tpu.memory_space<vmem>>, vector<1x1x32x96xbf16>
    %189 = vector.shape_cast %188 : vector<1x1x32x96xbf16> to vector<32x96xbf16>
    %cst_128 = arith.constant dense<0.000000e+00> : vector<220x96xf32>
    %190 = tpu.matmul %187, %189, %cst_128 {dimension_numbers = #tpu.dot_dimension_numbers<[1], [0], [0], [1], [0, 0, 1, 1], [], []>} : vector<220x32xbf16>, vector<32x96xbf16>, vector<220x96xf32> -> vector<220x96xf32>
    %c0_129 = arith.constant 0 : index
    %c0_130 = arith.constant 0 : index
    %191 = vector.load %arg8[%c0_129, %c0_130] : memref<840x96xf32, #tpu.memory_space<vmem>>, vector<220x96xf32>
    %192 = arith.addf %191, %190 : vector<220x96xf32>
    %c0_131 = arith.constant 0 : index
    %c0_132 = arith.constant 0 : index
    %193 = vector.load %arg8[%c0_131, %c0_132] : memref<840x96xf32, #tpu.memory_space<vmem>>, vector<220x96xf32>
    tpu.vector_store %arg8[%c0_131, %c0_132], %192 {strides = array<i32>} : memref<840x96xf32, #tpu.memory_space<vmem>>, vector<220x96xf32>,
    %c0_133 = arith.constant 0 : index
    %c0_134 = arith.constant 0 : index
    %194 = vector.load %arg8[%c0_133, %c0_134] : memref<840x96xf32, #tpu.memory_space<vmem>>, vector<218x32xf32>
    %c1_135 = arith.constant 1 : index
    %c32_136 = arith.constant 32 : index
    %195 = vector.load %arg8[%c1_135, %c32_136] : memref<840x96xf32, #tpu.memory_space<vmem>>, vector<218x32xf32>
    %196 = arith.addf %194, %195 : vector<218x32xf32>
    %c2_137 = arith.constant 2 : index
    %c64_138 = arith.constant 64 : index
    %197 = vector.load %arg8[%c2_137, %c64_138] : memref<840x96xf32, #tpu.memory_space<vmem>>, vector<218x32xf32>
    %198 = arith.addf %196, %197 : vector<218x32xf32>
    %c0_139 = arith.constant 0 : index
    %c0_140 = arith.constant 0 : index
    %199 = vector.load %arg9[%c0_139, %c0_140] : memref<840x32xf32, #tpu.memory_space<vmem>>, vector<218x32xf32>
    tpu.vector_store %arg9[%c0_139, %c0_140], %198 {strides = array<i32>} : memref<840x32xf32, #tpu.memory_space<vmem>>, vector<218x32xf32>,
    %c1_141 = arith.constant 1 : index
    %c0_142 = arith.constant 0 : index
    %200 = vector.load %arg6[%c1_141, %c0_142] : memref<8x128xf32, #tpu.memory_space<vmem>>, vector<1x32xf32>
    %c0_143 = arith.constant 0 : index
    %c0_144 = arith.constant 0 : index
    %201 = tpu.strided_load %arg9[%c0_143, %c0_144] {strides = array<i32: 2, 1>} : memref<840x32xf32, #tpu.memory_space<vmem>>, vector<10x32xf32>
    %202 = vector.broadcast %200 : vector<1x32xf32> to vector<10x32xf32>
    %203 = arith.addf %201, %202 : vector<10x32xf32>
    %cst_145 = arith.constant 0.000000e+00 : f32
    %204 = vector.broadcast %cst_145 : f32 to vector<10x32xf32>
    %205 = arith.maximumf %203, %204 : vector<10x32xf32>
    %206 = arith.truncf %205 : vector<10x32xf32> to vector<10x32xbf16>
    %c73 = arith.constant 73 : index
    %c0_146 = arith.constant 0 : index
    %207 = vector.load %arg11[%c73, %c0_146] : memref<144x32xbf16, #tpu.memory_space<vmem>>, vector<10x32xbf16>
    tpu.vector_store %arg11[%c73, %c0_146], %206 {strides = array<i32>} : memref<144x32xbf16, #tpu.memory_space<vmem>>, vector<10x32xbf16>,
    %c22_147 = arith.constant 22 : index
    %c0_148 = arith.constant 0 : index
    %208 = tpu.strided_load %arg9[%c22_147, %c0_148] {strides = array<i32: 2, 1>} : memref<840x32xf32, #tpu.memory_space<vmem>>, vector<10x32xf32>
    %209 = vector.broadcast %200 : vector<1x32xf32> to vector<10x32xf32>
    %210 = arith.addf %208, %209 : vector<10x32xf32>
    %cst_149 = arith.constant 0.000000e+00 : f32
    %211 = vector.broadcast %cst_149 : f32 to vector<10x32xf32>
    %212 = arith.maximumf %210, %211 : vector<10x32xf32>
    %213 = arith.truncf %212 : vector<10x32xf32> to vector<10x32xbf16>
    %c13 = arith.constant 13 : index
    %c0_150 = arith.constant 0 : index
    %214 = vector.load %arg11[%c13, %c0_150] : memref<144x32xbf16, #tpu.memory_space<vmem>>, vector<10x32xbf16>
    tpu.vector_store %arg11[%c13, %c0_150], %213 {strides = array<i32>} : memref<144x32xbf16, #tpu.memory_space<vmem>>, vector<10x32xbf16>,
    %c44 = arith.constant 44 : index
    %c0_151 = arith.constant 0 : index
    %215 = tpu.strided_load %arg9[%c44, %c0_151] {strides = array<i32: 2, 1>} : memref<840x32xf32, #tpu.memory_space<vmem>>, vector<10x32xf32>
    %216 = vector.broadcast %200 : vector<1x32xf32> to vector<10x32xf32>
    %217 = arith.addf %215, %216 : vector<10x32xf32>
    %cst_152 = arith.constant 0.000000e+00 : f32
    %218 = vector.broadcast %cst_152 : f32 to vector<10x32xf32>
    %219 = arith.maximumf %217, %218 : vector<10x32xf32>
    %220 = arith.truncf %219 : vector<10x32xf32> to vector<10x32xbf16>
    %c85 = arith.constant 85 : index
    %c0_153 = arith.constant 0 : index
    %221 = vector.load %arg11[%c85, %c0_153] : memref<144x32xbf16, #tpu.memory_space<vmem>>, vector<10x32xbf16>
    tpu.vector_store %arg11[%c85, %c0_153], %220 {strides = array<i32>} : memref<144x32xbf16, #tpu.memory_space<vmem>>, vector<10x32xbf16>,
    %c66 = arith.constant 66 : index
    %c0_154 = arith.constant 0 : index
    %222 = tpu.strided_load %arg9[%c66, %c0_154] {strides = array<i32: 2, 1>} : memref<840x32xf32, #tpu.memory_space<vmem>>, vector<10x32xf32>
    %223 = vector.broadcast %200 : vector<1x32xf32> to vector<10x32xf32>
    %224 = arith.addf %222, %223 : vector<10x32xf32>
    %cst_155 = arith.constant 0.000000e+00 : f32
    %225 = vector.broadcast %cst_155 : f32 to vector<10x32xf32>
    %226 = arith.maximumf %224, %225 : vector<10x32xf32>
    %227 = arith.truncf %226 : vector<10x32xf32> to vector<10x32xbf16>
    %c25 = arith.constant 25 : index
    %c0_156 = arith.constant 0 : index
    %228 = vector.load %arg11[%c25, %c0_156] : memref<144x32xbf16, #tpu.memory_space<vmem>>, vector<10x32xbf16>
    tpu.vector_store %arg11[%c25, %c0_156], %227 {strides = array<i32>} : memref<144x32xbf16, #tpu.memory_space<vmem>>, vector<10x32xbf16>,
    %c88 = arith.constant 88 : index
    %c0_157 = arith.constant 0 : index
    %229 = tpu.strided_load %arg9[%c88, %c0_157] {strides = array<i32: 2, 1>} : memref<840x32xf32, #tpu.memory_space<vmem>>, vector<10x32xf32>
    %230 = vector.broadcast %200 : vector<1x32xf32> to vector<10x32xf32>
    %231 = arith.addf %229, %230 : vector<10x32xf32>
    %cst_158 = arith.constant 0.000000e+00 : f32
    %232 = vector.broadcast %cst_158 : f32 to vector<10x32xf32>
    %233 = arith.maximumf %231, %232 : vector<10x32xf32>
    %234 = arith.truncf %233 : vector<10x32xf32> to vector<10x32xbf16>
    %c97 = arith.constant 97 : index
    %c0_159 = arith.constant 0 : index
    %235 = vector.load %arg11[%c97, %c0_159] : memref<144x32xbf16, #tpu.memory_space<vmem>>, vector<10x32xbf16>
    tpu.vector_store %arg11[%c97, %c0_159], %234 {strides = array<i32>} : memref<144x32xbf16, #tpu.memory_space<vmem>>, vector<10x32xbf16>,
    %c110 = arith.constant 110 : index
    %c0_160 = arith.constant 0 : index
    %236 = tpu.strided_load %arg9[%c110, %c0_160] {strides = array<i32: 2, 1>} : memref<840x32xf32, #tpu.memory_space<vmem>>, vector<10x32xf32>
    %237 = vector.broadcast %200 : vector<1x32xf32> to vector<10x32xf32>
    %238 = arith.addf %236, %237 : vector<10x32xf32>
    %cst_161 = arith.constant 0.000000e+00 : f32
    %239 = vector.broadcast %cst_161 : f32 to vector<10x32xf32>
    %240 = arith.maximumf %238, %239 : vector<10x32xf32>
    %241 = arith.truncf %240 : vector<10x32xf32> to vector<10x32xbf16>
    %c37 = arith.constant 37 : index
    %c0_162 = arith.constant 0 : index
    %242 = vector.load %arg11[%c37, %c0_162] : memref<144x32xbf16, #tpu.memory_space<vmem>>, vector<10x32xbf16>
    tpu.vector_store %arg11[%c37, %c0_162], %241 {strides = array<i32>} : memref<144x32xbf16, #tpu.memory_space<vmem>>, vector<10x32xbf16>,
    %c132 = arith.constant 132 : index
    %c0_163 = arith.constant 0 : index
    %243 = tpu.strided_load %arg9[%c132, %c0_163] {strides = array<i32: 2, 1>} : memref<840x32xf32, #tpu.memory_space<vmem>>, vector<10x32xf32>
    %244 = vector.broadcast %200 : vector<1x32xf32> to vector<10x32xf32>
    %245 = arith.addf %243, %244 : vector<10x32xf32>
    %cst_164 = arith.constant 0.000000e+00 : f32
    %246 = vector.broadcast %cst_164 : f32 to vector<10x32xf32>
    %247 = arith.maximumf %245, %246 : vector<10x32xf32>
    %248 = arith.truncf %247 : vector<10x32xf32> to vector<10x32xbf16>
    %c109 = arith.constant 109 : index
    %c0_165 = arith.constant 0 : index
    %249 = vector.load %arg11[%c109, %c0_165] : memref<144x32xbf16, #tpu.memory_space<vmem>>, vector<10x32xbf16>
    tpu.vector_store %arg11[%c109, %c0_165], %248 {strides = array<i32>} : memref<144x32xbf16, #tpu.memory_space<vmem>>, vector<10x32xbf16>,
    %c154 = arith.constant 154 : index
    %c0_166 = arith.constant 0 : index
    %250 = tpu.strided_load %arg9[%c154, %c0_166] {strides = array<i32: 2, 1>} : memref<840x32xf32, #tpu.memory_space<vmem>>, vector<10x32xf32>
    %251 = vector.broadcast %200 : vector<1x32xf32> to vector<10x32xf32>
    %252 = arith.addf %250, %251 : vector<10x32xf32>
    %cst_167 = arith.constant 0.000000e+00 : f32
    %253 = vector.broadcast %cst_167 : f32 to vector<10x32xf32>
    %254 = arith.maximumf %252, %253 : vector<10x32xf32>
    %255 = arith.truncf %254 : vector<10x32xf32> to vector<10x32xbf16>
    %c49 = arith.constant 49 : index
    %c0_168 = arith.constant 0 : index
    %256 = vector.load %arg11[%c49, %c0_168] : memref<144x32xbf16, #tpu.memory_space<vmem>>, vector<10x32xbf16>
    tpu.vector_store %arg11[%c49, %c0_168], %255 {strides = array<i32>} : memref<144x32xbf16, #tpu.memory_space<vmem>>, vector<10x32xbf16>,
    %c176 = arith.constant 176 : index
    %c0_169 = arith.constant 0 : index
    %257 = tpu.strided_load %arg9[%c176, %c0_169] {strides = array<i32: 2, 1>} : memref<840x32xf32, #tpu.memory_space<vmem>>, vector<10x32xf32>
    %258 = vector.broadcast %200 : vector<1x32xf32> to vector<10x32xf32>
    %259 = arith.addf %257, %258 : vector<10x32xf32>
    %cst_170 = arith.constant 0.000000e+00 : f32
    %260 = vector.broadcast %cst_170 : f32 to vector<10x32xf32>
    %261 = arith.maximumf %259, %260 : vector<10x32xf32>
    %262 = arith.truncf %261 : vector<10x32xf32> to vector<10x32xbf16>
    %c121 = arith.constant 121 : index
    %c0_171 = arith.constant 0 : index
    %263 = vector.load %arg11[%c121, %c0_171] : memref<144x32xbf16, #tpu.memory_space<vmem>>, vector<10x32xbf16>
    tpu.vector_store %arg11[%c121, %c0_171], %262 {strides = array<i32>} : memref<144x32xbf16, #tpu.memory_space<vmem>>, vector<10x32xbf16>,
    %c198 = arith.constant 198 : index
    %c0_172 = arith.constant 0 : index
    %264 = tpu.strided_load %arg9[%c198, %c0_172] {strides = array<i32: 2, 1>} : memref<840x32xf32, #tpu.memory_space<vmem>>, vector<10x32xf32>
    %265 = vector.broadcast %200 : vector<1x32xf32> to vector<10x32xf32>
    %266 = arith.addf %264, %265 : vector<10x32xf32>
    %cst_173 = arith.constant 0.000000e+00 : f32
    %267 = vector.broadcast %cst_173 : f32 to vector<10x32xf32>
    %268 = arith.maximumf %266, %267 : vector<10x32xf32>
    %269 = arith.truncf %268 : vector<10x32xf32> to vector<10x32xbf16>
    %c61 = arith.constant 61 : index
    %c0_174 = arith.constant 0 : index
    %270 = vector.load %arg11[%c61, %c0_174] : memref<144x32xbf16, #tpu.memory_space<vmem>>, vector<10x32xbf16>
    tpu.vector_store %arg11[%c61, %c0_174], %269 {strides = array<i32>} : memref<144x32xbf16, #tpu.memory_space<vmem>>, vector<10x32xbf16>,
    %c0_175 = arith.constant 0 : index
    %c0_176 = arith.constant 0 : index
    %271 = vector.load %arg11[%c0_175, %c0_176] : memref<144x32xbf16, #tpu.memory_space<vmem>>, vector<60x32xbf16>
    %c1_177 = arith.constant 1 : index
    %c0_178 = arith.constant 0 : index
    %c0_179 = arith.constant 0 : index
    %c0_180 = arith.constant 0 : index
    %272 = vector.load %arg4[%c1_177, %c0_178, %c0_179, %c0_180] : memref<3x3x32x96xbf16, #tpu.memory_space<vmem>>, vector<1x1x32x96xbf16>
    %273 = vector.shape_cast %272 : vector<1x1x32x96xbf16> to vector<32x96xbf16>
    %cst_181 = arith.constant dense<0.000000e+00> : vector<60x96xf32>
    %274 = tpu.matmul %271, %273, %cst_181 {dimension_numbers = #tpu.dot_dimension_numbers<[1], [0], [0], [1], [0, 0, 1, 1], [], []>} : vector<60x32xbf16>, vector<32x96xbf16>, vector<60x96xf32> -> vector<60x96xf32>
    %c0_182 = arith.constant 0 : index
    %c0_183 = arith.constant 0 : index
    %275 = vector.load %arg8[%c0_182, %c0_183] : memref<840x96xf32, #tpu.memory_space<vmem>>, vector<60x96xf32>
    tpu.vector_store %arg8[%c0_182, %c0_183], %274 {strides = array<i32>} : memref<840x96xf32, #tpu.memory_space<vmem>>, vector<60x96xf32>,
    %c72 = arith.constant 72 : index
    %c0_184 = arith.constant 0 : index
    %276 = vector.load %arg11[%c72, %c0_184] : memref<144x32xbf16, #tpu.memory_space<vmem>>, vector<60x32xbf16>
    %c1_185 = arith.constant 1 : index
    %c1_186 = arith.constant 1 : index
    %c0_187 = arith.constant 0 : index
    %c0_188 = arith.constant 0 : index
    %277 = vector.load %arg4[%c1_185, %c1_186, %c0_187, %c0_188] : memref<3x3x32x96xbf16, #tpu.memory_space<vmem>>, vector<1x1x32x96xbf16>
    %278 = vector.shape_cast %277 : vector<1x1x32x96xbf16> to vector<32x96xbf16>
    %cst_189 = arith.constant dense<0.000000e+00> : vector<60x96xf32>
    %279 = tpu.matmul %276, %278, %cst_189 {dimension_numbers = #tpu.dot_dimension_numbers<[1], [0], [0], [1], [0, 0, 1, 1], [], []>} : vector<60x32xbf16>, vector<32x96xbf16>, vector<60x96xf32> -> vector<60x96xf32>
    %c0_190 = arith.constant 0 : index
    %c0_191 = arith.constant 0 : index
    %280 = vector.load %arg8[%c0_190, %c0_191] : memref<840x96xf32, #tpu.memory_space<vmem>>, vector<60x96xf32>
    %281 = arith.addf %280, %279 : vector<60x96xf32>
    %c0_192 = arith.constant 0 : index
    %c0_193 = arith.constant 0 : index
    %282 = vector.load %arg8[%c0_192, %c0_193] : memref<840x96xf32, #tpu.memory_space<vmem>>, vector<60x96xf32>
    tpu.vector_store %arg8[%c0_192, %c0_193], %281 {strides = array<i32>} : memref<840x96xf32, #tpu.memory_space<vmem>>, vector<60x96xf32>,
    %c12 = arith.constant 12 : index
    %c0_194 = arith.constant 0 : index
    %283 = vector.load %arg11[%c12, %c0_194] : memref<144x32xbf16, #tpu.memory_space<vmem>>, vector<60x32xbf16>
    %c1_195 = arith.constant 1 : index
    %c2_196 = arith.constant 2 : index
    %c0_197 = arith.constant 0 : index
    %c0_198 = arith.constant 0 : index
    %284 = vector.load %arg4[%c1_195, %c2_196, %c0_197, %c0_198] : memref<3x3x32x96xbf16, #tpu.memory_space<vmem>>, vector<1x1x32x96xbf16>
    %285 = vector.shape_cast %284 : vector<1x1x32x96xbf16> to vector<32x96xbf16>
    %cst_199 = arith.constant dense<0.000000e+00> : vector<60x96xf32>
    %286 = tpu.matmul %283, %285, %cst_199 {dimension_numbers = #tpu.dot_dimension_numbers<[1], [0], [0], [1], [0, 0, 1, 1], [], []>} : vector<60x32xbf16>, vector<32x96xbf16>, vector<60x96xf32> -> vector<60x96xf32>
    %c0_200 = arith.constant 0 : index
    %c0_201 = arith.constant 0 : index
    %287 = vector.load %arg8[%c0_200, %c0_201] : memref<840x96xf32, #tpu.memory_space<vmem>>, vector<60x96xf32>
    %288 = arith.addf %287, %286 : vector<60x96xf32>
    %c0_202 = arith.constant 0 : index
    %c0_203 = arith.constant 0 : index
    %289 = vector.load %arg8[%c0_202, %c0_203] : memref<840x96xf32, #tpu.memory_space<vmem>>, vector<60x96xf32>
    tpu.vector_store %arg8[%c0_202, %c0_203], %288 {strides = array<i32>} : memref<840x96xf32, #tpu.memory_space<vmem>>, vector<60x96xf32>,
    %c0_204 = arith.constant 0 : index
    %c0_205 = arith.constant 0 : index
    %290 = vector.load %arg8[%c0_204, %c0_205] : memref<840x96xf32, #tpu.memory_space<vmem>>, vector<58x32xf32>
    %c1_206 = arith.constant 1 : index
    %c32_207 = arith.constant 32 : index
    %291 = vector.load %arg8[%c1_206, %c32_207] : memref<840x96xf32, #tpu.memory_space<vmem>>, vector<58x32xf32>
    %292 = arith.addf %290, %291 : vector<58x32xf32>
    %c2_208 = arith.constant 2 : index
    %c64_209 = arith.constant 64 : index
    %293 = vector.load %arg8[%c2_208, %c64_209] : memref<840x96xf32, #tpu.memory_space<vmem>>, vector<58x32xf32>
    %294 = arith.addf %292, %293 : vector<58x32xf32>
    %c0_210 = arith.constant 0 : index
    %c0_211 = arith.constant 0 : index
    %295 = vector.load %arg9[%c0_210, %c0_211] : memref<840x32xf32, #tpu.memory_space<vmem>>, vector<58x32xf32>
    tpu.vector_store %arg9[%c0_210, %c0_211], %294 {strides = array<i32>} : memref<840x32xf32, #tpu.memory_space<vmem>>, vector<58x32xf32>,
    %c2_212 = arith.constant 2 : index
    %c0_213 = arith.constant 0 : index
    %296 = vector.load %arg6[%c2_212, %c0_213] : memref<8x128xf32, #tpu.memory_space<vmem>>, vector<1x32xf32>
    %c0_214 = arith.constant 0 : index
    %c0_215 = arith.constant 0 : index
    %297 = tpu.strided_load %arg9[%c0_214, %c0_215] {strides = array<i32: 2, 1>} : memref<840x32xf32, #tpu.memory_space<vmem>>, vector<5x32xf32>
    %298 = vector.broadcast %296 : vector<1x32xf32> to vector<5x32xf32>
    %299 = arith.addf %297, %298 : vector<5x32xf32>
    %cst_216 = arith.constant 0.000000e+00 : f32
    %300 = vector.broadcast %cst_216 : f32 to vector<5x32xf32>
    %301 = arith.maximumf %299, %300 : vector<5x32xf32>
    %302 = arith.truncf %301 : vector<5x32xf32> to vector<5x32xbf16>
    %c29 = arith.constant 29 : index
    %c0_217 = arith.constant 0 : index
    %303 = vector.load %arg12[%c29, %c0_217] : memref<49x32xbf16, #tpu.memory_space<vmem>>, vector<5x32xbf16>
    tpu.vector_store %arg12[%c29, %c0_217], %302 {strides = array<i32>} : memref<49x32xbf16, #tpu.memory_space<vmem>>, vector<5x32xbf16>,
    %c12_218 = arith.constant 12 : index
    %c0_219 = arith.constant 0 : index
    %304 = tpu.strided_load %arg9[%c12_218, %c0_219] {strides = array<i32: 2, 1>} : memref<840x32xf32, #tpu.memory_space<vmem>>, vector<5x32xf32>
    %305 = vector.broadcast %296 : vector<1x32xf32> to vector<5x32xf32>
    %306 = arith.addf %304, %305 : vector<5x32xf32>
    %cst_220 = arith.constant 0.000000e+00 : f32
    %307 = vector.broadcast %cst_220 : f32 to vector<5x32xf32>
    %308 = arith.maximumf %306, %307 : vector<5x32xf32>
    %309 = arith.truncf %308 : vector<5x32xf32> to vector<5x32xbf16>
    %c8 = arith.constant 8 : index
    %c0_221 = arith.constant 0 : index
    %310 = vector.load %arg12[%c8, %c0_221] : memref<49x32xbf16, #tpu.memory_space<vmem>>, vector<5x32xbf16>
    tpu.vector_store %arg12[%c8, %c0_221], %309 {strides = array<i32>} : memref<49x32xbf16, #tpu.memory_space<vmem>>, vector<5x32xbf16>,
    %c24 = arith.constant 24 : index
    %c0_222 = arith.constant 0 : index
    %311 = tpu.strided_load %arg9[%c24, %c0_222] {strides = array<i32: 2, 1>} : memref<840x32xf32, #tpu.memory_space<vmem>>, vector<5x32xf32>
    %312 = vector.broadcast %296 : vector<1x32xf32> to vector<5x32xf32>
    %313 = arith.addf %311, %312 : vector<5x32xf32>
    %cst_223 = arith.constant 0.000000e+00 : f32
    %314 = vector.broadcast %cst_223 : f32 to vector<5x32xf32>
    %315 = arith.maximumf %313, %314 : vector<5x32xf32>
    %316 = arith.truncf %315 : vector<5x32xf32> to vector<5x32xbf16>
    %c36 = arith.constant 36 : index
    %c0_224 = arith.constant 0 : index
    %317 = vector.load %arg12[%c36, %c0_224] : memref<49x32xbf16, #tpu.memory_space<vmem>>, vector<5x32xbf16>
    tpu.vector_store %arg12[%c36, %c0_224], %316 {strides = array<i32>} : memref<49x32xbf16, #tpu.memory_space<vmem>>, vector<5x32xbf16>,
    %c36_225 = arith.constant 36 : index
    %c0_226 = arith.constant 0 : index
    %318 = tpu.strided_load %arg9[%c36_225, %c0_226] {strides = array<i32: 2, 1>} : memref<840x32xf32, #tpu.memory_space<vmem>>, vector<5x32xf32>
    %319 = vector.broadcast %296 : vector<1x32xf32> to vector<5x32xf32>
    %320 = arith.addf %318, %319 : vector<5x32xf32>
    %cst_227 = arith.constant 0.000000e+00 : f32
    %321 = vector.broadcast %cst_227 : f32 to vector<5x32xf32>
    %322 = arith.maximumf %320, %321 : vector<5x32xf32>
    %323 = arith.truncf %322 : vector<5x32xf32> to vector<5x32xbf16>
    %c15 = arith.constant 15 : index
    %c0_228 = arith.constant 0 : index
    %324 = vector.load %arg12[%c15, %c0_228] : memref<49x32xbf16, #tpu.memory_space<vmem>>, vector<5x32xbf16>
    tpu.vector_store %arg12[%c15, %c0_228], %323 {strides = array<i32>} : memref<49x32xbf16, #tpu.memory_space<vmem>>, vector<5x32xbf16>,
    %c48 = arith.constant 48 : index
    %c0_229 = arith.constant 0 : index
    %325 = tpu.strided_load %arg9[%c48, %c0_229] {strides = array<i32: 2, 1>} : memref<840x32xf32, #tpu.memory_space<vmem>>, vector<5x32xf32>
    %326 = vector.broadcast %296 : vector<1x32xf32> to vector<5x32xf32>
    %327 = arith.addf %325, %326 : vector<5x32xf32>
    %cst_230 = arith.constant 0.000000e+00 : f32
    %328 = vector.broadcast %cst_230 : f32 to vector<5x32xf32>
    %329 = arith.maximumf %327, %328 : vector<5x32xf32>
    %330 = arith.truncf %329 : vector<5x32xf32> to vector<5x32xbf16>
    %c43 = arith.constant 43 : index
    %c0_231 = arith.constant 0 : index
    %331 = vector.load %arg12[%c43, %c0_231] : memref<49x32xbf16, #tpu.memory_space<vmem>>, vector<5x32xbf16>
    tpu.vector_store %arg12[%c43, %c0_231], %330 {strides = array<i32>} : memref<49x32xbf16, #tpu.memory_space<vmem>>, vector<5x32xbf16>,
    %c0_232 = arith.constant 0 : index
    %c0_233 = arith.constant 0 : index
    %332 = vector.load %arg12[%c0_232, %c0_233] : memref<49x32xbf16, #tpu.memory_space<vmem>>, vector<21x32xbf16>
    %c2_234 = arith.constant 2 : index
    %c0_235 = arith.constant 0 : index
    %c0_236 = arith.constant 0 : index
    %c0_237 = arith.constant 0 : index
    %333 = vector.load %arg4[%c2_234, %c0_235, %c0_236, %c0_237] : memref<3x3x32x96xbf16, #tpu.memory_space<vmem>>, vector<1x1x32x96xbf16>
    %334 = vector.shape_cast %333 : vector<1x1x32x96xbf16> to vector<32x96xbf16>
    %cst_238 = arith.constant dense<0.000000e+00> : vector<21x96xf32>
    %335 = tpu.matmul %332, %334, %cst_238 {dimension_numbers = #tpu.dot_dimension_numbers<[1], [0], [0], [1], [0, 0, 1, 1], [], []>} : vector<21x32xbf16>, vector<32x96xbf16>, vector<21x96xf32> -> vector<21x96xf32>
    %c0_239 = arith.constant 0 : index
    %c0_240 = arith.constant 0 : index
    %336 = vector.load %arg8[%c0_239, %c0_240] : memref<840x96xf32, #tpu.memory_space<vmem>>, vector<21x96xf32>
    tpu.vector_store %arg8[%c0_239, %c0_240], %335 {strides = array<i32>} : memref<840x96xf32, #tpu.memory_space<vmem>>, vector<21x96xf32>,
    %c28 = arith.constant 28 : index
    %c0_241 = arith.constant 0 : index
    %337 = vector.load %arg12[%c28, %c0_241] : memref<49x32xbf16, #tpu.memory_space<vmem>>, vector<21x32xbf16>
    %c2_242 = arith.constant 2 : index
    %c1_243 = arith.constant 1 : index
    %c0_244 = arith.constant 0 : index
    %c0_245 = arith.constant 0 : index
    %338 = vector.load %arg4[%c2_242, %c1_243, %c0_244, %c0_245] : memref<3x3x32x96xbf16, #tpu.memory_space<vmem>>, vector<1x1x32x96xbf16>
    %339 = vector.shape_cast %338 : vector<1x1x32x96xbf16> to vector<32x96xbf16>
    %cst_246 = arith.constant dense<0.000000e+00> : vector<21x96xf32>
    %340 = tpu.matmul %337, %339, %cst_246 {dimension_numbers = #tpu.dot_dimension_numbers<[1], [0], [0], [1], [0, 0, 1, 1], [], []>} : vector<21x32xbf16>, vector<32x96xbf16>, vector<21x96xf32> -> vector<21x96xf32>
    %c0_247 = arith.constant 0 : index
    %c0_248 = arith.constant 0 : index
    %341 = vector.load %arg8[%c0_247, %c0_248] : memref<840x96xf32, #tpu.memory_space<vmem>>, vector<21x96xf32>
    %342 = arith.addf %341, %340 : vector<21x96xf32>
    %c0_249 = arith.constant 0 : index
    %c0_250 = arith.constant 0 : index
    %343 = vector.load %arg8[%c0_249, %c0_250] : memref<840x96xf32, #tpu.memory_space<vmem>>, vector<21x96xf32>
    tpu.vector_store %arg8[%c0_249, %c0_250], %342 {strides = array<i32>} : memref<840x96xf32, #tpu.memory_space<vmem>>, vector<21x96xf32>,
    %c7 = arith.constant 7 : index
    %c0_251 = arith.constant 0 : index
    %344 = vector.load %arg12[%c7, %c0_251] : memref<49x32xbf16, #tpu.memory_space<vmem>>, vector<21x32xbf16>
    %c2_252 = arith.constant 2 : index
    %c2_253 = arith.constant 2 : index
    %c0_254 = arith.constant 0 : index
    %c0_255 = arith.constant 0 : index
    %345 = vector.load %arg4[%c2_252, %c2_253, %c0_254, %c0_255] : memref<3x3x32x96xbf16, #tpu.memory_space<vmem>>, vector<1x1x32x96xbf16>
    %346 = vector.shape_cast %345 : vector<1x1x32x96xbf16> to vector<32x96xbf16>
    %cst_256 = arith.constant dense<0.000000e+00> : vector<21x96xf32>
    %347 = tpu.matmul %344, %346, %cst_256 {dimension_numbers = #tpu.dot_dimension_numbers<[1], [0], [0], [1], [0, 0, 1, 1], [], []>} : vector<21x32xbf16>, vector<32x96xbf16>, vector<21x96xf32> -> vector<21x96xf32>
    %c0_257 = arith.constant 0 : index
    %c0_258 = arith.constant 0 : index
    %348 = vector.load %arg8[%c0_257, %c0_258] : memref<840x96xf32, #tpu.memory_space<vmem>>, vector<21x96xf32>
    %349 = arith.addf %348, %347 : vector<21x96xf32>
    %c0_259 = arith.constant 0 : index
    %c0_260 = arith.constant 0 : index
    %350 = vector.load %arg8[%c0_259, %c0_260] : memref<840x96xf32, #tpu.memory_space<vmem>>, vector<21x96xf32>
    tpu.vector_store %arg8[%c0_259, %c0_260], %349 {strides = array<i32>} : memref<840x96xf32, #tpu.memory_space<vmem>>, vector<21x96xf32>,
    %c0_261 = arith.constant 0 : index
    %c0_262 = arith.constant 0 : index
    %351 = vector.load %arg8[%c0_261, %c0_262] : memref<840x96xf32, #tpu.memory_space<vmem>>, vector<19x32xf32>
    %c1_263 = arith.constant 1 : index
    %c32_264 = arith.constant 32 : index
    %352 = vector.load %arg8[%c1_263, %c32_264] : memref<840x96xf32, #tpu.memory_space<vmem>>, vector<19x32xf32>
    %353 = arith.addf %351, %352 : vector<19x32xf32>
    %c2_265 = arith.constant 2 : index
    %c64_266 = arith.constant 64 : index
    %354 = vector.load %arg8[%c2_265, %c64_266] : memref<840x96xf32, #tpu.memory_space<vmem>>, vector<19x32xf32>
    %355 = arith.addf %353, %354 : vector<19x32xf32>
    %c0_267 = arith.constant 0 : index
    %c0_268 = arith.constant 0 : index
    %356 = vector.load %arg9[%c0_267, %c0_268] : memref<840x32xf32, #tpu.memory_space<vmem>>, vector<19x32xf32>
    tpu.vector_store %arg9[%c0_267, %c0_268], %355 {strides = array<i32>} : memref<840x32xf32, #tpu.memory_space<vmem>>, vector<19x32xf32>,
    %c0_269 = arith.constant 0 : index
    %c0_270 = arith.constant 0 : index
    %357 = vector.load %arg9[%c0_269, %c0_270] : memref<840x32xf32, #tpu.memory_space<vmem>>, vector<19x32xf32>
    %c3 = arith.constant 3 : index
    %c0_271 = arith.constant 0 : index
    %358 = vector.load %arg6[%c3, %c0_271] : memref<8x128xf32, #tpu.memory_space<vmem>>, vector<1x32xf32>
    %359 = vector.broadcast %358 : vector<1x32xf32> to vector<19x32xf32>
    %360 = arith.addf %357, %359 : vector<19x32xf32>
    %cst_272 = arith.constant 0.000000e+00 : f32
    %361 = vector.broadcast %cst_272 : f32 to vector<19x32xf32>
    %362 = arith.maximumf %360, %361 : vector<19x32xf32>
    %363 = arith.truncf %362 : vector<19x32xf32> to vector<19x32xbf16>
    %c0_273 = arith.constant 0 : index
    %c0_274 = arith.constant 0 : index
    %364 = vector.load %arg5[%c0_273, %c0_274] : memref<32x1408xbf16, #tpu.memory_space<vmem>>, vector<32x1152xbf16>
    %cst_275 = arith.constant dense<0.000000e+00> : vector<19x1152xf32>
    %365 = tpu.matmul %363, %364, %cst_275 {dimension_numbers = #tpu.dot_dimension_numbers<[1], [0], [0], [1], [0, 0, 1, 1], [], []>} : vector<19x32xbf16>, vector<32x1152xbf16>, vector<19x1152xf32> -> vector<19x1152xf32>
    %c4 = arith.constant 4 : index
    %c0_276 = arith.constant 0 : index
    %366 = vector.load %arg6[%c4, %c0_276] : memref<8x128xf32, #tpu.memory_space<vmem>>, vector<1x128xf32>
    %367 = vector.extract_strided_slice %365 {offsets = [0, 0], sizes = [1, 128], strides = [1, 1]} : vector<19x1152xf32> to vector<1x128xf32>
    %368 = arith.addf %366, %367 : vector<1x128xf32>
    %369 = vector.extract_strided_slice %365 {offsets = [2, 128], sizes = [1, 128], strides = [1, 1]} : vector<19x1152xf32> to vector<1x128xf32>
    %370 = arith.addf %368, %369 : vector<1x128xf32>
    %371 = vector.extract_strided_slice %365 {offsets = [4, 256], sizes = [1, 128], strides = [1, 1]} : vector<19x1152xf32> to vector<1x128xf32>
    %372 = arith.addf %370, %371 : vector<1x128xf32>
    %373 = vector.extract_strided_slice %365 {offsets = [7, 384], sizes = [1, 128], strides = [1, 1]} : vector<19x1152xf32> to vector<1x128xf32>
    %374 = arith.addf %372, %373 : vector<1x128xf32>
    %375 = vector.extract_strided_slice %365 {offsets = [9, 512], sizes = [1, 128], strides = [1, 1]} : vector<19x1152xf32> to vector<1x128xf32>
    %376 = arith.addf %374, %375 : vector<1x128xf32>
    %377 = vector.extract_strided_slice %365 {offsets = [11, 640], sizes = [1, 128], strides = [1, 1]} : vector<19x1152xf32> to vector<1x128xf32>
    %378 = arith.addf %376, %377 : vector<1x128xf32>
    %379 = vector.extract_strided_slice %365 {offsets = [14, 768], sizes = [1, 128], strides = [1, 1]} : vector<19x1152xf32> to vector<1x128xf32>
    %380 = arith.addf %378, %379 : vector<1x128xf32>
    %381 = vector.extract_strided_slice %365 {offsets = [16, 896], sizes = [1, 128], strides = [1, 1]} : vector<19x1152xf32> to vector<1x128xf32>
    %382 = arith.addf %380, %381 : vector<1x128xf32>
    %383 = vector.extract_strided_slice %365 {offsets = [18, 1024], sizes = [1, 128], strides = [1, 1]} : vector<19x1152xf32> to vector<1x128xf32>
    %384 = arith.addf %382, %383 : vector<1x128xf32>
    %c0_277 = arith.constant 0 : index
    %c0_278 = arith.constant 0 : index
    %c0_279 = arith.constant 0 : index
    %385 = vector.load %arg2[%c0_277, %c0_278, %c0_279] : memref<1x1x64xf32, #tpu.memory_space<vmem>>, vector<1x1x32xf32>
    %386 = vector.shape_cast %385 : vector<1x1x32xf32> to vector<1x32xf32>
    %c0_280 = arith.constant 0 : index
    %c0_281 = arith.constant 0 : index
    %c32_282 = arith.constant 32 : index
    %387 = vector.load %arg2[%c0_280, %c0_281, %c32_282] : memref<1x1x64xf32, #tpu.memory_space<vmem>>, vector<1x1x32xf32>
    %388 = vector.shape_cast %387 : vector<1x1x32xf32> to vector<1x32xf32>
    %389 = arith.truncf %386 : vector<1x32xf32> to vector<1x32xbf16>
    %c0_283 = arith.constant 0 : index
    %c1152 = arith.constant 1152 : index
    %390 = vector.load %arg5[%c0_283, %c1152] : memref<32x1408xbf16, #tpu.memory_space<vmem>>, vector<32x128xbf16>
    %cst_284 = arith.constant dense<0.000000e+00> : vector<1x128xf32>
    %391 = tpu.matmul %389, %390, %cst_284 {dimension_numbers = #tpu.dot_dimension_numbers<[1], [0], [0], [1], [0, 0, 1, 1], [], []>} : vector<1x32xbf16>, vector<32x128xbf16>, vector<1x128xf32> -> vector<1x128xf32>
    %392 = arith.addf %384, %391 : vector<1x128xf32>
    %393 = vector.extract_strided_slice %392 {offsets = [0, 0], sizes = [1, 32], strides = [1, 1]} : vector<1x128xf32> to vector<1x32xf32>
    %394 = arith.negf %393 : vector<1x32xf32>
    %395 = math.exp %394 : vector<1x32xf32>
    %cst_285 = arith.constant 1.000000e+00 : f32
    %396 = vector.broadcast %cst_285 : f32 to vector<1x32xf32>
    %397 = arith.addf %396, %395 : vector<1x32xf32>
    %398 = arith.divf %396, %397 : vector<1x32xf32>
    %399 = vector.extract_strided_slice %392 {offsets = [0, 32], sizes = [1, 32], strides = [1, 1]} : vector<1x128xf32> to vector<1x32xf32>
    %400 = arith.negf %399 : vector<1x32xf32>
    %401 = math.exp %400 : vector<1x32xf32>
    %cst_286 = arith.constant 1.000000e+00 : f32
    %402 = vector.broadcast %cst_286 : f32 to vector<1x32xf32>
    %403 = arith.addf %402, %401 : vector<1x32xf32>
    %404 = arith.divf %402, %403 : vector<1x32xf32>
    %405 = vector.extract_strided_slice %392 {offsets = [0, 64], sizes = [1, 32], strides = [1, 1]} : vector<1x128xf32> to vector<1x32xf32>
    %406 = math.tanh %405 : vector<1x32xf32>
    %407 = vector.extract_strided_slice %392 {offsets = [0, 96], sizes = [1, 32], strides = [1, 1]} : vector<1x128xf32> to vector<1x32xf32>
    %408 = arith.negf %407 : vector<1x32xf32>
    %409 = math.exp %408 : vector<1x32xf32>
    %cst_287 = arith.constant 1.000000e+00 : f32
    %410 = vector.broadcast %cst_287 : f32 to vector<1x32xf32>
    %411 = arith.addf %410, %409 : vector<1x32xf32>
    %412 = arith.divf %410, %411 : vector<1x32xf32>
    %413 = arith.mulf %404, %388 : vector<1x32xf32>
    %414 = arith.mulf %398, %406 : vector<1x32xf32>
    %415 = arith.addf %413, %414 : vector<1x32xf32>
    %416 = math.tanh %415 : vector<1x32xf32>
    %417 = arith.mulf %412, %416 : vector<1x32xf32>
    %418 = arith.truncf %417 : vector<1x32xf32> to vector<1x32xbf16>
    %c0_288 = arith.constant 0 : index
    %c1280 = arith.constant 1280 : index
    %419 = vector.load %arg5[%c0_288, %c1280] : memref<32x1408xbf16, #tpu.memory_space<vmem>>, vector<32x5xbf16>
    %cst_289 = arith.constant dense<0.000000e+00> : vector<1x5xf32>
    %420 = tpu.matmul %418, %419, %cst_289 {dimension_numbers = #tpu.dot_dimension_numbers<[1], [0], [0], [1], [0, 0, 1, 1], [], []>} : vector<1x32xbf16>, vector<32x5xbf16>, vector<1x5xf32> -> vector<1x5xf32>
    %c5 = arith.constant 5 : index
    %c0_290 = arith.constant 0 : index
    %421 = vector.load %arg6[%c5, %c0_290] : memref<8x128xf32, #tpu.memory_space<vmem>>, vector<1x5xf32>
    %422 = arith.addf %420, %421 : vector<1x5xf32>
    %423 = vector.extract_strided_slice %422 {offsets = [0, 0], sizes = [1, 4], strides = [1, 1]} : vector<1x5xf32> to vector<1x4xf32>
    %cst_291 = arith.constant dense<0xFF800000> : vector<1xf32>
    %424 = vector.multi_reduction <maximumf>, %423, %cst_291 [1] : vector<1x4xf32> to vector<1xf32>
    %425 = vector.shape_cast %424 : vector<1xf32> to vector<1x1xf32>
    %426 = vector.broadcast %425 : vector<1x1xf32> to vector<1x4xf32>
    %427 = arith.subf %423, %426 : vector<1x4xf32>
    %428 = math.exp %427 : vector<1x4xf32>
    %cst_292 = arith.constant dense<0.000000e+00> : vector<1xf32>
    %429 = vector.multi_reduction <add>, %428, %cst_292 [1] : vector<1x4xf32> to vector<1xf32>
    %430 = vector.shape_cast %429 : vector<1xf32> to vector<1x1xf32>
    %431 = vector.broadcast %430 : vector<1x1xf32> to vector<1x4xf32>
    %432 = arith.divf %428, %431 : vector<1x4xf32>
    %cst_293 = arith.constant 0.000000e+00 : f32
    %433 = vector.broadcast %cst_293 : f32 to vector<1x128xf32>
    %c0_294 = arith.constant 0 : index
    %c0_295 = arith.constant 0 : index
    %c0_296 = arith.constant 0 : index
    %434 = vector.load %arg7[%c0_294, %c0_295, %c0_296] : memref<1x1x128xf32, #tpu.memory_space<vmem>>, vector<1x1x128xf32>
    %435 = vector.shape_cast %434 : vector<1x1x128xf32> to vector<1x128xf32>
    %436 = vector.shape_cast %433 : vector<1x128xf32> to vector<1x1x128xf32>
    tpu.vector_store %arg7[%c0_294, %c0_295, %c0_296], %436 {strides = array<i32>} : memref<1x1x128xf32, #tpu.memory_space<vmem>>, vector<1x1x128xf32>,
    %c0_297 = arith.constant 0 : index
    %c0_298 = arith.constant 0 : index
    %c0_299 = arith.constant 0 : index
    %437 = vector.load %arg7[%c0_297, %c0_298, %c0_299] : memref<1x1x128xf32, #tpu.memory_space<vmem>>, vector<1x1x4xf32>
    %438 = vector.shape_cast %437 : vector<1x1x4xf32> to vector<1x4xf32>
    %439 = vector.shape_cast %432 : vector<1x4xf32> to vector<1x1x4xf32>
    tpu.vector_store %arg7[%c0_297, %c0_298, %c0_299], %439 {strides = array<i32>} : memref<1x1x128xf32, #tpu.memory_space<vmem>>, vector<1x1x4xf32>,
    %440 = vector.extract_strided_slice %422 {offsets = [0, 4], sizes = [1, 1], strides = [1, 1]} : vector<1x5xf32> to vector<1x1xf32>
    %c0_300 = arith.constant 0 : index
    %c0_301 = arith.constant 0 : index
    %c4_302 = arith.constant 4 : index
    %441 = vector.load %arg7[%c0_300, %c0_301, %c4_302] : memref<1x1x128xf32, #tpu.memory_space<vmem>>, vector<1x1x1xf32>
    %442 = vector.shape_cast %441 : vector<1x1x1xf32> to vector<1x1xf32>
    %443 = vector.shape_cast %440 : vector<1x1xf32> to vector<1x1x1xf32>
    tpu.vector_store %arg7[%c0_300, %c0_301, %c4_302], %443 {strides = array<i32>} : memref<1x1x128xf32, #tpu.memory_space<vmem>>, vector<1x1x1xf32>,
    %c0_303 = arith.constant 0 : index
    %c0_304 = arith.constant 0 : index
    %c32_305 = arith.constant 32 : index
    %444 = vector.load %arg7[%c0_303, %c0_304, %c32_305] : memref<1x1x128xf32, #tpu.memory_space<vmem>>, vector<1x1x32xf32>
    %445 = vector.shape_cast %444 : vector<1x1x32xf32> to vector<1x32xf32>
    %446 = vector.shape_cast %417 : vector<1x32xf32> to vector<1x1x32xf32>
    tpu.vector_store %arg7[%c0_303, %c0_304, %c32_305], %446 {strides = array<i32>} : memref<1x1x128xf32, #tpu.memory_space<vmem>>, vector<1x1x32xf32>,
    %c0_306 = arith.constant 0 : index
    %c0_307 = arith.constant 0 : index
    %c64_308 = arith.constant 64 : index
    %447 = vector.load %arg7[%c0_306, %c0_307, %c64_308] : memref<1x1x128xf32, #tpu.memory_space<vmem>>, vector<1x1x32xf32>
    %448 = vector.shape_cast %447 : vector<1x1x32xf32> to vector<1x32xf32>
    %449 = vector.shape_cast %415 : vector<1x32xf32> to vector<1x1x32xf32>
    tpu.vector_store %arg7[%c0_306, %c0_307, %c64_308], %449 {strides = array<i32>} : memref<1x1x128xf32, #tpu.memory_space<vmem>>, vector<1x1x32xf32>,
    return
  }
  func.func @transform_0(%arg0: i32) -> (i32, i32, i32) {
    %c0_i32 = arith.constant 0 : i32
    %c0_i32_0 = arith.constant 0 : i32
    %c0_i32_1 = arith.constant 0 : i32
    return %arg0, %c0_i32, %c0_i32_0 : i32, i32, i32
  }
  func.func @transform_1(%arg0: i32) -> (i32, i32, i32) {
    %c0_i32 = arith.constant 0 : i32
    %c0_i32_0 = arith.constant 0 : i32
    %c0_i32_1 = arith.constant 0 : i32
    return %arg0, %c0_i32, %c0_i32_0 : i32, i32, i32
  }
  func.func @transform_2(%arg0: i32) -> (i32, i32, i32) {
    %c0_i32 = arith.constant 0 : i32
    %c0_i32_0 = arith.constant 0 : i32
    %c0_i32_1 = arith.constant 0 : i32
    %c0_i32_2 = arith.constant 0 : i32
    return %c0_i32, %c0_i32_0, %c0_i32_1 : i32, i32, i32
  }
  func.func @transform_3(%arg0: i32) -> (i32, i32, i32, i32) {
    %c0_i32 = arith.constant 0 : i32
    %c0_i32_0 = arith.constant 0 : i32
    %c0_i32_1 = arith.constant 0 : i32
    %c0_i32_2 = arith.constant 0 : i32
    %c0_i32_3 = arith.constant 0 : i32
    return %c0_i32, %c0_i32_0, %c0_i32_1, %c0_i32_2 : i32, i32, i32, i32
  }
  func.func @transform_4(%arg0: i32) -> (i32, i32) {
    %c0_i32 = arith.constant 0 : i32
    %c0_i32_0 = arith.constant 0 : i32
    %c0_i32_1 = arith.constant 0 : i32
    return %c0_i32, %c0_i32_0 : i32, i32
  }
  func.func @transform_5(%arg0: i32) -> (i32, i32) {
    %c0_i32 = arith.constant 0 : i32
    %c0_i32_0 = arith.constant 0 : i32
    %c0_i32_1 = arith.constant 0 : i32
    return %c0_i32, %c0_i32_0 : i32, i32
  }
  func.func @transform_6(%arg0: i32) -> (i32, i32, i32) {
    %c0_i32 = arith.constant 0 : i32
    %c0_i32_0 = arith.constant 0 : i32
    %c0_i32_1 = arith.constant 0 : i32
    return %arg0, %c0_i32, %c0_i32_0 : i32, i32, i32
  }
}

</mosaic_0001>

<llo_original>
// kernel: a3c_cnn_forward.1
$region0: #{a3c_cnn_forward.1}
  #allocation0 [shape = 'u32[]', space=smem, size = 0x4, offset = 0x4, fixed_abs, tag = 'smem constant byte address 0x4 - core index']
  #allocation1 [shape = 'u32[144,128]{1,0:T(1,128)}', space=vmem, size = 0x12000, scoped, tag = 'internal scratch']
  #allocation2 [shape = 'f32[840,96]{1,0:T(8,128)}', space=vmem, size = 0x69000, scoped, tag = 'scratch operand']
  #allocation3 [shape = 'f32[840,32]{1,0:T(8,128)}', space=vmem, size = 0x69000, scoped, tag = 'scratch operand']
  #allocation4 [shape = 'bf16[484,32]{1,0:T(8,128)(2,1)}', space=vmem, size = 0x1e800, scoped, tag = 'scratch operand']
  #allocation5 [shape = 'bf16[144,32]{1,0:T(8,128)(2,1)}', space=vmem, size = 0x9000, scoped, tag = 'scratch operand']
  #allocation6 [shape = 'bf16[49,32]{1,0:T(8,128)(2,1)}', space=vmem, size = 0x3800, scoped, tag = 'scratch operand']
  %s0 = inlined_call_operand.vmem [shape: bf16[2,1764,4], index: 0, kind: input, shape index: {}]
  %s1 = inlined_call_operand.vmem [shape: f32[2,1,64], index: 1, kind: input, shape index: {}]
  %s2 = inlined_call_operand.vmem [shape: bf16[3,4,96], index: 2, kind: input, shape index: {}]
  %s3 = inlined_call_operand.vmem [shape: bf16[3,3,32,96], index: 3, kind: input, shape index: {}]
  %s4 = inlined_call_operand.vmem [shape: bf16[32,1408], index: 4, kind: input, shape index: {}]
  %s5 = inlined_call_operand.vmem [shape: f32[8,128], index: 5, kind: input, shape index: {}]
  %s6 = inlined_call_operand.vmem [shape: f32[2,1,128], index: 6, kind: output, shape index: {}]
  %s7 = sld [smem:[#allocation0]]
  $region57: #{a3c_cnn_forward.1} parent=0
    _
  %s9 = ssub.s32 1, %s7
  %s10 = scalar_select 0, %s9, %s7
  loop: start=0, step=1, limit=4
  $region2: #{a3c_cnn_forward.1} parent=0 // loop_pre_header
    _
  $region3: #{a3c_cnn_forward.1} parent=0 // loop_header
    %s12 = sphi 0, %s16
    %p13 = scmp.ge.s32.totalorder %s12, 4
    %s22 = sphi 0, %s24
    %s25 = sphi 0, %s22
    %s26 = sphi 0, %s25
    %s42 = sphi 0, %s26
    %s48 = sphi 0, %s50
    %s51 = sphi 0, %s48
    %s52 = sphi 0, %s51
    %s68 = sphi 0, %s52
    %s72 = sphi 0, %s72
    %s74 = sphi 0, %s72
    %s75 = sphi 0, %s74
    %s89 = sphi 0, %s75
    %s93 = sphi 0, %s93
    %s95 = sphi 0, %s93
    %s96 = sphi 0, %s95
    %s110 = sphi 0, %s96
    %s114 = sphi 0, %s114
    %s116 = sphi 0, %s114
    %s117 = sphi 0, %s116
    %s131 = sphi 0, %s117
    %s135 = sphi 0, %s135
    %s137 = sphi 0, %s135
    %s138 = sphi 0, %s137
    %s152 = sphi 0, %s138
    %s158 = sphi 0, %s160
    %s161 = sphi 0, %s158
    %s162 = sphi 0, %s161
    %s178 = sphi 0, %s162
  $region4: #{a3c_cnn_forward.1} parent=0 // loop_header_branch
    %15 = sbr.rel (%p13) target = $region8
  $region5: #{a3c_cnn_forward.1} parent=0 // loop_body
    %s17 = ssub.s32 %s12, 1
    %s18 = ssub.s32 %s12, 2
    %s19 = sadd.s32 %s12, 1
    %s20 = ssub.s32 %s12, %s19
    %p21 = scmp.eq.s32.totalorder %s20, 0
    %s23 = sadd.s32 %s22, 1
    %s24 = scalar_select %p21, %s22, %s23
    %p27 = pneg %p21
    %p28 = scmp.eq.s32.totalorder %s12, 1
    %p29 = por %p27, %p28
    %p30 = scmp.ne.s32.totalorder %s22, %s25
    %p31 = scmp.eq.s32.totalorder %s12, 0
    %p32 = por %p30, %p31
    %p33 = scmp.ne.s32.totalorder %s22, %s25
    %p34 = scmp.eq.s32.totalorder %s17, 1
    %p35 = por %p33, %p34
    %p36 = scmp.ne.s32.totalorder %s25, %s26
    %p37 = scmp.eq.s32.totalorder %s17, 0
    %p38 = por %p36, %p37
    %p39 = scmp.ne.s32.totalorder %s25, %s26
    %p40 = scmp.eq.s32.totalorder %s18, 1
    %p41 = por %p39, %p40
    %p43 = scmp.ne.s32.totalorder %s26, %s42
    %p44 = scmp.eq.s32.totalorder %s18, 0
    %p45 = por %p43, %p44
    %s46 = ssub.s32 %s12, %s19
    %p47 = scmp.eq.s32.totalorder %s46, 0
    %s49 = sadd.s32 %s48, 1
    %s50 = scalar_select %p47, %s48, %s49
    %p53 = pneg %p47
    %p54 = scmp.eq.s32.totalorder %s12, 1
    %p55 = por %p53, %p54
    %p56 = scmp.ne.s32.totalorder %s48, %s51
    %p57 = scmp.eq.s32.totalorder %s12, 0
    %p58 = por %p56, %p57
    %p59 = scmp.ne.s32.totalorder %s48, %s51
    %p60 = scmp.eq.s32.totalorder %s17, 1
    %p61 = por %p59, %p60
    %p62 = scmp.ne.s32.totalorder %s51, %s52
    %p63 = scmp.eq.s32.totalorder %s17, 0
    %p64 = por %p62, %p63
    %p65 = scmp.ne.s32.totalorder %s51, %s52
    %p66 = scmp.eq.s32.totalorder %s18, 1
    %p67 = por %p65, %p66
    %p69 = scmp.ne.s32.totalorder %s52, %s68
    %p70 = scmp.eq.s32.totalorder %s18, 0
    %p71 = por %p69, %p70
    %s73 = sadd.s32 %s72, 1
    %p76 = scmp.eq.s32.totalorder %s12, 1
    %p77 = scmp.ne.s32.totalorder %s72, %s74
    %p78 = scmp.eq.s32.totalorder %s12, 0
    %p79 = por %p77, %p78
    %p80 = scmp.ne.s32.totalorder %s72, %s74
    %p81 = scmp.eq.s32.totalorder %s17, 1
    %p82 = por %p80, %p81
    %p83 = scmp.ne.s32.totalorder %s74, %s75
    %p84 = scmp.eq.s32.totalorder %s17, 0
    %p85 = por %p83, %p84
    %p86 = scmp.ne.s32.totalorder %s74, %s75
    %p87 = scmp.eq.s32.totalorder %s18, 1
    %p88 = por %p86, %p87
    %p90 = scmp.ne.s32.totalorder %s75, %s89
    %p91 = scmp.eq.s32.totalorder %s18, 0
    %p92 = por %p90, %p91
    %s94 = sadd.s32 %s93, 1
    %p97 = scmp.eq.s32.totalorder %s12, 1
    %p98 = scmp.ne.s32.totalorder %s93, %s95
    %p99 = scmp.eq.s32.totalorder %s12, 0
    %p100 = por %p98, %p99
    %p101 = scmp.ne.s32.totalorder %s93, %s95
    %p102 = scmp.eq.s32.totalorder %s17, 1
    %p103 = por %p101, %p102
    %p104 = scmp.ne.s32.totalorder %s95, %s96
    %p105 = scmp.eq.s32.totalorder %s17, 0
    %p106 = por %p104, %p105
    %p107 = scmp.ne.s32.totalorder %s95, %s96
    %p108 = scmp.eq.s32.totalorder %s18, 1
    %p109 = por %p107, %p108
    %p111 = scmp.ne.s32.totalorder %s96, %s110
    %p112 = scmp.eq.s32.totalorder %s18, 0
    %p113 = por %p111, %p112
    %s115 = sadd.s32 %s114, 1
    %p118 = scmp.eq.s32.totalorder %s12, 1
    %p119 = scmp.ne.s32.totalorder %s114, %s116
    %p120 = scmp.eq.s32.totalorder %s12, 0
    %p121 = por %p119, %p120
    %p122 = scmp.ne.s32.totalorder %s114, %s116
    %p123 = scmp.eq.s32.totalorder %s17, 1
    %p124 = por %p122, %p123
    %p125 = scmp.ne.s32.totalorder %s116, %s117
    %p126 = scmp.eq.s32.totalorder %s17, 0
    %p127 = por %p125, %p126
    %p128 = scmp.ne.s32.totalorder %s116, %s117
    %p129 = scmp.eq.s32.totalorder %s18, 1
    %p130 = por %p128, %p129
    %p132 = scmp.ne.s32.totalorder %s117, %s131
    %p133 = scmp.eq.s32.totalorder %s18, 0
    %p134 = por %p132, %p133
    %s136 = sadd.s32 %s135, 1
    %p139 = scmp.eq.s32.totalorder %s12, 1
    %p140 = scmp.ne.s32.totalorder %s135, %s137
    %p141 = scmp.eq.s32.totalorder %s12, 0
    %p142 = por %p140, %p141
    %p143 = scmp.ne.s32.totalorder %s135, %s137
    %p144 = scmp.eq.s32.totalorder %s17, 1
    %p145 = por %p143, %p144
    %p146 = scmp.ne.s32.totalorder %s137, %s138
    %p147 = scmp.eq.s32.totalorder %s17, 0
    %p148 = por %p146, %p147
    %p149 = scmp.ne.s32.totalorder %s137, %s138
    %p150 = scmp.eq.s32.totalorder %s18, 1
    %p151 = por %p149, %p150
    %p153 = scmp.ne.s32.totalorder %s138, %s152
    %p154 = scmp.eq.s32.totalorder %s18, 0
    %p155 = por %p153, %p154
    %s156 = ssub.s32 %s12, %s19
    %p157 = scmp.eq.s32.totalorder %s156, 0
    %s159 = sadd.s32 %s158, 1
    %s160 = scalar_select %p157, %s158, %s159
    %p163 = pneg %p157
    %p164 = scmp.eq.s32.totalorder %s12, 1
    %p165 = por %p163, %p164
    %p166 = scmp.ne.s32.totalorder %s158, %s161
    %p167 = scmp.eq.s32.totalorder %s12, 0
    %p168 = por %p166, %p167
    %p169 = scmp.ne.s32.totalorder %s158, %s161
    %p170 = scmp.eq.s32.totalorder %s17, 1
    %p171 = por %p169, %p170
    %p172 = scmp.ne.s32.totalorder %s161, %s162
    %p173 = scmp.eq.s32.totalorder %s17, 0
    %p174 = por %p172, %p173
    %p175 = scmp.ne.s32.totalorder %s161, %s162
    %p176 = scmp.eq.s32.totalorder %s18, 1
    %p177 = por %p175, %p176
    %p179 = scmp.ne.s32.totalorder %s162, %s178
    %p180 = scmp.eq.s32.totalorder %s18, 0
    %p181 = por %p179, %p180
    %p182 = scmp.le.s32.totalorder 1, %s12
    %p183 = scmp.lt.s32.totalorder %s12, 3
    %p184 = pnand %p182, %p183
    %p185 = pneg %p184
    // Predicated region
    $region9: #{a3c_cnn_forward.1} parent=5 // pred_check
      _
    $region10: #{a3c_cnn_forward.1} parent=5 // pred_check_branch
      %187 = sbr.rel (%p184) target = $region12
    $region11: #{a3c_cnn_forward.1} parent=5 // pred_region
      %s188 = ssub.s32 %s12, 1
      // Predicated region
      $region13: #{a3c_cnn_forward.1} parent=11 // pred_check
        %p189 = pneg %p85
      $region14: #{a3c_cnn_forward.1} parent=11 // pred_check_branch
        %191 = sbr.rel (%p189) target = $region16
      $region15: #{a3c_cnn_forward.1} parent=11 // pred_region
        _
      $region16: #{a3c_cnn_forward.1} parent=11 // pred_fallthru
        _
      // Predicated region
      $region17: #{a3c_cnn_forward.1} parent=11 // pred_check
        %p192 = pneg %p106
      $region18: #{a3c_cnn_forward.1} parent=11 // pred_check_branch
        %194 = sbr.rel (%p192) target = $region20
      $region19: #{a3c_cnn_forward.1} parent=11 // pred_region
        _
      $region20: #{a3c_cnn_forward.1} parent=11 // pred_fallthru
        _
      // Predicated region
      $region21: #{a3c_cnn_forward.1} parent=11 // pred_check
        %p195 = pneg %p127
      $region22: #{a3c_cnn_forward.1} parent=11 // pred_check_branch
        %197 = sbr.rel (%p195) target = $region24
      $region23: #{a3c_cnn_forward.1} parent=11 // pred_region
        _
      $region24: #{a3c_cnn_forward.1} parent=11 // pred_fallthru
        _
      // Predicated region
      $region25: #{a3c_cnn_forward.1} parent=11 // pred_check
        %p198 = pneg %p148
      $region26: #{a3c_cnn_forward.1} parent=11 // pred_check_branch
        %200 = sbr.rel (%p198) target = $region28
      $region27: #{a3c_cnn_forward.1} parent=11 // pred_region
        _
      $region28: #{a3c_cnn_forward.1} parent=11 // pred_fallthru
        _
    $region12: #{a3c_cnn_forward.1} parent=5 // pred_fallthru
      _
    %p201 = scmp.lt.s32.totalorder %s12, 2
    // Predicated region
    $region29: #{a3c_cnn_forward.1} parent=5 // pred_check
      %p202 = pneg %p201
    $region30: #{a3c_cnn_forward.1} parent=5 // pred_check_branch
      %204 = sbr.rel (%p202) target = $region32
    $region31: #{a3c_cnn_forward.1} parent=5 // pred_region
      // Predicated region
      $region33: #{a3c_cnn_forward.1} parent=31 // pred_check
        %p205 = pneg %p32
      $region34: #{a3c_cnn_forward.1} parent=31 // pred_check_branch
        %207 = sbr.rel (%p205) target = $region36
      $region35: #{a3c_cnn_forward.1} parent=31 // pred_region
        %p208 = scmp.lt.s32.totalorder %s12, 1
        %s209 = scalar_select %p208, %s12, 1
        %s210 = smul.addr %s209, 221
        %s211 = smul.addr %s210, 4
        %s212 = scalar_lea.vmem %s0, %s211
      $region36: #{a3c_cnn_forward.1} parent=31 // pred_fallthru
        _
      // Predicated region
      $region37: #{a3c_cnn_forward.1} parent=31 // pred_check
        %p213 = pneg %p58
      $region38: #{a3c_cnn_forward.1} parent=31 // pred_check_branch
        %215 = sbr.rel (%p213) target = $region40
      $region39: #{a3c_cnn_forward.1} parent=31 // pred_region
        %p216 = scmp.lt.s32.totalorder %s12, 1
        %s217 = scalar_select %p216, %s12, 1
        %s218 = scalar_lea.vmem %s1, %s217
      $region40: #{a3c_cnn_forward.1} parent=31 // pred_fallthru
        _
    $region32: #{a3c_cnn_forward.1} parent=5 // pred_fallthru
      _
    %p219 = scmp.le.s32.totalorder 1, %s12
    %p220 = scmp.lt.s32.totalorder %s12, 3
    %p221 = pnand %p219, %p220
    %p222 = pneg %p221
    // Predicated region
    $region41: #{a3c_cnn_forward.1} parent=5 // pred_check
      _
    $region42: #{a3c_cnn_forward.1} parent=5 // pred_check_branch
      %224 = sbr.rel (%p221) target = $region44
    $region43: #{a3c_cnn_forward.1} parent=5 // pred_region
      %s225 = ssub.s32 %s12, 1
      %p226 = scmp.lt.s32.totalorder %s17, 1
      %s227 = scalar_select %p226, %s17, 1
      %s228 = smul.addr %s227, 221
      %s229 = smul.addr %s228, 4
      %s230 = scalar_lea.vmem %s0, %s229
      %p231 = pneg %p38
      %p232 = pneg %p35
      %p233 = scmp.lt.s32.totalorder %s17, 1
      %s234 = scalar_select %p233, %s17, 1
      %s235 = scalar_lea.vmem %s1, %s234
      %p236 = pneg %p64
      %p237 = pneg %p61
      %p238 = pneg %p85
      %p239 = pneg %p82
      %p240 = pneg %p106
      %p241 = pneg %p103
      %p242 = pneg %p127
      %p243 = pneg %p124
      %p244 = pneg %p148
      %p245 = pneg %p145
      %p246 = pneg %p174
      %p247 = pneg %p171
      %p248 = scmp.lt.s32.totalorder %s17, 1
      %s249 = scalar_select %p248, %s17, 1
      %s250 = scalar_lea.vmem %s6, %s249
      %p251 = scmp.lt.s32.totalorder %s17, 1
      %s252 = scalar_select %p251, %s17, 1
      %s253 = smul.addr %s252, 221
      %s254 = smul.addr %s253, 4
      %s255 = scalar_lea.vmem %s0, %s254
      %p256 = scmp.lt.s32.totalorder %s17, 1
      %s257 = scalar_select %p256, %s17, 1
      %s258 = scalar_lea.vmem %s1, %s257
      %p259 = scmp.lt.s32.totalorder %s17, 1
      %s260 = scalar_select %p259, %s17, 1
      %s261 = scalar_lea.vmem %s6, %s260
      %vm263 = vcmask 257024
      %264 = vst.msk [vmem:[#allocation4] sm:$0xf] %vm263, 0
      %265 = vst.msk [vmem:[#allocation4 + $0x4] sm:$0xf] %vm263, 0
      %266 = vst.msk [vmem:[#allocation4 + $0x8] sm:$0xf] %vm263, 0
      %267 = vst.msk [vmem:[#allocation4 + $0xc] sm:$0xf] %vm263, 0
      %268 = vst.msk [vmem:[#allocation4 + $0x10] sm:$0xf] %vm263, 0
      %269 = vst.msk [vmem:[#allocation4 + $0x14] sm:$0xf] %vm263, 0
      %270 = vst.msk [vmem:[#allocation4 + $0x18] sm:$0xf] %vm263, 0
      %271 = vst.msk [vmem:[#allocation4 + $0x1c] sm:$0xf] %vm263, 0
      %272 = vst.msk [vmem:[#allocation4 + $0x20] sm:$0xf] %vm263, 0
      %273 = vst.msk [vmem:[#allocation4 + $0x24] sm:$0xf] %vm263, 0
      %274 = vst.msk [vmem:[#allocation4 + $0x28] sm:$0xf] %vm263, 0
      %275 = vst.msk [vmem:[#allocation4 + $0x2c] sm:$0xf] %vm263, 0
      %276 = vst.msk [vmem:[#allocation4 + $0x30] sm:$0xf] %vm263, 0
      %277 = vst.msk [vmem:[#allocation4 + $0x34] sm:$0xf] %vm263, 0
      %278 = vst.msk [vmem:[#allocation4 + $0x38] sm:$0xf] %vm263, 0
      %279 = vst.msk [vmem:[#allocation4 + $0x3c] sm:$0xf] %vm263, 0
      %280 = vst.msk [vmem:[#allocation4 + $0x40] sm:$0xf] %vm263, 0
      %281 = vst.msk [vmem:[#allocation4 + $0x44] sm:$0xf] %vm263, 0
      %282 = vst.msk [vmem:[#allocation4 + $0x48] sm:$0xf] %vm263, 0
      %283 = vst.msk [vmem:[#allocation4 + $0x4c] sm:$0xf] %vm263, 0
      %284 = vst.msk [vmem:[#allocation4 + $0x50] sm:$0xf] %vm263, 0
      %285 = vst.msk [vmem:[#allocation4 + $0x54] sm:$0xf] %vm263, 0
      %286 = vst.msk [vmem:[#allocation4 + $0x58] sm:$0xf] %vm263, 0
      %287 = vst.msk [vmem:[#allocation4 + $0x5c] sm:$0xf] %vm263, 0
      %288 = vst.msk [vmem:[#allocation4 + $0x60] sm:$0xf] %vm263, 0
      %289 = vst.msk [vmem:[#allocation4 + $0x64] sm:$0xf] %vm263, 0
      %290 = vst.msk [vmem:[#allocation4 + $0x68] sm:$0xf] %vm263, 0
      %291 = vst.msk [vmem:[#allocation4 + $0x6c] sm:$0xf] %vm263, 0
      %292 = vst.msk [vmem:[#allocation4 + $0x70] sm:$0xf] %vm263, 0
      %293 = vst.msk [vmem:[#allocation4 + $0x74] sm:$0xf] %vm263, 0
      %294 = vst.msk [vmem:[#allocation4 + $0x78] sm:$0xf] %vm263, 0
      %295 = vst.msk [vmem:[#allocation4 + $0x7c] sm:$0xf] %vm263, 0
      %296 = vst.msk [vmem:[#allocation4 + $0x80] sm:$0xf] %vm263, 0
      %297 = vst.msk [vmem:[#allocation4 + $0x84] sm:$0xf] %vm263, 0
      %298 = vst.msk [vmem:[#allocation4 + $0x88] sm:$0xf] %vm263, 0
      %299 = vst.msk [vmem:[#allocation4 + $0x8c] sm:$0xf] %vm263, 0
      %300 = vst.msk [vmem:[#allocation4 + $0x90] sm:$0xf] %vm263, 0
      %301 = vst.msk [vmem:[#allocation4 + $0x94] sm:$0xf] %vm263, 0
      %302 = vst.msk [vmem:[#allocation4 + $0x98] sm:$0xf] %vm263, 0
      %303 = vst.msk [vmem:[#allocation4 + $0x9c] sm:$0xf] %vm263, 0
      %304 = vst.msk [vmem:[#allocation4 + $0xa0] sm:$0xf] %vm263, 0
      %305 = vst.msk [vmem:[#allocation4 + $0xa4] sm:$0xf] %vm263, 0
      %306 = vst.msk [vmem:[#allocation4 + $0xa8] sm:$0xf] %vm263, 0
      %307 = vst.msk [vmem:[#allocation4 + $0xac] sm:$0xf] %vm263, 0
      %308 = vst.msk [vmem:[#allocation4 + $0xb0] sm:$0xf] %vm263, 0
      %309 = vst.msk [vmem:[#allocation4 + $0xb4] sm:$0xf] %vm263, 0
      %310 = vst.msk [vmem:[#allocation4 + $0xb8] sm:$0xf] %vm263, 0
      %311 = vst.msk [vmem:[#allocation4 + $0xbc] sm:$0xf] %vm263, 0
      %312 = vst.msk [vmem:[#allocation4 + $0xc0] sm:$0xf] %vm263, 0
      %313 = vst.msk [vmem:[#allocation4 + $0xc4] sm:$0xf] %vm263, 0
      %314 = vst.msk [vmem:[#allocation4 + $0xc8] sm:$0xf] %vm263, 0
      %315 = vst.msk [vmem:[#allocation4 + $0xcc] sm:$0xf] %vm263, 0
      %316 = vst.msk [vmem:[#allocation4 + $0xd0] sm:$0xf] %vm263, 0
      %317 = vst.msk [vmem:[#allocation4 + $0xd4] sm:$0xf] %vm263, 0
      %318 = vst.msk [vmem:[#allocation4 + $0xd8] sm:$0xf] %vm263, 0
      %319 = vst.msk [vmem:[#allocation4 + $0xdc] sm:$0xf] %vm263, 0
      %320 = vst.msk [vmem:[#allocation4 + $0xe0] sm:$0xf] %vm263, 0
      %321 = vst.msk [vmem:[#allocation4 + $0xe4] sm:$0xf] %vm263, 0
      %322 = vst.msk [vmem:[#allocation4 + $0xe8] sm:$0xf] %vm263, 0
      %323 = vst.msk [vmem:[#allocation4 + $0xec] sm:$0xf] %vm263, 0
      %vm324 = vcmask 254976
      %325 = vst.msk [vmem:[#allocation4 + $0xf0] sm:$0x3] %vm324, 0
      %326 = vst.msk [vmem:[#allocation5] sm:$0xf] %vm263, 0
      %327 = vst.msk [vmem:[#allocation5 + $0x4] sm:$0xf] %vm263, 0
      %328 = vst.msk [vmem:[#allocation5 + $0x8] sm:$0xf] %vm263, 0
      %329 = vst.msk [vmem:[#allocation5 + $0xc] sm:$0xf] %vm263, 0
      %330 = vst.msk [vmem:[#allocation5 + $0x10] sm:$0xf] %vm263, 0
      %331 = vst.msk [vmem:[#allocation5 + $0x14] sm:$0xf] %vm263, 0
      %332 = vst.msk [vmem:[#allocation5 + $0x18] sm:$0xf] %vm263, 0
      %333 = vst.msk [vmem:[#allocation5 + $0x1c] sm:$0xf] %vm263, 0
      %334 = vst.msk [vmem:[#allocation5 + $0x20] sm:$0xf] %vm263, 0
      %335 = vst.msk [vmem:[#allocation5 + $0x24] sm:$0xf] %vm263, 0
      %336 = vst.msk [vmem:[#allocation5 + $0x28] sm:$0xf] %vm263, 0
      %337 = vst.msk [vmem:[#allocation5 + $0x2c] sm:$0xf] %vm263, 0
      %338 = vst.msk [vmem:[#allocation5 + $0x30] sm:$0xf] %vm263, 0
      %339 = vst.msk [vmem:[#allocation5 + $0x34] sm:$0xf] %vm263, 0
      %340 = vst.msk [vmem:[#allocation5 + $0x38] sm:$0xf] %vm263, 0
      %341 = vst.msk [vmem:[#allocation5 + $0x3c] sm:$0xf] %vm263, 0
      %342 = vst.msk [vmem:[#allocation5 + $0x40] sm:$0xf] %vm263, 0
      %343 = vst.msk [vmem:[#allocation5 + $0x44] sm:$0xf] %vm263, 0
      %344 = vst.msk [vmem:[#allocation6] sm:$0xf] %vm263, 0
      %345 = vst.msk [vmem:[#allocation6 + $0x4] sm:$0xf] %vm263, 0
      %346 = vst.msk [vmem:[#allocation6 + $0x8] sm:$0xf] %vm263, 0
      %347 = vst.msk [vmem:[#allocation6 + $0xc] sm:$0xf] %vm263, 0
      %348 = vst.msk [vmem:[#allocation6 + $0x10] sm:$0xf] %vm263, 0
      %349 = vst.msk [vmem:[#allocation6 + $0x14] sm:$0xf] %vm263, 0
      %vm350 = vcmask 253952
      %vm351 = vsmask.f32 256
      %vm352 = vmand %vm350, %vm351
      %v353 = vld [vmem:[#allocation6 + $0x18] sm:$0x1]
      %v354 = vsel %vm352, 0, %v353
      %355 = vst [vmem:[#allocation6 + $0x18] sm:$0x1] %v354
      %v356 = vld [vmem:[%s255] sm:$0xf]
      %v357 = vld [vmem:[%s255 + $0x4] sm:$0xf]
      %v358 = vld [vmem:[%s255 + $0x8] sm:$0xf]
      %v359 = vld [vmem:[%s255 + $0xc] sm:$0xf]
      %v360 = vld [vmem:[%s255 + $0x10] sm:$0xf]
      %v361 = vld [vmem:[%s255 + $0x14] sm:$0xf]
      %v362 = vld [vmem:[%s255 + $0x18] sm:$0xf]
      %v363 = vld [vmem:[%s255 + $0x1c] sm:$0xf]
      %v364 = vld [vmem:[%s255 + $0x20] sm:$0xf]
      %v365 = vld [vmem:[%s255 + $0x24] sm:$0xf]
      %v366 = vld [vmem:[%s255 + $0x28] sm:$0xf]
      %v367 = vld [vmem:[%s255 + $0x2c] sm:$0xf]
      %v368 = vld [vmem:[%s255 + $0x30] sm:$0xf]
      %v369 = vld [vmem:[%s255 + $0x34] sm:$0xf]
      %v370 = vld [vmem:[%s255 + $0x38] sm:$0xf]
      %v371 = vld [vmem:[%s255 + $0x3c] sm:$0xf]
      %v372 = vld [vmem:[%s255 + $0x40] sm:$0xf]
      %v373 = vld [vmem:[%s255 + $0x44] sm:$0xf]
      %v374 = vld [vmem:[%s255 + $0x48] sm:$0xf]
      %v375 = vld [vmem:[%s255 + $0x4c] sm:$0xf]
      %v376 = vld [vmem:[%s255 + $0x50] sm:$0xf]
      %v377 = vld [vmem:[%s255 + $0x54] sm:$0xf]
      %v378 = vld [vmem:[%s255 + $0x58] sm:$0xf]
      %v379 = vld [vmem:[%s255 + $0x5c] sm:$0xf]
      %v380 = vld [vmem:[%s255 + $0x60] sm:$0xf]
      %v381 = vld [vmem:[%s255 + $0x64] sm:$0xf]
      %v382 = vld [vmem:[%s255 + $0x68] sm:$0xf]
      %v383 = vld [vmem:[%s255 + $0x6c] sm:$0xf]
      %v384 = vld [vmem:[%s255 + $0x70] sm:$0xf]
      %v385 = vld [vmem:[%s255 + $0x74] sm:$0xf]
      %v386 = vld [vmem:[%s255 + $0x78] sm:$0xf]
      %v387 = vld [vmem:[%s255 + $0x7c] sm:$0xf]
      %v388 = vld [vmem:[%s255 + $0x80] sm:$0xf]
      %v389 = vld [vmem:[%s255 + $0x84] sm:$0xf]
      %v390 = vld [vmem:[%s255 + $0x88] sm:$0xf]
      %v391 = vld [vmem:[%s255 + $0x8c] sm:$0xf]
      %v392 = vld [vmem:[%s255 + $0x90] sm:$0xf]
      %v393 = vld [vmem:[%s255 + $0x94] sm:$0xf]
      %v394 = vld [vmem:[%s255 + $0x98] sm:$0xf]
      %v395 = vld [vmem:[%s255 + $0x9c] sm:$0xf]
      %v396 = vld [vmem:[%s255 + $0xa0] sm:$0xf]
      %v397 = vld [vmem:[%s255 + $0xa4] sm:$0xf]
      %v398 = vld [vmem:[%s255 + $0xa8] sm:$0xf]
      %v399 = vld [vmem:[%s255 + $0xac] sm:$0xf]
      %v400 = vld [vmem:[%s255 + $0xb0] sm:$0xf]
      %v401 = vld [vmem:[%s255 + $0xb4] sm:$0xf]
      %v402 = vld [vmem:[%s255 + $0xb8] sm:$0xf]
      %v403 = vld [vmem:[%s255 + $0xbc] sm:$0xf]
      %v404 = vld [vmem:[%s255 + $0xc0] sm:$0xf]
      %v405 = vld [vmem:[%s255 + $0xc4] sm:$0xf]
      %v406 = vld [vmem:[%s255 + $0xc8] sm:$0xf]
      %v407 = vld [vmem:[%s255 + $0xcc] sm:$0xf]
      %v408 = vld [vmem:[%s255 + $0xd0] sm:$0xf]
      %v409 = vld [vmem:[%s255 + $0xd4] sm:$0xf]
      %v410 = vld [vmem:[%s255 + $0xd8] sm:$0xf]
      %v411 = vld [vmem:[%s255 + $0xdc] sm:$0xf]
      %v412 = vld [vmem:[%s255 + $0xe0] sm:$0xf]
      %v413 = vld [vmem:[%s255 + $0xe4] sm:$0xf]
      %v414 = vld [vmem:[%s255 + $0xe8] sm:$0xf]
      %v415 = vld [vmem:[%s255 + $0xec] sm:$0xf]
      %v416 = vld [vmem:[%s255 + $0xf0] sm:$0xf]
      %v417 = vld [vmem:[%s255 + $0xf4] sm:$0xf]
      %v418 = vld [vmem:[%s255 + $0xf8] sm:$0xf]
      %v419 = vld [vmem:[%s255 + $0xfc] sm:$0xf]
      %v420 = vld [vmem:[%s255 + $0x100] sm:$0xf]
      %v421 = vld [vmem:[%s255 + $0x104] sm:$0xf]
      %v422 = vld [vmem:[%s255 + $0x108] sm:$0xf]
      %v423 = vld [vmem:[%s255 + $0x10c] sm:$0xf]
      %v424 = vld [vmem:[%s255 + $0x110] sm:$0xf]
      %v425 = vld [vmem:[%s255 + $0x114] sm:$0xf]
      %v426 = vld [vmem:[%s255 + $0x118] sm:$0xf]
      %v427 = vld [vmem:[%s255 + $0x11c] sm:$0xf]
      %v428 = vld [vmem:[%s255 + $0x120] sm:$0xf]
      %v429 = vld [vmem:[%s255 + $0x124] sm:$0xf]
      %v430 = vld [vmem:[%s255 + $0x128] sm:$0xf]
      %v431 = vld [vmem:[%s255 + $0x12c] sm:$0xf]
      %v432 = vld [vmem:[%s255 + $0x130] sm:$0xf]
      %v433 = vld [vmem:[%s255 + $0x134] sm:$0xf]
      %v434 = vld [vmem:[%s255 + $0x138] sm:$0xf]
      %v435 = vld [vmem:[%s255 + $0x13c] sm:$0xf]
      %v436 = vld [vmem:[%s255 + $0x140] sm:$0xf]
      %v437 = vld [vmem:[%s255 + $0x144] sm:$0xf]
      %v438 = vld [vmem:[%s255 + $0x148] sm:$0xf]
      %v439 = vld [vmem:[%s255 + $0x14c] sm:$0xf]
      %v440 = vld [vmem:[%s255 + $0x150] sm:$0xf]
      %v441 = vld [vmem:[%s255 + $0x154] sm:$0xf]
      %v442 = vld [vmem:[%s255 + $0x158] sm:$0xf]
      %v443 = vld [vmem:[%s255 + $0x15c] sm:$0xf]
      %v444 = vld [vmem:[%s255 + $0x160] sm:$0xf]
      %v445 = vld [vmem:[%s255 + $0x164] sm:$0xf]
      %v446 = vld [vmem:[%s255 + $0x168] sm:$0xf]
      %v447 = vld [vmem:[%s255 + $0x16c] sm:$0xf]
      %v448 = vld [vmem:[%s255 + $0x170] sm:$0xf]
      %v449 = vld [vmem:[%s255 + $0x174] sm:$0xf]
      %v450 = vld [vmem:[%s255 + $0x178] sm:$0xf]
      %v451 = vld [vmem:[%s255 + $0x17c] sm:$0xf]
      %v452 = vld [vmem:[%s255 + $0x180] sm:$0xf]
      %v453 = vld [vmem:[%s255 + $0x184] sm:$0xf]
      %v454 = vld [vmem:[%s255 + $0x188] sm:$0xf]
      %v455 = vld [vmem:[%s255 + $0x18c] sm:$0xf]
      %v456 = vld [vmem:[%s255 + $0x190] sm:$0xf]
      %v457 = vld [vmem:[%s255 + $0x194] sm:$0xf]
      %v458 = vld [vmem:[%s255 + $0x198] sm:$0xf]
      %v459 = vld [vmem:[%s255 + $0x19c] sm:$0xf]
      %v460 = vld [vmem:[%s255 + $0x1a0] sm:$0xf]
      %v461 = vld [vmem:[%s2] sm:$0x3]
      %v567 = vunpack.c.l.b16 %v356
      %v568 = vunpack.c.l.b16 %v357
      %v569 = vunpack.c.l.b16 %v358
      %v570 = vunpack.c.l.b16 %v359
      %v571 = vunpack.c.l.b16 %v360
      %v572 = vunpack.c.l.b16 %v361
      %v573 = vunpack.c.l.b16 %v362
      %v574 = vunpack.c.l.b16 %v363
      %v575 = vunpack.c.l.b16 %v364
      %v576 = vunpack.c.l.b16 %v365
      %v577 = vunpack.c.l.b16 %v366
      %v578 = vunpack.c.l.b16 %v367
      %v579 = vunpack.c.l.b16 %v368
      %v580 = vunpack.c.l.b16 %v369
      %v581 = vunpack.c.l.b16 %v370
      %v582 = vunpack.c.l.b16 %v371
      %v583 = vunpack.c.l.b16 %v372
      %v584 = vunpack.c.l.b16 %v373
      %v585 = vunpack.c.l.b16 %v374
      %v586 = vunpack.c.l.b16 %v375
      %v587 = vunpack.c.l.b16 %v376
      %v588 = vunpack.c.l.b16 %v377
      %v589 = vunpack.c.l.b16 %v378
      %v590 = vunpack.c.l.b16 %v379
      %v591 = vunpack.c.l.b16 %v380
      %v592 = vunpack.c.l.b16 %v381
      %v593 = vunpack.c.l.b16 %v382
      %v594 = vunpack.c.l.b16 %v383
      %v595 = vunpack.c.l.b16 %v384
      %v596 = vunpack.c.l.b16 %v385
      %v597 = vunpack.c.l.b16 %v386
      %v598 = vunpack.c.l.b16 %v387
      %v599 = vunpack.c.l.b16 %v388
      %v600 = vunpack.c.l.b16 %v389
      %v601 = vunpack.c.l.b16 %v390
      %v602 = vunpack.c.l.b16 %v391
      %v603 = vunpack.c.l.b16 %v392
      %v604 = vunpack.c.l.b16 %v393
      %v605 = vunpack.c.l.b16 %v394
      %v606 = vunpack.c.l.b16 %v395
      %v607 = vunpack.c.l.b16 %v396
      %v608 = vunpack.c.l.b16 %v397
      %v609 = vunpack.c.l.b16 %v398
      %v610 = vunpack.c.l.b16 %v399
      %v611 = vunpack.c.l.b16 %v400
      %v612 = vunpack.c.l.b16 %v401
      %v613 = vunpack.c.l.b16 %v402
      %v614 = vunpack.c.l.b16 %v403
      %v615 = vunpack.c.l.b16 %v404
      %v616 = vunpack.c.l.b16 %v405
      %v617 = vunpack.c.l.b16 %v406
      %v618 = vunpack.c.l.b16 %v407
      %v619 = vunpack.c.l.b16 %v408
      %v620 = vunpack.c.l.b16 %v409
      %v621 = vunpack.c.l.b16 %v410
      %v622 = vunpack.c.l.b16 %v411
      %v623 = vunpack.c.l.b16 %v412
      %v624 = vunpack.c.l.b16 %v413
      %v625 = vunpack.c.l.b16 %v414
      %v626 = vunpack.c.l.b16 %v415
      %v627 = vunpack.c.l.b16 %v416
      %v628 = vunpack.c.l.b16 %v417
      %v629 = vunpack.c.l.b16 %v418
      %v630 = vunpack.c.l.b16 %v419
      %v631 = vunpack.c.l.b16 %v420
      %v632 = vunpack.c.l.b16 %v421
      %v633 = vunpack.c.l.b16 %v422
      %v634 = vunpack.c.l.b16 %v423
      %v635 = vunpack.c.l.b16 %v424
      %v636 = vunpack.c.l.b16 %v425
      %v637 = vunpack.c.l.b16 %v426
      %v638 = vunpack.c.l.b16 %v427
      %v639 = vunpack.c.l.b16 %v428
      %v640 = vunpack.c.l.b16 %v429
      %v641 = vunpack.c.l.b16 %v430
      %v642 = vunpack.c.l.b16 %v431
      %v643 = vunpack.c.l.b16 %v432
      %v644 = vunpack.c.l.b16 %v433
      %v645 = vunpack.c.l.b16 %v434
      %v646 = vunpack.c.l.b16 %v435
      %v647 = vunpack.c.l.b16 %v436
      %v648 = vunpack.c.l.b16 %v437
      %v649 = vunpack.c.l.b16 %v438
      %v650 = vunpack.c.l.b16 %v439
      %v651 = vunpack.c.l.b16 %v440
      %v652 = vunpack.c.l.b16 %v441
      %v653 = vunpack.c.l.b16 %v442
      %v654 = vunpack.c.l.b16 %v443
      %v655 = vunpack.c.l.b16 %v444
      %v656 = vunpack.c.l.b16 %v445
      %v657 = vunpack.c.l.b16 %v446
      %v658 = vunpack.c.l.b16 %v447
      %v659 = vunpack.c.l.b16 %v448
      %v660 = vunpack.c.l.b16 %v449
      %v661 = vunpack.c.l.b16 %v450
      %v662 = vunpack.c.l.b16 %v451
      %v663 = vunpack.c.l.b16 %v452
      %v664 = vunpack.c.l.b16 %v453
      %v665 = vunpack.c.l.b16 %v454
      %v666 = vunpack.c.l.b16 %v455
      %v667 = vunpack.c.l.b16 %v456
      %v668 = vunpack.c.l.b16 %v457
      %v669 = vunpack.c.l.b16 %v458
      %v670 = vunpack.c.l.b16 %v459
      %v671 = vunpack.c.l.b16 %v460
      %v672 = vpack.c.b16 %v568, %v567
      %v673 = vpack.c.b16 %v570, %v569
      %v674 = vpack.c.b16 %v572, %v571
      %v675 = vpack.c.b16 %v574, %v573
      %v676 = vpack.c.b16 %v576, %v575
      %v677 = vpack.c.b16 %v578, %v577
      %v678 = vpack.c.b16 %v580, %v579
      %v679 = vpack.c.b16 %v582, %v581
      %v680 = vpack.c.b16 %v584, %v583
      %v681 = vpack.c.b16 %v586, %v585
      %v682 = vpack.c.b16 %v588, %v587
      %v683 = vpack.c.b16 %v590, %v589
      %v684 = vpack.c.b16 %v592, %v591
      %v685 = vpack.c.b16 %v594, %v593
      %v686 = vpack.c.b16 %v596, %v595
      %v687 = vpack.c.b16 %v598, %v597
      %v688 = vpack.c.b16 %v600, %v599
      %v689 = vpack.c.b16 %v602, %v601
      %v690 = vpack.c.b16 %v604, %v603
      %v691 = vpack.c.b16 %v606, %v605
      %v692 = vpack.c.b16 %v608, %v607
      %v693 = vpack.c.b16 %v610, %v609
      %v694 = vpack.c.b16 %v612, %v611
      %v695 = vpack.c.b16 %v614, %v613
      %v696 = vpack.c.b16 %v616, %v615
      %v697 = vpack.c.b16 %v618, %v617
      %v698 = vpack.c.b16 %v620, %v619
      %v699 = vpack.c.b16 %v622, %v621
      %v700 = vpack.c.b16 %v624, %v623
      %v701 = vpack.c.b16 %v626, %v625
      %v702 = vpack.c.b16 %v628, %v627
      %v703 = vpack.c.b16 %v630, %v629
      %v704 = vpack.c.b16 %v632, %v631
      %v705 = vpack.c.b16 %v634, %v633
      %v706 = vpack.c.b16 %v636, %v635
      %v707 = vpack.c.b16 %v638, %v637
      %v708 = vpack.c.b16 %v640, %v639
      %v709 = vpack.c.b16 %v642, %v641
      %v710 = vpack.c.b16 %v644, %v643
      %v711 = vpack.c.b16 %v646, %v645
      %v712 = vpack.c.b16 %v648, %v647
      %v713 = vpack.c.b16 %v650, %v649
      %v714 = vpack.c.b16 %v652, %v651
      %v715 = vpack.c.b16 %v654, %v653
      %v716 = vpack.c.b16 %v656, %v655
      %v717 = vpack.c.b16 %v658, %v657
      %v718 = vpack.c.b16 %v660, %v659
      %v719 = vpack.c.b16 %v662, %v661
      %v720 = vpack.c.b16 %v664, %v663
      %v721 = vpack.c.b16 %v666, %v665
      %v722 = vpack.c.b16 %v668, %v667
      %v723 = vpack.c.b16 %v670, %v669
      %v724 = vpack.c.b16 %v671, %v671
      %vm725 = vcmask 31744
      %v727 = vsel %vm725, %v672, 0
      %v730 = vsel %vm725, %v673, 0
      %v733 = vsel %vm725, %v674, 0
      %v736 = vsel %vm725, %v675, 0
      %v739 = vsel %vm725, %v676, 0
      %v742 = vsel %vm725, %v677, 0
      %v745 = vsel %vm725, %v678, 0
      %v748 = vsel %vm725, %v679, 0
      %v751 = vsel %vm725, %v680, 0
      %v754 = vsel %vm725, %v681, 0
      %v757 = vsel %vm725, %v682, 0
      %v760 = vsel %vm725, %v683, 0
      %v763 = vsel %vm725, %v684, 0
      %v766 = vsel %vm725, %v685, 0
      %v769 = vsel %vm725, %v686, 0
      %v772 = vsel %vm725, %v687, 0
      %v775 = vsel %vm725, %v688, 0
      %v778 = vsel %vm725, %v689, 0
      %v781 = vsel %vm725, %v690, 0
      %v784 = vsel %vm725, %v691, 0
      %v787 = vsel %vm725, %v692, 0
      %v790 = vsel %vm725, %v693, 0
      %v793 = vsel %vm725, %v694, 0
      %v796 = vsel %vm725, %v695, 0
      %v799 = vsel %vm725, %v696, 0
      %v802 = vsel %vm725, %v697, 0
      %v805 = vsel %vm725, %v698, 0
      %v808 = vsel %vm725, %v699, 0
      %v811 = vsel %vm725, %v700, 0
      %v814 = vsel %vm725, %v701, 0
      %v817 = vsel %vm725, %v702, 0
      %v820 = vsel %vm725, %v703, 0
      %v823 = vsel %vm725, %v704, 0
      %v826 = vsel %vm725, %v705, 0
      %v829 = vsel %vm725, %v706, 0
      %v832 = vsel %vm725, %v707, 0
      %v835 = vsel %vm725, %v708, 0
      %v838 = vsel %vm725, %v709, 0
      %v841 = vsel %vm725, %v710, 0
      %v844 = vsel %vm725, %v711, 0
      %v847 = vsel %vm725, %v712, 0
      %v850 = vsel %vm725, %v713, 0
      %v853 = vsel %vm725, %v714, 0
      %v856 = vsel %vm725, %v715, 0
      %v859 = vsel %vm725, %v716, 0
      %v862 = vsel %vm725, %v717, 0
      %v865 = vsel %vm725, %v718, 0
      %v868 = vsel %vm725, %v719, 0
      %v871 = vsel %vm725, %v720, 0
      %v874 = vsel %vm725, %v721, 0
      %v877 = vsel %vm725, %v722, 0
      %v880 = vsel %vm725, %v723, 0
      %v883 = vsel %vm725, %v724, 0
      %vm885 = vcmask 1041408
      %v887 = vsel %vm885, %v461, 0
      %889 = vmatprep.subr.bf16.mxu0 0
      %890 = vmatpush1.bf16.msra.mxu0 0
      %891 = vmatprep.subr.bf16.mxu0 0
      %892 = vmatpush1.bf16.msra.mxu0 0
      %893 = vmatprep.subr.bf16.mxu0 0
      %894 = vmatpush1.bf16.msra.mxu0 0
      %895 = vmatprep.subr.bf16.mxu0 0
      %896 = vmatpush1.bf16.msra.mxu0 0
      %897 = vmatprep.subr.bf16.mxu0 0
      %898 = vmatpush1.bf16.msra.mxu0 0
      %899 = vmatprep.subr.bf16.mxu0 0
      %900 = vmatpush1.bf16.msra.mxu0 0
      %901 = vmatprep.subr.bf16.mxu0 0
      %902 = vmatpush1.bf16.msra.mxu0 0
      %903 = vmatprep.subr.bf16.mxu0 0
      %904 = vmatpush1.bf16.msra.mxu0 %v887
      %905 = vmatprep.subr.bf16.mxu0 0
      %906 = vmatpush2.bf16.msra.mxu0 0
      %907 = vmatprep.subr.bf16.mxu0 0
      %908 = vmatpush2.bf16.msra.mxu0 0
      %909 = vmatprep.subr.bf16.mxu0 0
      %910 = vmatpush2.bf16.msra.mxu0 0
      %911 = vmatprep.subr.bf16.mxu0 0
      %912 = vmatpush2.bf16.msra.mxu0 0
      %913 = vmatprep.subr.bf16.mxu0 0
      %914 = vmatpush2.bf16.msra.mxu0 0
      %915 = vmatprep.subr.bf16.mxu0 0
      %916 = vmatpush2.bf16.msra.mxu0 0
      %917 = vmatprep.subr.bf16.mxu0 0
      %918 = vmatpush2.bf16.msra.mxu0 0
      %919 = vmatprep.subr.bf16.mxu0 0
      %920 = vmatpush2.bf16.msra.mxu0 0
      %921 = vmatprep.mubr.bf16.mxu0 0
      %922 = vmatmul.mubr.bf16.gmra.mxu0 %v727
      %v923 = vpop.f32.mrf.mxu0
      %v924 = vadd.f32 0.0, %v923
      %v925 = vpop.f32.mrf.mxu0
      %v926 = vpop.f32.mrf.mxu0
      %v927 = vadd.f32 0.0, %v926
      %v928 = vpop.f32.mrf.mxu0
      %929 = vmatprep.mubr.bf16.mxu0 0
      %930 = vmatmul.mubr.bf16.gmra.mxu0 %v730
      %v931 = vpop.f32.mrf.mxu0
      %v932 = vadd.f32 0.0, %v931
      %v933 = vpop.f32.mrf.mxu0
      %v934 = vpop.f32.mrf.mxu0
      %v935 = vadd.f32 0.0, %v934
      %v936 = vpop.f32.mrf.mxu0
      %937 = vmatprep.mubr.bf16.mxu0 0
      %938 = vmatmul.mubr.bf16.gmra.mxu0 %v733
      %v939 = vpop.f32.mrf.mxu0
      %v940 = vadd.f32 0.0, %v939
      %v941 = vpop.f32.mrf.mxu0
      %v942 = vpop.f32.mrf.mxu0
      %v943 = vadd.f32 0.0, %v942
      %v944 = vpop.f32.mrf.mxu0
      %945 = vmatprep.mubr.bf16.mxu0 0
      %946 = vmatmul.mubr.bf16.gmra.mxu0 %v736
      %v947 = vpop.f32.mrf.mxu0
      %v948 = vadd.f32 0.0, %v947
      %v949 = vpop.f32.mrf.mxu0
      %v950 = vpop.f32.mrf.mxu0
      %v951 = vadd.f32 0.0, %v950
      %v952 = vpop.f32.mrf.mxu0
      %953 = vmatprep.mubr.bf16.mxu0 0
      %954 = vmatmul.mubr.bf16.gmra.mxu0 %v739
      %v955 = vpop.f32.mrf.mxu0
      %v956 = vadd.f32 0.0, %v955
      %v957 = vpop.f32.mrf.mxu0
      %v958 = vpop.f32.mrf.mxu0
      %v959 = vadd.f32 0.0, %v958
      %v960 = vpop.f32.mrf.mxu0
      %961 = vmatprep.mubr.bf16.mxu0 0
      %962 = vmatmul.mubr.bf16.gmra.mxu0 %v742
      %v963 = vpop.f32.mrf.mxu0
      %v964 = vadd.f32 0.0, %v963
      %v965 = vpop.f32.mrf.mxu0
      %v966 = vpop.f32.mrf.mxu0
      %v967 = vadd.f32 0.0, %v966
      %v968 = vpop.f32.mrf.mxu0
      %969 = vmatprep.mubr.bf16.mxu0 0
      %970 = vmatmul.mubr.bf16.gmra.mxu0 %v745
      %v971 = vpop.f32.mrf.mxu0
      %v972 = vadd.f32 0.0, %v971
      %v973 = vpop.f32.mrf.mxu0
      %v974 = vpop.f32.mrf.mxu0
      %v975 = vadd.f32 0.0, %v974
      %v976 = vpop.f32.mrf.mxu0
      %977 = vmatprep.mubr.bf16.mxu0 0
      %978 = vmatmul.mubr.bf16.gmra.mxu0 %v748
      %v979 = vpop.f32.mrf.mxu0
      %v980 = vadd.f32 0.0, %v979
      %v981 = vpop.f32.mrf.mxu0
      %v982 = vpop.f32.mrf.mxu0
      %v983 = vadd.f32 0.0, %v982
      %v984 = vpop.f32.mrf.mxu0
      %985 = vmatprep.mubr.bf16.mxu0 0
      %986 = vmatmul.mubr.bf16.gmra.mxu0 %v751
      %v987 = vpop.f32.mrf.mxu0
      %v988 = vadd.f32 0.0, %v987
      %v989 = vpop.f32.mrf.mxu0
      %v990 = vpop.f32.mrf.mxu0
      %v991 = vadd.f32 0.0, %v990
      %v992 = vpop.f32.mrf.mxu0
      %993 = vmatprep.mubr.bf16.mxu0 0
      %994 = vmatmul.mubr.bf16.gmra.mxu0 %v754
      %v995 = vpop.f32.mrf.mxu0
      %v996 = vadd.f32 0.0, %v995
      %v997 = vpop.f32.mrf.mxu0
      %v998 = vpop.f32.mrf.mxu0
      %v999 = vadd.f32 0.0, %v998
      %v1000 = vpop.f32.mrf.mxu0
      %1001 = vmatprep.mubr.bf16.mxu0 0
      %1002 = vmatmul.mubr.bf16.gmra.mxu0 %v757
      %v1003 = vpop.f32.mrf.mxu0
      %v1004 = vadd.f32 0.0, %v1003
      %v1005 = vpop.f32.mrf.mxu0
      %v1006 = vpop.f32.mrf.mxu0
      %v1007 = vadd.f32 0.0, %v1006
      %v1008 = vpop.f32.mrf.mxu0
      %1009 = vmatprep.mubr.bf16.mxu0 0
      %1010 = vmatmul.mubr.bf16.gmra.mxu0 %v760
      %v1011 = vpop.f32.mrf.mxu0
      %v1012 = vadd.f32 0.0, %v1011
      %v1013 = vpop.f32.mrf.mxu0
      %v1014 = vpop.f32.mrf.mxu0
      %v1015 = vadd.f32 0.0, %v1014
      %v1016 = vpop.f32.mrf.mxu0
      %1017 = vmatprep.mubr.bf16.mxu0 0
      %1018 = vmatmul.mubr.bf16.gmra.mxu0 %v763
      %v1019 = vpop.f32.mrf.mxu0
      %v1020 = vadd.f32 0.0, %v1019
      %v1021 = vpop.f32.mrf.mxu0
      %v1022 = vpop.f32.mrf.mxu0
      %v1023 = vadd.f32 0.0, %v1022
      %v1024 = vpop.f32.mrf.mxu0
      %1025 = vmatprep.mubr.bf16.mxu0 0
      %1026 = vmatmul.mubr.bf16.gmra.mxu0 %v766
      %v1027 = vpop.f32.mrf.mxu0
      %v1028 = vadd.f32 0.0, %v1027
      %v1029 = vpop.f32.mrf.mxu0
      %v1030 = vpop.f32.mrf.mxu0
      %v1031 = vadd.f32 0.0, %v1030
      %v1032 = vpop.f32.mrf.mxu0
      %1033 = vmatprep.mubr.bf16.mxu0 0
      %1034 = vmatmul.mubr.bf16.gmra.mxu0 %v769
      %v1035 = vpop.f32.mrf.mxu0
      %v1036 = vadd.f32 0.0, %v1035
      %v1037 = vpop.f32.mrf.mxu0
      %v1038 = vpop.f32.mrf.mxu0
      %v1039 = vadd.f32 0.0, %v1038
      %v1040 = vpop.f32.mrf.mxu0
      %1041 = vmatprep.mubr.bf16.mxu0 0
      %1042 = vmatmul.mubr.bf16.gmra.mxu0 %v772
      %v1043 = vpop.f32.mrf.mxu0
      %v1044 = vadd.f32 0.0, %v1043
      %v1045 = vpop.f32.mrf.mxu0
      %v1046 = vpop.f32.mrf.mxu0
      %v1047 = vadd.f32 0.0, %v1046
      %v1048 = vpop.f32.mrf.mxu0
      %1049 = vmatprep.mubr.bf16.mxu0 0
      %1050 = vmatmul.mubr.bf16.gmra.mxu0 %v775
      %v1051 = vpop.f32.mrf.mxu0
      %v1052 = vadd.f32 0.0, %v1051
      %v1053 = vpop.f32.mrf.mxu0
      %v1054 = vpop.f32.mrf.mxu0
      %v1055 = vadd.f32 0.0, %v1054
      %v1056 = vpop.f32.mrf.mxu0
      %1057 = vmatprep.mubr.bf16.mxu0 0
      %1058 = vmatmul.mubr.bf16.gmra.mxu0 %v778
      %v1059 = vpop.f32.mrf.mxu0
      %v1060 = vadd.f32 0.0, %v1059
      %v1061 = vpop.f32.mrf.mxu0
      %v1062 = vpop.f32.mrf.mxu0
      %v1063 = vadd.f32 0.0, %v1062
      %v1064 = vpop.f32.mrf.mxu0
      %1065 = vmatprep.mubr.bf16.mxu0 0
      %1066 = vmatmul.mubr.bf16.gmra.mxu0 %v781
      %v1067 = vpop.f32.mrf.mxu0
      %v1068 = vadd.f32 0.0, %v1067
      %v1069 = vpop.f32.mrf.mxu0
      %v1070 = vpop.f32.mrf.mxu0
      %v1071 = vadd.f32 0.0, %v1070
      %v1072 = vpop.f32.mrf.mxu0
      %1073 = vmatprep.mubr.bf16.mxu0 0
      %1074 = vmatmul.mubr.bf16.gmra.mxu0 %v784
      %v1075 = vpop.f32.mrf.mxu0
      %v1076 = vadd.f32 0.0, %v1075
      %v1077 = vpop.f32.mrf.mxu0
      %v1078 = vpop.f32.mrf.mxu0
      %v1079 = vadd.f32 0.0, %v1078
      %v1080 = vpop.f32.mrf.mxu0
      %1081 = vmatprep.mubr.bf16.mxu0 0
      %1082 = vmatmul.mubr.bf16.gmra.mxu0 %v787
      %v1083 = vpop.f32.mrf.mxu0
      %v1084 = vadd.f32 0.0, %v1083
      %v1085 = vpop.f32.mrf.mxu0
      %v1086 = vpop.f32.mrf.mxu0
      %v1087 = vadd.f32 0.0, %v1086
      %v1088 = vpop.f32.mrf.mxu0
      %1089 = vmatprep.mubr.bf16.mxu0 0
      %1090 = vmatmul.mubr.bf16.gmra.mxu0 %v790
      %v1091 = vpop.f32.mrf.mxu0
      %v1092 = vadd.f32 0.0, %v1091
      %v1093 = vpop.f32.mrf.mxu0
      %v1094 = vpop.f32.mrf.mxu0
      %v1095 = vadd.f32 0.0, %v1094
      %v1096 = vpop.f32.mrf.mxu0
      %1097 = vmatprep.mubr.bf16.mxu0 0
      %1098 = vmatmul.mubr.bf16.gmra.mxu0 %v793
      %v1099 = vpop.f32.mrf.mxu0
      %v1100 = vadd.f32 0.0, %v1099
      %v1101 = vpop.f32.mrf.mxu0
      %v1102 = vpop.f32.mrf.mxu0
      %v1103 = vadd.f32 0.0, %v1102
      %v1104 = vpop.f32.mrf.mxu0
      %1105 = vmatprep.mubr.bf16.mxu0 0
      %1106 = vmatmul.mubr.bf16.gmra.mxu0 %v796
      %v1107 = vpop.f32.mrf.mxu0
      %v1108 = vadd.f32 0.0, %v1107
      %v1109 = vpop.f32.mrf.mxu0
      %v1110 = vpop.f32.mrf.mxu0
      %v1111 = vadd.f32 0.0, %v1110
      %v1112 = vpop.f32.mrf.mxu0
      %1113 = vmatprep.mubr.bf16.mxu0 0
      %1114 = vmatmul.mubr.bf16.gmra.mxu0 %v799
      %v1115 = vpop.f32.mrf.mxu0
      %v1116 = vadd.f32 0.0, %v1115
      %v1117 = vpop.f32.mrf.mxu0
      %v1118 = vpop.f32.mrf.mxu0
      %v1119 = vadd.f32 0.0, %v1118
      %v1120 = vpop.f32.mrf.mxu0
      %1121 = vmatprep.mubr.bf16.mxu0 0
      %1122 = vmatmul.mubr.bf16.gmra.mxu0 %v802
      %v1123 = vpop.f32.mrf.mxu0
      %v1124 = vadd.f32 0.0, %v1123
      %v1125 = vpop.f32.mrf.mxu0
      %v1126 = vpop.f32.mrf.mxu0
      %v1127 = vadd.f32 0.0, %v1126
      %v1128 = vpop.f32.mrf.mxu0
      %1129 = vmatprep.mubr.bf16.mxu0 0
      %1130 = vmatmul.mubr.bf16.gmra.mxu0 %v805
      %v1131 = vpop.f32.mrf.mxu0
      %v1132 = vadd.f32 0.0, %v1131
      %v1133 = vpop.f32.mrf.mxu0
      %v1134 = vpop.f32.mrf.mxu0
      %v1135 = vadd.f32 0.0, %v1134
      %v1136 = vpop.f32.mrf.mxu0
      %1137 = vmatprep.mubr.bf16.mxu0 0
      %1138 = vmatmul.mubr.bf16.gmra.mxu0 %v808
      %v1139 = vpop.f32.mrf.mxu0
      %v1140 = vadd.f32 0.0, %v1139
      %v1141 = vpop.f32.mrf.mxu0
      %v1142 = vpop.f32.mrf.mxu0
      %v1143 = vadd.f32 0.0, %v1142
      %v1144 = vpop.f32.mrf.mxu0
      %1145 = vmatprep.mubr.bf16.mxu0 0
      %1146 = vmatmul.mubr.bf16.gmra.mxu0 %v811
      %v1147 = vpop.f32.mrf.mxu0
      %v1148 = vadd.f32 0.0, %v1147
      %v1149 = vpop.f32.mrf.mxu0
      %v1150 = vpop.f32.mrf.mxu0
      %v1151 = vadd.f32 0.0, %v1150
      %v1152 = vpop.f32.mrf.mxu0
      %1153 = vmatprep.mubr.bf16.mxu0 0
      %1154 = vmatmul.mubr.bf16.gmra.mxu0 %v814
      %v1155 = vpop.f32.mrf.mxu0
      %v1156 = vadd.f32 0.0, %v1155
      %v1157 = vpop.f32.mrf.mxu0
      %v1158 = vpop.f32.mrf.mxu0
      %v1159 = vadd.f32 0.0, %v1158
      %v1160 = vpop.f32.mrf.mxu0
      %1161 = vmatprep.mubr.bf16.mxu0 0
      %1162 = vmatmul.mubr.bf16.gmra.mxu0 %v817
      %v1163 = vpop.f32.mrf.mxu0
      %v1164 = vadd.f32 0.0, %v1163
      %v1165 = vpop.f32.mrf.mxu0
      %v1166 = vpop.f32.mrf.mxu0
      %v1167 = vadd.f32 0.0, %v1166
      %v1168 = vpop.f32.mrf.mxu0
      %1169 = vmatprep.mubr.bf16.mxu0 0
      %1170 = vmatmul.mubr.bf16.gmra.mxu0 %v820
      %v1171 = vpop.f32.mrf.mxu0
      %v1172 = vadd.f32 0.0, %v1171
      %v1173 = vpop.f32.mrf.mxu0
      %v1174 = vpop.f32.mrf.mxu0
      %v1175 = vadd.f32 0.0, %v1174
      %v1176 = vpop.f32.mrf.mxu0
      %1177 = vmatprep.mubr.bf16.mxu0 0
      %1178 = vmatmul.mubr.bf16.gmra.mxu0 %v823
      %v1179 = vpop.f32.mrf.mxu0
      %v1180 = vadd.f32 0.0, %v1179
      %v1181 = vpop.f32.mrf.mxu0
      %v1182 = vpop.f32.mrf.mxu0
      %v1183 = vadd.f32 0.0, %v1182
      %v1184 = vpop.f32.mrf.mxu0
      %1185 = vmatprep.mubr.bf16.mxu0 0
      %1186 = vmatmul.mubr.bf16.gmra.mxu0 %v826
      %v1187 = vpop.f32.mrf.mxu0
      %v1188 = vadd.f32 0.0, %v1187
      %v1189 = vpop.f32.mrf.mxu0
      %v1190 = vpop.f32.mrf.mxu0
      %v1191 = vadd.f32 0.0, %v1190
      %v1192 = vpop.f32.mrf.mxu0
      %1193 = vmatprep.mubr.bf16.mxu0 0
      %1194 = vmatmul.mubr.bf16.gmra.mxu0 %v829
      %v1195 = vpop.f32.mrf.mxu0
      %v1196 = vadd.f32 0.0, %v1195
      %v1197 = vpop.f32.mrf.mxu0
      %v1198 = vpop.f32.mrf.mxu0
      %v1199 = vadd.f32 0.0, %v1198
      %v1200 = vpop.f32.mrf.mxu0
      %1201 = vmatprep.mubr.bf16.mxu0 0
      %1202 = vmatmul.mubr.bf16.gmra.mxu0 %v832
      %v1203 = vpop.f32.mrf.mxu0
      %v1204 = vadd.f32 0.0, %v1203
      %v1205 = vpop.f32.mrf.mxu0
      %v1206 = vpop.f32.mrf.mxu0
      %v1207 = vadd.f32 0.0, %v1206
      %v1208 = vpop.f32.mrf.mxu0
      %1209 = vmatprep.mubr.bf16.mxu0 0
      %1210 = vmatmul.mubr.bf16.gmra.mxu0 %v835
      %v1211 = vpop.f32.mrf.mxu0
      %v1212 = vadd.f32 0.0, %v1211
      %v1213 = vpop.f32.mrf.mxu0
      %v1214 = vpop.f32.mrf.mxu0
      %v1215 = vadd.f32 0.0, %v1214
      %v1216 = vpop.f32.mrf.mxu0
      %1217 = vmatprep.mubr.bf16.mxu0 0
      %1218 = vmatmul.mubr.bf16.gmra.mxu0 %v838
      %v1219 = vpop.f32.mrf.mxu0
      %v1220 = vadd.f32 0.0, %v1219
      %v1221 = vpop.f32.mrf.mxu0
      %v1222 = vpop.f32.mrf.mxu0
      %v1223 = vadd.f32 0.0, %v1222
      %v1224 = vpop.f32.mrf.mxu0
      %1225 = vmatprep.mubr.bf16.mxu0 0
      %1226 = vmatmul.mubr.bf16.gmra.mxu0 %v841
      %v1227 = vpop.f32.mrf.mxu0
      %v1228 = vadd.f32 0.0, %v1227
      %v1229 = vpop.f32.mrf.mxu0
      %v1230 = vpop.f32.mrf.mxu0
      %v1231 = vadd.f32 0.0, %v1230
      %v1232 = vpop.f32.mrf.mxu0
      %1233 = vmatprep.mubr.bf16.mxu0 0
      %1234 = vmatmul.mubr.bf16.gmra.mxu0 %v844
      %v1235 = vpop.f32.mrf.mxu0
      %v1236 = vadd.f32 0.0, %v1235
      %v1237 = vpop.f32.mrf.mxu0
      %v1238 = vpop.f32.mrf.mxu0
      %v1239 = vadd.f32 0.0, %v1238
      %v1240 = vpop.f32.mrf.mxu0
      %1241 = vmatprep.mubr.bf16.mxu0 0
      %1242 = vmatmul.mubr.bf16.gmra.mxu0 %v847
      %v1243 = vpop.f32.mrf.mxu0
      %v1244 = vadd.f32 0.0, %v1243
      %v1245 = vpop.f32.mrf.mxu0
      %v1246 = vpop.f32.mrf.mxu0
      %v1247 = vadd.f32 0.0, %v1246
      %v1248 = vpop.f32.mrf.mxu0
      %1249 = vmatprep.mubr.bf16.mxu0 0
      %1250 = vmatmul.mubr.bf16.gmra.mxu0 %v850
      %v1251 = vpop.f32.mrf.mxu0
      %v1252 = vadd.f32 0.0, %v1251
      %v1253 = vpop.f32.mrf.mxu0
      %v1254 = vpop.f32.mrf.mxu0
      %v1255 = vadd.f32 0.0, %v1254
      %v1256 = vpop.f32.mrf.mxu0
      %1257 = vmatprep.mubr.bf16.mxu0 0
      %1258 = vmatmul.mubr.bf16.gmra.mxu0 %v853
      %v1259 = vpop.f32.mrf.mxu0
      %v1260 = vadd.f32 0.0, %v1259
      %v1261 = vpop.f32.mrf.mxu0
      %v1262 = vpop.f32.mrf.mxu0
      %v1263 = vadd.f32 0.0, %v1262
      %v1264 = vpop.f32.mrf.mxu0
      %1265 = vmatprep.mubr.bf16.mxu0 0
      %1266 = vmatmul.mubr.bf16.gmra.mxu0 %v856
      %v1267 = vpop.f32.mrf.mxu0
      %v1268 = vadd.f32 0.0, %v1267
      %v1269 = vpop.f32.mrf.mxu0
      %v1270 = vpop.f32.mrf.mxu0
      %v1271 = vadd.f32 0.0, %v1270
      %v1272 = vpop.f32.mrf.mxu0
      %1273 = vmatprep.mubr.bf16.mxu0 0
      %1274 = vmatmul.mubr.bf16.gmra.mxu0 %v859
      %v1275 = vpop.f32.mrf.mxu0
      %v1276 = vadd.f32 0.0, %v1275
      %v1277 = vpop.f32.mrf.mxu0
      %v1278 = vpop.f32.mrf.mxu0
      %v1279 = vadd.f32 0.0, %v1278
      %v1280 = vpop.f32.mrf.mxu0
      %1281 = vmatprep.mubr.bf16.mxu0 0
      %1282 = vmatmul.mubr.bf16.gmra.mxu0 %v862
      %v1283 = vpop.f32.mrf.mxu0
      %v1284 = vadd.f32 0.0, %v1283
      %v1285 = vpop.f32.mrf.mxu0
      %v1286 = vpop.f32.mrf.mxu0
      %v1287 = vadd.f32 0.0, %v1286
      %v1288 = vpop.f32.mrf.mxu0
      %1289 = vmatprep.mubr.bf16.mxu0 0
      %1290 = vmatmul.mubr.bf16.gmra.mxu0 %v865
      %v1291 = vpop.f32.mrf.mxu0
      %v1292 = vadd.f32 0.0, %v1291
      %v1293 = vpop.f32.mrf.mxu0
      %v1294 = vpop.f32.mrf.mxu0
      %v1295 = vadd.f32 0.0, %v1294
      %v1296 = vpop.f32.mrf.mxu0
      %1297 = vmatprep.mubr.bf16.mxu0 0
      %1298 = vmatmul.mubr.bf16.gmra.mxu0 %v868
      %v1299 = vpop.f32.mrf.mxu0
      %v1300 = vadd.f32 0.0, %v1299
      %v1301 = vpop.f32.mrf.mxu0
      %v1302 = vpop.f32.mrf.mxu0
      %v1303 = vadd.f32 0.0, %v1302
      %v1304 = vpop.f32.mrf.mxu0
      %1305 = vmatprep.mubr.bf16.mxu0 0
      %1306 = vmatmul.mubr.bf16.gmra.mxu0 %v871
      %v1307 = vpop.f32.mrf.mxu0
      %v1308 = vadd.f32 0.0, %v1307
      %v1309 = vpop.f32.mrf.mxu0
      %v1310 = vpop.f32.mrf.mxu0
      %v1311 = vadd.f32 0.0, %v1310
      %v1312 = vpop.f32.mrf.mxu0
      %1313 = vmatprep.mubr.bf16.mxu0 0
      %1314 = vmatmul.mubr.bf16.gmra.mxu0 %v874
      %v1315 = vpop.f32.mrf.mxu0
      %v1316 = vadd.f32 0.0, %v1315
      %v1317 = vpop.f32.mrf.mxu0
      %v1318 = vpop.f32.mrf.mxu0
      %v1319 = vadd.f32 0.0, %v1318
      %v1320 = vpop.f32.mrf.mxu0
      %1321 = vmatprep.mubr.bf16.mxu0 0
      %1322 = vmatmul.mubr.bf16.gmra.mxu0 %v877
      %v1323 = vpop.f32.mrf.mxu0
      %v1324 = vadd.f32 0.0, %v1323
      %v1325 = vpop.f32.mrf.mxu0
      %v1326 = vpop.f32.mrf.mxu0
      %v1327 = vadd.f32 0.0, %v1326
      %v1328 = vpop.f32.mrf.mxu0
      %1329 = vmatprep.mubr.bf16.mxu0 0
      %1330 = vmatmul.mubr.bf16.gmra.mxu0 %v880
      %v1331 = vpop.f32.mrf.mxu0
      %v1332 = vadd.f32 0.0, %v1331
      %v1333 = vpop.f32.mrf.mxu0
      %v1334 = vpop.f32.mrf.mxu0
      %v1335 = vadd.f32 0.0, %v1334
      %v1336 = vpop.f32.mrf.mxu0
      %1337 = vmatprep.mubr.bf16.mxu0 0
      %1338 = vmatmul.mubr.bf16.gmra.mxu0 %v883
      %v1339 = vpop.f32.mrf.mxu0
      %v1340 = vadd.f32 0.0, %v1339
      %v1341 = vpop.f32.mrf.mxu0
      %v1342 = vpop.f32.mrf.mxu0
      %v1343 = vpop.f32.mrf.mxu0
      %1344 = vdwg.mxu0
      %vm1345 = vcmask 785408
      %1346 = vst.msk [vmem:[#allocation2] sm:$0xff] %vm1345, %v924
      %1347 = vst.msk [vmem:[#allocation2 + $0x8] sm:$0xff] %vm1345, %v927
      %1348 = vst.msk [vmem:[#allocation2 + $0x10] sm:$0xff] %vm1345, %v932
      %1349 = vst.msk [vmem:[#allocation2 + $0x18] sm:$0xff] %vm1345, %v935
      %1350 = vst.msk [vmem:[#allocation2 + $0x20] sm:$0xff] %vm1345, %v940
      %1351 = vst.msk [vmem:[#allocation2 + $0x28] sm:$0xff] %vm1345, %v943
      %1352 = vst.msk [vmem:[#allocation2 + $0x30] sm:$0xff] %vm1345, %v948
      %1353 = vst.msk [vmem:[#allocation2 + $0x38] sm:$0xff] %vm1345, %v951
      %1354 = vst.msk [vmem:[#allocation2 + $0x40] sm:$0xff] %vm1345, %v956
      %1355 = vst.msk [vmem:[#allocation2 + $0x48] sm:$0xff] %vm1345, %v959
      %1356 = vst.msk [vmem:[#allocation2 + $0x50] sm:$0xff] %vm1345, %v964
      %1357 = vst.msk [vmem:[#allocation2 + $0x58] sm:$0xff] %vm1345, %v967
      %1358 = vst.msk [vmem:[#allocation2 + $0x60] sm:$0xff] %vm1345, %v972
      %1359 = vst.msk [vmem:[#allocation2 + $0x68] sm:$0xff] %vm1345, %v975
      %1360 = vst.msk [vmem:[#allocation2 + $0x70] sm:$0xff] %vm1345, %v980
      %1361 = vst.msk [vmem:[#allocation2 + $0x78] sm:$0xff] %vm1345, %v983
      %1362 = vst.msk [vmem:[#allocation2 + $0x80] sm:$0xff] %vm1345, %v988
      %1363 = vst.msk [vmem:[#allocation2 + $0x88] sm:$0xff] %vm1345, %v991
      %1364 = vst.msk [vmem:[#allocation2 + $0x90] sm:$0xff] %vm1345, %v996
      %1365 = vst.msk [vmem:[#allocation2 + $0x98] sm:$0xff] %vm1345, %v999
      %1366 = vst.msk [vmem:[#allocation2 + $0xa0] sm:$0xff] %vm1345, %v1004
      %1367 = vst.msk [vmem:[#allocation2 + $0xa8] sm:$0xff] %vm1345, %v1007
      %1368 = vst.msk [vmem:[#allocation2 + $0xb0] sm:$0xff] %vm1345, %v1012
      %1369 = vst.msk [vmem:[#allocation2 + $0xb8] sm:$0xff] %vm1345, %v1015
      %1370 = vst.msk [vmem:[#allocation2 + $0xc0] sm:$0xff] %vm1345, %v1020
      %1371 = vst.msk [vmem:[#allocation2 + $0xc8] sm:$0xff] %vm1345, %v1023
      %1372 = vst.msk [vmem:[#allocation2 + $0xd0] sm:$0xff] %vm1345, %v1028
      %1373 = vst.msk [vmem:[#allocation2 + $0xd8] sm:$0xff] %vm1345, %v1031
      %1374 = vst.msk [vmem:[#allocation2 + $0xe0] sm:$0xff] %vm1345, %v1036
      %1375 = vst.msk [vmem:[#allocation2 + $0xe8] sm:$0xff] %vm1345, %v1039
      %1376 = vst.msk [vmem:[#allocation2 + $0xf0] sm:$0xff] %vm1345, %v1044
      %1377 = vst.msk [vmem:[#allocation2 + $0xf8] sm:$0xff] %vm1345, %v1047
      %1378 = vst.msk [vmem:[#allocation2 + $0x100] sm:$0xff] %vm1345, %v1052
      %1379 = vst.msk [vmem:[#allocation2 + $0x108] sm:$0xff] %vm1345, %v1055
      %1380 = vst.msk [vmem:[#allocation2 + $0x110] sm:$0xff] %vm1345, %v1060
      %1381 = vst.msk [vmem:[#allocation2 + $0x118] sm:$0xff] %vm1345, %v1063
      %1382 = vst.msk [vmem:[#allocation2 + $0x120] sm:$0xff] %vm1345, %v1068
      %1383 = vst.msk [vmem:[#allocation2 + $0x128] sm:$0xff] %vm1345, %v1071
      %1384 = vst.msk [vmem:[#allocation2 + $0x130] sm:$0xff] %vm1345, %v1076
      %1385 = vst.msk [vmem:[#allocation2 + $0x138] sm:$0xff] %vm1345, %v1079
      %1386 = vst.msk [vmem:[#allocation2 + $0x140] sm:$0xff] %vm1345, %v1084
      %1387 = vst.msk [vmem:[#allocation2 + $0x148] sm:$0xff] %vm1345, %v1087
      %1388 = vst.msk [vmem:[#allocation2 + $0x150] sm:$0xff] %vm1345, %v1092
      %1389 = vst.msk [vmem:[#allocation2 + $0x158] sm:$0xff] %vm1345, %v1095
      %1390 = vst.msk [vmem:[#allocation2 + $0x160] sm:$0xff] %vm1345, %v1100
      %1391 = vst.msk [vmem:[#allocation2 + $0x168] sm:$0xff] %vm1345, %v1103
      %1392 = vst.msk [vmem:[#allocation2 + $0x170] sm:$0xff] %vm1345, %v1108
      %1393 = vst.msk [vmem:[#allocation2 + $0x178] sm:$0xff] %vm1345, %v1111
      %1394 = vst.msk [vmem:[#allocation2 + $0x180] sm:$0xff] %vm1345, %v1116
      %1395 = vst.msk [vmem:[#allocation2 + $0x188] sm:$0xff] %vm1345, %v1119
      %1396 = vst.msk [vmem:[#allocation2 + $0x190] sm:$0xff] %vm1345, %v1124
      %1397 = vst.msk [vmem:[#allocation2 + $0x198] sm:$0xff] %vm1345, %v1127
      %1398 = vst.msk [vmem:[#allocation2 + $0x1a0] sm:$0xff] %vm1345, %v1132
      %1399 = vst.msk [vmem:[#allocation2 + $0x1a8] sm:$0xff] %vm1345, %v1135
      %1400 = vst.msk [vmem:[#allocation2 + $0x1b0] sm:$0xff] %vm1345, %v1140
      %1401 = vst.msk [vmem:[#allocation2 + $0x1b8] sm:$0xff] %vm1345, %v1143
      %1402 = vst.msk [vmem:[#allocation2 + $0x1c0] sm:$0xff] %vm1345, %v1148
      %1403 = vst.msk [vmem:[#allocation2 + $0x1c8] sm:$0xff] %vm1345, %v1151
      %1404 = vst.msk [vmem:[#allocation2 + $0x1d0] sm:$0xff] %vm1345, %v1156
      %1405 = vst.msk [vmem:[#allocation2 + $0x1d8] sm:$0xff] %vm1345, %v1159
      %1406 = vst.msk [vmem:[#allocation2 + $0x1e0] sm:$0xff] %vm1345, %v1164
      %1407 = vst.msk [vmem:[#allocation2 + $0x1e8] sm:$0xff] %vm1345, %v1167
      %1408 = vst.msk [vmem:[#allocation2 + $0x1f0] sm:$0xff] %vm1345, %v1172
      %1409 = vst.msk [vmem:[#allocation2 + $0x1f8] sm:$0xff] %vm1345, %v1175
      %1410 = vst.msk [vmem:[#allocation2 + $0x200] sm:$0xff] %vm1345, %v1180
      %1411 = vst.msk [vmem:[#allocation2 + $0x208] sm:$0xff] %vm1345, %v1183
      %1412 = vst.msk [vmem:[#allocation2 + $0x210] sm:$0xff] %vm1345, %v1188
      %1413 = vst.msk [vmem:[#allocation2 + $0x218] sm:$0xff] %vm1345, %v1191
      %1414 = vst.msk [vmem:[#allocation2 + $0x220] sm:$0xff] %vm1345, %v1196
      %1415 = vst.msk [vmem:[#allocation2 + $0x228] sm:$0xff] %vm1345, %v1199
      %1416 = vst.msk [vmem:[#allocation2 + $0x230] sm:$0xff] %vm1345, %v1204
      %1417 = vst.msk [vmem:[#allocation2 + $0x238] sm:$0xff] %vm1345, %v1207
      %1418 = vst.msk [vmem:[#allocation2 + $0x240] sm:$0xff] %vm1345, %v1212
      %1419 = vst.msk [vmem:[#allocation2 + $0x248] sm:$0xff] %vm1345, %v1215
      %1420 = vst.msk [vmem:[#allocation2 + $0x250] sm:$0xff] %vm1345, %v1220
      %1421 = vst.msk [vmem:[#allocation2 + $0x258] sm:$0xff] %vm1345, %v1223
      %1422 = vst.msk [vmem:[#allocation2 + $0x260] sm:$0xff] %vm1345, %v1228
      %1423 = vst.msk [vmem:[#allocation2 + $0x268] sm:$0xff] %vm1345, %v1231
      %1424 = vst.msk [vmem:[#allocation2 + $0x270] sm:$0xff] %vm1345, %v1236
      %1425 = vst.msk [vmem:[#allocation2 + $0x278] sm:$0xff] %vm1345, %v1239
      %1426 = vst.msk [vmem:[#allocation2 + $0x280] sm:$0xff] %vm1345, %v1244
      %1427 = vst.msk [vmem:[#allocation2 + $0x288] sm:$0xff] %vm1345, %v1247
      %1428 = vst.msk [vmem:[#allocation2 + $0x290] sm:$0xff] %vm1345, %v1252
      %1429 = vst.msk [vmem:[#allocation2 + $0x298] sm:$0xff] %vm1345, %v1255
      %1430 = vst.msk [vmem:[#allocation2 + $0x2a0] sm:$0xff] %vm1345, %v1260
      %1431 = vst.msk [vmem:[#allocation2 + $0x2a8] sm:$0xff] %vm1345, %v1263
      %1432 = vst.msk [vmem:[#allocation2 + $0x2b0] sm:$0xff] %vm1345, %v1268
      %1433 = vst.msk [vmem:[#allocation2 + $0x2b8] sm:$0xff] %vm1345, %v1271
      %1434 = vst.msk [vmem:[#allocation2 + $0x2c0] sm:$0xff] %vm1345, %v1276
      %1435 = vst.msk [vmem:[#allocation2 + $0x2c8] sm:$0xff] %vm1345, %v1279
      %1436 = vst.msk [vmem:[#allocation2 + $0x2d0] sm:$0xff] %vm1345, %v1284
      %1437 = vst.msk [vmem:[#allocation2 + $0x2d8] sm:$0xff] %vm1345, %v1287
      %1438 = vst.msk [vmem:[#allocation2 + $0x2e0] sm:$0xff] %vm1345, %v1292
      %1439 = vst.msk [vmem:[#allocation2 + $0x2e8] sm:$0xff] %vm1345, %v1295
      %1440 = vst.msk [vmem:[#allocation2 + $0x2f0] sm:$0xff] %vm1345, %v1300
      %1441 = vst.msk [vmem:[#allocation2 + $0x2f8] sm:$0xff] %vm1345, %v1303
      %1442 = vst.msk [vmem:[#allocation2 + $0x300] sm:$0xff] %vm1345, %v1308
      %1443 = vst.msk [vmem:[#allocation2 + $0x308] sm:$0xff] %vm1345, %v1311
      %1444 = vst.msk [vmem:[#allocation2 + $0x310] sm:$0xff] %vm1345, %v1316
      %1445 = vst.msk [vmem:[#allocation2 + $0x318] sm:$0xff] %vm1345, %v1319
      %1446 = vst.msk [vmem:[#allocation2 + $0x320] sm:$0xff] %vm1345, %v1324
      %1447 = vst.msk [vmem:[#allocation2 + $0x328] sm:$0xff] %vm1345, %v1327
      %1448 = vst.msk [vmem:[#allocation2 + $0x330] sm:$0xff] %vm1345, %v1332
      %1449 = vst.msk [vmem:[#allocation2 + $0x338] sm:$0xff] %vm1345, %v1335
      %1450 = vst.msk [vmem:[#allocation2 + $0x340] sm:$0xff] %vm1345, %v1340
      %v1451 = vld [vmem:[%s255 + $0x1b8] sm:$0xe]
      %v1452 = vld [vmem:[%s255 + $0x1bc] sm:$0xf]
      %v1453 = vld [vmem:[%s255 + $0x1c0] sm:$0xf]
      %v1454 = vld [vmem:[%s255 + $0x1c4] sm:$0xf]
      %v1455 = vld [vmem:[%s255 + $0x1c8] sm:$0xf]
      %v1456 = vld [vmem:[%s255 + $0x1cc] sm:$0xf]
      %v1457 = vld [vmem:[%s255 + $0x1d0] sm:$0xf]
      %v1458 = vld [vmem:[%s255 + $0x1d4] sm:$0xf]
      %v1459 = vld [vmem:[%s255 + $0x1d8] sm:$0xf]
      %v1460 = vld [vmem:[%s255 + $0x1dc] sm:$0xf]
      %v1461 = vld [vmem:[%s255 + $0x1e0] sm:$0xf]
      %v1462 = vld [vmem:[%s255 + $0x1e4] sm:$0xf]
      %v1463 = vld [vmem:[%s255 + $0x1e8] sm:$0xf]
      %v1464 = vld [vmem:[%s255 + $0x1ec] sm:$0xf]
      %v1465 = vld [vmem:[%s255 + $0x1f0] sm:$0xf]
      %v1466 = vld [vmem:[%s255 + $0x1f4] sm:$0xf]
      %v1467 = vld [vmem:[%s255 + $0x1f8] sm:$0xf]
      %v1468 = vld [vmem:[%s255 + $0x1fc] sm:$0xf]
      %v1469 = vld [vmem:[%s255 + $0x200] sm:$0xf]
      %v1470 = vld [vmem:[%s255 + $0x204] sm:$0xf]
      %v1471 = vld [vmem:[%s255 + $0x208] sm:$0xf]
      %v1472 = vld [vmem:[%s255 + $0x20c] sm:$0xf]
      %v1473 = vld [vmem:[%s255 + $0x210] sm:$0xf]
      %v1474 = vld [vmem:[%s255 + $0x214] sm:$0xf]
      %v1475 = vld [vmem:[%s255 + $0x218] sm:$0xf]
      %v1476 = vld [vmem:[%s255 + $0x21c] sm:$0xf]
      %v1477 = vld [vmem:[%s255 + $0x220] sm:$0xf]
      %v1478 = vld [vmem:[%s255 + $0x224] sm:$0xf]
      %v1479 = vld [vmem:[%s255 + $0x228] sm:$0xf]
      %v1480 = vld [vmem:[%s255 + $0x22c] sm:$0xf]
      %v1481 = vld [vmem:[%s255 + $0x230] sm:$0xf]
      %v1482 = vld [vmem:[%s255 + $0x234] sm:$0xf]
      %v1483 = vld [vmem:[%s255 + $0x238] sm:$0xf]
      %v1484 = vld [vmem:[%s255 + $0x23c] sm:$0xf]
      %v1485 = vld [vmem:[%s255 + $0x240] sm:$0xf]
      %v1486 = vld [vmem:[%s255 + $0x244] sm:$0xf]
      %v1487 = vld [vmem:[%s255 + $0x248] sm:$0xf]
      %v1488 = vld [vmem:[%s255 + $0x24c] sm:$0xf]
      %v1489 = vld [vmem:[%s255 + $0x250] sm:$0xf]
      %v1490 = vld [vmem:[%s255 + $0x254] sm:$0xf]
      %v1491 = vld [vmem:[%s255 + $0x258] sm:$0xf]
      %v1492 = vld [vmem:[%s255 + $0x25c] sm:$0xf]
      %v1493 = vld [vmem:[%s255 + $0x260] sm:$0xf]
      %v1494 = vld [vmem:[%s255 + $0x264] sm:$0xf]
      %v1495 = vld [vmem:[%s255 + $0x268] sm:$0xf]
      %v1496 = vld [vmem:[%s255 + $0x26c] sm:$0xf]
      %v1497 = vld [vmem:[%s255 + $0x270] sm:$0xf]
      %v1498 = vld [vmem:[%s255 + $0x274] sm:$0xf]
      %v1499 = vld [vmem:[%s255 + $0x278] sm:$0xf]
      %v1500 = vld [vmem:[%s255 + $0x27c] sm:$0xf]
      %v1501 = vld [vmem:[%s255 + $0x280] sm:$0xf]
      %v1502 = vld [vmem:[%s255 + $0x284] sm:$0xf]
      %v1503 = vld [vmem:[%s255 + $0x288] sm:$0xf]
      %v1504 = vld [vmem:[%s255 + $0x28c] sm:$0xf]
      %v1505 = vld [vmem:[%s255 + $0x290] sm:$0xf]
      %v1506 = vld [vmem:[%s255 + $0x294] sm:$0xf]
      %v1507 = vld [vmem:[%s255 + $0x298] sm:$0xf]
      %v1508 = vld [vmem:[%s255 + $0x29c] sm:$0xf]
      %v1509 = vld [vmem:[%s255 + $0x2a0] sm:$0xf]
      %v1510 = vld [vmem:[%s255 + $0x2a4] sm:$0xf]
      %v1511 = vld [vmem:[%s255 + $0x2a8] sm:$0xf]
      %v1512 = vld [vmem:[%s255 + $0x2ac] sm:$0xf]
      %v1513 = vld [vmem:[%s255 + $0x2b0] sm:$0xf]
      %v1514 = vld [vmem:[%s255 + $0x2b4] sm:$0xf]
      %v1515 = vld [vmem:[%s255 + $0x2b8] sm:$0xf]
      %v1516 = vld [vmem:[%s255 + $0x2bc] sm:$0xf]
      %v1517 = vld [vmem:[%s255 + $0x2c0] sm:$0xf]
      %v1518 = vld [vmem:[%s255 + $0x2c4] sm:$0xf]
      %v1519 = vld [vmem:[%s255 + $0x2c8] sm:$0xf]
      %v1520 = vld [vmem:[%s255 + $0x2cc] sm:$0xf]
      %v1521 = vld [vmem:[%s255 + $0x2d0] sm:$0xf]
      %v1522 = vld [vmem:[%s255 + $0x2d4] sm:$0xf]
      %v1523 = vld [vmem:[%s255 + $0x2d8] sm:$0xf]
      %v1524 = vld [vmem:[%s255 + $0x2dc] sm:$0xf]
      %v1525 = vld [vmem:[%s255 + $0x2e0] sm:$0xf]
      %v1526 = vld [vmem:[%s255 + $0x2e4] sm:$0xf]
      %v1527 = vld [vmem:[%s255 + $0x2e8] sm:$0xf]
      %v1528 = vld [vmem:[%s255 + $0x2ec] sm:$0xf]
      %v1529 = vld [vmem:[%s255 + $0x2f0] sm:$0xf]
      %v1530 = vld [vmem:[%s255 + $0x2f4] sm:$0xf]
      %v1531 = vld [vmem:[%s255 + $0x2f8] sm:$0xf]
      %v1532 = vld [vmem:[%s255 + $0x2fc] sm:$0xf]
      %v1533 = vld [vmem:[%s255 + $0x300] sm:$0xf]
      %v1534 = vld [vmem:[%s255 + $0x304] sm:$0xf]
      %v1535 = vld [vmem:[%s255 + $0x308] sm:$0xf]
      %v1536 = vld [vmem:[%s255 + $0x30c] sm:$0xf]
      %v1537 = vld [vmem:[%s255 + $0x310] sm:$0xf]
      %v1538 = vld [vmem:[%s255 + $0x314] sm:$0xf]
      %v1539 = vld [vmem:[%s255 + $0x318] sm:$0xf]
      %v1540 = vld [vmem:[%s255 + $0x31c] sm:$0xf]
      %v1541 = vld [vmem:[%s255 + $0x320] sm:$0xf]
      %v1542 = vld [vmem:[%s255 + $0x324] sm:$0xf]
      %v1543 = vld [vmem:[%s255 + $0x328] sm:$0xf]
      %v1544 = vld [vmem:[%s255 + $0x32c] sm:$0xf]
      %v1545 = vld [vmem:[%s255 + $0x330] sm:$0xf]
      %v1546 = vld [vmem:[%s255 + $0x334] sm:$0xf]
      %v1547 = vld [vmem:[%s255 + $0x338] sm:$0xf]
      %v1548 = vld [vmem:[%s255 + $0x33c] sm:$0xf]
      %v1549 = vld [vmem:[%s255 + $0x340] sm:$0xf]
      %v1550 = vld [vmem:[%s255 + $0x344] sm:$0xf]
      %v1551 = vld [vmem:[%s255 + $0x348] sm:$0xf]
      %v1552 = vld [vmem:[%s255 + $0x34c] sm:$0xf]
      %v1553 = vld [vmem:[%s255 + $0x350] sm:$0xf]
      %v1554 = vld [vmem:[%s255 + $0x354] sm:$0xf]
      %v1555 = vld [vmem:[%s255 + $0x358] sm:$0xf]
      %v1556 = vld [vmem:[%s255 + $0x35c] sm:$0x1]
      %s1557 = scalar_lea.vmem %s2, 2
      %v1558 = vld [vmem:[%s1557] sm:$0x3]
      %v1665 = vunpack.c.l.b16 %v1451
      %v1666 = vunpack.c.l.b16 %v1452
      %v1667 = vunpack.c.l.b16 %v1453
      %v1668 = vunpack.c.l.b16 %v1454
      %v1669 = vunpack.c.l.b16 %v1455
      %v1670 = vunpack.c.l.b16 %v1456
      %v1671 = vunpack.c.l.b16 %v1457
      %v1672 = vunpack.c.l.b16 %v1458
      %v1673 = vunpack.c.l.b16 %v1459
      %v1674 = vunpack.c.l.b16 %v1460
      %v1675 = vunpack.c.l.b16 %v1461
      %v1676 = vunpack.c.l.b16 %v1462
      %v1677 = vunpack.c.l.b16 %v1463
      %v1678 = vunpack.c.l.b16 %v1464
      %v1679 = vunpack.c.l.b16 %v1465
      %v1680 = vunpack.c.l.b16 %v1466
      %v1681 = vunpack.c.l.b16 %v1467
      %v1682 = vunpack.c.l.b16 %v1468
      %v1683 = vunpack.c.l.b16 %v1469
      %v1684 = vunpack.c.l.b16 %v1470
      %v1685 = vunpack.c.l.b16 %v1471
      %v1686 = vunpack.c.l.b16 %v1472
      %v1687 = vunpack.c.l.b16 %v1473
      %v1688 = vunpack.c.l.b16 %v1474
      %v1689 = vunpack.c.l.b16 %v1475
      %v1690 = vunpack.c.l.b16 %v1476
      %v1691 = vunpack.c.l.b16 %v1477
      %v1692 = vunpack.c.l.b16 %v1478
      %v1693 = vunpack.c.l.b16 %v1479
      %v1694 = vunpack.c.l.b16 %v1480
      %v1695 = vunpack.c.l.b16 %v1481
      %v1696 = vunpack.c.l.b16 %v1482
      %v1697 = vunpack.c.l.b16 %v1483
      %v1698 = vunpack.c.l.b16 %v1484
      %v1699 = vunpack.c.l.b16 %v1485
      %v1700 = vunpack.c.l.b16 %v1486
      %v1701 = vunpack.c.l.b16 %v1487
      %v1702 = vunpack.c.l.b16 %v1488
      %v1703 = vunpack.c.l.b16 %v1489
      %v1704 = vunpack.c.l.b16 %v1490
      %v1705 = vunpack.c.l.b16 %v1491
      %v1706 = vunpack.c.l.b16 %v1492
      %v1707 = vunpack.c.l.b16 %v1493
      %v1708 = vunpack.c.l.b16 %v1494
      %v1709 = vunpack.c.l.b16 %v1495
      %v1710 = vunpack.c.l.b16 %v1496
      %v1711 = vunpack.c.l.b16 %v1497
      %v1712 = vunpack.c.l.b16 %v1498
      %v1713 = vunpack.c.l.b16 %v1499
      %v1714 = vunpack.c.l.b16 %v1500
      %v1715 = vunpack.c.l.b16 %v1501
      %v1716 = vunpack.c.l.b16 %v1502
      %v1717 = vunpack.c.l.b16 %v1503
      %v1718 = vunpack.c.l.b16 %v1504
      %v1719 = vunpack.c.l.b16 %v1505
      %v1720 = vunpack.c.l.b16 %v1506
      %v1721 = vunpack.c.l.b16 %v1507
      %v1722 = vunpack.c.l.b16 %v1508
      %v1723 = vunpack.c.l.b16 %v1509
      %v1724 = vunpack.c.l.b16 %v1510
      %v1725 = vunpack.c.l.b16 %v1511
      %v1726 = vunpack.c.l.b16 %v1512
      %v1727 = vunpack.c.l.b16 %v1513
      %v1728 = vunpack.c.l.b16 %v1514
      %v1729 = vunpack.c.l.b16 %v1515
      %v1730 = vunpack.c.l.b16 %v1516
      %v1731 = vunpack.c.l.b16 %v1517
      %v1732 = vunpack.c.l.b16 %v1518
      %v1733 = vunpack.c.l.b16 %v1519
      %v1734 = vunpack.c.l.b16 %v1520
      %v1735 = vunpack.c.l.b16 %v1521
      %v1736 = vunpack.c.l.b16 %v1522
      %v1737 = vunpack.c.l.b16 %v1523
      %v1738 = vunpack.c.l.b16 %v1524
      %v1739 = vunpack.c.l.b16 %v1525
      %v1740 = vunpack.c.l.b16 %v1526
      %v1741 = vunpack.c.l.b16 %v1527
      %v1742 = vunpack.c.l.b16 %v1528
      %v1743 = vunpack.c.l.b16 %v1529
      %v1744 = vunpack.c.l.b16 %v1530
      %v1745 = vunpack.c.l.b16 %v1531
      %v1746 = vunpack.c.l.b16 %v1532
      %v1747 = vunpack.c.l.b16 %v1533
      %v1748 = vunpack.c.l.b16 %v1534
      %v1749 = vunpack.c.l.b16 %v1535
      %v1750 = vunpack.c.l.b16 %v1536
      %v1751 = vunpack.c.l.b16 %v1537
      %v1752 = vunpack.c.l.b16 %v1538
      %v1753 = vunpack.c.l.b16 %v1539
      %v1754 = vunpack.c.l.b16 %v1540
      %v1755 = vunpack.c.l.b16 %v1541
      %v1756 = vunpack.c.l.b16 %v1542
      %v1757 = vunpack.c.l.b16 %v1543
      %v1758 = vunpack.c.l.b16 %v1544
      %v1759 = vunpack.c.l.b16 %v1545
      %v1760 = vunpack.c.l.b16 %v1546
      %v1761 = vunpack.c.l.b16 %v1547
      %v1762 = vunpack.c.l.b16 %v1548
      %v1763 = vunpack.c.l.b16 %v1549
      %v1764 = vunpack.c.l.b16 %v1550
      %v1765 = vunpack.c.l.b16 %v1551
      %v1766 = vunpack.c.l.b16 %v1552
      %v1767 = vunpack.c.l.b16 %v1553
      %v1768 = vunpack.c.l.b16 %v1554
      %v1769 = vunpack.c.l.b16 %v1555
      %v1770 = vunpack.c.l.b16 %v1556
      %v1771 = vpack.c.b16 %v1666, %v1665
      %v1772 = vpack.c.b16 %v1668, %v1667
      %v1773 = vpack.c.b16 %v1670, %v1669
      %v1774 = vpack.c.b16 %v1672, %v1671
      %v1775 = vpack.c.b16 %v1674, %v1673
      %v1776 = vpack.c.b16 %v1676, %v1675
      %v1777 = vpack.c.b16 %v1678, %v1677
      %v1778 = vpack.c.b16 %v1680, %v1679
      %v1779 = vpack.c.b16 %v1682, %v1681
      %v1780 = vpack.c.b16 %v1684, %v1683
      %v1781 = vpack.c.b16 %v1686, %v1685
      %v1782 = vpack.c.b16 %v1688, %v1687
      %v1783 = vpack.c.b16 %v1690, %v1689
      %v1784 = vpack.c.b16 %v1692, %v1691
      %v1785 = vpack.c.b16 %v1694, %v1693
      %v1786 = vpack.c.b16 %v1696, %v1695
      %v1787 = vpack.c.b16 %v1698, %v1697
      %v1788 = vpack.c.b16 %v1700, %v1699
      %v1789 = vpack.c.b16 %v1702, %v1701
      %v1790 = vpack.c.b16 %v1704, %v1703
      %v1791 = vpack.c.b16 %v1706, %v1705
      %v1792 = vpack.c.b16 %v1708, %v1707
      %v1793 = vpack.c.b16 %v1710, %v1709
      %v1794 = vpack.c.b16 %v1712, %v1711
      %v1795 = vpack.c.b16 %v1714, %v1713
      %v1796 = vpack.c.b16 %v1716, %v1715
      %v1797 = vpack.c.b16 %v1718, %v1717
      %v1798 = vpack.c.b16 %v1720, %v1719
      %v1799 = vpack.c.b16 %v1722, %v1721
      %v1800 = vpack.c.b16 %v1724, %v1723
      %v1801 = vpack.c.b16 %v1726, %v1725
      %v1802 = vpack.c.b16 %v1728, %v1727
      %v1803 = vpack.c.b16 %v1730, %v1729
      %v1804 = vpack.c.b16 %v1732, %v1731
      %v1805 = vpack.c.b16 %v1734, %v1733
      %v1806 = vpack.c.b16 %v1736, %v1735
      %v1807 = vpack.c.b16 %v1738, %v1737
      %v1808 = vpack.c.b16 %v1740, %v1739
      %v1809 = vpack.c.b16 %v1742, %v1741
      %v1810 = vpack.c.b16 %v1744, %v1743
      %v1811 = vpack.c.b16 %v1746, %v1745
      %v1812 = vpack.c.b16 %v1748, %v1747
      %v1813 = vpack.c.b16 %v1750, %v1749
      %v1814 = vpack.c.b16 %v1752, %v1751
      %v1815 = vpack.c.b16 %v1754, %v1753
      %v1816 = vpack.c.b16 %v1756, %v1755
      %v1817 = vpack.c.b16 %v1758, %v1757
      %v1818 = vpack.c.b16 %v1760, %v1759
      %v1819 = vpack.c.b16 %v1762, %v1761
      %v1820 = vpack.c.b16 %v1764, %v1763
      %v1821 = vpack.c.b16 %v1766, %v1765
      %v1822 = vpack.c.b16 %v1768, %v1767
      %v1823 = vpack.c.b16 %v1770, %v1769
      %vm1824 = vcmask 1046528
      %v1825 = vrot.slane %v1771, 1
      %v1826 = vrot.slane %v1772, 1
      %v1827 = vsel %vm1824, %v1825, %v1826
      %v1828 = vrot.slane %v1773, 1
      %v1829 = vsel %vm1824, %v1826, %v1828
      %v1830 = vrot.slane %v1774, 1
      %v1831 = vsel %vm1824, %v1828, %v1830
      %v1832 = vrot.slane %v1775, 1
      %v1833 = vsel %vm1824, %v1830, %v1832
      %v1834 = vrot.slane %v1776, 1
      %v1835 = vsel %vm1824, %v1832, %v1834
      %v1836 = vrot.slane %v1777, 1
      %v1837 = vsel %vm1824, %v1834, %v1836
      %v1838 = vrot.slane %v1778, 1
      %v1839 = vsel %vm1824, %v1836, %v1838
      %v1840 = vrot.slane %v1779, 1
      %v1841 = vsel %vm1824, %v1838, %v1840
      %v1842 = vrot.slane %v1780, 1
      %v1843 = vsel %vm1824, %v1840, %v1842
      %v1844 = vrot.slane %v1781, 1
      %v1845 = vsel %vm1824, %v1842, %v1844
      %v1846 = vrot.slane %v1782, 1
      %v1847 = vsel %vm1824, %v1844, %v1846
      %v1848 = vrot.slane %v1783, 1
      %v1849 = vsel %vm1824, %v1846, %v1848
      %v1850 = vrot.slane %v1784, 1
      %v1851 = vsel %vm1824, %v1848, %v1850
      %v1852 = vrot.slane %v1785, 1
      %v1853 = vsel %vm1824, %v1850, %v1852
      %v1854 = vrot.slane %v1786, 1
      %v1855 = vsel %vm1824, %v1852, %v1854
      %v1856 = vrot.slane %v1787, 1
      %v1857 = vsel %vm1824, %v1854, %v1856
      %v1858 = vrot.slane %v1788, 1
      %v1859 = vsel %vm1824, %v1856, %v1858
      %v1860 = vrot.slane %v1789, 1
      %v1861 = vsel %vm1824, %v1858, %v1860
      %v1862 = vrot.slane %v1790, 1
      %v1863 = vsel %vm1824, %v1860, %v1862
      %v1864 = vrot.slane %v1791, 1
      %v1865 = vsel %vm1824, %v1862, %v1864
      %v1866 = vrot.slane %v1792, 1
      %v1867 = vsel %vm1824, %v1864, %v1866
      %v1868 = vrot.slane %v1793, 1
      %v1869 = vsel %vm1824, %v1866, %v1868
      %v1870 = vrot.slane %v1794, 1
      %v1871 = vsel %vm1824, %v1868, %v1870
      %v1872 = vrot.slane %v1795, 1
      %v1873 = vsel %vm1824, %v1870, %v1872
      %v1874 = vrot.slane %v1796, 1
      %v1875 = vsel %vm1824, %v1872, %v1874
      %v1876 = vrot.slane %v1797, 1
      %v1877 = vsel %vm1824, %v1874, %v1876
      %v1878 = vrot.slane %v1798, 1
      %v1879 = vsel %vm1824, %v1876, %v1878
      %v1880 = vrot.slane %v1799, 1
      %v1881 = vsel %vm1824, %v1878, %v1880
      %v1882 = vrot.slane %v1800, 1
      %v1883 = vsel %vm1824, %v1880, %v1882
      %v1884 = vrot.slane %v1801, 1
      %v1885 = vsel %vm1824, %v1882, %v1884
      %v1886 = vrot.slane %v1802, 1
      %v1887 = vsel %vm1824, %v1884, %v1886
      %v1888 = vrot.slane %v1803, 1
      %v1889 = vsel %vm1824, %v1886, %v1888
      %v1890 = vrot.slane %v1804, 1
      %v1891 = vsel %vm1824, %v1888, %v1890
      %v1892 = vrot.slane %v1805, 1
      %v1893 = vsel %vm1824, %v1890, %v1892
      %v1894 = vrot.slane %v1806, 1
      %v1895 = vsel %vm1824, %v1892, %v1894
      %v1896 = vrot.slane %v1807, 1
      %v1897 = vsel %vm1824, %v1894, %v1896
      %v1898 = vrot.slane %v1808, 1
      %v1899 = vsel %vm1824, %v1896, %v1898
      %v1900 = vrot.slane %v1809, 1
      %v1901 = vsel %vm1824, %v1898, %v1900
      %v1902 = vrot.slane %v1810, 1
      %v1903 = vsel %vm1824, %v1900, %v1902
      %v1904 = vrot.slane %v1811, 1
      %v1905 = vsel %vm1824, %v1902, %v1904
      %v1906 = vrot.slane %v1812, 1
      %v1907 = vsel %vm1824, %v1904, %v1906
      %v1908 = vrot.slane %v1813, 1
      %v1909 = vsel %vm1824, %v1906, %v1908
      %v1910 = vrot.slane %v1814, 1
      %v1911 = vsel %vm1824, %v1908, %v1910
      %v1912 = vrot.slane %v1815, 1
      %v1913 = vsel %vm1824, %v1910, %v1912
      %v1914 = vrot.slane %v1816, 1
      %v1915 = vsel %vm1824, %v1912, %v1914
      %v1916 = vrot.slane %v1817, 1
      %v1917 = vsel %vm1824, %v1914, %v1916
      %v1918 = vrot.slane %v1818, 1
      %v1919 = vsel %vm1824, %v1916, %v1918
      %v1920 = vrot.slane %v1819, 1
      %v1921 = vsel %vm1824, %v1918, %v1920
      %v1922 = vrot.slane %v1820, 1
      %v1923 = vsel %vm1824, %v1920, %v1922
      %v1924 = vrot.slane %v1821, 1
      %v1925 = vsel %vm1824, %v1922, %v1924
      %v1926 = vrot.slane %v1822, 1
      %v1927 = vsel %vm1824, %v1924, %v1926
      %v1928 = vrot.slane %v1823, 1
      %v1929 = vsel %vm1824, %v1926, %v1928
      %v1931 = vsel %vm725, %v1827, 0
      %v1934 = vsel %vm725, %v1829, 0
      %v1937 = vsel %vm725, %v1831, 0
      %v1940 = vsel %vm725, %v1833, 0
      %v1943 = vsel %vm725, %v1835, 0
      %v1946 = vsel %vm725, %v1837, 0
      %v1949 = vsel %vm725, %v1839, 0
      %v1952 = vsel %vm725, %v1841, 0
      %v1955 = vsel %vm725, %v1843, 0
      %v1958 = vsel %vm725, %v1845, 0
      %v1961 = vsel %vm725, %v1847, 0
      %v1964 = vsel %vm725, %v1849, 0
      %v1967 = vsel %vm725, %v1851, 0
      %v1970 = vsel %vm725, %v1853, 0
      %v1973 = vsel %vm725, %v1855, 0
      %v1976 = vsel %vm725, %v1857, 0
      %v1979 = vsel %vm725, %v1859, 0
      %v1982 = vsel %vm725, %v1861, 0
      %v1985 = vsel %vm725, %v1863, 0
      %v1988 = vsel %vm725, %v1865, 0
      %v1991 = vsel %vm725, %v1867, 0
      %v1994 = vsel %vm725, %v1869, 0
      %v1997 = vsel %vm725, %v1871, 0
      %v2000 = vsel %vm725, %v1873, 0
      %v2003 = vsel %vm725, %v1875, 0
      %v2006 = vsel %vm725, %v1877, 0
      %v2009 = vsel %vm725, %v1879, 0
      %v2012 = vsel %vm725, %v1881, 0
      %v2015 = vsel %vm725, %v1883, 0
      %v2018 = vsel %vm725, %v1885, 0
      %v2021 = vsel %vm725, %v1887, 0
      %v2024 = vsel %vm725, %v1889, 0
      %v2027 = vsel %vm725, %v1891, 0
      %v2030 = vsel %vm725, %v1893, 0
      %v2033 = vsel %vm725, %v1895, 0
      %v2036 = vsel %vm725, %v1897, 0
      %v2039 = vsel %vm725, %v1899, 0
      %v2042 = vsel %vm725, %v1901, 0
      %v2045 = vsel %vm725, %v1903, 0
      %v2048 = vsel %vm725, %v1905, 0
      %v2051 = vsel %vm725, %v1907, 0
      %v2054 = vsel %vm725, %v1909, 0
      %v2057 = vsel %vm725, %v1911, 0
      %v2060 = vsel %vm725, %v1913, 0
      %v2063 = vsel %vm725, %v1915, 0
      %v2066 = vsel %vm725, %v1917, 0
      %v2069 = vsel %vm725, %v1919, 0
      %v2072 = vsel %vm725, %v1921, 0
      %v2075 = vsel %vm725, %v1923, 0
      %v2078 = vsel %vm725, %v1925, 0
      %v2081 = vsel %vm725, %v1927, 0
      %v2084 = vsel %vm725, %v1929, 0
      %v2087 = vsel %vm725, %v1928, 0
      %v2090 = vsel %vm885, %v1558, 0
      %2092 = vmatprep.subr.bf16.mxu0 0
      %2093 = vmatpush1.bf16.msra.mxu0 0
      %2094 = vmatprep.subr.bf16.mxu0 0
      %2095 = vmatpush1.bf16.msra.mxu0 0
      %2096 = vmatprep.subr.bf16.mxu0 0
      %2097 = vmatpush1.bf16.msra.mxu0 0
      %2098 = vmatprep.subr.bf16.mxu0 0
      %2099 = vmatpush1.bf16.msra.mxu0 0
      %2100 = vmatprep.subr.bf16.mxu0 0
      %2101 = vmatpush1.bf16.msra.mxu0 0
      %2102 = vmatprep.subr.bf16.mxu0 0
      %2103 = vmatpush1.bf16.msra.mxu0 0
      %2104 = vmatprep.subr.bf16.mxu0 0
      %2105 = vmatpush1.bf16.msra.mxu0 0
      %2106 = vmatprep.subr.bf16.mxu0 0
      %2107 = vmatpush1.bf16.msra.mxu0 %v2090
      %2108 = vmatprep.subr.bf16.mxu0 0
      %2109 = vmatpush2.bf16.msra.mxu0 0
      %2110 = vmatprep.subr.bf16.mxu0 0
      %2111 = vmatpush2.bf16.msra.mxu0 0
      %2112 = vmatprep.subr.bf16.mxu0 0
      %2113 = vmatpush2.bf16.msra.mxu0 0
      %2114 = vmatprep.subr.bf16.mxu0 0
      %2115 = vmatpush2.bf16.msra.mxu0 0
      %2116 = vmatprep.subr.bf16.mxu0 0
      %2117 = vmatpush2.bf16.msra.mxu0 0
      %2118 = vmatprep.subr.bf16.mxu0 0
      %2119 = vmatpush2.bf16.msra.mxu0 0
      %2120 = vmatprep.subr.bf16.mxu0 0
      %2121 = vmatpush2.bf16.msra.mxu0 0
      %2122 = vmatprep.subr.bf16.mxu0 0
      %2123 = vmatpush2.bf16.msra.mxu0 0
      %2124 = vmatprep.mubr.bf16.mxu0 0
      %2125 = vmatmul.mubr.bf16.gmra.mxu0 %v1931
      %v2126 = vpop.f32.mrf.mxu0
      %v2127 = vadd.f32 0.0, %v2126
      %v2128 = vpop.f32.mrf.mxu0
      %v2129 = vpop.f32.mrf.mxu0
      %v2130 = vadd.f32 0.0, %v2129
      %v2131 = vpop.f32.mrf.mxu0
      %2132 = vmatprep.mubr.bf16.mxu0 0
      %2133 = vmatmul.mubr.bf16.gmra.mxu0 %v1934
      %v2134 = vpop.f32.mrf.mxu0
      %v2135 = vadd.f32 0.0, %v2134
      %v2136 = vpop.f32.mrf.mxu0
      %v2137 = vpop.f32.mrf.mxu0
      %v2138 = vadd.f32 0.0, %v2137
      %v2139 = vpop.f32.mrf.mxu0
      %2140 = vmatprep.mubr.bf16.mxu0 0
      %2141 = vmatmul.mubr.bf16.gmra.mxu0 %v1937
      %v2142 = vpop.f32.mrf.mxu0
      %v2143 = vadd.f32 0.0, %v2142
      %v2144 = vpop.f32.mrf.mxu0
      %v2145 = vpop.f32.mrf.mxu0
      %v2146 = vadd.f32 0.0, %v2145
      %v2147 = vpop.f32.mrf.mxu0
      %2148 = vmatprep.mubr.bf16.mxu0 0
      %2149 = vmatmul.mubr.bf16.gmra.mxu0 %v1940
      %v2150 = vpop.f32.mrf.mxu0
      %v2151 = vadd.f32 0.0, %v2150
      %v2152 = vpop.f32.mrf.mxu0
      %v2153 = vpop.f32.mrf.mxu0
      %v2154 = vadd.f32 0.0, %v2153
      %v2155 = vpop.f32.mrf.mxu0
      %2156 = vmatprep.mubr.bf16.mxu0 0
      %2157 = vmatmul.mubr.bf16.gmra.mxu0 %v1943
      %v2158 = vpop.f32.mrf.mxu0
      %v2159 = vadd.f32 0.0, %v2158
      %v2160 = vpop.f32.mrf.mxu0
      %v2161 = vpop.f32.mrf.mxu0
      %v2162 = vadd.f32 0.0, %v2161
      %v2163 = vpop.f32.mrf.mxu0
      %2164 = vmatprep.mubr.bf16.mxu0 0
      %2165 = vmatmul.mubr.bf16.gmra.mxu0 %v1946
      %v2166 = vpop.f32.mrf.mxu0
      %v2167 = vadd.f32 0.0, %v2166
      %v2168 = vpop.f32.mrf.mxu0
      %v2169 = vpop.f32.mrf.mxu0
      %v2170 = vadd.f32 0.0, %v2169
      %v2171 = vpop.f32.mrf.mxu0
      %2172 = vmatprep.mubr.bf16.mxu0 0
      %2173 = vmatmul.mubr.bf16.gmra.mxu0 %v1949
      %v2174 = vpop.f32.mrf.mxu0
      %v2175 = vadd.f32 0.0, %v2174
      %v2176 = vpop.f32.mrf.mxu0
      %v2177 = vpop.f32.mrf.mxu0
      %v2178 = vadd.f32 0.0, %v2177
      %v2179 = vpop.f32.mrf.mxu0
      %2180 = vmatprep.mubr.bf16.mxu0 0
      %2181 = vmatmul.mubr.bf16.gmra.mxu0 %v1952
      %v2182 = vpop.f32.mrf.mxu0
      %v2183 = vadd.f32 0.0, %v2182
      %v2184 = vpop.f32.mrf.mxu0
      %v2185 = vpop.f32.mrf.mxu0
      %v2186 = vadd.f32 0.0, %v2185
      %v2187 = vpop.f32.mrf.mxu0
      %2188 = vmatprep.mubr.bf16.mxu0 0
      %2189 = vmatmul.mubr.bf16.gmra.mxu0 %v1955
      %v2190 = vpop.f32.mrf.mxu0
      %v2191 = vadd.f32 0.0, %v2190
      %v2192 = vpop.f32.mrf.mxu0
      %v2193 = vpop.f32.mrf.mxu0
      %v2194 = vadd.f32 0.0, %v2193
      %v2195 = vpop.f32.mrf.mxu0
      %2196 = vmatprep.mubr.bf16.mxu0 0
      %2197 = vmatmul.mubr.bf16.gmra.mxu0 %v1958
      %v2198 = vpop.f32.mrf.mxu0
      %v2199 = vadd.f32 0.0, %v2198
      %v2200 = vpop.f32.mrf.mxu0
      %v2201 = vpop.f32.mrf.mxu0
      %v2202 = vadd.f32 0.0, %v2201
      %v2203 = vpop.f32.mrf.mxu0
      %2204 = vmatprep.mubr.bf16.mxu0 0
      %2205 = vmatmul.mubr.bf16.gmra.mxu0 %v1961
      %v2206 = vpop.f32.mrf.mxu0
      %v2207 = vadd.f32 0.0, %v2206
      %v2208 = vpop.f32.mrf.mxu0
      %v2209 = vpop.f32.mrf.mxu0
      %v2210 = vadd.f32 0.0, %v2209
      %v2211 = vpop.f32.mrf.mxu0
      %2212 = vmatprep.mubr.bf16.mxu0 0
      %2213 = vmatmul.mubr.bf16.gmra.mxu0 %v1964
      %v2214 = vpop.f32.mrf.mxu0
      %v2215 = vadd.f32 0.0, %v2214
      %v2216 = vpop.f32.mrf.mxu0
      %v2217 = vpop.f32.mrf.mxu0
      %v2218 = vadd.f32 0.0, %v2217
      %v2219 = vpop.f32.mrf.mxu0
      %2220 = vmatprep.mubr.bf16.mxu0 0
      %2221 = vmatmul.mubr.bf16.gmra.mxu0 %v1967
      %v2222 = vpop.f32.mrf.mxu0
      %v2223 = vadd.f32 0.0, %v2222
      %v2224 = vpop.f32.mrf.mxu0
      %v2225 = vpop.f32.mrf.mxu0
      %v2226 = vadd.f32 0.0, %v2225
      %v2227 = vpop.f32.mrf.mxu0
      %2228 = vmatprep.mubr.bf16.mxu0 0
      %2229 = vmatmul.mubr.bf16.gmra.mxu0 %v1970
      %v2230 = vpop.f32.mrf.mxu0
      %v2231 = vadd.f32 0.0, %v2230
      %v2232 = vpop.f32.mrf.mxu0
      %v2233 = vpop.f32.mrf.mxu0
      %v2234 = vadd.f32 0.0, %v2233
      %v2235 = vpop.f32.mrf.mxu0
      %2236 = vmatprep.mubr.bf16.mxu0 0
      %2237 = vmatmul.mubr.bf16.gmra.mxu0 %v1973
      %v2238 = vpop.f32.mrf.mxu0
      %v2239 = vadd.f32 0.0, %v2238
      %v2240 = vpop.f32.mrf.mxu0
      %v2241 = vpop.f32.mrf.mxu0
      %v2242 = vadd.f32 0.0, %v2241
      %v2243 = vpop.f32.mrf.mxu0
      %2244 = vmatprep.mubr.bf16.mxu0 0
      %2245 = vmatmul.mubr.bf16.gmra.mxu0 %v1976
      %v2246 = vpop.f32.mrf.mxu0
      %v2247 = vadd.f32 0.0, %v2246
      %v2248 = vpop.f32.mrf.mxu0
      %v2249 = vpop.f32.mrf.mxu0
      %v2250 = vadd.f32 0.0, %v2249
      %v2251 = vpop.f32.mrf.mxu0
      %2252 = vmatprep.mubr.bf16.mxu0 0
      %2253 = vmatmul.mubr.bf16.gmra.mxu0 %v1979
      %v2254 = vpop.f32.mrf.mxu0
      %v2255 = vadd.f32 0.0, %v2254
      %v2256 = vpop.f32.mrf.mxu0
      %v2257 = vpop.f32.mrf.mxu0
      %v2258 = vadd.f32 0.0, %v2257
      %v2259 = vpop.f32.mrf.mxu0
      %2260 = vmatprep.mubr.bf16.mxu0 0
      %2261 = vmatmul.mubr.bf16.gmra.mxu0 %v1982
      %v2262 = vpop.f32.mrf.mxu0
      %v2263 = vadd.f32 0.0, %v2262
      %v2264 = vpop.f32.mrf.mxu0
      %v2265 = vpop.f32.mrf.mxu0
      %v2266 = vadd.f32 0.0, %v2265
      %v2267 = vpop.f32.mrf.mxu0
      %2268 = vmatprep.mubr.bf16.mxu0 0
      %2269 = vmatmul.mubr.bf16.gmra.mxu0 %v1985
      %v2270 = vpop.f32.mrf.mxu0
      %v2271 = vadd.f32 0.0, %v2270
      %v2272 = vpop.f32.mrf.mxu0
      %v2273 = vpop.f32.mrf.mxu0
      %v2274 = vadd.f32 0.0, %v2273
      %v2275 = vpop.f32.mrf.mxu0
      %2276 = vmatprep.mubr.bf16.mxu0 0
      %2277 = vmatmul.mubr.bf16.gmra.mxu0 %v1988
      %v2278 = vpop.f32.mrf.mxu0
      %v2279 = vadd.f32 0.0, %v2278
      %v2280 = vpop.f32.mrf.mxu0
      %v2281 = vpop.f32.mrf.mxu0
      %v2282 = vadd.f32 0.0, %v2281
      %v2283 = vpop.f32.mrf.mxu0
      %2284 = vmatprep.mubr.bf16.mxu0 0
      %2285 = vmatmul.mubr.bf16.gmra.mxu0 %v1991
      %v2286 = vpop.f32.mrf.mxu0
      %v2287 = vadd.f32 0.0, %v2286
      %v2288 = vpop.f32.mrf.mxu0
      %v2289 = vpop.f32.mrf.mxu0
      %v2290 = vadd.f32 0.0, %v2289
      %v2291 = vpop.f32.mrf.mxu0
      %2292 = vmatprep.mubr.bf16.mxu0 0
      %2293 = vmatmul.mubr.bf16.gmra.mxu0 %v1994
      %v2294 = vpop.f32.mrf.mxu0
      %v2295 = vadd.f32 0.0, %v2294
      %v2296 = vpop.f32.mrf.mxu0
      %v2297 = vpop.f32.mrf.mxu0
      %v2298 = vadd.f32 0.0, %v2297
      %v2299 = vpop.f32.mrf.mxu0
      %2300 = vmatprep.mubr.bf16.mxu0 0
      %2301 = vmatmul.mubr.bf16.gmra.mxu0 %v1997
      %v2302 = vpop.f32.mrf.mxu0
      %v2303 = vadd.f32 0.0, %v2302
      %v2304 = vpop.f32.mrf.mxu0
      %v2305 = vpop.f32.mrf.mxu0
      %v2306 = vadd.f32 0.0, %v2305
      %v2307 = vpop.f32.mrf.mxu0
      %2308 = vmatprep.mubr.bf16.mxu0 0
      %2309 = vmatmul.mubr.bf16.gmra.mxu0 %v2000
      %v2310 = vpop.f32.mrf.mxu0
      %v2311 = vadd.f32 0.0, %v2310
      %v2312 = vpop.f32.mrf.mxu0
      %v2313 = vpop.f32.mrf.mxu0
      %v2314 = vadd.f32 0.0, %v2313
      %v2315 = vpop.f32.mrf.mxu0
      %2316 = vmatprep.mubr.bf16.mxu0 0
      %2317 = vmatmul.mubr.bf16.gmra.mxu0 %v2003
      %v2318 = vpop.f32.mrf.mxu0
      %v2319 = vadd.f32 0.0, %v2318
      %v2320 = vpop.f32.mrf.mxu0
      %v2321 = vpop.f32.mrf.mxu0
      %v2322 = vadd.f32 0.0, %v2321
      %v2323 = vpop.f32.mrf.mxu0
      %2324 = vmatprep.mubr.bf16.mxu0 0
      %2325 = vmatmul.mubr.bf16.gmra.mxu0 %v2006
      %v2326 = vpop.f32.mrf.mxu0
      %v2327 = vadd.f32 0.0, %v2326
      %v2328 = vpop.f32.mrf.mxu0
      %v2329 = vpop.f32.mrf.mxu0
      %v2330 = vadd.f32 0.0, %v2329
      %v2331 = vpop.f32.mrf.mxu0
      %2332 = vmatprep.mubr.bf16.mxu0 0
      %2333 = vmatmul.mubr.bf16.gmra.mxu0 %v2009
      %v2334 = vpop.f32.mrf.mxu0
      %v2335 = vadd.f32 0.0, %v2334
      %v2336 = vpop.f32.mrf.mxu0
      %v2337 = vpop.f32.mrf.mxu0
      %v2338 = vadd.f32 0.0, %v2337
      %v2339 = vpop.f32.mrf.mxu0
      %2340 = vmatprep.mubr.bf16.mxu0 0
      %2341 = vmatmul.mubr.bf16.gmra.mxu0 %v2012
      %v2342 = vpop.f32.mrf.mxu0
      %v2343 = vadd.f32 0.0, %v2342
      %v2344 = vpop.f32.mrf.mxu0
      %v2345 = vpop.f32.mrf.mxu0
      %v2346 = vadd.f32 0.0, %v2345
      %v2347 = vpop.f32.mrf.mxu0
      %2348 = vmatprep.mubr.bf16.mxu0 0
      %2349 = vmatmul.mubr.bf16.gmra.mxu0 %v2015
      %v2350 = vpop.f32.mrf.mxu0
      %v2351 = vadd.f32 0.0, %v2350
      %v2352 = vpop.f32.mrf.mxu0
      %v2353 = vpop.f32.mrf.mxu0
      %v2354 = vadd.f32 0.0, %v2353
      %v2355 = vpop.f32.mrf.mxu0
      %2356 = vmatprep.mubr.bf16.mxu0 0
      %2357 = vmatmul.mubr.bf16.gmra.mxu0 %v2018
      %v2358 = vpop.f32.mrf.mxu0
      %v2359 = vadd.f32 0.0, %v2358
      %v2360 = vpop.f32.mrf.mxu0
      %v2361 = vpop.f32.mrf.mxu0
      %v2362 = vadd.f32 0.0, %v2361
      %v2363 = vpop.f32.mrf.mxu0
      %2364 = vmatprep.mubr.bf16.mxu0 0
      %2365 = vmatmul.mubr.bf16.gmra.mxu0 %v2021
      %v2366 = vpop.f32.mrf.mxu0
      %v2367 = vadd.f32 0.0, %v2366
      %v2368 = vpop.f32.mrf.mxu0
      %v2369 = vpop.f32.mrf.mxu0
      %v2370 = vadd.f32 0.0, %v2369
      %v2371 = vpop.f32.mrf.mxu0
      %2372 = vmatprep.mubr.bf16.mxu0 0
      %2373 = vmatmul.mubr.bf16.gmra.mxu0 %v2024
      %v2374 = vpop.f32.mrf.mxu0
      %v2375 = vadd.f32 0.0, %v2374
      %v2376 = vpop.f32.mrf.mxu0
      %v2377 = vpop.f32.mrf.mxu0
      %v2378 = vadd.f32 0.0, %v2377
      %v2379 = vpop.f32.mrf.mxu0
      %2380 = vmatprep.mubr.bf16.mxu0 0
      %2381 = vmatmul.mubr.bf16.gmra.mxu0 %v2027
      %v2382 = vpop.f32.mrf.mxu0
      %v2383 = vadd.f32 0.0, %v2382
      %v2384 = vpop.f32.mrf.mxu0
      %v2385 = vpop.f32.mrf.mxu0
      %v2386 = vadd.f32 0.0, %v2385
      %v2387 = vpop.f32.mrf.mxu0
      %2388 = vmatprep.mubr.bf16.mxu0 0
      %2389 = vmatmul.mubr.bf16.gmra.mxu0 %v2030
      %v2390 = vpop.f32.mrf.mxu0
      %v2391 = vadd.f32 0.0, %v2390
      %v2392 = vpop.f32.mrf.mxu0
      %v2393 = vpop.f32.mrf.mxu0
      %v2394 = vadd.f32 0.0, %v2393
      %v2395 = vpop.f32.mrf.mxu0
      %2396 = vmatprep.mubr.bf16.mxu0 0
      %2397 = vmatmul.mubr.bf16.gmra.mxu0 %v2033
      %v2398 = vpop.f32.mrf.mxu0
      %v2399 = vadd.f32 0.0, %v2398
      %v2400 = vpop.f32.mrf.mxu0
      %v2401 = vpop.f32.mrf.mxu0
      %v2402 = vadd.f32 0.0, %v2401
      %v2403 = vpop.f32.mrf.mxu0
      %2404 = vmatprep.mubr.bf16.mxu0 0
      %2405 = vmatmul.mubr.bf16.gmra.mxu0 %v2036
      %v2406 = vpop.f32.mrf.mxu0
      %v2407 = vadd.f32 0.0, %v2406
      %v2408 = vpop.f32.mrf.mxu0
      %v2409 = vpop.f32.mrf.mxu0
      %v2410 = vadd.f32 0.0, %v2409
      %v2411 = vpop.f32.mrf.mxu0
      %2412 = vmatprep.mubr.bf16.mxu0 0
      %2413 = vmatmul.mubr.bf16.gmra.mxu0 %v2039
      %v2414 = vpop.f32.mrf.mxu0
      %v2415 = vadd.f32 0.0, %v2414
      %v2416 = vpop.f32.mrf.mxu0
      %v2417 = vpop.f32.mrf.mxu0
      %v2418 = vadd.f32 0.0, %v2417
      %v2419 = vpop.f32.mrf.mxu0
      %2420 = vmatprep.mubr.bf16.mxu0 0
      %2421 = vmatmul.mubr.bf16.gmra.mxu0 %v2042
      %v2422 = vpop.f32.mrf.mxu0
      %v2423 = vadd.f32 0.0, %v2422
      %v2424 = vpop.f32.mrf.mxu0
      %v2425 = vpop.f32.mrf.mxu0
      %v2426 = vadd.f32 0.0, %v2425
      %v2427 = vpop.f32.mrf.mxu0
      %2428 = vmatprep.mubr.bf16.mxu0 0
      %2429 = vmatmul.mubr.bf16.gmra.mxu0 %v2045
      %v2430 = vpop.f32.mrf.mxu0
      %v2431 = vadd.f32 0.0, %v2430
      %v2432 = vpop.f32.mrf.mxu0
      %v2433 = vpop.f32.mrf.mxu0
      %v2434 = vadd.f32 0.0, %v2433
      %v2435 = vpop.f32.mrf.mxu0
      %2436 = vmatprep.mubr.bf16.mxu0 0
      %2437 = vmatmul.mubr.bf16.gmra.mxu0 %v2048
      %v2438 = vpop.f32.mrf.mxu0
      %v2439 = vadd.f32 0.0, %v2438
      %v2440 = vpop.f32.mrf.mxu0
      %v2441 = vpop.f32.mrf.mxu0
      %v2442 = vadd.f32 0.0, %v2441
      %v2443 = vpop.f32.mrf.mxu0
      %2444 = vmatprep.mubr.bf16.mxu0 0
      %2445 = vmatmul.mubr.bf16.gmra.mxu0 %v2051
      %v2446 = vpop.f32.mrf.mxu0
      %v2447 = vadd.f32 0.0, %v2446
      %v2448 = vpop.f32.mrf.mxu0
      %v2449 = vpop.f32.mrf.mxu0
      %v2450 = vadd.f32 0.0, %v2449
      %v2451 = vpop.f32.mrf.mxu0
      %2452 = vmatprep.mubr.bf16.mxu0 0
      %2453 = vmatmul.mubr.bf16.gmra.mxu0 %v2054
      %v2454 = vpop.f32.mrf.mxu0
      %v2455 = vadd.f32 0.0, %v2454
      %v2456 = vpop.f32.mrf.mxu0
      %v2457 = vpop.f32.mrf.mxu0
      %v2458 = vadd.f32 0.0, %v2457
      %v2459 = vpop.f32.mrf.mxu0
      %2460 = vmatprep.mubr.bf16.mxu0 0
      %2461 = vmatmul.mubr.bf16.gmra.mxu0 %v2057
      %v2462 = vpop.f32.mrf.mxu0
      %v2463 = vadd.f32 0.0, %v2462
      %v2464 = vpop.f32.mrf.mxu0
      %v2465 = vpop.f32.mrf.mxu0
      %v2466 = vadd.f32 0.0, %v2465
      %v2467 = vpop.f32.mrf.mxu0
      %2468 = vmatprep.mubr.bf16.mxu0 0
      %2469 = vmatmul.mubr.bf16.gmra.mxu0 %v2060
      %v2470 = vpop.f32.mrf.mxu0
      %v2471 = vadd.f32 0.0, %v2470
      %v2472 = vpop.f32.mrf.mxu0
      %v2473 = vpop.f32.mrf.mxu0
      %v2474 = vadd.f32 0.0, %v2473
      %v2475 = vpop.f32.mrf.mxu0
      %2476 = vmatprep.mubr.bf16.mxu0 0
      %2477 = vmatmul.mubr.bf16.gmra.mxu0 %v2063
      %v2478 = vpop.f32.mrf.mxu0
      %v2479 = vadd.f32 0.0, %v2478
      %v2480 = vpop.f32.mrf.mxu0
      %v2481 = vpop.f32.mrf.mxu0
      %v2482 = vadd.f32 0.0, %v2481
      %v2483 = vpop.f32.mrf.mxu0
      %2484 = vmatprep.mubr.bf16.mxu0 0
      %2485 = vmatmul.mubr.bf16.gmra.mxu0 %v2066
      %v2486 = vpop.f32.mrf.mxu0
      %v2487 = vadd.f32 0.0, %v2486
      %v2488 = vpop.f32.mrf.mxu0
      %v2489 = vpop.f32.mrf.mxu0
      %v2490 = vadd.f32 0.0, %v2489
      %v2491 = vpop.f32.mrf.mxu0
      %2492 = vmatprep.mubr.bf16.mxu0 0
      %2493 = vmatmul.mubr.bf16.gmra.mxu0 %v2069
      %v2494 = vpop.f32.mrf.mxu0
      %v2495 = vadd.f32 0.0, %v2494
      %v2496 = vpop.f32.mrf.mxu0
      %v2497 = vpop.f32.mrf.mxu0
      %v2498 = vadd.f32 0.0, %v2497
      %v2499 = vpop.f32.mrf.mxu0
      %2500 = vmatprep.mubr.bf16.mxu0 0
      %2501 = vmatmul.mubr.bf16.gmra.mxu0 %v2072
      %v2502 = vpop.f32.mrf.mxu0
      %v2503 = vadd.f32 0.0, %v2502
      %v2504 = vpop.f32.mrf.mxu0
      %v2505 = vpop.f32.mrf.mxu0
      %v2506 = vadd.f32 0.0, %v2505
      %v2507 = vpop.f32.mrf.mxu0
      %2508 = vmatprep.mubr.bf16.mxu0 0
      %2509 = vmatmul.mubr.bf16.gmra.mxu0 %v2075
      %v2510 = vpop.f32.mrf.mxu0
      %v2511 = vadd.f32 0.0, %v2510
      %v2512 = vpop.f32.mrf.mxu0
      %v2513 = vpop.f32.mrf.mxu0
      %v2514 = vadd.f32 0.0, %v2513
      %v2515 = vpop.f32.mrf.mxu0
      %2516 = vmatprep.mubr.bf16.mxu0 0
      %2517 = vmatmul.mubr.bf16.gmra.mxu0 %v2078
      %v2518 = vpop.f32.mrf.mxu0
      %v2519 = vadd.f32 0.0, %v2518
      %v2520 = vpop.f32.mrf.mxu0
      %v2521 = vpop.f32.mrf.mxu0
      %v2522 = vadd.f32 0.0, %v2521
      %v2523 = vpop.f32.mrf.mxu0
      %2524 = vmatprep.mubr.bf16.mxu0 0
      %2525 = vmatmul.mubr.bf16.gmra.mxu0 %v2081
      %v2526 = vpop.f32.mrf.mxu0
      %v2527 = vadd.f32 0.0, %v2526
      %v2528 = vpop.f32.mrf.mxu0
      %v2529 = vpop.f32.mrf.mxu0
      %v2530 = vadd.f32 0.0, %v2529
      %v2531 = vpop.f32.mrf.mxu0
      %2532 = vmatprep.mubr.bf16.mxu0 0
      %2533 = vmatmul.mubr.bf16.gmra.mxu0 %v2084
      %v2534 = vpop.f32.mrf.mxu0
      %v2535 = vadd.f32 0.0, %v2534
      %v2536 = vpop.f32.mrf.mxu0
      %v2537 = vpop.f32.mrf.mxu0
      %v2538 = vadd.f32 0.0, %v2537
      %v2539 = vpop.f32.mrf.mxu0
      %2540 = vmatprep.mubr.bf16.mxu0 0
      %2541 = vmatmul.mubr.bf16.gmra.mxu0 %v2087
      %v2542 = vpop.f32.mrf.mxu0
      %v2543 = vadd.f32 0.0, %v2542
      %v2544 = vpop.f32.mrf.mxu0
      %v2545 = vpop.f32.mrf.mxu0
      %v2546 = vpop.f32.mrf.mxu0
      %2547 = vdwg.mxu0
      %v2548 = vld [vmem:[#allocation2] sm:$0xff]
      %v2549 = vld [vmem:[#allocation2 + $0x8] sm:$0xff]
      %v2550 = vld [vmem:[#allocation2 + $0x10] sm:$0xff]
      %v2551 = vld [vmem:[#allocation2 + $0x18] sm:$0xff]
      %v2552 = vld [vmem:[#allocation2 + $0x20] sm:$0xff]
      %v2553 = vld [vmem:[#allocation2 + $0x28] sm:$0xff]
      %v2554 = vld [vmem:[#allocation2 + $0x30] sm:$0xff]
      %v2555 = vld [vmem:[#allocation2 + $0x38] sm:$0xff]
      %v2556 = vld [vmem:[#allocation2 + $0x40] sm:$0xff]
      %v2557 = vld [vmem:[#allocation2 + $0x48] sm:$0xff]
      %v2558 = vld [vmem:[#allocation2 + $0x50] sm:$0xff]
      %v2559 = vld [vmem:[#allocation2 + $0x58] sm:$0xff]
      %v2560 = vld [vmem:[#allocation2 + $0x60] sm:$0xff]
      %v2561 = vld [vmem:[#allocation2 + $0x68] sm:$0xff]
      %v2562 = vld [vmem:[#allocation2 + $0x70] sm:$0xff]
      %v2563 = vld [vmem:[#allocation2 + $0x78] sm:$0xff]
      %v2564 = vld [vmem:[#allocation2 + $0x80] sm:$0xff]
      %v2565 = vld [vmem:[#allocation2 + $0x88] sm:$0xff]
      %v2566 = vld [vmem:[#allocation2 + $0x90] sm:$0xff]
      %v2567 = vld [vmem:[#allocation2 + $0x98] sm:$0xff]
      %v2568 = vld [vmem:[#allocation2 + $0xa0] sm:$0xff]
      %v2569 = vld [vmem:[#allocation2 + $0xa8] sm:$0xff]
      %v2570 = vld [vmem:[#allocation2 + $0xb0] sm:$0xff]
      %v2571 = vld [vmem:[#allocation2 + $0xb8] sm:$0xff]
      %v2572 = vld [vmem:[#allocation2 + $0xc0] sm:$0xff]
      %v2573 = vld [vmem:[#allocation2 + $0xc8] sm:$0xff]
      %v2574 = vld [vmem:[#allocation2 + $0xd0] sm:$0xff]
      %v2575 = vld [vmem:[#allocation2 + $0xd8] sm:$0xff]
      %v2576 = vld [vmem:[#allocation2 + $0xe0] sm:$0xff]
      %v2577 = vld [vmem:[#allocation2 + $0xe8] sm:$0xff]
      %v2578 = vld [vmem:[#allocation2 + $0xf0] sm:$0xff]
      %v2579 = vld [vmem:[#allocation2 + $0xf8] sm:$0xff]
      %v2580 = vld [vmem:[#allocation2 + $0x100] sm:$0xff]
      %v2581 = vld [vmem:[#allocation2 + $0x108] sm:$0xff]
      %v2582 = vld [vmem:[#allocation2 + $0x110] sm:$0xff]
      %v2583 = vld [vmem:[#allocation2 + $0x118] sm:$0xff]
      %v2584 = vld [vmem:[#allocation2 + $0x120] sm:$0xff]
      %v2585 = vld [vmem:[#allocation2 + $0x128] sm:$0xff]
      %v2586 = vld [vmem:[#allocation2 + $0x130] sm:$0xff]
      %v2587 = vld [vmem:[#allocation2 + $0x138] sm:$0xff]
      %v2588 = vld [vmem:[#allocation2 + $0x140] sm:$0xff]
      %v2589 = vld [vmem:[#allocation2 + $0x148] sm:$0xff]
      %v2590 = vld [vmem:[#allocation2 + $0x150] sm:$0xff]
      %v2591 = vld [vmem:[#allocation2 + $0x158] sm:$0xff]
      %v2592 = vld [vmem:[#allocation2 + $0x160] sm:$0xff]
      %v2593 = vld [vmem:[#allocation2 + $0x168] sm:$0xff]
      %v2594 = vld [vmem:[#allocation2 + $0x170] sm:$0xff]
      %v2595 = vld [vmem:[#allocation2 + $0x178] sm:$0xff]
      %v2596 = vld [vmem:[#allocation2 + $0x180] sm:$0xff]
      %v2597 = vld [vmem:[#allocation2 + $0x188] sm:$0xff]
      %v2598 = vld [vmem:[#allocation2 + $0x190] sm:$0xff]
      %v2599 = vld [vmem:[#allocation2 + $0x198] sm:$0xff]
      %v2600 = vld [vmem:[#allocation2 + $0x1a0] sm:$0xff]
      %v2601 = vld [vmem:[#allocation2 + $0x1a8] sm:$0xff]
      %v2602 = vld [vmem:[#allocation2 + $0x1b0] sm:$0xff]
      %v2603 = vld [vmem:[#allocation2 + $0x1b8] sm:$0xff]
      %v2604 = vld [vmem:[#allocation2 + $0x1c0] sm:$0xff]
      %v2605 = vld [vmem:[#allocation2 + $0x1c8] sm:$0xff]
      %v2606 = vld [vmem:[#allocation2 + $0x1d0] sm:$0xff]
      %v2607 = vld [vmem:[#allocation2 + $0x1d8] sm:$0xff]
      %v2608 = vld [vmem:[#allocation2 + $0x1e0] sm:$0xff]
      %v2609 = vld [vmem:[#allocation2 + $0x1e8] sm:$0xff]
      %v2610 = vld [vmem:[#allocation2 + $0x1f0] sm:$0xff]
      %v2611 = vld [vmem:[#allocation2 + $0x1f8] sm:$0xff]
      %v2612 = vld [vmem:[#allocation2 + $0x200] sm:$0xff]
      %v2613 = vld [vmem:[#allocation2 + $0x208] sm:$0xff]
      %v2614 = vld [vmem:[#allocation2 + $0x210] sm:$0xff]
      %v2615 = vld [vmem:[#allocation2 + $0x218] sm:$0xff]
      %v2616 = vld [vmem:[#allocation2 + $0x220] sm:$0xff]
      %v2617 = vld [vmem:[#allocation2 + $0x228] sm:$0xff]
      %v2618 = vld [vmem:[#allocation2 + $0x230] sm:$0xff]
      %v2619 = vld [vmem:[#allocation2 + $0x238] sm:$0xff]
      %v2620 = vld [vmem:[#allocation2 + $0x240] sm:$0xff]
      %v2621 = vld [vmem:[#allocation2 + $0x248] sm:$0xff]
      %v2622 = vld [vmem:[#allocation2 + $0x250] sm:$0xff]
      %v2623 = vld [vmem:[#allocation2 + $0x258] sm:$0xff]
      %v2624 = vld [vmem:[#allocation2 + $0x260] sm:$0xff]
      %v2625 = vld [vmem:[#allocation2 + $0x268] sm:$0xff]
      %v2626 = vld [vmem:[#allocation2 + $0x270] sm:$0xff]
      %v2627 = vld [vmem:[#allocation2 + $0x278] sm:$0xff]
      %v2628 = vld [vmem:[#allocation2 + $0x280] sm:$0xff]
      %v2629 = vld [vmem:[#allocation2 + $0x288] sm:$0xff]
      %v2630 = vld [vmem:[#allocation2 + $0x290] sm:$0xff]
      %v2631 = vld [vmem:[#allocation2 + $0x298] sm:$0xff]
      %v2632 = vld [vmem:[#allocation2 + $0x2a0] sm:$0xff]
      %v2633 = vld [vmem:[#allocation2 + $0x2a8] sm:$0xff]
      %v2634 = vld [vmem:[#allocation2 + $0x2b0] sm:$0xff]
      %v2635 = vld [vmem:[#allocation2 + $0x2b8] sm:$0xff]
      %v2636 = vld [vmem:[#allocation2 + $0x2c0] sm:$0xff]
      %v2637 = vld [vmem:[#allocation2 + $0x2c8] sm:$0xff]
      %v2638 = vld [vmem:[#allocation2 + $0x2d0] sm:$0xff]
      %v2639 = vld [vmem:[#allocation2 + $0x2d8] sm:$0xff]
      %v2640 = vld [vmem:[#allocation2 + $0x2e0] sm:$0xff]
      %v2641 = vld [vmem:[#allocation2 + $0x2e8] sm:$0xff]
      %v2642 = vld [vmem:[#allocation2 + $0x2f0] sm:$0xff]
      %v2643 = vld [vmem:[#allocation2 + $0x2f8] sm:$0xff]
      %v2644 = vld [vmem:[#allocation2 + $0x300] sm:$0xff]
      %v2645 = vld [vmem:[#allocation2 + $0x308] sm:$0xff]
      %v2646 = vld [vmem:[#allocation2 + $0x310] sm:$0xff]
      %v2647 = vld [vmem:[#allocation2 + $0x318] sm:$0xff]
      %v2648 = vld [vmem:[#allocation2 + $0x320] sm:$0xff]
      %v2649 = vld [vmem:[#allocation2 + $0x328] sm:$0xff]
      %v2650 = vld [vmem:[#allocation2 + $0x330] sm:$0xff]
      %v2651 = vld [vmem:[#allocation2 + $0x338] sm:$0xff]
      %v2652 = vld [vmem:[#allocation2 + $0x340] sm:$0xff]
      %v2653 = vadd.f32 %v2548, %v2127
      %v2654 = vadd.f32 %v2549, %v2130
      %v2655 = vadd.f32 %v2550, %v2135
      %v2656 = vadd.f32 %v2551, %v2138
      %v2657 = vadd.f32 %v2552, %v2143
      %v2658 = vadd.f32 %v2553, %v2146
      %v2659 = vadd.f32 %v2554, %v2151
      %v2660 = vadd.f32 %v2555, %v2154
      %v2661 = vadd.f32 %v2556, %v2159
      %v2662 = vadd.f32 %v2557, %v2162
      %v2663 = vadd.f32 %v2558, %v2167
      %v2664 = vadd.f32 %v2559, %v2170
      %v2665 = vadd.f32 %v2560, %v2175
      %v2666 = vadd.f32 %v2561, %v2178
      %v2667 = vadd.f32 %v2562, %v2183
      %v2668 = vadd.f32 %v2563, %v2186
      %v2669 = vadd.f32 %v2564, %v2191
      %v2670 = vadd.f32 %v2565, %v2194
      %v2671 = vadd.f32 %v2566, %v2199
      %v2672 = vadd.f32 %v2567, %v2202
      %v2673 = vadd.f32 %v2568, %v2207
      %v2674 = vadd.f32 %v2569, %v2210
      %v2675 = vadd.f32 %v2570, %v2215
      %v2676 = vadd.f32 %v2571, %v2218
      %v2677 = vadd.f32 %v2572, %v2223
      %v2678 = vadd.f32 %v2573, %v2226
      %v2679 = vadd.f32 %v2574, %v2231
      %v2680 = vadd.f32 %v2575, %v2234
      %v2681 = vadd.f32 %v2576, %v2239
      %v2682 = vadd.f32 %v2577, %v2242
      %v2683 = vadd.f32 %v2578, %v2247
      %v2684 = vadd.f32 %v2579, %v2250
      %v2685 = vadd.f32 %v2580, %v2255
      %v2686 = vadd.f32 %v2581, %v2258
      %v2687 = vadd.f32 %v2582, %v2263
      %v2688 = vadd.f32 %v2583, %v2266
      %v2689 = vadd.f32 %v2584, %v2271
      %v2690 = vadd.f32 %v2585, %v2274
      %v2691 = vadd.f32 %v2586, %v2279
      %v2692 = vadd.f32 %v2587, %v2282
      %v2693 = vadd.f32 %v2588, %v2287
      %v2694 = vadd.f32 %v2589, %v2290
      %v2695 = vadd.f32 %v2590, %v2295
      %v2696 = vadd.f32 %v2591, %v2298
      %v2697 = vadd.f32 %v2592, %v2303
      %v2698 = vadd.f32 %v2593, %v2306
      %v2699 = vadd.f32 %v2594, %v2311
      %v2700 = vadd.f32 %v2595, %v2314
      %v2701 = vadd.f32 %v2596, %v2319
      %v2702 = vadd.f32 %v2597, %v2322
      %v2703 = vadd.f32 %v2598, %v2327
      %v2704 = vadd.f32 %v2599, %v2330
      %v2705 = vadd.f32 %v2600, %v2335
      %v2706 = vadd.f32 %v2601, %v2338
      %v2707 = vadd.f32 %v2602, %v2343
      %v2708 = vadd.f32 %v2603, %v2346
      %v2709 = vadd.f32 %v2604, %v2351
      %v2710 = vadd.f32 %v2605, %v2354
      %v2711 = vadd.f32 %v2606, %v2359
      %v2712 = vadd.f32 %v2607, %v2362
      %v2713 = vadd.f32 %v2608, %v2367
      %v2714 = vadd.f32 %v2609, %v2370
      %v2715 = vadd.f32 %v2610, %v2375
      %v2716 = vadd.f32 %v2611, %v2378
      %v2717 = vadd.f32 %v2612, %v2383
      %v2718 = vadd.f32 %v2613, %v2386
      %v2719 = vadd.f32 %v2614, %v2391
      %v2720 = vadd.f32 %v2615, %v2394
      %v2721 = vadd.f32 %v2616, %v2399
      %v2722 = vadd.f32 %v2617, %v2402
      %v2723 = vadd.f32 %v2618, %v2407
      %v2724 = vadd.f32 %v2619, %v2410
      %v2725 = vadd.f32 %v2620, %v2415
      %v2726 = vadd.f32 %v2621, %v2418
      %v2727 = vadd.f32 %v2622, %v2423
      %v2728 = vadd.f32 %v2623, %v2426
      %v2729 = vadd.f32 %v2624, %v2431
      %v2730 = vadd.f32 %v2625, %v2434
      %v2731 = vadd.f32 %v2626, %v2439
      %v2732 = vadd.f32 %v2627, %v2442
      %v2733 = vadd.f32 %v2628, %v2447
      %v2734 = vadd.f32 %v2629, %v2450
      %v2735 = vadd.f32 %v2630, %v2455
      %v2736 = vadd.f32 %v2631, %v2458
      %v2737 = vadd.f32 %v2632, %v2463
      %v2738 = vadd.f32 %v2633, %v2466
      %v2739 = vadd.f32 %v2634, %v2471
      %v2740 = vadd.f32 %v2635, %v2474
      %v2741 = vadd.f32 %v2636, %v2479
      %v2742 = vadd.f32 %v2637, %v2482
      %v2743 = vadd.f32 %v2638, %v2487
      %v2744 = vadd.f32 %v2639, %v2490
      %v2745 = vadd.f32 %v2640, %v2495
      %v2746 = vadd.f32 %v2641, %v2498
      %v2747 = vadd.f32 %v2642, %v2503
      %v2748 = vadd.f32 %v2643, %v2506
      %v2749 = vadd.f32 %v2644, %v2511
      %v2750 = vadd.f32 %v2645, %v2514
      %v2751 = vadd.f32 %v2646, %v2519
      %v2752 = vadd.f32 %v2647, %v2522
      %v2753 = vadd.f32 %v2648, %v2527
      %v2754 = vadd.f32 %v2649, %v2530
      %v2755 = vadd.f32 %v2650, %v2535
      %v2756 = vadd.f32 %v2651, %v2538
      %v2757 = vadd.f32 %v2652, %v2543
      %2758 = vst.msk [vmem:[#allocation2] sm:$0xff] %vm1345, %v2653
      %2759 = vst.msk [vmem:[#allocation2 + $0x8] sm:$0xff] %vm1345, %v2654
      %2760 = vst.msk [vmem:[#allocation2 + $0x10] sm:$0xff] %vm1345, %v2655
      %2761 = vst.msk [vmem:[#allocation2 + $0x18] sm:$0xff] %vm1345, %v2656
      %2762 = vst.msk [vmem:[#allocation2 + $0x20] sm:$0xff] %vm1345, %v2657
      %2763 = vst.msk [vmem:[#allocation2 + $0x28] sm:$0xff] %vm1345, %v2658
      %2764 = vst.msk [vmem:[#allocation2 + $0x30] sm:$0xff] %vm1345, %v2659
      %2765 = vst.msk [vmem:[#allocation2 + $0x38] sm:$0xff] %vm1345, %v2660
      %2766 = vst.msk [vmem:[#allocation2 + $0x40] sm:$0xff] %vm1345, %v2661
      %2767 = vst.msk [vmem:[#allocation2 + $0x48] sm:$0xff] %vm1345, %v2662
      %2768 = vst.msk [vmem:[#allocation2 + $0x50] sm:$0xff] %vm1345, %v2663
      %2769 = vst.msk [vmem:[#allocation2 + $0x58] sm:$0xff] %vm1345, %v2664
      %2770 = vst.msk [vmem:[#allocation2 + $0x60] sm:$0xff] %vm1345, %v2665
      %2771 = vst.msk [vmem:[#allocation2 + $0x68] sm:$0xff] %vm1345, %v2666
      %2772 = vst.msk [vmem:[#allocation2 + $0x70] sm:$0xff] %vm1345, %v2667
      %2773 = vst.msk [vmem:[#allocation2 + $0x78] sm:$0xff] %vm1345, %v2668
      %2774 = vst.msk [vmem:[#allocation2 + $0x80] sm:$0xff] %vm1345, %v2669
      %2775 = vst.msk [vmem:[#allocation2 + $0x88] sm:$0xff] %vm1345, %v2670
      %2776 = vst.msk [vmem:[#allocation2 + $0x90] sm:$0xff] %vm1345, %v2671
      %2777 = vst.msk [vmem:[#allocation2 + $0x98] sm:$0xff] %vm1345, %v2672
      %2778 = vst.msk [vmem:[#allocation2 + $0xa0] sm:$0xff] %vm1345, %v2673
      %2779 = vst.msk [vmem:[#allocation2 + $0xa8] sm:$0xff] %vm1345, %v2674
      %2780 = vst.msk [vmem:[#allocation2 + $0xb0] sm:$0xff] %vm1345, %v2675
      %2781 = vst.msk [vmem:[#allocation2 + $0xb8] sm:$0xff] %vm1345, %v2676
      %2782 = vst.msk [vmem:[#allocation2 + $0xc0] sm:$0xff] %vm1345, %v2677
      %2783 = vst.msk [vmem:[#allocation2 + $0xc8] sm:$0xff] %vm1345, %v2678
      %2784 = vst.msk [vmem:[#allocation2 + $0xd0] sm:$0xff] %vm1345, %v2679
      %2785 = vst.msk [vmem:[#allocation2 + $0xd8] sm:$0xff] %vm1345, %v2680
      %2786 = vst.msk [vmem:[#allocation2 + $0xe0] sm:$0xff] %vm1345, %v2681
      %2787 = vst.msk [vmem:[#allocation2 + $0xe8] sm:$0xff] %vm1345, %v2682
      %2788 = vst.msk [vmem:[#allocation2 + $0xf0] sm:$0xff] %vm1345, %v2683
      %2789 = vst.msk [vmem:[#allocation2 + $0xf8] sm:$0xff] %vm1345, %v2684
      %2790 = vst.msk [vmem:[#allocation2 + $0x100] sm:$0xff] %vm1345, %v2685
      %2791 = vst.msk [vmem:[#allocation2 + $0x108] sm:$0xff] %vm1345, %v2686
      %2792 = vst.msk [vmem:[#allocation2 + $0x110] sm:$0xff] %vm1345, %v2687
      %2793 = vst.msk [vmem:[#allocation2 + $0x118] sm:$0xff] %vm1345, %v2688
      %2794 = vst.msk [vmem:[#allocation2 + $0x120] sm:$0xff] %vm1345, %v2689
      %2795 = vst.msk [vmem:[#allocation2 + $0x128] sm:$0xff] %vm1345, %v2690
      %2796 = vst.msk [vmem:[#allocation2 + $0x130] sm:$0xff] %vm1345, %v2691
      %2797 = vst.msk [vmem:[#allocation2 + $0x138] sm:$0xff] %vm1345, %v2692
      %2798 = vst.msk [vmem:[#allocation2 + $0x140] sm:$0xff] %vm1345, %v2693
      %2799 = vst.msk [vmem:[#allocation2 + $0x148] sm:$0xff] %vm1345, %v2694
      %2800 = vst.msk [vmem:[#allocation2 + $0x150] sm:$0xff] %vm1345, %v2695
      %2801 = vst.msk [vmem:[#allocation2 + $0x158] sm:$0xff] %vm1345, %v2696
      %2802 = vst.msk [vmem:[#allocation2 + $0x160] sm:$0xff] %vm1345, %v2697
      %2803 = vst.msk [vmem:[#allocation2 + $0x168] sm:$0xff] %vm1345, %v2698
      %2804 = vst.msk [vmem:[#allocation2 + $0x170] sm:$0xff] %vm1345, %v2699
      %2805 = vst.msk [vmem:[#allocation2 + $0x178] sm:$0xff] %vm1345, %v2700
      %2806 = vst.msk [vmem:[#allocation2 + $0x180] sm:$0xff] %vm1345, %v2701
      %2807 = vst.msk [vmem:[#allocation2 + $0x188] sm:$0xff] %vm1345, %v2702
      %2808 = vst.msk [vmem:[#allocation2 + $0x190] sm:$0xff] %vm1345, %v2703
      %2809 = vst.msk [vmem:[#allocation2 + $0x198] sm:$0xff] %vm1345, %v2704
      %2810 = vst.msk [vmem:[#allocation2 + $0x1a0] sm:$0xff] %vm1345, %v2705
      %2811 = vst.msk [vmem:[#allocation2 + $0x1a8] sm:$0xff] %vm1345, %v2706
      %2812 = vst.msk [vmem:[#allocation2 + $0x1b0] sm:$0xff] %vm1345, %v2707
      %2813 = vst.msk [vmem:[#allocation2 + $0x1b8] sm:$0xff] %vm1345, %v2708
      %2814 = vst.msk [vmem:[#allocation2 + $0x1c0] sm:$0xff] %vm1345, %v2709
      %2815 = vst.msk [vmem:[#allocation2 + $0x1c8] sm:$0xff] %vm1345, %v2710
      %2816 = vst.msk [vmem:[#allocation2 + $0x1d0] sm:$0xff] %vm1345, %v2711
      %2817 = vst.msk [vmem:[#allocation2 + $0x1d8] sm:$0xff] %vm1345, %v2712
      %2818 = vst.msk [vmem:[#allocation2 + $0x1e0] sm:$0xff] %vm1345, %v2713
      %2819 = vst.msk [vmem:[#allocation2 + $0x1e8] sm:$0xff] %vm1345, %v2714
      %2820 = vst.msk [vmem:[#allocation2 + $0x1f0] sm:$0xff] %vm1345, %v2715
      %2821 = vst.msk [vmem:[#allocation2 + $0x1f8] sm:$0xff] %vm1345, %v2716
      %2822 = vst.msk [vmem:[#allocation2 + $0x200] sm:$0xff] %vm1345, %v2717
      %2823 = vst.msk [vmem:[#allocation2 + $0x208] sm:$0xff] %vm1345, %v2718
      %2824 = vst.msk [vmem:[#allocation2 + $0x210] sm:$0xff] %vm1345, %v2719
      %2825 = vst.msk [vmem:[#allocation2 + $0x218] sm:$0xff] %vm1345, %v2720
      %2826 = vst.msk [vmem:[#allocation2 + $0x220] sm:$0xff] %vm1345, %v2721
      %2827 = vst.msk [vmem:[#allocation2 + $0x228] sm:$0xff] %vm1345, %v2722
      %2828 = vst.msk [vmem:[#allocation2 + $0x230] sm:$0xff] %vm1345, %v2723
      %2829 = vst.msk [vmem:[#allocation2 + $0x238] sm:$0xff] %vm1345, %v2724
      %2830 = vst.msk [vmem:[#allocation2 + $0x240] sm:$0xff] %vm1345, %v2725
      %2831 = vst.msk [vmem:[#allocation2 + $0x248] sm:$0xff] %vm1345, %v2726
      %2832 = vst.msk [vmem:[#allocation2 + $0x250] sm:$0xff] %vm1345, %v2727
      %2833 = vst.msk [vmem:[#allocation2 + $0x258] sm:$0xff] %vm1345, %v2728
      %2834 = vst.msk [vmem:[#allocation2 + $0x260] sm:$0xff] %vm1345, %v2729
      %2835 = vst.msk [vmem:[#allocation2 + $0x268] sm:$0xff] %vm1345, %v2730
      %2836 = vst.msk [vmem:[#allocation2 + $0x270] sm:$0xff] %vm1345, %v2731
      %2837 = vst.msk [vmem:[#allocation2 + $0x278] sm:$0xff] %vm1345, %v2732
      %2838 = vst.msk [vmem:[#allocation2 + $0x280] sm:$0xff] %vm1345, %v2733
      %2839 = vst.msk [vmem:[#allocation2 + $0x288] sm:$0xff] %vm1345, %v2734
      %2840 = vst.msk [vmem:[#allocation2 + $0x290] sm:$0xff] %vm1345, %v2735
      %2841 = vst.msk [vmem:[#allocation2 + $0x298] sm:$0xff] %vm1345, %v2736
      %2842 = vst.msk [vmem:[#allocation2 + $0x2a0] sm:$0xff] %vm1345, %v2737
      %2843 = vst.msk [vmem:[#allocation2 + $0x2a8] sm:$0xff] %vm1345, %v2738
      %2844 = vst.msk [vmem:[#allocation2 + $0x2b0] sm:$0xff] %vm1345, %v2739
      %2845 = vst.msk [vmem:[#allocation2 + $0x2b8] sm:$0xff] %vm1345, %v2740
      %2846 = vst.msk [vmem:[#allocation2 + $0x2c0] sm:$0xff] %vm1345, %v2741
      %2847 = vst.msk [vmem:[#allocation2 + $0x2c8] sm:$0xff] %vm1345, %v2742
      %2848 = vst.msk [vmem:[#allocation2 + $0x2d0] sm:$0xff] %vm1345, %v2743
      %2849 = vst.msk [vmem:[#allocation2 + $0x2d8] sm:$0xff] %vm1345, %v2744
      %2850 = vst.msk [vmem:[#allocation2 + $0x2e0] sm:$0xff] %vm1345, %v2745
      %2851 = vst.msk [vmem:[#allocation2 + $0x2e8] sm:$0xff] %vm1345, %v2746
      %2852 = vst.msk [vmem:[#allocation2 + $0x2f0] sm:$0xff] %vm1345, %v2747
      %2853 = vst.msk [vmem:[#allocation2 + $0x2f8] sm:$0xff] %vm1345, %v2748
      %2854 = vst.msk [vmem:[#allocation2 + $0x300] sm:$0xff] %vm1345, %v2749
      %2855 = vst.msk [vmem:[#allocation2 + $0x308] sm:$0xff] %vm1345, %v2750
      %2856 = vst.msk [vmem:[#allocation2 + $0x310] sm:$0xff] %vm1345, %v2751
      %2857 = vst.msk [vmem:[#allocation2 + $0x318] sm:$0xff] %vm1345, %v2752
      %2858 = vst.msk [vmem:[#allocation2 + $0x320] sm:$0xff] %vm1345, %v2753
      %2859 = vst.msk [vmem:[#allocation2 + $0x328] sm:$0xff] %vm1345, %v2754
      %2860 = vst.msk [vmem:[#allocation2 + $0x330] sm:$0xff] %vm1345, %v2755
      %2861 = vst.msk [vmem:[#allocation2 + $0x338] sm:$0xff] %vm1345, %v2756
      %2862 = vst.msk [vmem:[#allocation2 + $0x340] sm:$0xff] %vm1345, %v2757
      %v2863 = vld [vmem:[%s255 + $0x14] sm:$0xe]
      %v2864 = vld [vmem:[%s255 + $0x18] sm:$0xf]
      %v2865 = vld [vmem:[%s255 + $0x1c] sm:$0xf]
      %v2866 = vld [vmem:[%s255 + $0x20] sm:$0xf]
      %v2867 = vld [vmem:[%s255 + $0x24] sm:$0xf]
      %v2868 = vld [vmem:[%s255 + $0x28] sm:$0xf]
      %v2869 = vld [vmem:[%s255 + $0x2c] sm:$0xf]
      %v2870 = vld [vmem:[%s255 + $0x30] sm:$0xf]
      %v2871 = vld [vmem:[%s255 + $0x34] sm:$0xf]
      %v2872 = vld [vmem:[%s255 + $0x38] sm:$0xf]
      %v2873 = vld [vmem:[%s255 + $0x3c] sm:$0xf]
      %v2874 = vld [vmem:[%s255 + $0x40] sm:$0xf]
      %v2875 = vld [vmem:[%s255 + $0x44] sm:$0xf]
      %v2876 = vld [vmem:[%s255 + $0x48] sm:$0xf]
      %v2877 = vld [vmem:[%s255 + $0x4c] sm:$0xf]
      %v2878 = vld [vmem:[%s255 + $0x50] sm:$0xf]
      %v2879 = vld [vmem:[%s255 + $0x54] sm:$0xf]
      %v2880 = vld [vmem:[%s255 + $0x58] sm:$0xf]
      %v2881 = vld [vmem:[%s255 + $0x5c] sm:$0xf]
      %v2882 = vld [vmem:[%s255 + $0x60] sm:$0xf]
      %v2883 = vld [vmem:[%s255 + $0x64] sm:$0xf]
      %v2884 = vld [vmem:[%s255 + $0x68] sm:$0xf]
      %v2885 = vld [vmem:[%s255 + $0x6c] sm:$0xf]
      %v2886 = vld [vmem:[%s255 + $0x70] sm:$0xf]
      %v2887 = vld [vmem:[%s255 + $0x74] sm:$0xf]
      %v2888 = vld [vmem:[%s255 + $0x78] sm:$0xf]
      %v2889 = vld [vmem:[%s255 + $0x7c] sm:$0xf]
      %v2890 = vld [vmem:[%s255 + $0x80] sm:$0xf]
      %v2891 = vld [vmem:[%s255 + $0x84] sm:$0xf]
      %v2892 = vld [vmem:[%s255 + $0x88] sm:$0xf]
      %v2893 = vld [vmem:[%s255 + $0x8c] sm:$0xf]
      %v2894 = vld [vmem:[%s255 + $0x90] sm:$0xf]
      %v2895 = vld [vmem:[%s255 + $0x94] sm:$0xf]
      %v2896 = vld [vmem:[%s255 + $0x98] sm:$0xf]
      %v2897 = vld [vmem:[%s255 + $0x9c] sm:$0xf]
      %v2898 = vld [vmem:[%s255 + $0xa0] sm:$0xf]
      %v2899 = vld [vmem:[%s255 + $0xa4] sm:$0xf]
      %v2900 = vld [vmem:[%s255 + $0xa8] sm:$0xf]
      %v2901 = vld [vmem:[%s255 + $0xac] sm:$0xf]
      %v2902 = vld [vmem:[%s255 + $0xb0] sm:$0xf]
      %v2903 = vld [vmem:[%s255 + $0xb4] sm:$0xf]
      %v2904 = vld [vmem:[%s255 + $0xb8] sm:$0xf]
      %v2905 = vld [vmem:[%s255 + $0xbc] sm:$0xf]
      %v2906 = vld [vmem:[%s255 + $0xc0] sm:$0xf]
      %v2907 = vld [vmem:[%s255 + $0xc4] sm:$0xf]
      %v2908 = vld [vmem:[%s255 + $0xc8] sm:$0xf]
      %v2909 = vld [vmem:[%s255 + $0xcc] sm:$0xf]
      %v2910 = vld [vmem:[%s255 + $0xd0] sm:$0xf]
      %v2911 = vld [vmem:[%s255 + $0xd4] sm:$0xf]
      %v2912 = vld [vmem:[%s255 + $0xd8] sm:$0xf]
      %v2913 = vld [vmem:[%s255 + $0xdc] sm:$0xf]
      %v2914 = vld [vmem:[%s255 + $0xe0] sm:$0xf]
      %v2915 = vld [vmem:[%s255 + $0xe4] sm:$0xf]
      %v2916 = vld [vmem:[%s255 + $0xe8] sm:$0xf]
      %v2917 = vld [vmem:[%s255 + $0xec] sm:$0xf]
      %v2918 = vld [vmem:[%s255 + $0xf0] sm:$0xf]
      %v2919 = vld [vmem:[%s255 + $0xf4] sm:$0xf]
      %v2920 = vld [vmem:[%s255 + $0xf8] sm:$0xf]
      %v2921 = vld [vmem:[%s255 + $0xfc] sm:$0xf]
      %v2922 = vld [vmem:[%s255 + $0x100] sm:$0xf]
      %v2923 = vld [vmem:[%s255 + $0x104] sm:$0xf]
      %v2924 = vld [vmem:[%s255 + $0x108] sm:$0xf]
      %v2925 = vld [vmem:[%s255 + $0x10c] sm:$0xf]
      %v2926 = vld [vmem:[%s255 + $0x110] sm:$0xf]
      %v2927 = vld [vmem:[%s255 + $0x114] sm:$0xf]
      %v2928 = vld [vmem:[%s255 + $0x118] sm:$0xf]
      %v2929 = vld [vmem:[%s255 + $0x11c] sm:$0xf]
      %v2930 = vld [vmem:[%s255 + $0x120] sm:$0xf]
      %v2931 = vld [vmem:[%s255 + $0x124] sm:$0xf]
      %v2932 = vld [vmem:[%s255 + $0x128] sm:$0xf]
      %v2933 = vld [vmem:[%s255 + $0x12c] sm:$0xf]
      %v2934 = vld [vmem:[%s255 + $0x130] sm:$0xf]
      %v2935 = vld [vmem:[%s255 + $0x134] sm:$0xf]
      %v2936 = vld [vmem:[%s255 + $0x138] sm:$0xf]
      %v2937 = vld [vmem:[%s255 + $0x13c] sm:$0xf]
      %v2938 = vld [vmem:[%s255 + $0x140] sm:$0xf]
      %v2939 = vld [vmem:[%s255 + $0x144] sm:$0xf]
      %v2940 = vld [vmem:[%s255 + $0x148] sm:$0xf]
      %v2941 = vld [vmem:[%s255 + $0x14c] sm:$0xf]
      %v2942 = vld [vmem:[%s255 + $0x150] sm:$0xf]
      %v2943 = vld [vmem:[%s255 + $0x154] sm:$0xf]
      %v2944 = vld [vmem:[%s255 + $0x158] sm:$0xf]
      %v2945 = vld [vmem:[%s255 + $0x15c] sm:$0xf]
      %v2946 = vld [vmem:[%s255 + $0x160] sm:$0xf]
      %v2947 = vld [vmem:[%s255 + $0x164] sm:$0xf]
      %v2948 = vld [vmem:[%s255 + $0x168] sm:$0xf]
      %v2949 = vld [vmem:[%s255 + $0x16c] sm:$0xf]
      %v2950 = vld [vmem:[%s255 + $0x170] sm:$0xf]
      %v2951 = vld [vmem:[%s255 + $0x174] sm:$0xf]
      %v2952 = vld [vmem:[%s255 + $0x178] sm:$0xf]
      %v2953 = vld [vmem:[%s255 + $0x17c] sm:$0xf]
      %v2954 = vld [vmem:[%s255 + $0x180] sm:$0xf]
      %v2955 = vld [vmem:[%s255 + $0x184] sm:$0xf]
      %v2956 = vld [vmem:[%s255 + $0x188] sm:$0xf]
      %v2957 = vld [vmem:[%s255 + $0x18c] sm:$0xf]
      %v2958 = vld [vmem:[%s255 + $0x190] sm:$0xf]
      %v2959 = vld [vmem:[%s255 + $0x194] sm:$0xf]
      %v2960 = vld [vmem:[%s255 + $0x198] sm:$0xf]
      %v2961 = vld [vmem:[%s255 + $0x19c] sm:$0xf]
      %v2962 = vld [vmem:[%s255 + $0x1a0] sm:$0xf]
      %v2963 = vld [vmem:[%s255 + $0x1a4] sm:$0xf]
      %v2964 = vld [vmem:[%s255 + $0x1a8] sm:$0xf]
      %v2965 = vld [vmem:[%s255 + $0x1ac] sm:$0xf]
      %v2966 = vld [vmem:[%s255 + $0x1b0] sm:$0xf]
      %v2967 = vld [vmem:[%s255 + $0x1b4] sm:$0xf]
      %v2968 = vld [vmem:[%s255 + $0x1b8] sm:$0x1]
      %s2969 = scalar_lea.vmem %s2, 4
      %v2970 = vld [vmem:[%s2969] sm:$0x3]
      %v3077 = vunpack.c.l.b16 %v2863
      %v3078 = vunpack.c.l.b16 %v2864
      %v3079 = vunpack.c.l.b16 %v2865
      %v3080 = vunpack.c.l.b16 %v2866
      %v3081 = vunpack.c.l.b16 %v2867
      %v3082 = vunpack.c.l.b16 %v2868
      %v3083 = vunpack.c.l.b16 %v2869
      %v3084 = vunpack.c.l.b16 %v2870
      %v3085 = vunpack.c.l.b16 %v2871
      %v3086 = vunpack.c.l.b16 %v2872
      %v3087 = vunpack.c.l.b16 %v2873
      %v3088 = vunpack.c.l.b16 %v2874
      %v3089 = vunpack.c.l.b16 %v2875
      %v3090 = vunpack.c.l.b16 %v2876
      %v3091 = vunpack.c.l.b16 %v2877
      %v3092 = vunpack.c.l.b16 %v2878
      %v3093 = vunpack.c.l.b16 %v2879
      %v3094 = vunpack.c.l.b16 %v2880
      %v3095 = vunpack.c.l.b16 %v2881
      %v3096 = vunpack.c.l.b16 %v2882
      %v3097 = vunpack.c.l.b16 %v2883
      %v3098 = vunpack.c.l.b16 %v2884
      %v3099 = vunpack.c.l.b16 %v2885
      %v3100 = vunpack.c.l.b16 %v2886
      %v3101 = vunpack.c.l.b16 %v2887
      %v3102 = vunpack.c.l.b16 %v2888
      %v3103 = vunpack.c.l.b16 %v2889
      %v3104 = vunpack.c.l.b16 %v2890
      %v3105 = vunpack.c.l.b16 %v2891
      %v3106 = vunpack.c.l.b16 %v2892
      %v3107 = vunpack.c.l.b16 %v2893
      %v3108 = vunpack.c.l.b16 %v2894
      %v3109 = vunpack.c.l.b16 %v2895
      %v3110 = vunpack.c.l.b16 %v2896
      %v3111 = vunpack.c.l.b16 %v2897
      %v3112 = vunpack.c.l.b16 %v2898
      %v3113 = vunpack.c.l.b16 %v2899
      %v3114 = vunpack.c.l.b16 %v2900
      %v3115 = vunpack.c.l.b16 %v2901
      %v3116 = vunpack.c.l.b16 %v2902
      %v3117 = vunpack.c.l.b16 %v2903
      %v3118 = vunpack.c.l.b16 %v2904
      %v3119 = vunpack.c.l.b16 %v2905
      %v3120 = vunpack.c.l.b16 %v2906
      %v3121 = vunpack.c.l.b16 %v2907
      %v3122 = vunpack.c.l.b16 %v2908
      %v3123 = vunpack.c.l.b16 %v2909
      %v3124 = vunpack.c.l.b16 %v2910
      %v3125 = vunpack.c.l.b16 %v2911
      %v3126 = vunpack.c.l.b16 %v2912
      %v3127 = vunpack.c.l.b16 %v2913
      %v3128 = vunpack.c.l.b16 %v2914
      %v3129 = vunpack.c.l.b16 %v2915
      %v3130 = vunpack.c.l.b16 %v2916
      %v3131 = vunpack.c.l.b16 %v2917
      %v3132 = vunpack.c.l.b16 %v2918
      %v3133 = vunpack.c.l.b16 %v2919
      %v3134 = vunpack.c.l.b16 %v2920
      %v3135 = vunpack.c.l.b16 %v2921
      %v3136 = vunpack.c.l.b16 %v2922
      %v3137 = vunpack.c.l.b16 %v2923
      %v3138 = vunpack.c.l.b16 %v2924
      %v3139 = vunpack.c.l.b16 %v2925
      %v3140 = vunpack.c.l.b16 %v2926
      %v3141 = vunpack.c.l.b16 %v2927
      %v3142 = vunpack.c.l.b16 %v2928
      %v3143 = vunpack.c.l.b16 %v2929
      %v3144 = vunpack.c.l.b16 %v2930
      %v3145 = vunpack.c.l.b16 %v2931
      %v3146 = vunpack.c.l.b16 %v2932
      %v3147 = vunpack.c.l.b16 %v2933
      %v3148 = vunpack.c.l.b16 %v2934
      %v3149 = vunpack.c.l.b16 %v2935
      %v3150 = vunpack.c.l.b16 %v2936
      %v3151 = vunpack.c.l.b16 %v2937
      %v3152 = vunpack.c.l.b16 %v2938
      %v3153 = vunpack.c.l.b16 %v2939
      %v3154 = vunpack.c.l.b16 %v2940
      %v3155 = vunpack.c.l.b16 %v2941
      %v3156 = vunpack.c.l.b16 %v2942
      %v3157 = vunpack.c.l.b16 %v2943
      %v3158 = vunpack.c.l.b16 %v2944
      %v3159 = vunpack.c.l.b16 %v2945
      %v3160 = vunpack.c.l.b16 %v2946
      %v3161 = vunpack.c.l.b16 %v2947
      %v3162 = vunpack.c.l.b16 %v2948
      %v3163 = vunpack.c.l.b16 %v2949
      %v3164 = vunpack.c.l.b16 %v2950
      %v3165 = vunpack.c.l.b16 %v2951
      %v3166 = vunpack.c.l.b16 %v2952
      %v3167 = vunpack.c.l.b16 %v2953
      %v3168 = vunpack.c.l.b16 %v2954
      %v3169 = vunpack.c.l.b16 %v2955
      %v3170 = vunpack.c.l.b16 %v2956
      %v3171 = vunpack.c.l.b16 %v2957
      %v3172 = vunpack.c.l.b16 %v2958
      %v3173 = vunpack.c.l.b16 %v2959
      %v3174 = vunpack.c.l.b16 %v2960
      %v3175 = vunpack.c.l.b16 %v2961
      %v3176 = vunpack.c.l.b16 %v2962
      %v3177 = vunpack.c.l.b16 %v2963
      %v3178 = vunpack.c.l.b16 %v2964
      %v3179 = vunpack.c.l.b16 %v2965
      %v3180 = vunpack.c.l.b16 %v2966
      %v3181 = vunpack.c.l.b16 %v2967
      %v3182 = vunpack.c.l.b16 %v2968
      %v3183 = vpack.c.b16 %v3078, %v3077
      %v3184 = vpack.c.b16 %v3080, %v3079
      %v3185 = vpack.c.b16 %v3082, %v3081
      %v3186 = vpack.c.b16 %v3084, %v3083
      %v3187 = vpack.c.b16 %v3086, %v3085
      %v3188 = vpack.c.b16 %v3088, %v3087
      %v3189 = vpack.c.b16 %v3090, %v3089
      %v3190 = vpack.c.b16 %v3092, %v3091
      %v3191 = vpack.c.b16 %v3094, %v3093
      %v3192 = vpack.c.b16 %v3096, %v3095
      %v3193 = vpack.c.b16 %v3098, %v3097
      %v3194 = vpack.c.b16 %v3100, %v3099
      %v3195 = vpack.c.b16 %v3102, %v3101
      %v3196 = vpack.c.b16 %v3104, %v3103
      %v3197 = vpack.c.b16 %v3106, %v3105
      %v3198 = vpack.c.b16 %v3108, %v3107
      %v3199 = vpack.c.b16 %v3110, %v3109
      %v3200 = vpack.c.b16 %v3112, %v3111
      %v3201 = vpack.c.b16 %v3114, %v3113
      %v3202 = vpack.c.b16 %v3116, %v3115
      %v3203 = vpack.c.b16 %v3118, %v3117
      %v3204 = vpack.c.b16 %v3120, %v3119
      %v3205 = vpack.c.b16 %v3122, %v3121
      %v3206 = vpack.c.b16 %v3124, %v3123
      %v3207 = vpack.c.b16 %v3126, %v3125
      %v3208 = vpack.c.b16 %v3128, %v3127
      %v3209 = vpack.c.b16 %v3130, %v3129
      %v3210 = vpack.c.b16 %v3132, %v3131
      %v3211 = vpack.c.b16 %v3134, %v3133
      %v3212 = vpack.c.b16 %v3136, %v3135
      %v3213 = vpack.c.b16 %v3138, %v3137
      %v3214 = vpack.c.b16 %v3140, %v3139
      %v3215 = vpack.c.b16 %v3142, %v3141
      %v3216 = vpack.c.b16 %v3144, %v3143
      %v3217 = vpack.c.b16 %v3146, %v3145
      %v3218 = vpack.c.b16 %v3148, %v3147
      %v3219 = vpack.c.b16 %v3150, %v3149
      %v3220 = vpack.c.b16 %v3152, %v3151
      %v3221 = vpack.c.b16 %v3154, %v3153
      %v3222 = vpack.c.b16 %v3156, %v3155
      %v3223 = vpack.c.b16 %v3158, %v3157
      %v3224 = vpack.c.b16 %v3160, %v3159
      %v3225 = vpack.c.b16 %v3162, %v3161
      %v3226 = vpack.c.b16 %v3164, %v3163
      %v3227 = vpack.c.b16 %v3166, %v3165
      %v3228 = vpack.c.b16 %v3168, %v3167
      %v3229 = vpack.c.b16 %v3170, %v3169
      %v3230 = vpack.c.b16 %v3172, %v3171
      %v3231 = vpack.c.b16 %v3174, %v3173
      %v3232 = vpack.c.b16 %v3176, %v3175
      %v3233 = vpack.c.b16 %v3178, %v3177
      %v3234 = vpack.c.b16 %v3180, %v3179
      %v3235 = vpack.c.b16 %v3182, %v3181
      %v3236 = vrot.slane %v3183, 1
      %v3237 = vrot.slane %v3184, 1
      %v3238 = vsel %vm1824, %v3236, %v3237
      %v3239 = vrot.slane %v3185, 1
      %v3240 = vsel %vm1824, %v3237, %v3239
      %v3241 = vrot.slane %v3186, 1
      %v3242 = vsel %vm1824, %v3239, %v3241
      %v3243 = vrot.slane %v3187, 1
      %v3244 = vsel %vm1824, %v3241, %v3243
      %v3245 = vrot.slane %v3188, 1
      %v3246 = vsel %vm1824, %v3243, %v3245
      %v3247 = vrot.slane %v3189, 1
      %v3248 = vsel %vm1824, %v3245, %v3247
      %v3249 = vrot.slane %v3190, 1
      %v3250 = vsel %vm1824, %v3247, %v3249
      %v3251 = vrot.slane %v3191, 1
      %v3252 = vsel %vm1824, %v3249, %v3251
      %v3253 = vrot.slane %v3192, 1
      %v3254 = vsel %vm1824, %v3251, %v3253
      %v3255 = vrot.slane %v3193, 1
      %v3256 = vsel %vm1824, %v3253, %v3255
      %v3257 = vrot.slane %v3194, 1
      %v3258 = vsel %vm1824, %v3255, %v3257
      %v3259 = vrot.slane %v3195, 1
      %v3260 = vsel %vm1824, %v3257, %v3259
      %v3261 = vrot.slane %v3196, 1
      %v3262 = vsel %vm1824, %v3259, %v3261
      %v3263 = vrot.slane %v3197, 1
      %v3264 = vsel %vm1824, %v3261, %v3263
      %v3265 = vrot.slane %v3198, 1
      %v3266 = vsel %vm1824, %v3263, %v3265
      %v3267 = vrot.slane %v3199, 1
      %v3268 = vsel %vm1824, %v3265, %v3267
      %v3269 = vrot.slane %v3200, 1
      %v3270 = vsel %vm1824, %v3267, %v3269
      %v3271 = vrot.slane %v3201, 1
      %v3272 = vsel %vm1824, %v3269, %v3271
      %v3273 = vrot.slane %v3202, 1
      %v3274 = vsel %vm1824, %v3271, %v3273
      %v3275 = vrot.slane %v3203, 1
      %v3276 = vsel %vm1824, %v3273, %v3275
      %v3277 = vrot.slane %v3204, 1
      %v3278 = vsel %vm1824, %v3275, %v3277
      %v3279 = vrot.slane %v3205, 1
      %v3280 = vsel %vm1824, %v3277, %v3279
      %v3281 = vrot.slane %v3206, 1
      %v3282 = vsel %vm1824, %v3279, %v3281
      %v3283 = vrot.slane %v3207, 1
      %v3284 = vsel %vm1824, %v3281, %v3283
      %v3285 = vrot.slane %v3208, 1
      %v3286 = vsel %vm1824, %v3283, %v3285
      %v3287 = vrot.slane %v3209, 1
      %v3288 = vsel %vm1824, %v3285, %v3287
      %v3289 = vrot.slane %v3210, 1
      %v3290 = vsel %vm1824, %v3287, %v3289
      %v3291 = vrot.slane %v3211, 1
      %v3292 = vsel %vm1824, %v3289, %v3291
      %v3293 = vrot.slane %v3212, 1
      %v3294 = vsel %vm1824, %v3291, %v3293
      %v3295 = vrot.slane %v3213, 1
      %v3296 = vsel %vm1824, %v3293, %v3295
      %v3297 = vrot.slane %v3214, 1
      %v3298 = vsel %vm1824, %v3295, %v3297
      %v3299 = vrot.slane %v3215, 1
      %v3300 = vsel %vm1824, %v3297, %v3299
      %v3301 = vrot.slane %v3216, 1
      %v3302 = vsel %vm1824, %v3299, %v3301
      %v3303 = vrot.slane %v3217, 1
      %v3304 = vsel %vm1824, %v3301, %v3303
      %v3305 = vrot.slane %v3218, 1
      %v3306 = vsel %vm1824, %v3303, %v3305
      %v3307 = vrot.slane %v3219, 1
      %v3308 = vsel %vm1824, %v3305, %v3307
      %v3309 = vrot.slane %v3220, 1
      %v3310 = vsel %vm1824, %v3307, %v3309
      %v3311 = vrot.slane %v3221, 1
      %v3312 = vsel %vm1824, %v3309, %v3311
      %v3313 = vrot.slane %v3222, 1
      %v3314 = vsel %vm1824, %v3311, %v3313
      %v3315 = vrot.slane %v3223, 1
      %v3316 = vsel %vm1824, %v3313, %v3315
      %v3317 = vrot.slane %v3224, 1
      %v3318 = vsel %vm1824, %v3315, %v3317
      %v3319 = vrot.slane %v3225, 1
      %v3320 = vsel %vm1824, %v3317, %v3319
      %v3321 = vrot.slane %v3226, 1
      %v3322 = vsel %vm1824, %v3319, %v3321
      %v3323 = vrot.slane %v3227, 1
      %v3324 = vsel %vm1824, %v3321, %v3323
      %v3325 = vrot.slane %v3228, 1
      %v3326 = vsel %vm1824, %v3323, %v3325
      %v3327 = vrot.slane %v3229, 1
      %v3328 = vsel %vm1824, %v3325, %v3327
      %v3329 = vrot.slane %v3230, 1
      %v3330 = vsel %vm1824, %v3327, %v3329
      %v3331 = vrot.slane %v3231, 1
      %v3332 = vsel %vm1824, %v3329, %v3331
      %v3333 = vrot.slane %v3232, 1
      %v3334 = vsel %vm1824, %v3331, %v3333
      %v3335 = vrot.slane %v3233, 1
      %v3336 = vsel %vm1824, %v3333, %v3335
      %v3337 = vrot.slane %v3234, 1
      %v3338 = vsel %vm1824, %v3335, %v3337
      %v3339 = vrot.slane %v3235, 1
      %v3340 = vsel %vm1824, %v3337, %v3339
      %v3342 = vsel %vm725, %v3238, 0
      %v3345 = vsel %vm725, %v3240, 0
      %v3348 = vsel %vm725, %v3242, 0
      %v3351 = vsel %vm725, %v3244, 0
      %v3354 = vsel %vm725, %v3246, 0
      %v3357 = vsel %vm725, %v3248, 0
      %v3360 = vsel %vm725, %v3250, 0
      %v3363 = vsel %vm725, %v3252, 0
      %v3366 = vsel %vm725, %v3254, 0
      %v3369 = vsel %vm725, %v3256, 0
      %v3372 = vsel %vm725, %v3258, 0
      %v3375 = vsel %vm725, %v3260, 0
      %v3378 = vsel %vm725, %v3262, 0
      %v3381 = vsel %vm725, %v3264, 0
      %v3384 = vsel %vm725, %v3266, 0
      %v3387 = vsel %vm725, %v3268, 0
      %v3390 = vsel %vm725, %v3270, 0
      %v3393 = vsel %vm725, %v3272, 0
      %v3396 = vsel %vm725, %v3274, 0
      %v3399 = vsel %vm725, %v3276, 0
      %v3402 = vsel %vm725, %v3278, 0
      %v3405 = vsel %vm725, %v3280, 0
      %v3408 = vsel %vm725, %v3282, 0
      %v3411 = vsel %vm725, %v3284, 0
      %v3414 = vsel %vm725, %v3286, 0
      %v3417 = vsel %vm725, %v3288, 0
      %v3420 = vsel %vm725, %v3290, 0
      %v3423 = vsel %vm725, %v3292, 0
      %v3426 = vsel %vm725, %v3294, 0
      %v3429 = vsel %vm725, %v3296, 0
      %v3432 = vsel %vm725, %v3298, 0
      %v3435 = vsel %vm725, %v3300, 0
      %v3438 = vsel %vm725, %v3302, 0
      %v3441 = vsel %vm725, %v3304, 0
      %v3444 = vsel %vm725, %v3306, 0
      %v3447 = vsel %vm725, %v3308, 0
      %v3450 = vsel %vm725, %v3310, 0
      %v3453 = vsel %vm725, %v3312, 0
      %v3456 = vsel %vm725, %v3314, 0
      %v3459 = vsel %vm725, %v3316, 0
      %v3462 = vsel %vm725, %v3318, 0
      %v3465 = vsel %vm725, %v3320, 0
      %v3468 = vsel %vm725, %v3322, 0
      %v3471 = vsel %vm725, %v3324, 0
      %v3474 = vsel %vm725, %v3326, 0
      %v3477 = vsel %vm725, %v3328, 0
      %v3480 = vsel %vm725, %v3330, 0
      %v3483 = vsel %vm725, %v3332, 0
      %v3486 = vsel %vm725, %v3334, 0
      %v3489 = vsel %vm725, %v3336, 0
      %v3492 = vsel %vm725, %v3338, 0
      %v3495 = vsel %vm725, %v3340, 0
      %v3498 = vsel %vm725, %v3339, 0
      %v3501 = vsel %vm885, %v2970, 0
      %3503 = vmatprep.subr.bf16.mxu0 0
      %3504 = vmatpush1.bf16.msra.mxu0 0
      %3505 = vmatprep.subr.bf16.mxu0 0
      %3506 = vmatpush1.bf16.msra.mxu0 0
      %3507 = vmatprep.subr.bf16.mxu0 0
      %3508 = vmatpush1.bf16.msra.mxu0 0
      %3509 = vmatprep.subr.bf16.mxu0 0
      %3510 = vmatpush1.bf16.msra.mxu0 0
      %3511 = vmatprep.subr.bf16.mxu0 0
      %3512 = vmatpush1.bf16.msra.mxu0 0
      %3513 = vmatprep.subr.bf16.mxu0 0
      %3514 = vmatpush1.bf16.msra.mxu0 0
      %3515 = vmatprep.subr.bf16.mxu0 0
      %3516 = vmatpush1.bf16.msra.mxu0 0
      %3517 = vmatprep.subr.bf16.mxu0 0
      %3518 = vmatpush1.bf16.msra.mxu0 %v3501
      %3519 = vmatprep.subr.bf16.mxu0 0
      %3520 = vmatpush2.bf16.msra.mxu0 0
      %3521 = vmatprep.subr.bf16.mxu0 0
      %3522 = vmatpush2.bf16.msra.mxu0 0
      %3523 = vmatprep.subr.bf16.mxu0 0
      %3524 = vmatpush2.bf16.msra.mxu0 0
      %3525 = vmatprep.subr.bf16.mxu0 0
      %3526 = vmatpush2.bf16.msra.mxu0 0
      %3527 = vmatprep.subr.bf16.mxu0 0
      %3528 = vmatpush2.bf16.msra.mxu0 0
      %3529 = vmatprep.subr.bf16.mxu0 0
      %3530 = vmatpush2.bf16.msra.mxu0 0
      %3531 = vmatprep.subr.bf16.mxu0 0
      %3532 = vmatpush2.bf16.msra.mxu0 0
      %3533 = vmatprep.subr.bf16.mxu0 0
      %3534 = vmatpush2.bf16.msra.mxu0 0
      %3535 = vmatprep.mubr.bf16.mxu0 0
      %3536 = vmatmul.mubr.bf16.gmra.mxu0 %v3342
      %v3537 = vpop.f32.mrf.mxu0
      %v3538 = vadd.f32 0.0, %v3537
      %v3539 = vpop.f32.mrf.mxu0
      %v3540 = vpop.f32.mrf.mxu0
      %v3541 = vadd.f32 0.0, %v3540
      %v3542 = vpop.f32.mrf.mxu0
      %3543 = vmatprep.mubr.bf16.mxu0 0
      %3544 = vmatmul.mubr.bf16.gmra.mxu0 %v3345
      %v3545 = vpop.f32.mrf.mxu0
      %v3546 = vadd.f32 0.0, %v3545
      %v3547 = vpop.f32.mrf.mxu0
      %v3548 = vpop.f32.mrf.mxu0
      %v3549 = vadd.f32 0.0, %v3548
      %v3550 = vpop.f32.mrf.mxu0
      %3551 = vmatprep.mubr.bf16.mxu0 0
      %3552 = vmatmul.mubr.bf16.gmra.mxu0 %v3348
      %v3553 = vpop.f32.mrf.mxu0
      %v3554 = vadd.f32 0.0, %v3553
      %v3555 = vpop.f32.mrf.mxu0
      %v3556 = vpop.f32.mrf.mxu0
      %v3557 = vadd.f32 0.0, %v3556
      %v3558 = vpop.f32.mrf.mxu0
      %3559 = vmatprep.mubr.bf16.mxu0 0
      %3560 = vmatmul.mubr.bf16.gmra.mxu0 %v3351
      %v3561 = vpop.f32.mrf.mxu0
      %v3562 = vadd.f32 0.0, %v3561
      %v3563 = vpop.f32.mrf.mxu0
      %v3564 = vpop.f32.mrf.mxu0
      %v3565 = vadd.f32 0.0, %v3564
      %v3566 = vpop.f32.mrf.mxu0
      %3567 = vmatprep.mubr.bf16.mxu0 0
      %3568 = vmatmul.mubr.bf16.gmra.mxu0 %v3354
      %v3569 = vpop.f32.mrf.mxu0
      %v3570 = vadd.f32 0.0, %v3569
      %v3571 = vpop.f32.mrf.mxu0
      %v3572 = vpop.f32.mrf.mxu0
      %v3573 = vadd.f32 0.0, %v3572
      %v3574 = vpop.f32.mrf.mxu0
      %3575 = vmatprep.mubr.bf16.mxu0 0
      %3576 = vmatmul.mubr.bf16.gmra.mxu0 %v3357
      %v3577 = vpop.f32.mrf.mxu0
      %v3578 = vadd.f32 0.0, %v3577
      %v3579 = vpop.f32.mrf.mxu0
      %v3580 = vpop.f32.mrf.mxu0
      %v3581 = vadd.f32 0.0, %v3580
      %v3582 = vpop.f32.mrf.mxu0
      %3583 = vmatprep.mubr.bf16.mxu0 0
      %3584 = vmatmul.mubr.bf16.gmra.mxu0 %v3360
      %v3585 = vpop.f32.mrf.mxu0
      %v3586 = vadd.f32 0.0, %v3585
      %v3587 = vpop.f32.mrf.mxu0
      %v3588 = vpop.f32.mrf.mxu0
      %v3589 = vadd.f32 0.0, %v3588
      %v3590 = vpop.f32.mrf.mxu0
      %3591 = vmatprep.mubr.bf16.mxu0 0
      %3592 = vmatmul.mubr.bf16.gmra.mxu0 %v3363
      %v3593 = vpop.f32.mrf.mxu0
      %v3594 = vadd.f32 0.0, %v3593
      %v3595 = vpop.f32.mrf.mxu0
      %v3596 = vpop.f32.mrf.mxu0
      %v3597 = vadd.f32 0.0, %v3596
      %v3598 = vpop.f32.mrf.mxu0
      %3599 = vmatprep.mubr.bf16.mxu0 0
      %3600 = vmatmul.mubr.bf16.gmra.mxu0 %v3366
      %v3601 = vpop.f32.mrf.mxu0
      %v3602 = vadd.f32 0.0, %v3601
      %v3603 = vpop.f32.mrf.mxu0
      %v3604 = vpop.f32.mrf.mxu0
      %v3605 = vadd.f32 0.0, %v3604
      %v3606 = vpop.f32.mrf.mxu0
      %3607 = vmatprep.mubr.bf16.mxu0 0
      %3608 = vmatmul.mubr.bf16.gmra.mxu0 %v3369
      %v3609 = vpop.f32.mrf.mxu0
      %v3610 = vadd.f32 0.0, %v3609
      %v3611 = vpop.f32.mrf.mxu0
      %v3612 = vpop.f32.mrf.mxu0
      %v3613 = vadd.f32 0.0, %v3612
      %v3614 = vpop.f32.mrf.mxu0
      %3615 = vmatprep.mubr.bf16.mxu0 0
      %3616 = vmatmul.mubr.bf16.gmra.mxu0 %v3372
      %v3617 = vpop.f32.mrf.mxu0
      %v3618 = vadd.f32 0.0, %v3617
      %v3619 = vpop.f32.mrf.mxu0
      %v3620 = vpop.f32.mrf.mxu0
      %v3621 = vadd.f32 0.0, %v3620
      %v3622 = vpop.f32.mrf.mxu0
      %3623 = vmatprep.mubr.bf16.mxu0 0
      %3624 = vmatmul.mubr.bf16.gmra.mxu0 %v3375
      %v3625 = vpop.f32.mrf.mxu0
      %v3626 = vadd.f32 0.0, %v3625
      %v3627 = vpop.f32.mrf.mxu0
      %v3628 = vpop.f32.mrf.mxu0
      %v3629 = vadd.f32 0.0, %v3628
      %v3630 = vpop.f32.mrf.mxu0
      %3631 = vmatprep.mubr.bf16.mxu0 0
      %3632 = vmatmul.mubr.bf16.gmra.mxu0 %v3378
      %v3633 = vpop.f32.mrf.mxu0
      %v3634 = vadd.f32 0.0, %v3633
      %v3635 = vpop.f32.mrf.mxu0
      %v3636 = vpop.f32.mrf.mxu0
      %v3637 = vadd.f32 0.0, %v3636
      %v3638 = vpop.f32.mrf.mxu0
      %3639 = vmatprep.mubr.bf16.mxu0 0
      %3640 = vmatmul.mubr.bf16.gmra.mxu0 %v3381
      %v3641 = vpop.f32.mrf.mxu0
      %v3642 = vadd.f32 0.0, %v3641
      %v3643 = vpop.f32.mrf.mxu0
      %v3644 = vpop.f32.mrf.mxu0
      %v3645 = vadd.f32 0.0, %v3644
      %v3646 = vpop.f32.mrf.mxu0
      %3647 = vmatprep.mubr.bf16.mxu0 0
      %3648 = vmatmul.mubr.bf16.gmra.mxu0 %v3384
      %v3649 = vpop.f32.mrf.mxu0
      %v3650 = vadd.f32 0.0, %v3649
      %v3651 = vpop.f32.mrf.mxu0
      %v3652 = vpop.f32.mrf.mxu0
      %v3653 = vadd.f32 0.0, %v3652
      %v3654 = vpop.f32.mrf.mxu0
      %3655 = vmatprep.mubr.bf16.mxu0 0
      %3656 = vmatmul.mubr.bf16.gmra.mxu0 %v3387
      %v3657 = vpop.f32.mrf.mxu0
      %v3658 = vadd.f32 0.0, %v3657
      %v3659 = vpop.f32.mrf.mxu0
      %v3660 = vpop.f32.mrf.mxu0
      %v3661 = vadd.f32 0.0, %v3660
      %v3662 = vpop.f32.mrf.mxu0
      %3663 = vmatprep.mubr.bf16.mxu0 0
      %3664 = vmatmul.mubr.bf16.gmra.mxu0 %v3390
      %v3665 = vpop.f32.mrf.mxu0
      %v3666 = vadd.f32 0.0, %v3665
      %v3667 = vpop.f32.mrf.mxu0
      %v3668 = vpop.f32.mrf.mxu0
      %v3669 = vadd.f32 0.0, %v3668
      %v3670 = vpop.f32.mrf.mxu0
      %3671 = vmatprep.mubr.bf16.mxu0 0
      %3672 = vmatmul.mubr.bf16.gmra.mxu0 %v3393
      %v3673 = vpop.f32.mrf.mxu0
      %v3674 = vadd.f32 0.0, %v3673
      %v3675 = vpop.f32.mrf.mxu0
      %v3676 = vpop.f32.mrf.mxu0
      %v3677 = vadd.f32 0.0, %v3676
      %v3678 = vpop.f32.mrf.mxu0
      %3679 = vmatprep.mubr.bf16.mxu0 0
      %3680 = vmatmul.mubr.bf16.gmra.mxu0 %v3396
      %v3681 = vpop.f32.mrf.mxu0
      %v3682 = vadd.f32 0.0, %v3681
      %v3683 = vpop.f32.mrf.mxu0
      %v3684 = vpop.f32.mrf.mxu0
      %v3685 = vadd.f32 0.0, %v3684
      %v3686 = vpop.f32.mrf.mxu0
      %3687 = vmatprep.mubr.bf16.mxu0 0
      %3688 = vmatmul.mubr.bf16.gmra.mxu0 %v3399
      %v3689 = vpop.f32.mrf.mxu0
      %v3690 = vadd.f32 0.0, %v3689
      %v3691 = vpop.f32.mrf.mxu0
      %v3692 = vpop.f32.mrf.mxu0
      %v3693 = vadd.f32 0.0, %v3692
      %v3694 = vpop.f32.mrf.mxu0
      %3695 = vmatprep.mubr.bf16.mxu0 0
      %3696 = vmatmul.mubr.bf16.gmra.mxu0 %v3402
      %v3697 = vpop.f32.mrf.mxu0
      %v3698 = vadd.f32 0.0, %v3697
      %v3699 = vpop.f32.mrf.mxu0
      %v3700 = vpop.f32.mrf.mxu0
      %v3701 = vadd.f32 0.0, %v3700
      %v3702 = vpop.f32.mrf.mxu0
      %3703 = vmatprep.mubr.bf16.mxu0 0
      %3704 = vmatmul.mubr.bf16.gmra.mxu0 %v3405
      %v3705 = vpop.f32.mrf.mxu0
      %v3706 = vadd.f32 0.0, %v3705
      %v3707 = vpop.f32.mrf.mxu0
      %v3708 = vpop.f32.mrf.mxu0
      %v3709 = vadd.f32 0.0, %v3708
      %v3710 = vpop.f32.mrf.mxu0
      %3711 = vmatprep.mubr.bf16.mxu0 0
      %3712 = vmatmul.mubr.bf16.gmra.mxu0 %v3408
      %v3713 = vpop.f32.mrf.mxu0
      %v3714 = vadd.f32 0.0, %v3713
      %v3715 = vpop.f32.mrf.mxu0
      %v3716 = vpop.f32.mrf.mxu0
      %v3717 = vadd.f32 0.0, %v3716
      %v3718 = vpop.f32.mrf.mxu0
      %3719 = vmatprep.mubr.bf16.mxu0 0
      %3720 = vmatmul.mubr.bf16.gmra.mxu0 %v3411
      %v3721 = vpop.f32.mrf.mxu0
      %v3722 = vadd.f32 0.0, %v3721
      %v3723 = vpop.f32.mrf.mxu0
      %v3724 = vpop.f32.mrf.mxu0
      %v3725 = vadd.f32 0.0, %v3724
      %v3726 = vpop.f32.mrf.mxu0
      %3727 = vmatprep.mubr.bf16.mxu0 0
      %3728 = vmatmul.mubr.bf16.gmra.mxu0 %v3414
      %v3729 = vpop.f32.mrf.mxu0
      %v3730 = vadd.f32 0.0, %v3729
      %v3731 = vpop.f32.mrf.mxu0
      %v3732 = vpop.f32.mrf.mxu0
      %v3733 = vadd.f32 0.0, %v3732
      %v3734 = vpop.f32.mrf.mxu0
      %3735 = vmatprep.mubr.bf16.mxu0 0
      %3736 = vmatmul.mubr.bf16.gmra.mxu0 %v3417
      %v3737 = vpop.f32.mrf.mxu0
      %v3738 = vadd.f32 0.0, %v3737
      %v3739 = vpop.f32.mrf.mxu0
      %v3740 = vpop.f32.mrf.mxu0
      %v3741 = vadd.f32 0.0, %v3740
      %v3742 = vpop.f32.mrf.mxu0
      %3743 = vmatprep.mubr.bf16.mxu0 0
      %3744 = vmatmul.mubr.bf16.gmra.mxu0 %v3420
      %v3745 = vpop.f32.mrf.mxu0
      %v3746 = vadd.f32 0.0, %v3745
      %v3747 = vpop.f32.mrf.mxu0
      %v3748 = vpop.f32.mrf.mxu0
      %v3749 = vadd.f32 0.0, %v3748
      %v3750 = vpop.f32.mrf.mxu0
      %3751 = vmatprep.mubr.bf16.mxu0 0
      %3752 = vmatmul.mubr.bf16.gmra.mxu0 %v3423
      %v3753 = vpop.f32.mrf.mxu0
      %v3754 = vadd.f32 0.0, %v3753
      %v3755 = vpop.f32.mrf.mxu0
      %v3756 = vpop.f32.mrf.mxu0
      %v3757 = vadd.f32 0.0, %v3756
      %v3758 = vpop.f32.mrf.mxu0
      %3759 = vmatprep.mubr.bf16.mxu0 0
      %3760 = vmatmul.mubr.bf16.gmra.mxu0 %v3426
      %v3761 = vpop.f32.mrf.mxu0
      %v3762 = vadd.f32 0.0, %v3761
      %v3763 = vpop.f32.mrf.mxu0
      %v3764 = vpop.f32.mrf.mxu0
      %v3765 = vadd.f32 0.0, %v3764
      %v3766 = vpop.f32.mrf.mxu0
      %3767 = vmatprep.mubr.bf16.mxu0 0
      %3768 = vmatmul.mubr.bf16.gmra.mxu0 %v3429
      %v3769 = vpop.f32.mrf.mxu0
      %v3770 = vadd.f32 0.0, %v3769
      %v3771 = vpop.f32.mrf.mxu0
      %v3772 = vpop.f32.mrf.mxu0
      %v3773 = vadd.f32 0.0, %v3772
      %v3774 = vpop.f32.mrf.mxu0
      %3775 = vmatprep.mubr.bf16.mxu0 0
      %3776 = vmatmul.mubr.bf16.gmra.mxu0 %v3432
      %v3777 = vpop.f32.mrf.mxu0
      %v3778 = vadd.f32 0.0, %v3777
      %v3779 = vpop.f32.mrf.mxu0
      %v3780 = vpop.f32.mrf.mxu0
      %v3781 = vadd.f32 0.0, %v3780
      %v3782 = vpop.f32.mrf.mxu0
      %3783 = vmatprep.mubr.bf16.mxu0 0
      %3784 = vmatmul.mubr.bf16.gmra.mxu0 %v3435
      %v3785 = vpop.f32.mrf.mxu0
      %v3786 = vadd.f32 0.0, %v3785
      %v3787 = vpop.f32.mrf.mxu0
      %v3788 = vpop.f32.mrf.mxu0
      %v3789 = vadd.f32 0.0, %v3788
      %v3790 = vpop.f32.mrf.mxu0
      %3791 = vmatprep.mubr.bf16.mxu0 0
      %3792 = vmatmul.mubr.bf16.gmra.mxu0 %v3438
      %v3793 = vpop.f32.mrf.mxu0
      %v3794 = vadd.f32 0.0, %v3793
      %v3795 = vpop.f32.mrf.mxu0
      %v3796 = vpop.f32.mrf.mxu0
      %v3797 = vadd.f32 0.0, %v3796
      %v3798 = vpop.f32.mrf.mxu0
      %3799 = vmatprep.mubr.bf16.mxu0 0
      %3800 = vmatmul.mubr.bf16.gmra.mxu0 %v3441
      %v3801 = vpop.f32.mrf.mxu0
      %v3802 = vadd.f32 0.0, %v3801
      %v3803 = vpop.f32.mrf.mxu0
      %v3804 = vpop.f32.mrf.mxu0
      %v3805 = vadd.f32 0.0, %v3804
      %v3806 = vpop.f32.mrf.mxu0
      %3807 = vmatprep.mubr.bf16.mxu0 0
      %3808 = vmatmul.mubr.bf16.gmra.mxu0 %v3444
      %v3809 = vpop.f32.mrf.mxu0
      %v3810 = vadd.f32 0.0, %v3809
      %v3811 = vpop.f32.mrf.mxu0
      %v3812 = vpop.f32.mrf.mxu0
      %v3813 = vadd.f32 0.0, %v3812
      %v3814 = vpop.f32.mrf.mxu0
      %3815 = vmatprep.mubr.bf16.mxu0 0
      %3816 = vmatmul.mubr.bf16.gmra.mxu0 %v3447
      %v3817 = vpop.f32.mrf.mxu0
      %v3818 = vadd.f32 0.0, %v3817
      %v3819 = vpop.f32.mrf.mxu0
      %v3820 = vpop.f32.mrf.mxu0
      %v3821 = vadd.f32 0.0, %v3820
      %v3822 = vpop.f32.mrf.mxu0
      %3823 = vmatprep.mubr.bf16.mxu0 0
      %3824 = vmatmul.mubr.bf16.gmra.mxu0 %v3450
      %v3825 = vpop.f32.mrf.mxu0
      %v3826 = vadd.f32 0.0, %v3825
      %v3827 = vpop.f32.mrf.mxu0
      %v3828 = vpop.f32.mrf.mxu0
      %v3829 = vadd.f32 0.0, %v3828
      %v3830 = vpop.f32.mrf.mxu0
      %3831 = vmatprep.mubr.bf16.mxu0 0
      %3832 = vmatmul.mubr.bf16.gmra.mxu0 %v3453
      %v3833 = vpop.f32.mrf.mxu0
      %v3834 = vadd.f32 0.0, %v3833
      %v3835 = vpop.f32.mrf.mxu0
      %v3836 = vpop.f32.mrf.mxu0
      %v3837 = vadd.f32 0.0, %v3836
      %v3838 = vpop.f32.mrf.mxu0
      %3839 = vmatprep.mubr.bf16.mxu0 0
      %3840 = vmatmul.mubr.bf16.gmra.mxu0 %v3456
      %v3841 = vpop.f32.mrf.mxu0
      %v3842 = vadd.f32 0.0, %v3841
      %v3843 = vpop.f32.mrf.mxu0
      %v3844 = vpop.f32.mrf.mxu0
      %v3845 = vadd.f32 0.0, %v3844
      %v3846 = vpop.f32.mrf.mxu0
      %3847 = vmatprep.mubr.bf16.mxu0 0
      %3848 = vmatmul.mubr.bf16.gmra.mxu0 %v3459
      %v3849 = vpop.f32.mrf.mxu0
      %v3850 = vadd.f32 0.0, %v3849
      %v3851 = vpop.f32.mrf.mxu0
      %v3852 = vpop.f32.mrf.mxu0
      %v3853 = vadd.f32 0.0, %v3852
      %v3854 = vpop.f32.mrf.mxu0
      %3855 = vmatprep.mubr.bf16.mxu0 0
      %3856 = vmatmul.mubr.bf16.gmra.mxu0 %v3462
      %v3857 = vpop.f32.mrf.mxu0
      %v3858 = vadd.f32 0.0, %v3857
      %v3859 = vpop.f32.mrf.mxu0
      %v3860 = vpop.f32.mrf.mxu0
      %v3861 = vadd.f32 0.0, %v3860
      %v3862 = vpop.f32.mrf.mxu0
      %3863 = vmatprep.mubr.bf16.mxu0 0
      %3864 = vmatmul.mubr.bf16.gmra.mxu0 %v3465
      %v3865 = vpop.f32.mrf.mxu0
      %v3866 = vadd.f32 0.0, %v3865
      %v3867 = vpop.f32.mrf.mxu0
      %v3868 = vpop.f32.mrf.mxu0
      %v3869 = vadd.f32 0.0, %v3868
      %v3870 = vpop.f32.mrf.mxu0
      %3871 = vmatprep.mubr.bf16.mxu0 0
      %3872 = vmatmul.mubr.bf16.gmra.mxu0 %v3468
      %v3873 = vpop.f32.mrf.mxu0
      %v3874 = vadd.f32 0.0, %v3873
      %v3875 = vpop.f32.mrf.mxu0
      %v3876 = vpop.f32.mrf.mxu0
      %v3877 = vadd.f32 0.0, %v3876
      %v3878 = vpop.f32.mrf.mxu0
      %3879 = vmatprep.mubr.bf16.mxu0 0
      %3880 = vmatmul.mubr.bf16.gmra.mxu0 %v3471
      %v3881 = vpop.f32.mrf.mxu0
      %v3882 = vadd.f32 0.0, %v3881
      %v3883 = vpop.f32.mrf.mxu0
      %v3884 = vpop.f32.mrf.mxu0
      %v3885 = vadd.f32 0.0, %v3884
      %v3886 = vpop.f32.mrf.mxu0
      %3887 = vmatprep.mubr.bf16.mxu0 0
      %3888 = vmatmul.mubr.bf16.gmra.mxu0 %v3474
      %v3889 = vpop.f32.mrf.mxu0
      %v3890 = vadd.f32 0.0, %v3889
      %v3891 = vpop.f32.mrf.mxu0
      %v3892 = vpop.f32.mrf.mxu0
      %v3893 = vadd.f32 0.0, %v3892
      %v3894 = vpop.f32.mrf.mxu0
      %3895 = vmatprep.mubr.bf16.mxu0 0
      %3896 = vmatmul.mubr.bf16.gmra.mxu0 %v3477
      %v3897 = vpop.f32.mrf.mxu0
      %v3898 = vadd.f32 0.0, %v3897
      %v3899 = vpop.f32.mrf.mxu0
      %v3900 = vpop.f32.mrf.mxu0
      %v3901 = vadd.f32 0.0, %v3900
      %v3902 = vpop.f32.mrf.mxu0
      %3903 = vmatprep.mubr.bf16.mxu0 0
      %3904 = vmatmul.mubr.bf16.gmra.mxu0 %v3480
      %v3905 = vpop.f32.mrf.mxu0
      %v3906 = vadd.f32 0.0, %v3905
      %v3907 = vpop.f32.mrf.mxu0
      %v3908 = vpop.f32.mrf.mxu0
      %v3909 = vadd.f32 0.0, %v3908
      %v3910 = vpop.f32.mrf.mxu0
      %3911 = vmatprep.mubr.bf16.mxu0 0
      %3912 = vmatmul.mubr.bf16.gmra.mxu0 %v3483
      %v3913 = vpop.f32.mrf.mxu0
      %v3914 = vadd.f32 0.0, %v3913
      %v3915 = vpop.f32.mrf.mxu0
      %v3916 = vpop.f32.mrf.mxu0
      %v3917 = vadd.f32 0.0, %v3916
      %v3918 = vpop.f32.mrf.mxu0
      %3919 = vmatprep.mubr.bf16.mxu0 0
      %3920 = vmatmul.mubr.bf16.gmra.mxu0 %v3486
      %v3921 = vpop.f32.mrf.mxu0
      %v3922 = vadd.f32 0.0, %v3921
      %v3923 = vpop.f32.mrf.mxu0
      %v3924 = vpop.f32.mrf.mxu0
      %v3925 = vadd.f32 0.0, %v3924
      %v3926 = vpop.f32.mrf.mxu0
      %3927 = vmatprep.mubr.bf16.mxu0 0
      %3928 = vmatmul.mubr.bf16.gmra.mxu0 %v3489
      %v3929 = vpop.f32.mrf.mxu0
      %v3930 = vadd.f32 0.0, %v3929
      %v3931 = vpop.f32.mrf.mxu0
      %v3932 = vpop.f32.mrf.mxu0
      %v3933 = vadd.f32 0.0, %v3932
      %v3934 = vpop.f32.mrf.mxu0
      %3935 = vmatprep.mubr.bf16.mxu0 0
      %3936 = vmatmul.mubr.bf16.gmra.mxu0 %v3492
      %v3937 = vpop.f32.mrf.mxu0
      %v3938 = vadd.f32 0.0, %v3937
      %v3939 = vpop.f32.mrf.mxu0
      %v3940 = vpop.f32.mrf.mxu0
      %v3941 = vadd.f32 0.0, %v3940
      %v3942 = vpop.f32.mrf.mxu0
      %3943 = vmatprep.mubr.bf16.mxu0 0
      %3944 = vmatmul.mubr.bf16.gmra.mxu0 %v3495
      %v3945 = vpop.f32.mrf.mxu0
      %v3946 = vadd.f32 0.0, %v3945
      %v3947 = vpop.f32.mrf.mxu0
      %v3948 = vpop.f32.mrf.mxu0
      %v3949 = vadd.f32 0.0, %v3948
      %v3950 = vpop.f32.mrf.mxu0
      %3951 = vmatprep.mubr.bf16.mxu0 0
      %3952 = vmatmul.mubr.bf16.gmra.mxu0 %v3498
      %v3953 = vpop.f32.mrf.mxu0
      %v3954 = vadd.f32 0.0, %v3953
      %v3955 = vpop.f32.mrf.mxu0
      %v3956 = vpop.f32.mrf.mxu0
      %v3957 = vpop.f32.mrf.mxu0
      %3958 = vdwg.mxu0
      %v3959 = vld [vmem:[#allocation2] sm:$0xff]
      %v3960 = vld [vmem:[#allocation2 + $0x8] sm:$0xff]
      %v3961 = vld [vmem:[#allocation2 + $0x10] sm:$0xff]
      %v3962 = vld [vmem:[#allocation2 + $0x18] sm:$0xff]
      %v3963 = vld [vmem:[#allocation2 + $0x20] sm:$0xff]
      %v3964 = vld [vmem:[#allocation2 + $0x28] sm:$0xff]
      %v3965 = vld [vmem:[#allocation2 + $0x30] sm:$0xff]
      %v3966 = vld [vmem:[#allocation2 + $0x38] sm:$0xff]
      %v3967 = vld [vmem:[#allocation2 + $0x40] sm:$0xff]
      %v3968 = vld [vmem:[#allocation2 + $0x48] sm:$0xff]
      %v3969 = vld [vmem:[#allocation2 + $0x50] sm:$0xff]
      %v3970 = vld [vmem:[#allocation2 + $0x58] sm:$0xff]
      %v3971 = vld [vmem:[#allocation2 + $0x60] sm:$0xff]
      %v3972 = vld [vmem:[#allocation2 + $0x68] sm:$0xff]
      %v3973 = vld [vmem:[#allocation2 + $0x70] sm:$0xff]
      %v3974 = vld [vmem:[#allocation2 + $0x78] sm:$0xff]
      %v3975 = vld [vmem:[#allocation2 + $0x80] sm:$0xff]
      %v3976 = vld [vmem:[#allocation2 + $0x88] sm:$0xff]
      %v3977 = vld [vmem:[#allocation2 + $0x90] sm:$0xff]
      %v3978 = vld [vmem:[#allocation2 + $0x98] sm:$0xff]
      %v3979 = vld [vmem:[#allocation2 + $0xa0] sm:$0xff]
      %v3980 = vld [vmem:[#allocation2 + $0xa8] sm:$0xff]
      %v3981 = vld [vmem:[#allocation2 + $0xb0] sm:$0xff]
      %v3982 = vld [vmem:[#allocation2 + $0xb8] sm:$0xff]
      %v3983 = vld [vmem:[#allocation2 + $0xc0] sm:$0xff]
      %v3984 = vld [vmem:[#allocation2 + $0xc8] sm:$0xff]
      %v3985 = vld [vmem:[#allocation2 + $0xd0] sm:$0xff]
      %v3986 = vld [vmem:[#allocation2 + $0xd8] sm:$0xff]
      %v3987 = vld [vmem:[#allocation2 + $0xe0] sm:$0xff]
      %v3988 = vld [vmem:[#allocation2 + $0xe8] sm:$0xff]
      %v3989 = vld [vmem:[#allocation2 + $0xf0] sm:$0xff]
      %v3990 = vld [vmem:[#allocation2 + $0xf8] sm:$0xff]
      %v3991 = vld [vmem:[#allocation2 + $0x100] sm:$0xff]
      %v3992 = vld [vmem:[#allocation2 + $0x108] sm:$0xff]
      %v3993 = vld [vmem:[#allocation2 + $0x110] sm:$0xff]
      %v3994 = vld [vmem:[#allocation2 + $0x118] sm:$0xff]
      %v3995 = vld [vmem:[#allocation2 + $0x120] sm:$0xff]
      %v3996 = vld [vmem:[#allocation2 + $0x128] sm:$0xff]
      %v3997 = vld [vmem:[#allocation2 + $0x130] sm:$0xff]
      %v3998 = vld [vmem:[#allocation2 + $0x138] sm:$0xff]
      %v3999 = vld [vmem:[#allocation2 + $0x140] sm:$0xff]
      %v4000 = vld [vmem:[#allocation2 + $0x148] sm:$0xff]
      %v4001 = vld [vmem:[#allocation2 + $0x150] sm:$0xff]
      %v4002 = vld [vmem:[#allocation2 + $0x158] sm:$0xff]
      %v4003 = vld [vmem:[#allocation2 + $0x160] sm:$0xff]
      %v4004 = vld [vmem:[#allocation2 + $0x168] sm:$0xff]
      %v4005 = vld [vmem:[#allocation2 + $0x170] sm:$0xff]
      %v4006 = vld [vmem:[#allocation2 + $0x178] sm:$0xff]
      %v4007 = vld [vmem:[#allocation2 + $0x180] sm:$0xff]
      %v4008 = vld [vmem:[#allocation2 + $0x188] sm:$0xff]
      %v4009 = vld [vmem:[#allocation2 + $0x190] sm:$0xff]
      %v4010 = vld [vmem:[#allocation2 + $0x198] sm:$0xff]
      %v4011 = vld [vmem:[#allocation2 + $0x1a0] sm:$0xff]
      %v4012 = vld [vmem:[#allocation2 + $0x1a8] sm:$0xff]
      %v4013 = vld [vmem:[#allocation2 + $0x1b0] sm:$0xff]
      %v4014 = vld [vmem:[#allocation2 + $0x1b8] sm:$0xff]
      %v4015 = vld [vmem:[#allocation2 + $0x1c0] sm:$0xff]
      %v4016 = vld [vmem:[#allocation2 + $0x1c8] sm:$0xff]
      %v4017 = vld [vmem:[#allocation2 + $0x1d0] sm:$0xff]
      %v4018 = vld [vmem:[#allocation2 + $0x1d8] sm:$0xff]
      %v4019 = vld [vmem:[#allocation2 + $0x1e0] sm:$0xff]
      %v4020 = vld [vmem:[#allocation2 + $0x1e8] sm:$0xff]
      %v4021 = vld [vmem:[#allocation2 + $0x1f0] sm:$0xff]
      %v4022 = vld [vmem:[#allocation2 + $0x1f8] sm:$0xff]
      %v4023 = vld [vmem:[#allocation2 + $0x200] sm:$0xff]
      %v4024 = vld [vmem:[#allocation2 + $0x208] sm:$0xff]
      %v4025 = vld [vmem:[#allocation2 + $0x210] sm:$0xff]
      %v4026 = vld [vmem:[#allocation2 + $0x218] sm:$0xff]
      %v4027 = vld [vmem:[#allocation2 + $0x220] sm:$0xff]
      %v4028 = vld [vmem:[#allocation2 + $0x228] sm:$0xff]
      %v4029 = vld [vmem:[#allocation2 + $0x230] sm:$0xff]
      %v4030 = vld [vmem:[#allocation2 + $0x238] sm:$0xff]
      %v4031 = vld [vmem:[#allocation2 + $0x240] sm:$0xff]
      %v4032 = vld [vmem:[#allocation2 + $0x248] sm:$0xff]
      %v4033 = vld [vmem:[#allocation2 + $0x250] sm:$0xff]
      %v4034 = vld [vmem:[#allocation2 + $0x258] sm:$0xff]
      %v4035 = vld [vmem:[#allocation2 + $0x260] sm:$0xff]
      %v4036 = vld [vmem:[#allocation2 + $0x268] sm:$0xff]
      %v4037 = vld [vmem:[#allocation2 + $0x270] sm:$0xff]
      %v4038 = vld [vmem:[#allocation2 + $0x278] sm:$0xff]
      %v4039 = vld [vmem:[#allocation2 + $0x280] sm:$0xff]
      %v4040 = vld [vmem:[#allocation2 + $0x288] sm:$0xff]
      %v4041 = vld [vmem:[#allocation2 + $0x290] sm:$0xff]
      %v4042 = vld [vmem:[#allocation2 + $0x298] sm:$0xff]
      %v4043 = vld [vmem:[#allocation2 + $0x2a0] sm:$0xff]
      %v4044 = vld [vmem:[#allocation2 + $0x2a8] sm:$0xff]
      %v4045 = vld [vmem:[#allocation2 + $0x2b0] sm:$0xff]
      %v4046 = vld [vmem:[#allocation2 + $0x2b8] sm:$0xff]
      %v4047 = vld [vmem:[#allocation2 + $0x2c0] sm:$0xff]
      %v4048 = vld [vmem:[#allocation2 + $0x2c8] sm:$0xff]
      %v4049 = vld [vmem:[#allocation2 + $0x2d0] sm:$0xff]
      %v4050 = vld [vmem:[#allocation2 + $0x2d8] sm:$0xff]
      %v4051 = vld [vmem:[#allocation2 + $0x2e0] sm:$0xff]
      %v4052 = vld [vmem:[#allocation2 + $0x2e8] sm:$0xff]
      %v4053 = vld [vmem:[#allocation2 + $0x2f0] sm:$0xff]
      %v4054 = vld [vmem:[#allocation2 + $0x2f8] sm:$0xff]
      %v4055 = vld [vmem:[#allocation2 + $0x300] sm:$0xff]
      %v4056 = vld [vmem:[#allocation2 + $0x308] sm:$0xff]
      %v4057 = vld [vmem:[#allocation2 + $0x310] sm:$0xff]
      %v4058 = vld [vmem:[#allocation2 + $0x318] sm:$0xff]
      %v4059 = vld [vmem:[#allocation2 + $0x320] sm:$0xff]
      %v4060 = vld [vmem:[#allocation2 + $0x328] sm:$0xff]
      %v4061 = vld [vmem:[#allocation2 + $0x330] sm:$0xff]
      %v4062 = vld [vmem:[#allocation2 + $0x338] sm:$0xff]
      %v4063 = vld [vmem:[#allocation2 + $0x340] sm:$0xff]
      %v4064 = vadd.f32 %v3959, %v3538
      %v4065 = vadd.f32 %v3960, %v3541
      %v4066 = vadd.f32 %v3961, %v3546
      %v4067 = vadd.f32 %v3962, %v3549
      %v4068 = vadd.f32 %v3963, %v3554
      %v4069 = vadd.f32 %v3964, %v3557
      %v4070 = vadd.f32 %v3965, %v3562
      %v4071 = vadd.f32 %v3966, %v3565
      %v4072 = vadd.f32 %v3967, %v3570
      %v4073 = vadd.f32 %v3968, %v3573
      %v4074 = vadd.f32 %v3969, %v3578
      %v4075 = vadd.f32 %v3970, %v3581
      %v4076 = vadd.f32 %v3971, %v3586
      %v4077 = vadd.f32 %v3972, %v3589
      %v4078 = vadd.f32 %v3973, %v3594
      %v4079 = vadd.f32 %v3974, %v3597
      %v4080 = vadd.f32 %v3975, %v3602
      %v4081 = vadd.f32 %v3976, %v3605
      %v4082 = vadd.f32 %v3977, %v3610
      %v4083 = vadd.f32 %v3978, %v3613
      %v4084 = vadd.f32 %v3979, %v3618
      %v4085 = vadd.f32 %v3980, %v3621
      %v4086 = vadd.f32 %v3981, %v3626
      %v4087 = vadd.f32 %v3982, %v3629
      %v4088 = vadd.f32 %v3983, %v3634
      %v4089 = vadd.f32 %v3984, %v3637
      %v4090 = vadd.f32 %v3985, %v3642
      %v4091 = vadd.f32 %v3986, %v3645
      %v4092 = vadd.f32 %v3987, %v3650
      %v4093 = vadd.f32 %v3988, %v3653
      %v4094 = vadd.f32 %v3989, %v3658
      %v4095 = vadd.f32 %v3990, %v3661
      %v4096 = vadd.f32 %v3991, %v3666
      %v4097 = vadd.f32 %v3992, %v3669
      %v4098 = vadd.f32 %v3993, %v3674
      %v4099 = vadd.f32 %v3994, %v3677
      %v4100 = vadd.f32 %v3995, %v3682
      %v4101 = vadd.f32 %v3996, %v3685
      %v4102 = vadd.f32 %v3997, %v3690
      %v4103 = vadd.f32 %v3998, %v3693
      %v4104 = vadd.f32 %v3999, %v3698
      %v4105 = vadd.f32 %v4000, %v3701
      %v4106 = vadd.f32 %v4001, %v3706
      %v4107 = vadd.f32 %v4002, %v3709
      %v4108 = vadd.f32 %v4003, %v3714
      %v4109 = vadd.f32 %v4004, %v3717
      %v4110 = vadd.f32 %v4005, %v3722
      %v4111 = vadd.f32 %v4006, %v3725
      %v4112 = vadd.f32 %v4007, %v3730
      %v4113 = vadd.f32 %v4008, %v3733
      %v4114 = vadd.f32 %v4009, %v3738
      %v4115 = vadd.f32 %v4010, %v3741
      %v4116 = vadd.f32 %v4011, %v3746
      %v4117 = vadd.f32 %v4012, %v3749
      %v4118 = vadd.f32 %v4013, %v3754
      %v4119 = vadd.f32 %v4014, %v3757
      %v4120 = vadd.f32 %v4015, %v3762
      %v4121 = vadd.f32 %v4016, %v3765
      %v4122 = vadd.f32 %v4017, %v3770
      %v4123 = vadd.f32 %v4018, %v3773
      %v4124 = vadd.f32 %v4019, %v3778
      %v4125 = vadd.f32 %v4020, %v3781
      %v4126 = vadd.f32 %v4021, %v3786
      %v4127 = vadd.f32 %v4022, %v3789
      %v4128 = vadd.f32 %v4023, %v3794
      %v4129 = vadd.f32 %v4024, %v3797
      %v4130 = vadd.f32 %v4025, %v3802
      %v4131 = vadd.f32 %v4026, %v3805
      %v4132 = vadd.f32 %v4027, %v3810
      %v4133 = vadd.f32 %v4028, %v3813
      %v4134 = vadd.f32 %v4029, %v3818
      %v4135 = vadd.f32 %v4030, %v3821
      %v4136 = vadd.f32 %v4031, %v3826
      %v4137 = vadd.f32 %v4032, %v3829
      %v4138 = vadd.f32 %v4033, %v3834
      %v4139 = vadd.f32 %v4034, %v3837
      %v4140 = vadd.f32 %v4035, %v3842
      %v4141 = vadd.f32 %v4036, %v3845
      %v4142 = vadd.f32 %v4037, %v3850
      %v4143 = vadd.f32 %v4038, %v3853
      %v4144 = vadd.f32 %v4039, %v3858
      %v4145 = vadd.f32 %v4040, %v3861
      %v4146 = vadd.f32 %v4041, %v3866
      %v4147 = vadd.f32 %v4042, %v3869
      %v4148 = vadd.f32 %v4043, %v3874
      %v4149 = vadd.f32 %v4044, %v3877
      %v4150 = vadd.f32 %v4045, %v3882
      %v4151 = vadd.f32 %v4046, %v3885
      %v4152 = vadd.f32 %v4047, %v3890
      %v4153 = vadd.f32 %v4048, %v3893
      %v4154 = vadd.f32 %v4049, %v3898
      %v4155 = vadd.f32 %v4050, %v3901
      %v4156 = vadd.f32 %v4051, %v3906
      %v4157 = vadd.f32 %v4052, %v3909
      %v4158 = vadd.f32 %v4053, %v3914
      %v4159 = vadd.f32 %v4054, %v3917
      %v4160 = vadd.f32 %v4055, %v3922
      %v4161 = vadd.f32 %v4056, %v3925
      %v4162 = vadd.f32 %v4057, %v3930
      %v4163 = vadd.f32 %v4058, %v3933
      %v4164 = vadd.f32 %v4059, %v3938
      %v4165 = vadd.f32 %v4060, %v3941
      %v4166 = vadd.f32 %v4061, %v3946
      %v4167 = vadd.f32 %v4062, %v3949
      %v4168 = vadd.f32 %v4063, %v3954
      %4169 = vst.msk [vmem:[#allocation2] sm:$0xff] %vm1345, %v4064
      %4170 = vst.msk [vmem:[#allocation2 + $0x8] sm:$0xff] %vm1345, %v4065
      %4171 = vst.msk [vmem:[#allocation2 + $0x10] sm:$0xff] %vm1345, %v4066
      %4172 = vst.msk [vmem:[#allocation2 + $0x18] sm:$0xff] %vm1345, %v4067
      %4173 = vst.msk [vmem:[#allocation2 + $0x20] sm:$0xff] %vm1345, %v4068
      %4174 = vst.msk [vmem:[#allocation2 + $0x28] sm:$0xff] %vm1345, %v4069
      %4175 = vst.msk [vmem:[#allocation2 + $0x30] sm:$0xff] %vm1345, %v4070
      %4176 = vst.msk [vmem:[#allocation2 + $0x38] sm:$0xff] %vm1345, %v4071
      %4177 = vst.msk [vmem:[#allocation2 + $0x40] sm:$0xff] %vm1345, %v4072
      %4178 = vst.msk [vmem:[#allocation2 + $0x48] sm:$0xff] %vm1345, %v4073
      %4179 = vst.msk [vmem:[#allocation2 + $0x50] sm:$0xff] %vm1345, %v4074
      %4180 = vst.msk [vmem:[#allocation2 + $0x58] sm:$0xff] %vm1345, %v4075
      %4181 = vst.msk [vmem:[#allocation2 + $0x60] sm:$0xff] %vm1345, %v4076
      %4182 = vst.msk [vmem:[#allocation2 + $0x68] sm:$0xff] %vm1345, %v4077
      %4183 = vst.msk [vmem:[#allocation2 + $0x70] sm:$0xff] %vm1345, %v4078
      %4184 = vst.msk [vmem:[#allocation2 + $0x78] sm:$0xff] %vm1345, %v4079
      %4185 = vst.msk [vmem:[#allocation2 + $0x80] sm:$0xff] %vm1345, %v4080
      %4186 = vst.msk [vmem:[#allocation2 + $0x88] sm:$0xff] %vm1345, %v4081
      %4187 = vst.msk [vmem:[#allocation2 + $0x90] sm:$0xff] %vm1345, %v4082
      %4188 = vst.msk [vmem:[#allocation2 + $0x98] sm:$0xff] %vm1345, %v4083
      %4189 = vst.msk [vmem:[#allocation2 + $0xa0] sm:$0xff] %vm1345, %v4084
      %4190 = vst.msk [vmem:[#allocation2 + $0xa8] sm:$0xff] %vm1345, %v4085
      %4191 = vst.msk [vmem:[#allocation2 + $0xb0] sm:$0xff] %vm1345, %v4086
      %4192 = vst.msk [vmem:[#allocation2 + $0xb8] sm:$0xff] %vm1345, %v4087
      %4193 = vst.msk [vmem:[#allocation2 + $0xc0] sm:$0xff] %vm1345, %v4088
      %4194 = vst.msk [vmem:[#allocation2 + $0xc8] sm:$0xff] %vm1345, %v4089
      %4195 = vst.msk [vmem:[#allocation2 + $0xd0] sm:$0xff] %vm1345, %v4090
      %4196 = vst.msk [vmem:[#allocation2 + $0xd8] sm:$0xff] %vm1345, %v4091
      %4197 = vst.msk [vmem:[#allocation2 + $0xe0] sm:$0xff] %vm1345, %v4092
      %4198 = vst.msk [vmem:[#allocation2 + $0xe8] sm:$0xff] %vm1345, %v4093
      %4199 = vst.msk [vmem:[#allocation2 + $0xf0] sm:$0xff] %vm1345, %v4094
      %4200 = vst.msk [vmem:[#allocation2 + $0xf8] sm:$0xff] %vm1345, %v4095
      %4201 = vst.msk [vmem:[#allocation2 + $0x100] sm:$0xff] %vm1345, %v4096
      %4202 = vst.msk [vmem:[#allocation2 + $0x108] sm:$0xff] %vm1345, %v4097
      %4203 = vst.msk [vmem:[#allocation2 + $0x110] sm:$0xff] %vm1345, %v4098
      %4204 = vst.msk [vmem:[#allocation2 + $0x118] sm:$0xff] %vm1345, %v4099
      %4205 = vst.msk [vmem:[#allocation2 + $0x120] sm:$0xff] %vm1345, %v4100
      %4206 = vst.msk [vmem:[#allocation2 + $0x128] sm:$0xff] %vm1345, %v4101
      %4207 = vst.msk [vmem:[#allocation2 + $0x130] sm:$0xff] %vm1345, %v4102
      %4208 = vst.msk [vmem:[#allocation2 + $0x138] sm:$0xff] %vm1345, %v4103
      %4209 = vst.msk [vmem:[#allocation2 + $0x140] sm:$0xff] %vm1345, %v4104
      %4210 = vst.msk [vmem:[#allocation2 + $0x148] sm:$0xff] %vm1345, %v4105
      %4211 = vst.msk [vmem:[#allocation2 + $0x150] sm:$0xff] %vm1345, %v4106
      %4212 = vst.msk [vmem:[#allocation2 + $0x158] sm:$0xff] %vm1345, %v4107
      %4213 = vst.msk [vmem:[#allocation2 + $0x160] sm:$0xff] %vm1345, %v4108
      %4214 = vst.msk [vmem:[#allocation2 + $0x168] sm:$0xff] %vm1345, %v4109
      %4215 = vst.msk [vmem:[#allocation2 + $0x170] sm:$0xff] %vm1345, %v4110
      %4216 = vst.msk [vmem:[#allocation2 + $0x178] sm:$0xff] %vm1345, %v4111
      %4217 = vst.msk [vmem:[#allocation2 + $0x180] sm:$0xff] %vm1345, %v4112
      %4218 = vst.msk [vmem:[#allocation2 + $0x188] sm:$0xff] %vm1345, %v4113
      %4219 = vst.msk [vmem:[#allocation2 + $0x190] sm:$0xff] %vm1345, %v4114
      %4220 = vst.msk [vmem:[#allocation2 + $0x198] sm:$0xff] %vm1345, %v4115
      %4221 = vst.msk [vmem:[#allocation2 + $0x1a0] sm:$0xff] %vm1345, %v4116
      %4222 = vst.msk [vmem:[#allocation2 + $0x1a8] sm:$0xff] %vm1345, %v4117
      %4223 = vst.msk [vmem:[#allocation2 + $0x1b0] sm:$0xff] %vm1345, %v4118
      %4224 = vst.msk [vmem:[#allocation2 + $0x1b8] sm:$0xff] %vm1345, %v4119
      %4225 = vst.msk [vmem:[#allocation2 + $0x1c0] sm:$0xff] %vm1345, %v4120
      %4226 = vst.msk [vmem:[#allocation2 + $0x1c8] sm:$0xff] %vm1345, %v4121
      %4227 = vst.msk [vmem:[#allocation2 + $0x1d0] sm:$0xff] %vm1345, %v4122
      %4228 = vst.msk [vmem:[#allocation2 + $0x1d8] sm:$0xff] %vm1345, %v4123
      %4229 = vst.msk [vmem:[#allocation2 + $0x1e0] sm:$0xff] %vm1345, %v4124
      %4230 = vst.msk [vmem:[#allocation2 + $0x1e8] sm:$0xff] %vm1345, %v4125
      %4231 = vst.msk [vmem:[#allocation2 + $0x1f0] sm:$0xff] %vm1345, %v4126
      %4232 = vst.msk [vmem:[#allocation2 + $0x1f8] sm:$0xff] %vm1345, %v4127
      %4233 = vst.msk [vmem:[#allocation2 + $0x200] sm:$0xff] %vm1345, %v4128
      %4234 = vst.msk [vmem:[#allocation2 + $0x208] sm:$0xff] %vm1345, %v4129
      %4235 = vst.msk [vmem:[#allocation2 + $0x210] sm:$0xff] %vm1345, %v4130
      %4236 = vst.msk [vmem:[#allocation2 + $0x218] sm:$0xff] %vm1345, %v4131
      %4237 = vst.msk [vmem:[#allocation2 + $0x220] sm:$0xff] %vm1345, %v4132
      %4238 = vst.msk [vmem:[#allocation2 + $0x228] sm:$0xff] %vm1345, %v4133
      %4239 = vst.msk [vmem:[#allocation2 + $0x230] sm:$0xff] %vm1345, %v4134
      %4240 = vst.msk [vmem:[#allocation2 + $0x238] sm:$0xff] %vm1345, %v4135
      %4241 = vst.msk [vmem:[#allocation2 + $0x240] sm:$0xff] %vm1345, %v4136
      %4242 = vst.msk [vmem:[#allocation2 + $0x248] sm:$0xff] %vm1345, %v4137
      %4243 = vst.msk [vmem:[#allocation2 + $0x250] sm:$0xff] %vm1345, %v4138
      %4244 = vst.msk [vmem:[#allocation2 + $0x258] sm:$0xff] %vm1345, %v4139
      %4245 = vst.msk [vmem:[#allocation2 + $0x260] sm:$0xff] %vm1345, %v4140
      %4246 = vst.msk [vmem:[#allocation2 + $0x268] sm:$0xff] %vm1345, %v4141
      %4247 = vst.msk [vmem:[#allocation2 + $0x270] sm:$0xff] %vm1345, %v4142
      %4248 = vst.msk [vmem:[#allocation2 + $0x278] sm:$0xff] %vm1345, %v4143
      %4249 = vst.msk [vmem:[#allocation2 + $0x280] sm:$0xff] %vm1345, %v4144
      %4250 = vst.msk [vmem:[#allocation2 + $0x288] sm:$0xff] %vm1345, %v4145
      %4251 = vst.msk [vmem:[#allocation2 + $0x290] sm:$0xff] %vm1345, %v4146
      %4252 = vst.msk [vmem:[#allocation2 + $0x298] sm:$0xff] %vm1345, %v4147
      %4253 = vst.msk [vmem:[#allocation2 + $0x2a0] sm:$0xff] %vm1345, %v4148
      %4254 = vst.msk [vmem:[#allocation2 + $0x2a8] sm:$0xff] %vm1345, %v4149
      %4255 = vst.msk [vmem:[#allocation2 + $0x2b0] sm:$0xff] %vm1345, %v4150
      %4256 = vst.msk [vmem:[#allocation2 + $0x2b8] sm:$0xff] %vm1345, %v4151
      %4257 = vst.msk [vmem:[#allocation2 + $0x2c0] sm:$0xff] %vm1345, %v4152
      %4258 = vst.msk [vmem:[#allocation2 + $0x2c8] sm:$0xff] %vm1345, %v4153
      %4259 = vst.msk [vmem:[#allocation2 + $0x2d0] sm:$0xff] %vm1345, %v4154
      %4260 = vst.msk [vmem:[#allocation2 + $0x2d8] sm:$0xff] %vm1345, %v4155
      %4261 = vst.msk [vmem:[#allocation2 + $0x2e0] sm:$0xff] %vm1345, %v4156
      %4262 = vst.msk [vmem:[#allocation2 + $0x2e8] sm:$0xff] %vm1345, %v4157
      %4263 = vst.msk [vmem:[#allocation2 + $0x2f0] sm:$0xff] %vm1345, %v4158
      %4264 = vst.msk [vmem:[#allocation2 + $0x2f8] sm:$0xff] %vm1345, %v4159
      %4265 = vst.msk [vmem:[#allocation2 + $0x300] sm:$0xff] %vm1345, %v4160
      %4266 = vst.msk [vmem:[#allocation2 + $0x308] sm:$0xff] %vm1345, %v4161
      %4267 = vst.msk [vmem:[#allocation2 + $0x310] sm:$0xff] %vm1345, %v4162
      %4268 = vst.msk [vmem:[#allocation2 + $0x318] sm:$0xff] %vm1345, %v4163
      %4269 = vst.msk [vmem:[#allocation2 + $0x320] sm:$0xff] %vm1345, %v4164
      %4270 = vst.msk [vmem:[#allocation2 + $0x328] sm:$0xff] %vm1345, %v4165
      %4271 = vst.msk [vmem:[#allocation2 + $0x330] sm:$0xff] %vm1345, %v4166
      %4272 = vst.msk [vmem:[#allocation2 + $0x338] sm:$0xff] %vm1345, %v4167
      %4273 = vst.msk [vmem:[#allocation2 + $0x340] sm:$0xff] %vm1345, %v4168
      %v4274 = vld [vmem:[#allocation2] sm:$0xff]
      %v4275 = vld [vmem:[#allocation2 + $0x8] sm:$0xff]
      %v4276 = vld [vmem:[#allocation2 + $0x10] sm:$0xff]
      %v4277 = vld [vmem:[#allocation2 + $0x18] sm:$0xff]
      %v4278 = vld [vmem:[#allocation2 + $0x20] sm:$0xff]
      %v4279 = vld [vmem:[#allocation2 + $0x28] sm:$0xff]
      %v4280 = vld [vmem:[#allocation2 + $0x30] sm:$0xff]
      %v4281 = vld [vmem:[#allocation2 + $0x38] sm:$0xff]
      %v4282 = vld [vmem:[#allocation2 + $0x40] sm:$0xff]
      %v4283 = vld [vmem:[#allocation2 + $0x48] sm:$0xff]
      %v4284 = vld [vmem:[#allocation2 + $0x50] sm:$0xff]
      %v4285 = vld [vmem:[#allocation2 + $0x58] sm:$0xff]
      %v4286 = vld [vmem:[#allocation2 + $0x60] sm:$0xff]
      %v4287 = vld [vmem:[#allocation2 + $0x68] sm:$0xff]
      %v4288 = vld [vmem:[#allocation2 + $0x70] sm:$0xff]
      %v4289 = vld [vmem:[#allocation2 + $0x78] sm:$0xff]
      %v4290 = vld [vmem:[#allocation2 + $0x80] sm:$0xff]
      %v4291 = vld [vmem:[#allocation2 + $0x88] sm:$0xff]
      %v4292 = vld [vmem:[#allocation2 + $0x90] sm:$0xff]
      %v4293 = vld [vmem:[#allocation2 + $0x98] sm:$0xff]
      %v4294 = vld [vmem:[#allocation2 + $0xa0] sm:$0xff]
      %v4295 = vld [vmem:[#allocation2 + $0xa8] sm:$0xff]
      %v4296 = vld [vmem:[#allocation2 + $0xb0] sm:$0xff]
      %v4297 = vld [vmem:[#allocation2 + $0xb8] sm:$0xff]
      %v4298 = vld [vmem:[#allocation2 + $0xc0] sm:$0xff]
      %v4299 = vld [vmem:[#allocation2 + $0xc8] sm:$0xff]
      %v4300 = vld [vmem:[#allocation2 + $0xd0] sm:$0xff]
      %v4301 = vld [vmem:[#allocation2 + $0xd8] sm:$0xff]
      %v4302 = vld [vmem:[#allocation2 + $0xe0] sm:$0xff]
      %v4303 = vld [vmem:[#allocation2 + $0xe8] sm:$0xff]
      %v4304 = vld [vmem:[#allocation2 + $0xf0] sm:$0xff]
      %v4305 = vld [vmem:[#allocation2 + $0xf8] sm:$0xff]
      %v4306 = vld [vmem:[#allocation2 + $0x100] sm:$0xff]
      %v4307 = vld [vmem:[#allocation2 + $0x108] sm:$0xff]
      %v4308 = vld [vmem:[#allocation2 + $0x110] sm:$0xff]
      %v4309 = vld [vmem:[#allocation2 + $0x118] sm:$0xff]
      %v4310 = vld [vmem:[#allocation2 + $0x120] sm:$0xff]
      %v4311 = vld [vmem:[#allocation2 + $0x128] sm:$0xff]
      %v4312 = vld [vmem:[#allocation2 + $0x130] sm:$0xff]
      %v4313 = vld [vmem:[#allocation2 + $0x138] sm:$0xff]
      %v4314 = vld [vmem:[#allocation2 + $0x140] sm:$0xff]
      %v4315 = vld [vmem:[#allocation2 + $0x148] sm:$0xff]
      %v4316 = vld [vmem:[#allocation2 + $0x150] sm:$0xff]
      %v4317 = vld [vmem:[#allocation2 + $0x158] sm:$0xff]
      %v4318 = vld [vmem:[#allocation2 + $0x160] sm:$0xff]
      %v4319 = vld [vmem:[#allocation2 + $0x168] sm:$0xff]
      %v4320 = vld [vmem:[#allocation2 + $0x170] sm:$0xff]
      %v4321 = vld [vmem:[#allocation2 + $0x178] sm:$0xff]
      %v4322 = vld [vmem:[#allocation2 + $0x180] sm:$0xff]
      %v4323 = vld [vmem:[#allocation2 + $0x188] sm:$0xff]
      %v4324 = vld [vmem:[#allocation2 + $0x190] sm:$0xff]
      %v4325 = vld [vmem:[#allocation2 + $0x198] sm:$0xff]
      %v4326 = vld [vmem:[#allocation2 + $0x1a0] sm:$0xff]
      %v4327 = vld [vmem:[#allocation2 + $0x1a8] sm:$0xff]
      %v4328 = vld [vmem:[#allocation2 + $0x1b0] sm:$0xff]
      %v4329 = vld [vmem:[#allocation2 + $0x1b8] sm:$0xff]
      %v4330 = vld [vmem:[#allocation2 + $0x1c0] sm:$0xff]
      %v4331 = vld [vmem:[#allocation2 + $0x1c8] sm:$0xff]
      %v4332 = vld [vmem:[#allocation2 + $0x1d0] sm:$0xff]
      %v4333 = vld [vmem:[#allocation2 + $0x1d8] sm:$0xff]
      %v4334 = vld [vmem:[#allocation2 + $0x1e0] sm:$0xff]
      %v4335 = vld [vmem:[#allocation2 + $0x1e8] sm:$0xff]
      %v4336 = vld [vmem:[#allocation2 + $0x1f0] sm:$0xff]
      %v4337 = vld [vmem:[#allocation2 + $0x1f8] sm:$0xff]
      %v4338 = vld [vmem:[#allocation2 + $0x200] sm:$0xff]
      %v4339 = vld [vmem:[#allocation2 + $0x208] sm:$0xff]
      %v4340 = vld [vmem:[#allocation2 + $0x210] sm:$0xff]
      %v4341 = vld [vmem:[#allocation2 + $0x218] sm:$0xff]
      %v4342 = vld [vmem:[#allocation2 + $0x220] sm:$0xff]
      %v4343 = vld [vmem:[#allocation2 + $0x228] sm:$0xff]
      %v4344 = vld [vmem:[#allocation2 + $0x230] sm:$0xff]
      %v4345 = vld [vmem:[#allocation2 + $0x238] sm:$0xff]
      %v4346 = vld [vmem:[#allocation2 + $0x240] sm:$0xff]
      %v4347 = vld [vmem:[#allocation2 + $0x248] sm:$0xff]
      %v4348 = vld [vmem:[#allocation2 + $0x250] sm:$0xff]
      %v4349 = vld [vmem:[#allocation2 + $0x258] sm:$0xff]
      %v4350 = vld [vmem:[#allocation2 + $0x260] sm:$0xff]
      %v4351 = vld [vmem:[#allocation2 + $0x268] sm:$0xff]
      %v4352 = vld [vmem:[#allocation2 + $0x270] sm:$0xff]
      %v4353 = vld [vmem:[#allocation2 + $0x278] sm:$0xff]
      %v4354 = vld [vmem:[#allocation2 + $0x280] sm:$0xff]
      %v4355 = vld [vmem:[#allocation2 + $0x288] sm:$0xff]
      %v4356 = vld [vmem:[#allocation2 + $0x290] sm:$0xff]
      %v4357 = vld [vmem:[#allocation2 + $0x298] sm:$0xff]
      %v4358 = vld [vmem:[#allocation2 + $0x2a0] sm:$0xff]
      %v4359 = vld [vmem:[#allocation2 + $0x2a8] sm:$0xff]
      %v4360 = vld [vmem:[#allocation2 + $0x2b0] sm:$0xff]
      %v4361 = vld [vmem:[#allocation2 + $0x2b8] sm:$0xff]
      %v4362 = vld [vmem:[#allocation2 + $0x2c0] sm:$0xff]
      %v4363 = vld [vmem:[#allocation2 + $0x2c8] sm:$0xff]
      %v4364 = vld [vmem:[#allocation2 + $0x2d0] sm:$0xff]
      %v4365 = vld [vmem:[#allocation2 + $0x2d8] sm:$0xff]
      %v4366 = vld [vmem:[#allocation2 + $0x2e0] sm:$0xff]
      %v4367 = vld [vmem:[#allocation2 + $0x2e8] sm:$0xff]
      %v4368 = vld [vmem:[#allocation2 + $0x2f0] sm:$0xff]
      %v4369 = vld [vmem:[#allocation2 + $0x2f8] sm:$0xff]
      %v4370 = vld [vmem:[#allocation2 + $0x300] sm:$0xff]
      %v4371 = vld [vmem:[#allocation2 + $0x308] sm:$0xff]
      %v4372 = vld [vmem:[#allocation2 + $0x310] sm:$0xff]
      %v4373 = vld [vmem:[#allocation2 + $0x318] sm:$0xff]
      %v4374 = vld [vmem:[#allocation2 + $0x320] sm:$0xff]
      %v4375 = vld [vmem:[#allocation2 + $0x328] sm:$0xff]
      %v4376 = vld [vmem:[#allocation2 + $0x330] sm:$0xff]
      %v4377 = vld [vmem:[#allocation2 + $0x338] sm:$0xff]
      %v4378 = vld [vmem:[#allocation2 + $0x340] sm:$0x3f]
      %v4379 = vld [vmem:[#allocation2 + $0x1] sm:$0xff]
      %v4380 = vld [vmem:[#allocation2 + $0x9] sm:$0xff]
      %v4381 = vld [vmem:[#allocation2 + $0x11] sm:$0xff]
      %v4382 = vld [vmem:[#allocation2 + $0x19] sm:$0xff]
      %v4383 = vld [vmem:[#allocation2 + $0x21] sm:$0xff]
      %v4384 = vld [vmem:[#allocation2 + $0x29] sm:$0xff]
      %v4385 = vld [vmem:[#allocation2 + $0x31] sm:$0xff]
      %v4386 = vld [vmem:[#allocation2 + $0x39] sm:$0xff]
      %v4387 = vld [vmem:[#allocation2 + $0x41] sm:$0xff]
      %v4388 = vld [vmem:[#allocation2 + $0x49] sm:$0xff]
      %v4389 = vld [vmem:[#allocation2 + $0x51] sm:$0xff]
      %v4390 = vld [vmem:[#allocation2 + $0x59] sm:$0xff]
      %v4391 = vld [vmem:[#allocation2 + $0x61] sm:$0xff]
      %v4392 = vld [vmem:[#allocation2 + $0x69] sm:$0xff]
      %v4393 = vld [vmem:[#allocation2 + $0x71] sm:$0xff]
      %v4394 = vld [vmem:[#allocation2 + $0x79] sm:$0xff]
      %v4395 = vld [vmem:[#allocation2 + $0x81] sm:$0xff]
      %v4396 = vld [vmem:[#allocation2 + $0x89] sm:$0xff]
      %v4397 = vld [vmem:[#allocation2 + $0x91] sm:$0xff]
      %v4398 = vld [vmem:[#allocation2 + $0x99] sm:$0xff]
      %v4399 = vld [vmem:[#allocation2 + $0xa1] sm:$0xff]
      %v4400 = vld [vmem:[#allocation2 + $0xa9] sm:$0xff]
      %v4401 = vld [vmem:[#allocation2 + $0xb1] sm:$0xff]
      %v4402 = vld [vmem:[#allocation2 + $0xb9] sm:$0xff]
      %v4403 = vld [vmem:[#allocation2 + $0xc1] sm:$0xff]
      %v4404 = vld [vmem:[#allocation2 + $0xc9] sm:$0xff]
      %v4405 = vld [vmem:[#allocation2 + $0xd1] sm:$0xff]
      %v4406 = vld [vmem:[#allocation2 + $0xd9] sm:$0xff]
      %v4407 = vld [vmem:[#allocation2 + $0xe1] sm:$0xff]
      %v4408 = vld [vmem:[#allocation2 + $0xe9] sm:$0xff]
      %v4409 = vld [vmem:[#allocation2 + $0xf1] sm:$0xff]
      %v4410 = vld [vmem:[#allocation2 + $0xf9] sm:$0xff]
      %v4411 = vld [vmem:[#allocation2 + $0x101] sm:$0xff]
      %v4412 = vld [vmem:[#allocation2 + $0x109] sm:$0xff]
      %v4413 = vld [vmem:[#allocation2 + $0x111] sm:$0xff]
      %v4414 = vld [vmem:[#allocation2 + $0x119] sm:$0xff]
      %v4415 = vld [vmem:[#allocation2 + $0x121] sm:$0xff]
      %v4416 = vld [vmem:[#allocation2 + $0x129] sm:$0xff]
      %v4417 = vld [vmem:[#allocation2 + $0x131] sm:$0xff]
      %v4418 = vld [vmem:[#allocation2 + $0x139] sm:$0xff]
      %v4419 = vld [vmem:[#allocation2 + $0x141] sm:$0xff]
      %v4420 = vld [vmem:[#allocation2 + $0x149] sm:$0xff]
      %v4421 = vld [vmem:[#allocation2 + $0x151] sm:$0xff]
      %v4422 = vld [vmem:[#allocation2 + $0x159] sm:$0xff]
      %v4423 = vld [vmem:[#allocation2 + $0x161] sm:$0xff]
      %v4424 = vld [vmem:[#allocation2 + $0x169] sm:$0xff]
      %v4425 = vld [vmem:[#allocation2 + $0x171] sm:$0xff]
      %v4426 = vld [vmem:[#allocation2 + $0x179] sm:$0xff]
      %v4427 = vld [vmem:[#allocation2 + $0x181] sm:$0xff]
      %v4428 = vld [vmem:[#allocation2 + $0x189] sm:$0xff]
      %v4429 = vld [vmem:[#allocation2 + $0x191] sm:$0xff]
      %v4430 = vld [vmem:[#allocation2 + $0x199] sm:$0xff]
      %v4431 = vld [vmem:[#allocation2 + $0x1a1] sm:$0xff]
      %v4432 = vld [vmem:[#allocation2 + $0x1a9] sm:$0xff]
      %v4433 = vld [vmem:[#allocation2 + $0x1b1] sm:$0xff]
      %v4434 = vld [vmem:[#allocation2 + $0x1b9] sm:$0xff]
      %v4435 = vld [vmem:[#allocation2 + $0x1c1] sm:$0xff]
      %v4436 = vld [vmem:[#allocation2 + $0x1c9] sm:$0xff]
      %v4437 = vld [vmem:[#allocation2 + $0x1d1] sm:$0xff]
      %v4438 = vld [vmem:[#allocation2 + $0x1d9] sm:$0xff]
      %v4439 = vld [vmem:[#allocation2 + $0x1e1] sm:$0xff]
      %v4440 = vld [vmem:[#allocation2 + $0x1e9] sm:$0xff]
      %v4441 = vld [vmem:[#allocation2 + $0x1f1] sm:$0xff]
      %v4442 = vld [vmem:[#allocation2 + $0x1f9] sm:$0xff]
      %v4443 = vld [vmem:[#allocation2 + $0x201] sm:$0xff]
      %v4444 = vld [vmem:[#allocation2 + $0x209] sm:$0xff]
      %v4445 = vld [vmem:[#allocation2 + $0x211] sm:$0xff]
      %v4446 = vld [vmem:[#allocation2 + $0x219] sm:$0xff]
      %v4447 = vld [vmem:[#allocation2 + $0x221] sm:$0xff]
      %v4448 = vld [vmem:[#allocation2 + $0x229] sm:$0xff]
      %v4449 = vld [vmem:[#allocation2 + $0x231] sm:$0xff]
      %v4450 = vld [vmem:[#allocation2 + $0x239] sm:$0xff]
      %v4451 = vld [vmem:[#allocation2 + $0x241] sm:$0xff]
      %v4452 = vld [vmem:[#allocation2 + $0x249] sm:$0xff]
      %v4453 = vld [vmem:[#allocation2 + $0x251] sm:$0xff]
      %v4454 = vld [vmem:[#allocation2 + $0x259] sm:$0xff]
      %v4455 = vld [vmem:[#allocation2 + $0x261] sm:$0xff]
      %v4456 = vld [vmem:[#allocation2 + $0x269] sm:$0xff]
      %v4457 = vld [vmem:[#allocation2 + $0x271] sm:$0xff]
      %v4458 = vld [vmem:[#allocation2 + $0x279] sm:$0xff]
      %v4459 = vld [vmem:[#allocation2 + $0x281] sm:$0xff]
      %v4460 = vld [vmem:[#allocation2 + $0x289] sm:$0xff]
      %v4461 = vld [vmem:[#allocation2 + $0x291] sm:$0xff]
      %v4462 = vld [vmem:[#allocation2 + $0x299] sm:$0xff]
      %v4463 = vld [vmem:[#allocation2 + $0x2a1] sm:$0xff]
      %v4464 = vld [vmem:[#allocation2 + $0x2a9] sm:$0xff]
      %v4465 = vld [vmem:[#allocation2 + $0x2b1] sm:$0xff]
      %v4466 = vld [vmem:[#allocation2 + $0x2b9] sm:$0xff]
      %v4467 = vld [vmem:[#allocation2 + $0x2c1] sm:$0xff]
      %v4468 = vld [vmem:[#allocation2 + $0x2c9] sm:$0xff]
      %v4469 = vld [vmem:[#allocation2 + $0x2d1] sm:$0xff]
      %v4470 = vld [vmem:[#allocation2 + $0x2d9] sm:$0xff]
      %v4471 = vld [vmem:[#allocation2 + $0x2e1] sm:$0xff]
      %v4472 = vld [vmem:[#allocation2 + $0x2e9] sm:$0xff]
      %v4473 = vld [vmem:[#allocation2 + $0x2f1] sm:$0xff]
      %v4474 = vld [vmem:[#allocation2 + $0x2f9] sm:$0xff]
      %v4475 = vld [vmem:[#allocation2 + $0x301] sm:$0xff]
      %v4476 = vld [vmem:[#allocation2 + $0x309] sm:$0xff]
      %v4477 = vld [vmem:[#allocation2 + $0x311] sm:$0xff]
      %v4478 = vld [vmem:[#allocation2 + $0x319] sm:$0xff]
      %v4479 = vld [vmem:[#allocation2 + $0x321] sm:$0xff]
      %v4480 = vld [vmem:[#allocation2 + $0x329] sm:$0xff]
      %v4481 = vld [vmem:[#allocation2 + $0x331] sm:$0xff]
      %v4482 = vld [vmem:[#allocation2 + $0x339] sm:$0xff]
      %v4483 = vld [vmem:[#allocation2 + $0x341] sm:$0x3f]
      %4589 = vrot.lane.b32.xlu0 %v4379, 96
      %v4590 = vpop.permute.xlu0 %4589
      %4591 = vrot.lane.b32.xlu0 %v4380, 96
      %v4592 = vpop.permute.xlu0 %4591
      %4593 = vrot.lane.b32.xlu0 %v4381, 96
      %v4594 = vpop.permute.xlu0 %4593
      %4595 = vrot.lane.b32.xlu0 %v4382, 96
      %v4596 = vpop.permute.xlu0 %4595
      %4597 = vrot.lane.b32.xlu0 %v4383, 96
      %v4598 = vpop.permute.xlu0 %4597
      %4599 = vrot.lane.b32.xlu0 %v4384, 96
      %v4600 = vpop.permute.xlu0 %4599
      %4601 = vrot.lane.b32.xlu0 %v4385, 96
      %v4602 = vpop.permute.xlu0 %4601
      %4603 = vrot.lane.b32.xlu0 %v4386, 96
      %v4604 = vpop.permute.xlu0 %4603
      %4605 = vrot.lane.b32.xlu0 %v4387, 96
      %v4606 = vpop.permute.xlu0 %4605
      %4607 = vrot.lane.b32.xlu0 %v4388, 96
      %v4608 = vpop.permute.xlu0 %4607
      %4609 = vrot.lane.b32.xlu0 %v4389, 96
      %v4610 = vpop.permute.xlu0 %4609
      %4611 = vrot.lane.b32.xlu0 %v4390, 96
      %v4612 = vpop.permute.xlu0 %4611
      %4613 = vrot.lane.b32.xlu0 %v4391, 96
      %v4614 = vpop.permute.xlu0 %4613
      %4615 = vrot.lane.b32.xlu0 %v4392, 96
      %v4616 = vpop.permute.xlu0 %4615
      %4617 = vrot.lane.b32.xlu0 %v4393, 96
      %v4618 = vpop.permute.xlu0 %4617
      %4619 = vrot.lane.b32.xlu0 %v4394, 96
      %v4620 = vpop.permute.xlu0 %4619
      %4621 = vrot.lane.b32.xlu0 %v4395, 96
      %v4622 = vpop.permute.xlu0 %4621
      %4623 = vrot.lane.b32.xlu0 %v4396, 96
      %v4624 = vpop.permute.xlu0 %4623
      %4625 = vrot.lane.b32.xlu0 %v4397, 96
      %v4626 = vpop.permute.xlu0 %4625
      %4627 = vrot.lane.b32.xlu0 %v4398, 96
      %v4628 = vpop.permute.xlu0 %4627
      %4629 = vrot.lane.b32.xlu0 %v4399, 96
      %v4630 = vpop.permute.xlu0 %4629
      %4631 = vrot.lane.b32.xlu0 %v4400, 96
      %v4632 = vpop.permute.xlu0 %4631
      %4633 = vrot.lane.b32.xlu0 %v4401, 96
      %v4634 = vpop.permute.xlu0 %4633
      %4635 = vrot.lane.b32.xlu0 %v4402, 96
      %v4636 = vpop.permute.xlu0 %4635
      %4637 = vrot.lane.b32.xlu0 %v4403, 96
      %v4638 = vpop.permute.xlu0 %4637
      %4639 = vrot.lane.b32.xlu0 %v4404, 96
      %v4640 = vpop.permute.xlu0 %4639
      %4641 = vrot.lane.b32.xlu0 %v4405, 96
      %v4642 = vpop.permute.xlu0 %4641
      %4643 = vrot.lane.b32.xlu0 %v4406, 96
      %v4644 = vpop.permute.xlu0 %4643
      %4645 = vrot.lane.b32.xlu0 %v4407, 96
      %v4646 = vpop.permute.xlu0 %4645
      %4647 = vrot.lane.b32.xlu0 %v4408, 96
      %v4648 = vpop.permute.xlu0 %4647
      %4649 = vrot.lane.b32.xlu0 %v4409, 96
      %v4650 = vpop.permute.xlu0 %4649
      %4651 = vrot.lane.b32.xlu0 %v4410, 96
      %v4652 = vpop.permute.xlu0 %4651
      %4653 = vrot.lane.b32.xlu0 %v4411, 96
      %v4654 = vpop.permute.xlu0 %4653
      %4655 = vrot.lane.b32.xlu0 %v4412, 96
      %v4656 = vpop.permute.xlu0 %4655
      %4657 = vrot.lane.b32.xlu0 %v4413, 96
      %v4658 = vpop.permute.xlu0 %4657
      %4659 = vrot.lane.b32.xlu0 %v4414, 96
      %v4660 = vpop.permute.xlu0 %4659
      %4661 = vrot.lane.b32.xlu0 %v4415, 96
      %v4662 = vpop.permute.xlu0 %4661
      %4663 = vrot.lane.b32.xlu0 %v4416, 96
      %v4664 = vpop.permute.xlu0 %4663
      %4665 = vrot.lane.b32.xlu0 %v4417, 96
      %v4666 = vpop.permute.xlu0 %4665
      %4667 = vrot.lane.b32.xlu0 %v4418, 96
      %v4668 = vpop.permute.xlu0 %4667
      %4669 = vrot.lane.b32.xlu0 %v4419, 96
      %v4670 = vpop.permute.xlu0 %4669
      %4671 = vrot.lane.b32.xlu0 %v4420, 96
      %v4672 = vpop.permute.xlu0 %4671
      %4673 = vrot.lane.b32.xlu0 %v4421, 96
      %v4674 = vpop.permute.xlu0 %4673
      %4675 = vrot.lane.b32.xlu0 %v4422, 96
      %v4676 = vpop.permute.xlu0 %4675
      %4677 = vrot.lane.b32.xlu0 %v4423, 96
      %v4678 = vpop.permute.xlu0 %4677
      %4679 = vrot.lane.b32.xlu0 %v4424, 96
      %v4680 = vpop.permute.xlu0 %4679
      %4681 = vrot.lane.b32.xlu0 %v4425, 96
      %v4682 = vpop.permute.xlu0 %4681
      %4683 = vrot.lane.b32.xlu0 %v4426, 96
      %v4684 = vpop.permute.xlu0 %4683
      %4685 = vrot.lane.b32.xlu0 %v4427, 96
      %v4686 = vpop.permute.xlu0 %4685
      %4687 = vrot.lane.b32.xlu0 %v4428, 96
      %v4688 = vpop.permute.xlu0 %4687
      %4689 = vrot.lane.b32.xlu0 %v4429, 96
      %v4690 = vpop.permute.xlu0 %4689
      %4691 = vrot.lane.b32.xlu0 %v4430, 96
      %v4692 = vpop.permute.xlu0 %4691
      %4693 = vrot.lane.b32.xlu0 %v4431, 96
      %v4694 = vpop.permute.xlu0 %4693
      %4695 = vrot.lane.b32.xlu0 %v4432, 96
      %v4696 = vpop.permute.xlu0 %4695
      %4697 = vrot.lane.b32.xlu0 %v4433, 96
      %v4698 = vpop.permute.xlu0 %4697
      %4699 = vrot.lane.b32.xlu0 %v4434, 96
      %v4700 = vpop.permute.xlu0 %4699
      %4701 = vrot.lane.b32.xlu0 %v4435, 96
      %v4702 = vpop.permute.xlu0 %4701
      %4703 = vrot.lane.b32.xlu0 %v4436, 96
      %v4704 = vpop.permute.xlu0 %4703
      %4705 = vrot.lane.b32.xlu0 %v4437, 96
      %v4706 = vpop.permute.xlu0 %4705
      %4707 = vrot.lane.b32.xlu0 %v4438, 96
      %v4708 = vpop.permute.xlu0 %4707
      %4709 = vrot.lane.b32.xlu0 %v4439, 96
      %v4710 = vpop.permute.xlu0 %4709
      %4711 = vrot.lane.b32.xlu0 %v4440, 96
      %v4712 = vpop.permute.xlu0 %4711
      %4713 = vrot.lane.b32.xlu0 %v4441, 96
      %v4714 = vpop.permute.xlu0 %4713
      %4715 = vrot.lane.b32.xlu0 %v4442, 96
      %v4716 = vpop.permute.xlu0 %4715
      %4717 = vrot.lane.b32.xlu0 %v4443, 96
      %v4718 = vpop.permute.xlu0 %4717
      %4719 = vrot.lane.b32.xlu0 %v4444, 96
      %v4720 = vpop.permute.xlu0 %4719
      %4721 = vrot.lane.b32.xlu0 %v4445, 96
      %v4722 = vpop.permute.xlu0 %4721
      %4723 = vrot.lane.b32.xlu0 %v4446, 96
      %v4724 = vpop.permute.xlu0 %4723
      %4725 = vrot.lane.b32.xlu0 %v4447, 96
      %v4726 = vpop.permute.xlu0 %4725
      %4727 = vrot.lane.b32.xlu0 %v4448, 96
      %v4728 = vpop.permute.xlu0 %4727
      %4729 = vrot.lane.b32.xlu0 %v4449, 96
      %v4730 = vpop.permute.xlu0 %4729
      %4731 = vrot.lane.b32.xlu0 %v4450, 96
      %v4732 = vpop.permute.xlu0 %4731
      %4733 = vrot.lane.b32.xlu0 %v4451, 96
      %v4734 = vpop.permute.xlu0 %4733
      %4735 = vrot.lane.b32.xlu0 %v4452, 96
      %v4736 = vpop.permute.xlu0 %4735
      %4737 = vrot.lane.b32.xlu0 %v4453, 96
      %v4738 = vpop.permute.xlu0 %4737
      %4739 = vrot.lane.b32.xlu0 %v4454, 96
      %v4740 = vpop.permute.xlu0 %4739
      %4741 = vrot.lane.b32.xlu0 %v4455, 96
      %v4742 = vpop.permute.xlu0 %4741
      %4743 = vrot.lane.b32.xlu0 %v4456, 96
      %v4744 = vpop.permute.xlu0 %4743
      %4745 = vrot.lane.b32.xlu0 %v4457, 96
      %v4746 = vpop.permute.xlu0 %4745
      %4747 = vrot.lane.b32.xlu0 %v4458, 96
      %v4748 = vpop.permute.xlu0 %4747
      %4749 = vrot.lane.b32.xlu0 %v4459, 96
      %v4750 = vpop.permute.xlu0 %4749
      %4751 = vrot.lane.b32.xlu0 %v4460, 96
      %v4752 = vpop.permute.xlu0 %4751
      %4753 = vrot.lane.b32.xlu0 %v4461, 96
      %v4754 = vpop.permute.xlu0 %4753
      %4755 = vrot.lane.b32.xlu0 %v4462, 96
      %v4756 = vpop.permute.xlu0 %4755
      %4757 = vrot.lane.b32.xlu0 %v4463, 96
      %v4758 = vpop.permute.xlu0 %4757
      %4759 = vrot.lane.b32.xlu0 %v4464, 96
      %v4760 = vpop.permute.xlu0 %4759
      %4761 = vrot.lane.b32.xlu0 %v4465, 96
      %v4762 = vpop.permute.xlu0 %4761
      %4763 = vrot.lane.b32.xlu0 %v4466, 96
      %v4764 = vpop.permute.xlu0 %4763
      %4765 = vrot.lane.b32.xlu0 %v4467, 96
      %v4766 = vpop.permute.xlu0 %4765
      %4767 = vrot.lane.b32.xlu0 %v4468, 96
      %v4768 = vpop.permute.xlu0 %4767
      %4769 = vrot.lane.b32.xlu0 %v4469, 96
      %v4770 = vpop.permute.xlu0 %4769
      %4771 = vrot.lane.b32.xlu0 %v4470, 96
      %v4772 = vpop.permute.xlu0 %4771
      %4773 = vrot.lane.b32.xlu0 %v4471, 96
      %v4774 = vpop.permute.xlu0 %4773
      %4775 = vrot.lane.b32.xlu0 %v4472, 96
      %v4776 = vpop.permute.xlu0 %4775
      %4777 = vrot.lane.b32.xlu0 %v4473, 96
      %v4778 = vpop.permute.xlu0 %4777
      %4779 = vrot.lane.b32.xlu0 %v4474, 96
      %v4780 = vpop.permute.xlu0 %4779
      %4781 = vrot.lane.b32.xlu0 %v4475, 96
      %v4782 = vpop.permute.xlu0 %4781
      %4783 = vrot.lane.b32.xlu0 %v4476, 96
      %v4784 = vpop.permute.xlu0 %4783
      %4785 = vrot.lane.b32.xlu0 %v4477, 96
      %v4786 = vpop.permute.xlu0 %4785
      %4787 = vrot.lane.b32.xlu0 %v4478, 96
      %v4788 = vpop.permute.xlu0 %4787
      %4789 = vrot.lane.b32.xlu0 %v4479, 96
      %v4790 = vpop.permute.xlu0 %4789
      %4791 = vrot.lane.b32.xlu0 %v4480, 96
      %v4792 = vpop.permute.xlu0 %4791
      %4793 = vrot.lane.b32.xlu0 %v4481, 96
      %v4794 = vpop.permute.xlu0 %4793
      %4795 = vrot.lane.b32.xlu0 %v4482, 96
      %v4796 = vpop.permute.xlu0 %4795
      %4797 = vrot.lane.b32.xlu0 %v4483, 96
      %v4798 = vpop.permute.xlu0 %4797
      %v4904 = vadd.f32 %v4274, %v4590
      %v4905 = vadd.f32 %v4275, %v4592
      %v4906 = vadd.f32 %v4276, %v4594
      %v4907 = vadd.f32 %v4277, %v4596
      %v4908 = vadd.f32 %v4278, %v4598
      %v4909 = vadd.f32 %v4279, %v4600
      %v4910 = vadd.f32 %v4280, %v4602
      %v4911 = vadd.f32 %v4281, %v4604
      %v4912 = vadd.f32 %v4282, %v4606
      %v4913 = vadd.f32 %v4283, %v4608
      %v4914 = vadd.f32 %v4284, %v4610
      %v4915 = vadd.f32 %v4285, %v4612
      %v4916 = vadd.f32 %v4286, %v4614
      %v4917 = vadd.f32 %v4287, %v4616
      %v4918 = vadd.f32 %v4288, %v4618
      %v4919 = vadd.f32 %v4289, %v4620
      %v4920 = vadd.f32 %v4290, %v4622
      %v4921 = vadd.f32 %v4291, %v4624
      %v4922 = vadd.f32 %v4292, %v4626
      %v4923 = vadd.f32 %v4293, %v4628
      %v4924 = vadd.f32 %v4294, %v4630
      %v4925 = vadd.f32 %v4295, %v4632
      %v4926 = vadd.f32 %v4296, %v4634
      %v4927 = vadd.f32 %v4297, %v4636
      %v4928 = vadd.f32 %v4298, %v4638
      %v4929 = vadd.f32 %v4299, %v4640
      %v4930 = vadd.f32 %v4300, %v4642
      %v4931 = vadd.f32 %v4301, %v4644
      %v4932 = vadd.f32 %v4302, %v4646
      %v4933 = vadd.f32 %v4303, %v4648
      %v4934 = vadd.f32 %v4304, %v4650
      %v4935 = vadd.f32 %v4305, %v4652
      %v4936 = vadd.f32 %v4306, %v4654
      %v4937 = vadd.f32 %v4307, %v4656
      %v4938 = vadd.f32 %v4308, %v4658
      %v4939 = vadd.f32 %v4309, %v4660
      %v4940 = vadd.f32 %v4310, %v4662
      %v4941 = vadd.f32 %v4311, %v4664
      %v4942 = vadd.f32 %v4312, %v4666
      %v4943 = vadd.f32 %v4313, %v4668
      %v4944 = vadd.f32 %v4314, %v4670
      %v4945 = vadd.f32 %v4315, %v4672
      %v4946 = vadd.f32 %v4316, %v4674
      %v4947 = vadd.f32 %v4317, %v4676
      %v4948 = vadd.f32 %v4318, %v4678
      %v4949 = vadd.f32 %v4319, %v4680
      %v4950 = vadd.f32 %v4320, %v4682
      %v4951 = vadd.f32 %v4321, %v4684
      %v4952 = vadd.f32 %v4322, %v4686
      %v4953 = vadd.f32 %v4323, %v4688
      %v4954 = vadd.f32 %v4324, %v4690
      %v4955 = vadd.f32 %v4325, %v4692
      %v4956 = vadd.f32 %v4326, %v4694
      %v4957 = vadd.f32 %v4327, %v4696
      %v4958 = vadd.f32 %v4328, %v4698
      %v4959 = vadd.f32 %v4329, %v4700
      %v4960 = vadd.f32 %v4330, %v4702
      %v4961 = vadd.f32 %v4331, %v4704
      %v4962 = vadd.f32 %v4332, %v4706
      %v4963 = vadd.f32 %v4333, %v4708
      %v4964 = vadd.f32 %v4334, %v4710
      %v4965 = vadd.f32 %v4335, %v4712
      %v4966 = vadd.f32 %v4336, %v4714
      %v4967 = vadd.f32 %v4337, %v4716
      %v4968 = vadd.f32 %v4338, %v4718
      %v4969 = vadd.f32 %v4339, %v4720
      %v4970 = vadd.f32 %v4340, %v4722
      %v4971 = vadd.f32 %v4341, %v4724
      %v4972 = vadd.f32 %v4342, %v4726
      %v4973 = vadd.f32 %v4343, %v4728
      %v4974 = vadd.f32 %v4344, %v4730
      %v4975 = vadd.f32 %v4345, %v4732
      %v4976 = vadd.f32 %v4346, %v4734
      %v4977 = vadd.f32 %v4347, %v4736
      %v4978 = vadd.f32 %v4348, %v4738
      %v4979 = vadd.f32 %v4349, %v4740
      %v4980 = vadd.f32 %v4350, %v4742
      %v4981 = vadd.f32 %v4351, %v4744
      %v4982 = vadd.f32 %v4352, %v4746
      %v4983 = vadd.f32 %v4353, %v4748
      %v4984 = vadd.f32 %v4354, %v4750
      %v4985 = vadd.f32 %v4355, %v4752
      %v4986 = vadd.f32 %v4356, %v4754
      %v4987 = vadd.f32 %v4357, %v4756
      %v4988 = vadd.f32 %v4358, %v4758
      %v4989 = vadd.f32 %v4359, %v4760
      %v4990 = vadd.f32 %v4360, %v4762
      %v4991 = vadd.f32 %v4361, %v4764
      %v4992 = vadd.f32 %v4362, %v4766
      %v4993 = vadd.f32 %v4363, %v4768
      %v4994 = vadd.f32 %v4364, %v4770
      %v4995 = vadd.f32 %v4365, %v4772
      %v4996 = vadd.f32 %v4366, %v4774
      %v4997 = vadd.f32 %v4367, %v4776
      %v4998 = vadd.f32 %v4368, %v4778
      %v4999 = vadd.f32 %v4369, %v4780
      %v5000 = vadd.f32 %v4370, %v4782
      %v5001 = vadd.f32 %v4371, %v4784
      %v5002 = vadd.f32 %v4372, %v4786
      %v5003 = vadd.f32 %v4373, %v4788
      %v5004 = vadd.f32 %v4374, %v4790
      %v5005 = vadd.f32 %v4375, %v4792
      %v5006 = vadd.f32 %v4376, %v4794
      %v5007 = vadd.f32 %v4377, %v4796
      %v5008 = vadd.f32 %v4378, %v4798
      %v5009 = vld [vmem:[#allocation2 + $0x2] sm:$0xff]
      %v5010 = vld [vmem:[#allocation2 + $0xa] sm:$0xff]
      %v5011 = vld [vmem:[#allocation2 + $0x12] sm:$0xff]
      %v5012 = vld [vmem:[#allocation2 + $0x1a] sm:$0xff]
      %v5013 = vld [vmem:[#allocation2 + $0x22] sm:$0xff]
      %v5014 = vld [vmem:[#allocation2 + $0x2a] sm:$0xff]
      %v5015 = vld [vmem:[#allocation2 + $0x32] sm:$0xff]
      %v5016 = vld [vmem:[#allocation2 + $0x3a] sm:$0xff]
      %v5017 = vld [vmem:[#allocation2 + $0x42] sm:$0xff]
      %v5018 = vld [vmem:[#allocation2 + $0x4a] sm:$0xff]
      %v5019 = vld [vmem:[#allocation2 + $0x52] sm:$0xff]
      %v5020 = vld [vmem:[#allocation2 + $0x5a] sm:$0xff]
      %v5021 = vld [vmem:[#allocation2 + $0x62] sm:$0xff]
      %v5022 = vld [vmem:[#allocation2 + $0x6a] sm:$0xff]
      %v5023 = vld [vmem:[#allocation2 + $0x72] sm:$0xff]
      %v5024 = vld [vmem:[#allocation2 + $0x7a] sm:$0xff]
      %v5025 = vld [vmem:[#allocation2 + $0x82] sm:$0xff]
      %v5026 = vld [vmem:[#allocation2 + $0x8a] sm:$0xff]
      %v5027 = vld [vmem:[#allocation2 + $0x92] sm:$0xff]
      %v5028 = vld [vmem:[#allocation2 + $0x9a] sm:$0xff]
      %v5029 = vld [vmem:[#allocation2 + $0xa2] sm:$0xff]
      %v5030 = vld [vmem:[#allocation2 + $0xaa] sm:$0xff]
      %v5031 = vld [vmem:[#allocation2 + $0xb2] sm:$0xff]
      %v5032 = vld [vmem:[#allocation2 + $0xba] sm:$0xff]
      %v5033 = vld [vmem:[#allocation2 + $0xc2] sm:$0xff]
      %v5034 = vld [vmem:[#allocation2 + $0xca] sm:$0xff]
      %v5035 = vld [vmem:[#allocation2 + $0xd2] sm:$0xff]
      %v5036 = vld [vmem:[#allocation2 + $0xda] sm:$0xff]
      %v5037 = vld [vmem:[#allocation2 + $0xe2] sm:$0xff]
      %v5038 = vld [vmem:[#allocation2 + $0xea] sm:$0xff]
      %v5039 = vld [vmem:[#allocation2 + $0xf2] sm:$0xff]
      %v5040 = vld [vmem:[#allocation2 + $0xfa] sm:$0xff]
      %v5041 = vld [vmem:[#allocation2 + $0x102] sm:$0xff]
      %v5042 = vld [vmem:[#allocation2 + $0x10a] sm:$0xff]
      %v5043 = vld [vmem:[#allocation2 + $0x112] sm:$0xff]
      %v5044 = vld [vmem:[#allocation2 + $0x11a] sm:$0xff]
      %v5045 = vld [vmem:[#allocation2 + $0x122] sm:$0xff]
      %v5046 = vld [vmem:[#allocation2 + $0x12a] sm:$0xff]
      %v5047 = vld [vmem:[#allocation2 + $0x132] sm:$0xff]
      %v5048 = vld [vmem:[#allocation2 + $0x13a] sm:$0xff]
      %v5049 = vld [vmem:[#allocation2 + $0x142] sm:$0xff]
      %v5050 = vld [vmem:[#allocation2 + $0x14a] sm:$0xff]
      %v5051 = vld [vmem:[#allocation2 + $0x152] sm:$0xff]
      %v5052 = vld [vmem:[#allocation2 + $0x15a] sm:$0xff]
      %v5053 = vld [vmem:[#allocation2 + $0x162] sm:$0xff]
      %v5054 = vld [vmem:[#allocation2 + $0x16a] sm:$0xff]
      %v5055 = vld [vmem:[#allocation2 + $0x172] sm:$0xff]
      %v5056 = vld [vmem:[#allocation2 + $0x17a] sm:$0xff]
      %v5057 = vld [vmem:[#allocation2 + $0x182] sm:$0xff]
      %v5058 = vld [vmem:[#allocation2 + $0x18a] sm:$0xff]
      %v5059 = vld [vmem:[#allocation2 + $0x192] sm:$0xff]
      %v5060 = vld [vmem:[#allocation2 + $0x19a] sm:$0xff]
      %v5061 = vld [vmem:[#allocation2 + $0x1a2] sm:$0xff]
      %v5062 = vld [vmem:[#allocation2 + $0x1aa] sm:$0xff]
      %v5063 = vld [vmem:[#allocation2 + $0x1b2] sm:$0xff]
      %v5064 = vld [vmem:[#allocation2 + $0x1ba] sm:$0xff]
      %v5065 = vld [vmem:[#allocation2 + $0x1c2] sm:$0xff]
      %v5066 = vld [vmem:[#allocation2 + $0x1ca] sm:$0xff]
      %v5067 = vld [vmem:[#allocation2 + $0x1d2] sm:$0xff]
      %v5068 = vld [vmem:[#allocation2 + $0x1da] sm:$0xff]
      %v5069 = vld [vmem:[#allocation2 + $0x1e2] sm:$0xff]
      %v5070 = vld [vmem:[#allocation2 + $0x1ea] sm:$0xff]
      %v5071 = vld [vmem:[#allocation2 + $0x1f2] sm:$0xff]
      %v5072 = vld [vmem:[#allocation2 + $0x1fa] sm:$0xff]
      %v5073 = vld [vmem:[#allocation2 + $0x202] sm:$0xff]
      %v5074 = vld [vmem:[#allocation2 + $0x20a] sm:$0xff]
      %v5075 = vld [vmem:[#allocation2 + $0x212] sm:$0xff]
      %v5076 = vld [vmem:[#allocation2 + $0x21a] sm:$0xff]
      %v5077 = vld [vmem:[#allocation2 + $0x222] sm:$0xff]
      %v5078 = vld [vmem:[#allocation2 + $0x22a] sm:$0xff]
      %v5079 = vld [vmem:[#allocation2 + $0x232] sm:$0xff]
      %v5080 = vld [vmem:[#allocation2 + $0x23a] sm:$0xff]
      %v5081 = vld [vmem:[#allocation2 + $0x242] sm:$0xff]
      %v5082 = vld [vmem:[#allocation2 + $0x24a] sm:$0xff]
      %v5083 = vld [vmem:[#allocation2 + $0x252] sm:$0xff]
      %v5084 = vld [vmem:[#allocation2 + $0x25a] sm:$0xff]
      %v5085 = vld [vmem:[#allocation2 + $0x262] sm:$0xff]
      %v5086 = vld [vmem:[#allocation2 + $0x26a] sm:$0xff]
      %v5087 = vld [vmem:[#allocation2 + $0x272] sm:$0xff]
      %v5088 = vld [vmem:[#allocation2 + $0x27a] sm:$0xff]
      %v5089 = vld [vmem:[#allocation2 + $0x282] sm:$0xff]
      %v5090 = vld [vmem:[#allocation2 + $0x28a] sm:$0xff]
      %v5091 = vld [vmem:[#allocation2 + $0x292] sm:$0xff]
      %v5092 = vld [vmem:[#allocation2 + $0x29a] sm:$0xff]
      %v5093 = vld [vmem:[#allocation2 + $0x2a2] sm:$0xff]
      %v5094 = vld [vmem:[#allocation2 + $0x2aa] sm:$0xff]
      %v5095 = vld [vmem:[#allocation2 + $0x2b2] sm:$0xff]
      %v5096 = vld [vmem:[#allocation2 + $0x2ba] sm:$0xff]
      %v5097 = vld [vmem:[#allocation2 + $0x2c2] sm:$0xff]
      %v5098 = vld [vmem:[#allocation2 + $0x2ca] sm:$0xff]
      %v5099 = vld [vmem:[#allocation2 + $0x2d2] sm:$0xff]
      %v5100 = vld [vmem:[#allocation2 + $0x2da] sm:$0xff]
      %v5101 = vld [vmem:[#allocation2 + $0x2e2] sm:$0xff]
      %v5102 = vld [vmem:[#allocation2 + $0x2ea] sm:$0xff]
      %v5103 = vld [vmem:[#allocation2 + $0x2f2] sm:$0xff]
      %v5104 = vld [vmem:[#allocation2 + $0x2fa] sm:$0xff]
      %v5105 = vld [vmem:[#allocation2 + $0x302] sm:$0xff]
      %v5106 = vld [vmem:[#allocation2 + $0x30a] sm:$0xff]
      %v5107 = vld [vmem:[#allocation2 + $0x312] sm:$0xff]
      %v5108 = vld [vmem:[#allocation2 + $0x31a] sm:$0xff]
      %v5109 = vld [vmem:[#allocation2 + $0x322] sm:$0xff]
      %v5110 = vld [vmem:[#allocation2 + $0x32a] sm:$0xff]
      %v5111 = vld [vmem:[#allocation2 + $0x332] sm:$0xff]
      %v5112 = vld [vmem:[#allocation2 + $0x33a] sm:$0xff]
      %v5113 = vld [vmem:[#allocation2 + $0x342] sm:$0x3f]
      %5219 = vrot.lane.b32.xlu0 %v5009, 64
      %v5220 = vpop.permute.xlu0 %5219
      %5221 = vrot.lane.b32.xlu0 %v5010, 64
      %v5222 = vpop.permute.xlu0 %5221
      %5223 = vrot.lane.b32.xlu0 %v5011, 64
      %v5224 = vpop.permute.xlu0 %5223
      %5225 = vrot.lane.b32.xlu0 %v5012, 64
      %v5226 = vpop.permute.xlu0 %5225
      %5227 = vrot.lane.b32.xlu0 %v5013, 64
      %v5228 = vpop.permute.xlu0 %5227
      %5229 = vrot.lane.b32.xlu0 %v5014, 64
      %v5230 = vpop.permute.xlu0 %5229
      %5231 = vrot.lane.b32.xlu0 %v5015, 64
      %v5232 = vpop.permute.xlu0 %5231
      %5233 = vrot.lane.b32.xlu0 %v5016, 64
      %v5234 = vpop.permute.xlu0 %5233
      %5235 = vrot.lane.b32.xlu0 %v5017, 64
      %v5236 = vpop.permute.xlu0 %5235
      %5237 = vrot.lane.b32.xlu0 %v5018, 64
      %v5238 = vpop.permute.xlu0 %5237
      %5239 = vrot.lane.b32.xlu0 %v5019, 64
      %v5240 = vpop.permute.xlu0 %5239
      %5241 = vrot.lane.b32.xlu0 %v5020, 64
      %v5242 = vpop.permute.xlu0 %5241
      %5243 = vrot.lane.b32.xlu0 %v5021, 64
      %v5244 = vpop.permute.xlu0 %5243
      %5245 = vrot.lane.b32.xlu0 %v5022, 64
      %v5246 = vpop.permute.xlu0 %5245
      %5247 = vrot.lane.b32.xlu0 %v5023, 64
      %v5248 = vpop.permute.xlu0 %5247
      %5249 = vrot.lane.b32.xlu0 %v5024, 64
      %v5250 = vpop.permute.xlu0 %5249
      %5251 = vrot.lane.b32.xlu0 %v5025, 64
      %v5252 = vpop.permute.xlu0 %5251
      %5253 = vrot.lane.b32.xlu0 %v5026, 64
      %v5254 = vpop.permute.xlu0 %5253
      %5255 = vrot.lane.b32.xlu0 %v5027, 64
      %v5256 = vpop.permute.xlu0 %5255
      %5257 = vrot.lane.b32.xlu0 %v5028, 64
      %v5258 = vpop.permute.xlu0 %5257
      %5259 = vrot.lane.b32.xlu0 %v5029, 64
      %v5260 = vpop.permute.xlu0 %5259
      %5261 = vrot.lane.b32.xlu0 %v5030, 64
      %v5262 = vpop.permute.xlu0 %5261
      %5263 = vrot.lane.b32.xlu0 %v5031, 64
      %v5264 = vpop.permute.xlu0 %5263
      %5265 = vrot.lane.b32.xlu0 %v5032, 64
      %v5266 = vpop.permute.xlu0 %5265
      %5267 = vrot.lane.b32.xlu0 %v5033, 64
      %v5268 = vpop.permute.xlu0 %5267
      %5269 = vrot.lane.b32.xlu0 %v5034, 64
      %v5270 = vpop.permute.xlu0 %5269
      %5271 = vrot.lane.b32.xlu0 %v5035, 64
      %v5272 = vpop.permute.xlu0 %5271
      %5273 = vrot.lane.b32.xlu0 %v5036, 64
      %v5274 = vpop.permute.xlu0 %5273
      %5275 = vrot.lane.b32.xlu0 %v5037, 64
      %v5276 = vpop.permute.xlu0 %5275
      %5277 = vrot.lane.b32.xlu0 %v5038, 64
      %v5278 = vpop.permute.xlu0 %5277
      %5279 = vrot.lane.b32.xlu0 %v5039, 64
      %v5280 = vpop.permute.xlu0 %5279
      %5281 = vrot.lane.b32.xlu0 %v5040, 64
      %v5282 = vpop.permute.xlu0 %5281
      %5283 = vrot.lane.b32.xlu0 %v5041, 64
      %v5284 = vpop.permute.xlu0 %5283
      %5285 = vrot.lane.b32.xlu0 %v5042, 64
      %v5286 = vpop.permute.xlu0 %5285
      %5287 = vrot.lane.b32.xlu0 %v5043, 64
      %v5288 = vpop.permute.xlu0 %5287
      %5289 = vrot.lane.b32.xlu0 %v5044, 64
      %v5290 = vpop.permute.xlu0 %5289
      %5291 = vrot.lane.b32.xlu0 %v5045, 64
      %v5292 = vpop.permute.xlu0 %5291
      %5293 = vrot.lane.b32.xlu0 %v5046, 64
      %v5294 = vpop.permute.xlu0 %5293
      %5295 = vrot.lane.b32.xlu0 %v5047, 64
      %v5296 = vpop.permute.xlu0 %5295
      %5297 = vrot.lane.b32.xlu0 %v5048, 64
      %v5298 = vpop.permute.xlu0 %5297
      %5299 = vrot.lane.b32.xlu0 %v5049, 64
      %v5300 = vpop.permute.xlu0 %5299
      %5301 = vrot.lane.b32.xlu0 %v5050, 64
      %v5302 = vpop.permute.xlu0 %5301
      %5303 = vrot.lane.b32.xlu0 %v5051, 64
      %v5304 = vpop.permute.xlu0 %5303
      %5305 = vrot.lane.b32.xlu0 %v5052, 64
      %v5306 = vpop.permute.xlu0 %5305
      %5307 = vrot.lane.b32.xlu0 %v5053, 64
      %v5308 = vpop.permute.xlu0 %5307
      %5309 = vrot.lane.b32.xlu0 %v5054, 64
      %v5310 = vpop.permute.xlu0 %5309
      %5311 = vrot.lane.b32.xlu0 %v5055, 64
      %v5312 = vpop.permute.xlu0 %5311
      %5313 = vrot.lane.b32.xlu0 %v5056, 64
      %v5314 = vpop.permute.xlu0 %5313
      %5315 = vrot.lane.b32.xlu0 %v5057, 64
      %v5316 = vpop.permute.xlu0 %5315
      %5317 = vrot.lane.b32.xlu0 %v5058, 64
      %v5318 = vpop.permute.xlu0 %5317
      %5319 = vrot.lane.b32.xlu0 %v5059, 64
      %v5320 = vpop.permute.xlu0 %5319
      %5321 = vrot.lane.b32.xlu0 %v5060, 64
      %v5322 = vpop.permute.xlu0 %5321
      %5323 = vrot.lane.b32.xlu0 %v5061, 64
      %v5324 = vpop.permute.xlu0 %5323
      %5325 = vrot.lane.b32.xlu0 %v5062, 64
      %v5326 = vpop.permute.xlu0 %5325
      %5327 = vrot.lane.b32.xlu0 %v5063, 64
      %v5328 = vpop.permute.xlu0 %5327
      %5329 = vrot.lane.b32.xlu0 %v5064, 64
      %v5330 = vpop.permute.xlu0 %5329
      %5331 = vrot.lane.b32.xlu0 %v5065, 64
      %v5332 = vpop.permute.xlu0 %5331
      %5333 = vrot.lane.b32.xlu0 %v5066, 64
      %v5334 = vpop.permute.xlu0 %5333
      %5335 = vrot.lane.b32.xlu0 %v5067, 64
      %v5336 = vpop.permute.xlu0 %5335
      %5337 = vrot.lane.b32.xlu0 %v5068, 64
      %v5338 = vpop.permute.xlu0 %5337
      %5339 = vrot.lane.b32.xlu0 %v5069, 64
      %v5340 = vpop.permute.xlu0 %5339
      %5341 = vrot.lane.b32.xlu0 %v5070, 64
      %v5342 = vpop.permute.xlu0 %5341
      %5343 = vrot.lane.b32.xlu0 %v5071, 64
      %v5344 = vpop.permute.xlu0 %5343
      %5345 = vrot.lane.b32.xlu0 %v5072, 64
      %v5346 = vpop.permute.xlu0 %5345
      %5347 = vrot.lane.b32.xlu0 %v5073, 64
      %v5348 = vpop.permute.xlu0 %5347
      %5349 = vrot.lane.b32.xlu0 %v5074, 64
      %v5350 = vpop.permute.xlu0 %5349
      %5351 = vrot.lane.b32.xlu0 %v5075, 64
      %v5352 = vpop.permute.xlu0 %5351
      %5353 = vrot.lane.b32.xlu0 %v5076, 64
      %v5354 = vpop.permute.xlu0 %5353
      %5355 = vrot.lane.b32.xlu0 %v5077, 64
      %v5356 = vpop.permute.xlu0 %5355
      %5357 = vrot.lane.b32.xlu0 %v5078, 64
      %v5358 = vpop.permute.xlu0 %5357
      %5359 = vrot.lane.b32.xlu0 %v5079, 64
      %v5360 = vpop.permute.xlu0 %5359
      %5361 = vrot.lane.b32.xlu0 %v5080, 64
      %v5362 = vpop.permute.xlu0 %5361
      %5363 = vrot.lane.b32.xlu0 %v5081, 64
      %v5364 = vpop.permute.xlu0 %5363
      %5365 = vrot.lane.b32.xlu0 %v5082, 64
      %v5366 = vpop.permute.xlu0 %5365
      %5367 = vrot.lane.b32.xlu0 %v5083, 64
      %v5368 = vpop.permute.xlu0 %5367
      %5369 = vrot.lane.b32.xlu0 %v5084, 64
      %v5370 = vpop.permute.xlu0 %5369
      %5371 = vrot.lane.b32.xlu0 %v5085, 64
      %v5372 = vpop.permute.xlu0 %5371
      %5373 = vrot.lane.b32.xlu0 %v5086, 64
      %v5374 = vpop.permute.xlu0 %5373
      %5375 = vrot.lane.b32.xlu0 %v5087, 64
      %v5376 = vpop.permute.xlu0 %5375
      %5377 = vrot.lane.b32.xlu0 %v5088, 64
      %v5378 = vpop.permute.xlu0 %5377
      %5379 = vrot.lane.b32.xlu0 %v5089, 64
      %v5380 = vpop.permute.xlu0 %5379
      %5381 = vrot.lane.b32.xlu0 %v5090, 64
      %v5382 = vpop.permute.xlu0 %5381
      %5383 = vrot.lane.b32.xlu0 %v5091, 64
      %v5384 = vpop.permute.xlu0 %5383
      %5385 = vrot.lane.b32.xlu0 %v5092, 64
      %v5386 = vpop.permute.xlu0 %5385
      %5387 = vrot.lane.b32.xlu0 %v5093, 64
      %v5388 = vpop.permute.xlu0 %5387
      %5389 = vrot.lane.b32.xlu0 %v5094, 64
      %v5390 = vpop.permute.xlu0 %5389
      %5391 = vrot.lane.b32.xlu0 %v5095, 64
      %v5392 = vpop.permute.xlu0 %5391
      %5393 = vrot.lane.b32.xlu0 %v5096, 64
      %v5394 = vpop.permute.xlu0 %5393
      %5395 = vrot.lane.b32.xlu0 %v5097, 64
      %v5396 = vpop.permute.xlu0 %5395
      %5397 = vrot.lane.b32.xlu0 %v5098, 64
      %v5398 = vpop.permute.xlu0 %5397
      %5399 = vrot.lane.b32.xlu0 %v5099, 64
      %v5400 = vpop.permute.xlu0 %5399
      %5401 = vrot.lane.b32.xlu0 %v5100, 64
      %v5402 = vpop.permute.xlu0 %5401
      %5403 = vrot.lane.b32.xlu0 %v5101, 64
      %v5404 = vpop.permute.xlu0 %5403
      %5405 = vrot.lane.b32.xlu0 %v5102, 64
      %v5406 = vpop.permute.xlu0 %5405
      %5407 = vrot.lane.b32.xlu0 %v5103, 64
      %v5408 = vpop.permute.xlu0 %5407
      %5409 = vrot.lane.b32.xlu0 %v5104, 64
      %v5410 = vpop.permute.xlu0 %5409
      %5411 = vrot.lane.b32.xlu0 %v5105, 64
      %v5412 = vpop.permute.xlu0 %5411
      %5413 = vrot.lane.b32.xlu0 %v5106, 64
      %v5414 = vpop.permute.xlu0 %5413
      %5415 = vrot.lane.b32.xlu0 %v5107, 64
      %v5416 = vpop.permute.xlu0 %5415
      %5417 = vrot.lane.b32.xlu0 %v5108, 64
      %v5418 = vpop.permute.xlu0 %5417
      %5419 = vrot.lane.b32.xlu0 %v5109, 64
      %v5420 = vpop.permute.xlu0 %5419
      %5421 = vrot.lane.b32.xlu0 %v5110, 64
      %v5422 = vpop.permute.xlu0 %5421
      %5423 = vrot.lane.b32.xlu0 %v5111, 64
      %v5424 = vpop.permute.xlu0 %5423
      %5425 = vrot.lane.b32.xlu0 %v5112, 64
      %v5426 = vpop.permute.xlu0 %5425
      %5427 = vrot.lane.b32.xlu0 %v5113, 64
      %v5428 = vpop.permute.xlu0 %5427
      %v5534 = vadd.f32 %v4904, %v5220
      %v5535 = vadd.f32 %v4905, %v5222
      %v5536 = vadd.f32 %v4906, %v5224
      %v5537 = vadd.f32 %v4907, %v5226
      %v5538 = vadd.f32 %v4908, %v5228
      %v5539 = vadd.f32 %v4909, %v5230
      %v5540 = vadd.f32 %v4910, %v5232
      %v5541 = vadd.f32 %v4911, %v5234
      %v5542 = vadd.f32 %v4912, %v5236
      %v5543 = vadd.f32 %v4913, %v5238
      %v5544 = vadd.f32 %v4914, %v5240
      %v5545 = vadd.f32 %v4915, %v5242
      %v5546 = vadd.f32 %v4916, %v5244
      %v5547 = vadd.f32 %v4917, %v5246
      %v5548 = vadd.f32 %v4918, %v5248
      %v5549 = vadd.f32 %v4919, %v5250
      %v5550 = vadd.f32 %v4920, %v5252
      %v5551 = vadd.f32 %v4921, %v5254
      %v5552 = vadd.f32 %v4922, %v5256
      %v5553 = vadd.f32 %v4923, %v5258
      %v5554 = vadd.f32 %v4924, %v5260
      %v5555 = vadd.f32 %v4925, %v5262
      %v5556 = vadd.f32 %v4926, %v5264
      %v5557 = vadd.f32 %v4927, %v5266
      %v5558 = vadd.f32 %v4928, %v5268
      %v5559 = vadd.f32 %v4929, %v5270
      %v5560 = vadd.f32 %v4930, %v5272
      %v5561 = vadd.f32 %v4931, %v5274
      %v5562 = vadd.f32 %v4932, %v5276
      %v5563 = vadd.f32 %v4933, %v5278
      %v5564 = vadd.f32 %v4934, %v5280
      %v5565 = vadd.f32 %v4935, %v5282
      %v5566 = vadd.f32 %v4936, %v5284
      %v5567 = vadd.f32 %v4937, %v5286
      %v5568 = vadd.f32 %v4938, %v5288
      %v5569 = vadd.f32 %v4939, %v5290
      %v5570 = vadd.f32 %v4940, %v5292
      %v5571 = vadd.f32 %v4941, %v5294
      %v5572 = vadd.f32 %v4942, %v5296
      %v5573 = vadd.f32 %v4943, %v5298
      %v5574 = vadd.f32 %v4944, %v5300
      %v5575 = vadd.f32 %v4945, %v5302
      %v5576 = vadd.f32 %v4946, %v5304
      %v5577 = vadd.f32 %v4947, %v5306
      %v5578 = vadd.f32 %v4948, %v5308
      %v5579 = vadd.f32 %v4949, %v5310
      %v5580 = vadd.f32 %v4950, %v5312
      %v5581 = vadd.f32 %v4951, %v5314
      %v5582 = vadd.f32 %v4952, %v5316
      %v5583 = vadd.f32 %v4953, %v5318
      %v5584 = vadd.f32 %v4954, %v5320
      %v5585 = vadd.f32 %v4955, %v5322
      %v5586 = vadd.f32 %v4956, %v5324
      %v5587 = vadd.f32 %v4957, %v5326
      %v5588 = vadd.f32 %v4958, %v5328
      %v5589 = vadd.f32 %v4959, %v5330
      %v5590 = vadd.f32 %v4960, %v5332
      %v5591 = vadd.f32 %v4961, %v5334
      %v5592 = vadd.f32 %v4962, %v5336
      %v5593 = vadd.f32 %v4963, %v5338
      %v5594 = vadd.f32 %v4964, %v5340
      %v5595 = vadd.f32 %v4965, %v5342
      %v5596 = vadd.f32 %v4966, %v5344
      %v5597 = vadd.f32 %v4967, %v5346
      %v5598 = vadd.f32 %v4968, %v5348
      %v5599 = vadd.f32 %v4969, %v5350
      %v5600 = vadd.f32 %v4970, %v5352
      %v5601 = vadd.f32 %v4971, %v5354
      %v5602 = vadd.f32 %v4972, %v5356
      %v5603 = vadd.f32 %v4973, %v5358
      %v5604 = vadd.f32 %v4974, %v5360
      %v5605 = vadd.f32 %v4975, %v5362
      %v5606 = vadd.f32 %v4976, %v5364
      %v5607 = vadd.f32 %v4977, %v5366
      %v5608 = vadd.f32 %v4978, %v5368
      %v5609 = vadd.f32 %v4979, %v5370
      %v5610 = vadd.f32 %v4980, %v5372
      %v5611 = vadd.f32 %v4981, %v5374
      %v5612 = vadd.f32 %v4982, %v5376
      %v5613 = vadd.f32 %v4983, %v5378
      %v5614 = vadd.f32 %v4984, %v5380
      %v5615 = vadd.f32 %v4985, %v5382
      %v5616 = vadd.f32 %v4986, %v5384
      %v5617 = vadd.f32 %v4987, %v5386
      %v5618 = vadd.f32 %v4988, %v5388
      %v5619 = vadd.f32 %v4989, %v5390
      %v5620 = vadd.f32 %v4990, %v5392
      %v5621 = vadd.f32 %v4991, %v5394
      %v5622 = vadd.f32 %v4992, %v5396
      %v5623 = vadd.f32 %v4993, %v5398
      %v5624 = vadd.f32 %v4994, %v5400
      %v5625 = vadd.f32 %v4995, %v5402
      %v5626 = vadd.f32 %v4996, %v5404
      %v5627 = vadd.f32 %v4997, %v5406
      %v5628 = vadd.f32 %v4998, %v5408
      %v5629 = vadd.f32 %v4999, %v5410
      %v5630 = vadd.f32 %v5000, %v5412
      %v5631 = vadd.f32 %v5001, %v5414
      %v5632 = vadd.f32 %v5002, %v5416
      %v5633 = vadd.f32 %v5003, %v5418
      %v5634 = vadd.f32 %v5004, %v5420
      %v5635 = vadd.f32 %v5005, %v5422
      %v5636 = vadd.f32 %v5006, %v5424
      %v5637 = vadd.f32 %v5007, %v5426
      %v5638 = vadd.f32 %v5008, %v5428
      %vm5639 = vcmask 261120
      %5640 = vst.msk [vmem:[#allocation3] sm:$0xff] %vm5639, %v5534
      %5641 = vst.msk [vmem:[#allocation3 + $0x8] sm:$0xff] %vm5639, %v5535
      %5642 = vst.msk [vmem:[#allocation3 + $0x10] sm:$0xff] %vm5639, %v5536
      %5643 = vst.msk [vmem:[#allocation3 + $0x18] sm:$0xff] %vm5639, %v5537
      %5644 = vst.msk [vmem:[#allocation3 + $0x20] sm:$0xff] %vm5639, %v5538
      %5645 = vst.msk [vmem:[#allocation3 + $0x28] sm:$0xff] %vm5639, %v5539
      %5646 = vst.msk [vmem:[#allocation3 + $0x30] sm:$0xff] %vm5639, %v5540
      %5647 = vst.msk [vmem:[#allocation3 + $0x38] sm:$0xff] %vm5639, %v5541
      %5648 = vst.msk [vmem:[#allocation3 + $0x40] sm:$0xff] %vm5639, %v5542
      %5649 = vst.msk [vmem:[#allocation3 + $0x48] sm:$0xff] %vm5639, %v5543
      %5650 = vst.msk [vmem:[#allocation3 + $0x50] sm:$0xff] %vm5639, %v5544
      %5651 = vst.msk [vmem:[#allocation3 + $0x58] sm:$0xff] %vm5639, %v5545
      %5652 = vst.msk [vmem:[#allocation3 + $0x60] sm:$0xff] %vm5639, %v5546
      %5653 = vst.msk [vmem:[#allocation3 + $0x68] sm:$0xff] %vm5639, %v5547
      %5654 = vst.msk [vmem:[#allocation3 + $0x70] sm:$0xff] %vm5639, %v5548
      %5655 = vst.msk [vmem:[#allocation3 + $0x78] sm:$0xff] %vm5639, %v5549
      %5656 = vst.msk [vmem:[#allocation3 + $0x80] sm:$0xff] %vm5639, %v5550
      %5657 = vst.msk [vmem:[#allocation3 + $0x88] sm:$0xff] %vm5639, %v5551
      %5658 = vst.msk [vmem:[#allocation3 + $0x90] sm:$0xff] %vm5639, %v5552
      %5659 = vst.msk [vmem:[#allocation3 + $0x98] sm:$0xff] %vm5639, %v5553
      %5660 = vst.msk [vmem:[#allocation3 + $0xa0] sm:$0xff] %vm5639, %v5554
      %5661 = vst.msk [vmem:[#allocation3 + $0xa8] sm:$0xff] %vm5639, %v5555
      %5662 = vst.msk [vmem:[#allocation3 + $0xb0] sm:$0xff] %vm5639, %v5556
      %5663 = vst.msk [vmem:[#allocation3 + $0xb8] sm:$0xff] %vm5639, %v5557
      %5664 = vst.msk [vmem:[#allocation3 + $0xc0] sm:$0xff] %vm5639, %v5558
      %5665 = vst.msk [vmem:[#allocation3 + $0xc8] sm:$0xff] %vm5639, %v5559
      %5666 = vst.msk [vmem:[#allocation3 + $0xd0] sm:$0xff] %vm5639, %v5560
      %5667 = vst.msk [vmem:[#allocation3 + $0xd8] sm:$0xff] %vm5639, %v5561
      %5668 = vst.msk [vmem:[#allocation3 + $0xe0] sm:$0xff] %vm5639, %v5562
      %5669 = vst.msk [vmem:[#allocation3 + $0xe8] sm:$0xff] %vm5639, %v5563
      %5670 = vst.msk [vmem:[#allocation3 + $0xf0] sm:$0xff] %vm5639, %v5564
      %5671 = vst.msk [vmem:[#allocation3 + $0xf8] sm:$0xff] %vm5639, %v5565
      %5672 = vst.msk [vmem:[#allocation3 + $0x100] sm:$0xff] %vm5639, %v5566
      %5673 = vst.msk [vmem:[#allocation3 + $0x108] sm:$0xff] %vm5639, %v5567
      %5674 = vst.msk [vmem:[#allocation3 + $0x110] sm:$0xff] %vm5639, %v5568
      %5675 = vst.msk [vmem:[#allocation3 + $0x118] sm:$0xff] %vm5639, %v5569
      %5676 = vst.msk [vmem:[#allocation3 + $0x120] sm:$0xff] %vm5639, %v5570
      %5677 = vst.msk [vmem:[#allocation3 + $0x128] sm:$0xff] %vm5639, %v5571
      %5678 = vst.msk [vmem:[#allocation3 + $0x130] sm:$0xff] %vm5639, %v5572
      %5679 = vst.msk [vmem:[#allocation3 + $0x138] sm:$0xff] %vm5639, %v5573
      %5680 = vst.msk [vmem:[#allocation3 + $0x140] sm:$0xff] %vm5639, %v5574
      %5681 = vst.msk [vmem:[#allocation3 + $0x148] sm:$0xff] %vm5639, %v5575
      %5682 = vst.msk [vmem:[#allocation3 + $0x150] sm:$0xff] %vm5639, %v5576
      %5683 = vst.msk [vmem:[#allocation3 + $0x158] sm:$0xff] %vm5639, %v5577
      %5684 = vst.msk [vmem:[#allocation3 + $0x160] sm:$0xff] %vm5639, %v5578
      %5685 = vst.msk [vmem:[#allocation3 + $0x168] sm:$0xff] %vm5639, %v5579
      %5686 = vst.msk [vmem:[#allocation3 + $0x170] sm:$0xff] %vm5639, %v5580
      %5687 = vst.msk [vmem:[#allocation3 + $0x178] sm:$0xff] %vm5639, %v5581
      %5688 = vst.msk [vmem:[#allocation3 + $0x180] sm:$0xff] %vm5639, %v5582
      %5689 = vst.msk [vmem:[#allocation3 + $0x188] sm:$0xff] %vm5639, %v5583
      %5690 = vst.msk [vmem:[#allocation3 + $0x190] sm:$0xff] %vm5639, %v5584
      %5691 = vst.msk [vmem:[#allocation3 + $0x198] sm:$0xff] %vm5639, %v5585
      %5692 = vst.msk [vmem:[#allocation3 + $0x1a0] sm:$0xff] %vm5639, %v5586
      %5693 = vst.msk [vmem:[#allocation3 + $0x1a8] sm:$0xff] %vm5639, %v5587
      %5694 = vst.msk [vmem:[#allocation3 + $0x1b0] sm:$0xff] %vm5639, %v5588
      %5695 = vst.msk [vmem:[#allocation3 + $0x1b8] sm:$0xff] %vm5639, %v5589
      %5696 = vst.msk [vmem:[#allocation3 + $0x1c0] sm:$0xff] %vm5639, %v5590
      %5697 = vst.msk [vmem:[#allocation3 + $0x1c8] sm:$0xff] %vm5639, %v5591
      %5698 = vst.msk [vmem:[#allocation3 + $0x1d0] sm:$0xff] %vm5639, %v5592
      %5699 = vst.msk [vmem:[#allocation3 + $0x1d8] sm:$0xff] %vm5639, %v5593
      %5700 = vst.msk [vmem:[#allocation3 + $0x1e0] sm:$0xff] %vm5639, %v5594
      %5701 = vst.msk [vmem:[#allocation3 + $0x1e8] sm:$0xff] %vm5639, %v5595
      %5702 = vst.msk [vmem:[#allocation3 + $0x1f0] sm:$0xff] %vm5639, %v5596
      %5703 = vst.msk [vmem:[#allocation3 + $0x1f8] sm:$0xff] %vm5639, %v5597
      %5704 = vst.msk [vmem:[#allocation3 + $0x200] sm:$0xff] %vm5639, %v5598
      %5705 = vst.msk [vmem:[#allocation3 + $0x208] sm:$0xff] %vm5639, %v5599
      %5706 = vst.msk [vmem:[#allocation3 + $0x210] sm:$0xff] %vm5639, %v5600
      %5707 = vst.msk [vmem:[#allocation3 + $0x218] sm:$0xff] %vm5639, %v5601
      %5708 = vst.msk [vmem:[#allocation3 + $0x220] sm:$0xff] %vm5639, %v5602
      %5709 = vst.msk [vmem:[#allocation3 + $0x228] sm:$0xff] %vm5639, %v5603
      %5710 = vst.msk [vmem:[#allocation3 + $0x230] sm:$0xff] %vm5639, %v5604
      %5711 = vst.msk [vmem:[#allocation3 + $0x238] sm:$0xff] %vm5639, %v5605
      %5712 = vst.msk [vmem:[#allocation3 + $0x240] sm:$0xff] %vm5639, %v5606
      %5713 = vst.msk [vmem:[#allocation3 + $0x248] sm:$0xff] %vm5639, %v5607
      %5714 = vst.msk [vmem:[#allocation3 + $0x250] sm:$0xff] %vm5639, %v5608
      %5715 = vst.msk [vmem:[#allocation3 + $0x258] sm:$0xff] %vm5639, %v5609
      %5716 = vst.msk [vmem:[#allocation3 + $0x260] sm:$0xff] %vm5639, %v5610
      %5717 = vst.msk [vmem:[#allocation3 + $0x268] sm:$0xff] %vm5639, %v5611
      %5718 = vst.msk [vmem:[#allocation3 + $0x270] sm:$0xff] %vm5639, %v5612
      %5719 = vst.msk [vmem:[#allocation3 + $0x278] sm:$0xff] %vm5639, %v5613
      %5720 = vst.msk [vmem:[#allocation3 + $0x280] sm:$0xff] %vm5639, %v5614
      %5721 = vst.msk [vmem:[#allocation3 + $0x288] sm:$0xff] %vm5639, %v5615
      %5722 = vst.msk [vmem:[#allocation3 + $0x290] sm:$0xff] %vm5639, %v5616
      %5723 = vst.msk [vmem:[#allocation3 + $0x298] sm:$0xff] %vm5639, %v5617
      %5724 = vst.msk [vmem:[#allocation3 + $0x2a0] sm:$0xff] %vm5639, %v5618
      %5725 = vst.msk [vmem:[#allocation3 + $0x2a8] sm:$0xff] %vm5639, %v5619
      %5726 = vst.msk [vmem:[#allocation3 + $0x2b0] sm:$0xff] %vm5639, %v5620
      %5727 = vst.msk [vmem:[#allocation3 + $0x2b8] sm:$0xff] %vm5639, %v5621
      %5728 = vst.msk [vmem:[#allocation3 + $0x2c0] sm:$0xff] %vm5639, %v5622
      %5729 = vst.msk [vmem:[#allocation3 + $0x2c8] sm:$0xff] %vm5639, %v5623
      %5730 = vst.msk [vmem:[#allocation3 + $0x2d0] sm:$0xff] %vm5639, %v5624
      %5731 = vst.msk [vmem:[#allocation3 + $0x2d8] sm:$0xff] %vm5639, %v5625
      %5732 = vst.msk [vmem:[#allocation3 + $0x2e0] sm:$0xff] %vm5639, %v5626
      %5733 = vst.msk [vmem:[#allocation3 + $0x2e8] sm:$0xff] %vm5639, %v5627
      %5734 = vst.msk [vmem:[#allocation3 + $0x2f0] sm:$0xff] %vm5639, %v5628
      %5735 = vst.msk [vmem:[#allocation3 + $0x2f8] sm:$0xff] %vm5639, %v5629
      %5736 = vst.msk [vmem:[#allocation3 + $0x300] sm:$0xff] %vm5639, %v5630
      %5737 = vst.msk [vmem:[#allocation3 + $0x308] sm:$0xff] %vm5639, %v5631
      %5738 = vst.msk [vmem:[#allocation3 + $0x310] sm:$0xff] %vm5639, %v5632
      %5739 = vst.msk [vmem:[#allocation3 + $0x318] sm:$0xff] %vm5639, %v5633
      %5740 = vst.msk [vmem:[#allocation3 + $0x320] sm:$0xff] %vm5639, %v5634
      %5741 = vst.msk [vmem:[#allocation3 + $0x328] sm:$0xff] %vm5639, %v5635
      %5742 = vst.msk [vmem:[#allocation3 + $0x330] sm:$0xff] %vm5639, %v5636
      %5743 = vst.msk [vmem:[#allocation3 + $0x338] sm:$0xff] %vm5639, %v5637
      %vm5744 = vcmask 259072
      %5745 = vst.msk [vmem:[#allocation3 + $0x340] sm:$0x3f] %vm5744, %v5638
      %v5746 = vld [vmem:[%s5] sm:$0x1]
      %v5747 = vld [vmem:[#allocation3] ss:$2 sm:$0xff]
      %s5748 = scalar_lea.vmem [#allocation3], 16
      %v5749 = vld [vmem:[%s5748] ss:$2 sm:$0xff]
      %s5750 = scalar_lea.vmem [#allocation3], 32
      %v5751 = vld [vmem:[%s5750] ss:$2 sm:$0xf]
      %v5752 = vlaneseq
      %v5753 = vshrl.u32 %v5752, 7
      %v5754 = vsub.s32 0, %v5753
      %v5755 = vrot.slane %v5746, %v5754
      %v5756 = vadd.f32 %v5747, %v5755
      %v5757 = vadd.f32 %v5749, %v5755
      %v5758 = vadd.f32 %v5751, %v5755
      %v5759 = vmax.f32 %v5756, 0.0
      %v5760 = vmax.f32 %v5757, 0.0
      %v5761 = vmax.f32 %v5758, 0.0
      %v5762 = vpack.c.bf16 %v5760, %v5759
      %v5763 = vpack.c.bf16 %v5761, %v5761
      %v5766 = vunpack.c.l.b16 %v5762
      %v5767 = vunpack.c.h.b16 %v5762
      %v5768 = vunpack.c.l.b16 %v5763
      %v5769 = vpack.c.b16 %v5766, %v5766
      %v5770 = vpack.c.b16 %v5767, %v5767
      %v5771 = vpack.c.b16 %v5768, %v5768
      %vm5772 = vsmask.f32 1280
      %vm5773 = vsmask.f32 5392
      %vm5774 = vmor %vm5772, %vm5773
      %v5776 = vshrl.u32 %v5769, 16
      %v5778 = vrot.slane %v5776, 6
      %v5779 = vshll.u32 %v5769, 16
      %v5781 = vrot.slane %v5779, 7
      %v5782 = vor.u32 %v5778, %v5781
      %v5783 = vrot.slane %v5782, 4
      %v5785 = vshrl.u32 %v5770, 16
      %v5787 = vrot.slane %v5785, 6
      %v5788 = vshll.u32 %v5770, 16
      %v5790 = vrot.slane %v5788, 7
      %v5791 = vor.u32 %v5787, %v5790
      %v5792 = vsel %vm5774, %v5783, %v5791
      %v5793 = vrot.slane %v5791, 4
      %v5795 = vshrl.u32 %v5771, 16
      %v5797 = vrot.slane %v5795, 6
      %v5798 = vshll.u32 %v5771, 16
      %v5800 = vrot.slane %v5798, 7
      %v5801 = vor.u32 %v5797, %v5800
      %v5802 = vsel %vm5774, %v5793, %v5801
      %vm5806 = vcmask 257025
      %vm5807 = vsmask.f32 7942
      %vm5808 = vmand %vm5806, %vm5807
      %v5809 = vld [vmem:[#allocation4 + $0x78] sm:$0xe]
      %v5810 = vsel %vm5808, %v5782, %v5809
      %5811 = vst [vmem:[#allocation4 + $0x78] sm:$0xe] %v5810
      %5812 = vst.msk [vmem:[#allocation4 + $0x7c] sm:$0xf] %vm263, %v5792
      %vm5813 = vcmask 257024
      %vm5814 = vsmask.f32 3328
      %vm5815 = vmand %vm5813, %vm5814
      %v5816 = vld [vmem:[#allocation4 + $0x80] sm:$0xf]
      %v5817 = vsel %vm5815, %v5802, %v5816
      %5818 = vst [vmem:[#allocation4 + $0x80] sm:$0xf] %v5817
      %s5819 = scalar_lea.vmem [#allocation3], 42
      %v5820 = vld [vmem:[%s5819] ss:$2 sm:$0xff]
      %s5821 = scalar_lea.vmem [#allocation3], 58
      %v5822 = vld [vmem:[%s5821] ss:$2 sm:$0xff]
      %s5823 = scalar_lea.vmem [#allocation3], 74
      %v5824 = vld [vmem:[%s5823] ss:$2 sm:$0xf]
      %v5825 = vadd.f32 %v5820, %v5755
      %v5826 = vadd.f32 %v5822, %v5755
      %v5827 = vadd.f32 %v5824, %v5755
      %v5828 = vmax.f32 %v5825, 0.0
      %v5829 = vmax.f32 %v5826, 0.0
      %v5830 = vmax.f32 %v5827, 0.0
      %v5831 = vpack.c.bf16 %v5829, %v5828
      %v5832 = vpack.c.bf16 %v5830, %v5830
      %v5835 = vunpack.c.l.b16 %v5831
      %v5836 = vunpack.c.h.b16 %v5831
      %v5837 = vunpack.c.l.b16 %v5832
      %v5838 = vpack.c.b16 %v5835, %v5835
      %v5839 = vpack.c.b16 %v5836, %v5836
      %v5840 = vpack.c.b16 %v5837, %v5837
      %vm5841 = vsmask.f32 7440
      %vm5842 = vmor %vm5814, %vm5841
      %v5844 = vshll.u32 %v5838, 16
      %v5846 = vrot.slane %v5844, 5
      %v5847 = vshrl.u32 %v5838, 16
      %v5849 = vrot.slane %v5847, 4
      %v5850 = vor.u32 %v5849, %v5846
      %v5851 = vrot.slane %v5850, 4
      %v5853 = vshll.u32 %v5839, 16
      %v5855 = vrot.slane %v5853, 5
      %v5856 = vsel %vm5842, %v5851, %v5855
      %v5857 = vshrl.u32 %v5839, 16
      %v5859 = vrot.slane %v5857, 4
      %v5860 = vor.u32 %v5859, %v5855
      %v5861 = vrot.slane %v5860, 4
      %v5863 = vshll.u32 %v5840, 16
      %v5865 = vrot.slane %v5863, 5
      %v5866 = vsel %vm5842, %v5861, %v5865
      %v5867 = vshrl.u32 %v5840, 16
      %v5869 = vrot.slane %v5867, 4
      %v5870 = vor.u32 %v5869, %v5865
      %v5871 = vrot.slane %v5870, 4
      %vm5876 = vcmask 257027
      %vm5877 = vsmask.f32 7950
      %vm5878 = vmand %vm5876, %vm5877
      %v5879 = vld [vmem:[#allocation4 + $0x8] sm:$0x8]
      %v5880 = vsel %vm5878, %v5846, %v5879
      %5881 = vst [vmem:[#allocation4 + $0x8] sm:$0x8] %v5880
      %5882 = vst.msk [vmem:[#allocation4 + $0xc] sm:$0xf] %vm263, %v5856
      %5883 = vst.msk [vmem:[#allocation4 + $0x10] sm:$0xf] %vm263, %v5866
      %vm5884 = vcmask 254976
      %vm5885 = vmand %vm5884, %vm5772
      %v5886 = vld [vmem:[#allocation4 + $0x14] sm:$0x3]
      %v5887 = vsel %vm5885, %v5871, %v5886
      %5888 = vst [vmem:[#allocation4 + $0x14] sm:$0x3] %v5887
      %s5889 = scalar_lea.vmem [#allocation3], 84
      %v5890 = vld [vmem:[%s5889] ss:$2 sm:$0xff]
      %s5891 = scalar_lea.vmem [#allocation3], 100
      %v5892 = vld [vmem:[%s5891] ss:$2 sm:$0xff]
      %s5893 = scalar_lea.vmem [#allocation3], 116
      %v5894 = vld [vmem:[%s5893] ss:$2 sm:$0xf]
      %v5895 = vadd.f32 %v5890, %v5755
      %v5896 = vadd.f32 %v5892, %v5755
      %v5897 = vadd.f32 %v5894, %v5755
      %v5898 = vmax.f32 %v5895, 0.0
      %v5899 = vmax.f32 %v5896, 0.0
      %v5900 = vmax.f32 %v5897, 0.0
      %v5901 = vpack.c.bf16 %v5899, %v5898
      %v5902 = vpack.c.bf16 %v5900, %v5900
      %v5905 = vunpack.c.l.b16 %v5901
      %v5906 = vunpack.c.h.b16 %v5901
      %v5907 = vunpack.c.l.b16 %v5902
      %v5908 = vpack.c.b16 %v5905, %v5905
      %v5909 = vpack.c.b16 %v5906, %v5906
      %v5910 = vpack.c.b16 %v5907, %v5907
      %vm5911 = vsmask.f32 4368
      %vm5912 = vmor %vm351, %vm5911
      %v5914 = vshrl.u32 %v5908, 16
      %v5916 = vrot.slane %v5914, 7
      %v5917 = vshll.u32 %v5908, 16
      %v5919 = vor.u32 %v5916, %v5917
      %v5920 = vrot.slane %v5916, 4
      %v5922 = vshrl.u32 %v5909, 16
      %v5924 = vrot.slane %v5922, 7
      %v5925 = vshll.u32 %v5909, 16
      %v5927 = vor.u32 %v5924, %v5925
      %v5928 = vsel %vm5912, %v5920, %v5927
      %v5929 = vrot.slane %v5924, 4
      %v5931 = vshrl.u32 %v5910, 16
      %v5933 = vrot.slane %v5931, 7
      %v5934 = vshll.u32 %v5910, 16
      %v5936 = vor.u32 %v5933, %v5934
      %v5937 = vsel %vm5912, %v5929, %v5936
      %vm5941 = vsmask.f32 7938
      %vm5942 = vmand %vm5813, %vm5941
      %v5943 = vld [vmem:[#allocation4 + $0x84] sm:$0xf]
      %v5944 = vsel %vm5942, %v5919, %v5943
      %5945 = vst [vmem:[#allocation4 + $0x84] sm:$0xf] %v5944
      %5946 = vst.msk [vmem:[#allocation4 + $0x88] sm:$0xf] %vm263, %v5928
      %vm5947 = vcmask 256000
      %vm5948 = vsmask.f32 2304
      %vm5949 = vmand %vm5947, %vm5948
      %v5950 = vld [vmem:[#allocation4 + $0x8c] sm:$0x7]
      %v5951 = vsel %vm5949, %v5937, %v5950
      %5952 = vst [vmem:[#allocation4 + $0x8c] sm:$0x7] %v5951
      %s5953 = scalar_lea.vmem [#allocation3], 126
      %v5954 = vld [vmem:[%s5953] ss:$2 sm:$0xff]
      %s5955 = scalar_lea.vmem [#allocation3], 142
      %v5956 = vld [vmem:[%s5955] ss:$2 sm:$0xff]
      %s5957 = scalar_lea.vmem [#allocation3], 158
      %v5958 = vld [vmem:[%s5957] ss:$2 sm:$0xf]
      %v5959 = vadd.f32 %v5954, %v5755
      %v5960 = vadd.f32 %v5956, %v5755
      %v5961 = vadd.f32 %v5958, %v5755
      %v5962 = vmax.f32 %v5959, 0.0
      %v5963 = vmax.f32 %v5960, 0.0
      %v5964 = vmax.f32 %v5961, 0.0
      %v5965 = vpack.c.bf16 %v5963, %v5962
      %v5966 = vpack.c.bf16 %v5964, %v5964
      %v5969 = vunpack.c.l.b16 %v5965
      %v5970 = vunpack.c.h.b16 %v5965
      %v5971 = vunpack.c.l.b16 %v5966
      %v5972 = vpack.c.b16 %v5969, %v5969
      %v5973 = vpack.c.b16 %v5970, %v5970
      %v5974 = vpack.c.b16 %v5971, %v5971
      %vm5975 = vsmask.f32 6416
      %vm5976 = vmor %vm5948, %vm5975
      %v5978 = vshrl.u32 %v5972, 16
      %v5980 = vrot.slane %v5978, 5
      %v5981 = vshll.u32 %v5972, 16
      %v5983 = vrot.slane %v5981, 6
      %v5984 = vor.u32 %v5980, %v5983
      %v5985 = vrot.slane %v5984, 4
      %v5987 = vshrl.u32 %v5973, 16
      %v5989 = vrot.slane %v5987, 5
      %v5990 = vshll.u32 %v5973, 16
      %v5992 = vrot.slane %v5990, 6
      %v5993 = vor.u32 %v5989, %v5992
      %v5994 = vsel %vm5976, %v5985, %v5993
      %v5995 = vrot.slane %v5993, 4
      %v5997 = vshrl.u32 %v5974, 16
      %v5999 = vrot.slane %v5997, 5
      %v6000 = vshll.u32 %v5974, 16
      %v6002 = vrot.slane %v6000, 6
      %v6003 = vor.u32 %v5999, %v6002
      %v6004 = vsel %vm5976, %v5995, %v6003
      %v6005 = vrot.slane %v5999, 4
      %vm6010 = vcmask 257026
      %vm6011 = vsmask.f32 7946
      %vm6012 = vmand %vm6010, %vm6011
      %v6013 = vld [vmem:[#allocation4 + $0x14] sm:$0xc]
      %v6014 = vsel %vm6012, %v5984, %v6013
      %6015 = vst [vmem:[#allocation4 + $0x14] sm:$0xc] %v6014
      %6016 = vst.msk [vmem:[#allocation4 + $0x18] sm:$0xf] %vm263, %v5994
      %6017 = vst.msk [vmem:[#allocation4 + $0x1c] sm:$0xf] %vm263, %v6004
      %v6018 = vld [vmem:[#allocation4 + $0x20] sm:$0x1]
      %v6019 = vsel %vm352, %v6005, %v6018
      %6020 = vst [vmem:[#allocation4 + $0x20] sm:$0x1] %v6019
      %s6021 = scalar_lea.vmem [#allocation3], 168
      %v6022 = vld [vmem:[%s6021] ss:$2 sm:$0xff]
      %s6023 = scalar_lea.vmem [#allocation3], 184
      %v6024 = vld [vmem:[%s6023] ss:$2 sm:$0xff]
      %s6025 = scalar_lea.vmem [#allocation3], 200
      %v6026 = vld [vmem:[%s6025] ss:$2 sm:$0xf]
      %v6027 = vadd.f32 %v6022, %v5755
      %v6028 = vadd.f32 %v6024, %v5755
      %v6029 = vadd.f32 %v6026, %v5755
      %v6030 = vmax.f32 %v6027, 0.0
      %v6031 = vmax.f32 %v6028, 0.0
      %v6032 = vmax.f32 %v6029, 0.0
      %v6033 = vpack.c.bf16 %v6031, %v6030
      %v6034 = vpack.c.bf16 %v6032, %v6032
      %v6037 = vunpack.c.l.b16 %v6033
      %v6038 = vunpack.c.h.b16 %v6033
      %v6039 = vunpack.c.l.b16 %v6034
      %v6040 = vpack.c.b16 %v6037, %v6037
      %v6041 = vpack.c.b16 %v6038, %v6038
      %v6042 = vpack.c.b16 %v6039, %v6039
      %v6044 = vshll.u32 %v6040, 16
      %v6046 = vrot.slane %v6044, 5
      %v6047 = vshrl.u32 %v6040, 16
      %v6049 = vrot.slane %v6047, 4
      %v6050 = vor.u32 %v6049, %v6046
      %v6051 = vrot.slane %v6050, 4
      %v6053 = vshll.u32 %v6041, 16
      %v6055 = vrot.slane %v6053, 5
      %v6056 = vsel %vm5842, %v6051, %v6055
      %v6057 = vshrl.u32 %v6041, 16
      %v6059 = vrot.slane %v6057, 4
      %v6060 = vor.u32 %v6059, %v6055
      %v6061 = vrot.slane %v6060, 4
      %v6063 = vshll.u32 %v6042, 16
      %v6065 = vrot.slane %v6063, 5
      %v6066 = vsel %vm5842, %v6061, %v6065
      %v6067 = vshrl.u32 %v6042, 16
      %v6069 = vrot.slane %v6067, 4
      %v6070 = vor.u32 %v6069, %v6065
      %v6071 = vrot.slane %v6070, 4
      %v6076 = vld [vmem:[#allocation4 + $0x8c] sm:$0x8]
      %v6077 = vsel %vm5878, %v6046, %v6076
      %6078 = vst [vmem:[#allocation4 + $0x8c] sm:$0x8] %v6077
      %6079 = vst.msk [vmem:[#allocation4 + $0x90] sm:$0xf] %vm263, %v6056
      %6080 = vst.msk [vmem:[#allocation4 + $0x94] sm:$0xf] %vm263, %v6066
      %v6081 = vld [vmem:[#allocation4 + $0x98] sm:$0x3]
      %v6082 = vsel %vm5885, %v6071, %v6081
      %6083 = vst [vmem:[#allocation4 + $0x98] sm:$0x3] %v6082
      %s6084 = scalar_lea.vmem [#allocation3], 210
      %v6085 = vld [vmem:[%s6084] ss:$2 sm:$0xff]
      %s6086 = scalar_lea.vmem [#allocation3], 226
      %v6087 = vld [vmem:[%s6086] ss:$2 sm:$0xff]
      %s6088 = scalar_lea.vmem [#allocation3], 242
      %v6089 = vld [vmem:[%s6088] ss:$2 sm:$0xf]
      %v6090 = vadd.f32 %v6085, %v5755
      %v6091 = vadd.f32 %v6087, %v5755
      %v6092 = vadd.f32 %v6089, %v5755
      %v6093 = vmax.f32 %v6090, 0.0
      %v6094 = vmax.f32 %v6091, 0.0
      %v6095 = vmax.f32 %v6092, 0.0
      %v6096 = vpack.c.bf16 %v6094, %v6093
      %v6097 = vpack.c.bf16 %v6095, %v6095
      %v6100 = vunpack.c.l.b16 %v6096
      %v6101 = vunpack.c.h.b16 %v6096
      %v6102 = vunpack.c.l.b16 %v6097
      %v6103 = vpack.c.b16 %v6100, %v6100
      %v6104 = vpack.c.b16 %v6101, %v6101
      %v6105 = vpack.c.b16 %v6102, %v6102
      %v6107 = vshrl.u32 %v6103, 16
      %v6109 = vrot.slane %v6107, 6
      %v6110 = vshll.u32 %v6103, 16
      %v6112 = vrot.slane %v6110, 7
      %v6113 = vor.u32 %v6109, %v6112
      %v6114 = vrot.slane %v6113, 4
      %v6116 = vshrl.u32 %v6104, 16
      %v6118 = vrot.slane %v6116, 6
      %v6119 = vshll.u32 %v6104, 16
      %v6121 = vrot.slane %v6119, 7
      %v6122 = vor.u32 %v6118, %v6121
      %v6123 = vsel %vm5774, %v6114, %v6122
      %v6124 = vrot.slane %v6122, 4
      %v6126 = vshrl.u32 %v6105, 16
      %v6128 = vrot.slane %v6126, 6
      %v6129 = vshll.u32 %v6105, 16
      %v6131 = vrot.slane %v6129, 7
      %v6132 = vor.u32 %v6128, %v6131
      %v6133 = vsel %vm5774, %v6124, %v6132
      %v6137 = vld [vmem:[#allocation4 + $0x20] sm:$0xe]
      %v6138 = vsel %vm5808, %v6113, %v6137
      %6139 = vst [vmem:[#allocation4 + $0x20] sm:$0xe] %v6138
      %6140 = vst.msk [vmem:[#allocation4 + $0x24] sm:$0xf] %vm263, %v6123
      %v6141 = vld [vmem:[#allocation4 + $0x28] sm:$0xf]
      %v6142 = vsel %vm5815, %v6133, %v6141
      %6143 = vst [vmem:[#allocation4 + $0x28] sm:$0xf] %v6142
      %s6144 = scalar_lea.vmem [#allocation3], 252
      %v6145 = vld [vmem:[%s6144] ss:$2 sm:$0xff]
      %s6146 = scalar_lea.vmem [#allocation3], 268
      %v6147 = vld [vmem:[%s6146] ss:$2 sm:$0xff]
      %s6148 = scalar_lea.vmem [#allocation3], 284
      %v6149 = vld [vmem:[%s6148] ss:$2 sm:$0xf]
      %v6150 = vadd.f32 %v6145, %v5755
      %v6151 = vadd.f32 %v6147, %v5755
      %v6152 = vadd.f32 %v6149, %v5755
      %v6153 = vmax.f32 %v6150, 0.0
      %v6154 = vmax.f32 %v6151, 0.0
      %v6155 = vmax.f32 %v6152, 0.0
      %v6156 = vpack.c.bf16 %v6154, %v6153
      %v6157 = vpack.c.bf16 %v6155, %v6155
      %v6160 = vunpack.c.l.b16 %v6156
      %v6161 = vunpack.c.h.b16 %v6156
      %v6162 = vunpack.c.l.b16 %v6157
      %v6163 = vpack.c.b16 %v6160, %v6160
      %v6164 = vpack.c.b16 %v6161, %v6161
      %v6165 = vpack.c.b16 %v6162, %v6162
      %v6167 = vshrl.u32 %v6163, 16
      %v6169 = vrot.slane %v6167, 5
      %v6170 = vshll.u32 %v6163, 16
      %v6172 = vrot.slane %v6170, 6
      %v6173 = vor.u32 %v6169, %v6172
      %v6174 = vrot.slane %v6173, 4
      %v6176 = vshrl.u32 %v6164, 16
      %v6178 = vrot.slane %v6176, 5
      %v6179 = vshll.u32 %v6164, 16
      %v6181 = vrot.slane %v6179, 6
      %v6182 = vor.u32 %v6178, %v6181
      %v6183 = vsel %vm5976, %v6174, %v6182
      %v6184 = vrot.slane %v6182, 4
      %v6186 = vshrl.u32 %v6165, 16
      %v6188 = vrot.slane %v6186, 5
      %v6189 = vshll.u32 %v6165, 16
      %v6191 = vrot.slane %v6189, 6
      %v6192 = vor.u32 %v6188, %v6191
      %v6193 = vsel %vm5976, %v6184, %v6192
      %v6194 = vrot.slane %v6188, 4
      %v6199 = vld [vmem:[#allocation4 + $0x98] sm:$0xc]
      %v6200 = vsel %vm6012, %v6173, %v6199
      %6201 = vst [vmem:[#allocation4 + $0x98] sm:$0xc] %v6200
      %6202 = vst.msk [vmem:[#allocation4 + $0x9c] sm:$0xf] %vm263, %v6183
      %6203 = vst.msk [vmem:[#allocation4 + $0xa0] sm:$0xf] %vm263, %v6193
      %v6204 = vld [vmem:[#allocation4 + $0xa4] sm:$0x1]
      %v6205 = vsel %vm352, %v6194, %v6204
      %6206 = vst [vmem:[#allocation4 + $0xa4] sm:$0x1] %v6205
      %s6207 = scalar_lea.vmem [#allocation3], 294
      %v6208 = vld [vmem:[%s6207] ss:$2 sm:$0xff]
      %s6209 = scalar_lea.vmem [#allocation3], 310
      %v6210 = vld [vmem:[%s6209] ss:$2 sm:$0xff]
      %s6211 = scalar_lea.vmem [#allocation3], 326
      %v6212 = vld [vmem:[%s6211] ss:$2 sm:$0xf]
      %v6213 = vadd.f32 %v6208, %v5755
      %v6214 = vadd.f32 %v6210, %v5755
      %v6215 = vadd.f32 %v6212, %v5755
      %v6216 = vmax.f32 %v6213, 0.0
      %v6217 = vmax.f32 %v6214, 0.0
      %v6218 = vmax.f32 %v6215, 0.0
      %v6219 = vpack.c.bf16 %v6217, %v6216
      %v6220 = vpack.c.bf16 %v6218, %v6218
      %v6223 = vunpack.c.l.b16 %v6219
      %v6224 = vunpack.c.h.b16 %v6219
      %v6225 = vunpack.c.l.b16 %v6220
      %v6226 = vpack.c.b16 %v6223, %v6223
      %v6227 = vpack.c.b16 %v6224, %v6224
      %v6228 = vpack.c.b16 %v6225, %v6225
      %v6230 = vshrl.u32 %v6226, 16
      %v6232 = vrot.slane %v6230, 7
      %v6233 = vshll.u32 %v6226, 16
      %v6235 = vor.u32 %v6232, %v6233
      %v6236 = vrot.slane %v6232, 4
      %v6238 = vshrl.u32 %v6227, 16
      %v6240 = vrot.slane %v6238, 7
      %v6241 = vshll.u32 %v6227, 16
      %v6243 = vor.u32 %v6240, %v6241
      %v6244 = vsel %vm5912, %v6236, %v6243
      %v6245 = vrot.slane %v6240, 4
      %v6247 = vshrl.u32 %v6228, 16
      %v6249 = vrot.slane %v6247, 7
      %v6250 = vshll.u32 %v6228, 16
      %v6252 = vor.u32 %v6249, %v6250
      %v6253 = vsel %vm5912, %v6245, %v6252
      %v6257 = vld [vmem:[#allocation4 + $0x2c] sm:$0xf]
      %v6258 = vsel %vm5942, %v6235, %v6257
      %6259 = vst [vmem:[#allocation4 + $0x2c] sm:$0xf] %v6258
      %6260 = vst.msk [vmem:[#allocation4 + $0x30] sm:$0xf] %vm263, %v6244
      %v6261 = vld [vmem:[#allocation4 + $0x34] sm:$0x7]
      %v6262 = vsel %vm5949, %v6253, %v6261
      %6263 = vst [vmem:[#allocation4 + $0x34] sm:$0x7] %v6262
      %s6264 = scalar_lea.vmem [#allocation3], 336
      %v6265 = vld [vmem:[%s6264] ss:$2 sm:$0xff]
      %s6266 = scalar_lea.vmem [#allocation3], 352
      %v6267 = vld [vmem:[%s6266] ss:$2 sm:$0xff]
      %s6268 = scalar_lea.vmem [#allocation3], 368
      %v6269 = vld [vmem:[%s6268] ss:$2 sm:$0xf]
      %v6270 = vadd.f32 %v6265, %v5755
      %v6271 = vadd.f32 %v6267, %v5755
      %v6272 = vadd.f32 %v6269, %v5755
      %v6273 = vmax.f32 %v6270, 0.0
      %v6274 = vmax.f32 %v6271, 0.0
      %v6275 = vmax.f32 %v6272, 0.0
      %v6276 = vpack.c.bf16 %v6274, %v6273
      %v6277 = vpack.c.bf16 %v6275, %v6275
      %v6280 = vunpack.c.l.b16 %v6276
      %v6281 = vunpack.c.h.b16 %v6276
      %v6282 = vunpack.c.l.b16 %v6277
      %v6283 = vpack.c.b16 %v6280, %v6280
      %v6284 = vpack.c.b16 %v6281, %v6281
      %v6285 = vpack.c.b16 %v6282, %v6282
      %v6287 = vshrl.u32 %v6283, 16
      %v6289 = vrot.slane %v6287, 6
      %v6290 = vshll.u32 %v6283, 16
      %v6292 = vrot.slane %v6290, 7
      %v6293 = vor.u32 %v6289, %v6292
      %v6294 = vrot.slane %v6293, 4
      %v6296 = vshrl.u32 %v6284, 16
      %v6298 = vrot.slane %v6296, 6
      %v6299 = vshll.u32 %v6284, 16
      %v6301 = vrot.slane %v6299, 7
      %v6302 = vor.u32 %v6298, %v6301
      %v6303 = vsel %vm5774, %v6294, %v6302
      %v6304 = vrot.slane %v6302, 4
      %v6306 = vshrl.u32 %v6285, 16
      %v6308 = vrot.slane %v6306, 6
      %v6309 = vshll.u32 %v6285, 16
      %v6311 = vrot.slane %v6309, 7
      %v6312 = vor.u32 %v6308, %v6311
      %v6313 = vsel %vm5774, %v6304, %v6312
      %v6317 = vld [vmem:[#allocation4 + $0xa4] sm:$0xe]
      %v6318 = vsel %vm5808, %v6293, %v6317
      %6319 = vst [vmem:[#allocation4 + $0xa4] sm:$0xe] %v6318
      %6320 = vst.msk [vmem:[#allocation4 + $0xa8] sm:$0xf] %vm263, %v6303
      %v6321 = vld [vmem:[#allocation4 + $0xac] sm:$0xf]
      %v6322 = vsel %vm5815, %v6313, %v6321
      %6323 = vst [vmem:[#allocation4 + $0xac] sm:$0xf] %v6322
      %s6324 = scalar_lea.vmem [#allocation3], 378
      %v6325 = vld [vmem:[%s6324] ss:$2 sm:$0xff]
      %s6326 = scalar_lea.vmem [#allocation3], 394
      %v6327 = vld [vmem:[%s6326] ss:$2 sm:$0xff]
      %s6328 = scalar_lea.vmem [#allocation3], 410
      %v6329 = vld [vmem:[%s6328] ss:$2 sm:$0xf]
      %v6330 = vadd.f32 %v6325, %v5755
      %v6331 = vadd.f32 %v6327, %v5755
      %v6332 = vadd.f32 %v6329, %v5755
      %v6333 = vmax.f32 %v6330, 0.0
      %v6334 = vmax.f32 %v6331, 0.0
      %v6335 = vmax.f32 %v6332, 0.0
      %v6336 = vpack.c.bf16 %v6334, %v6333
      %v6337 = vpack.c.bf16 %v6335, %v6335
      %v6340 = vunpack.c.l.b16 %v6336
      %v6341 = vunpack.c.h.b16 %v6336
      %v6342 = vunpack.c.l.b16 %v6337
      %v6343 = vpack.c.b16 %v6340, %v6340
      %v6344 = vpack.c.b16 %v6341, %v6341
      %v6345 = vpack.c.b16 %v6342, %v6342
      %v6347 = vshll.u32 %v6343, 16
      %v6349 = vrot.slane %v6347, 5
      %v6350 = vshrl.u32 %v6343, 16
      %v6352 = vrot.slane %v6350, 4
      %v6353 = vor.u32 %v6352, %v6349
      %v6354 = vrot.slane %v6353, 4
      %v6356 = vshll.u32 %v6344, 16
      %v6358 = vrot.slane %v6356, 5
      %v6359 = vsel %vm5842, %v6354, %v6358
      %v6360 = vshrl.u32 %v6344, 16
      %v6362 = vrot.slane %v6360, 4
      %v6363 = vor.u32 %v6362, %v6358
      %v6364 = vrot.slane %v6363, 4
      %v6366 = vshll.u32 %v6345, 16
      %v6368 = vrot.slane %v6366, 5
      %v6369 = vsel %vm5842, %v6364, %v6368
      %v6370 = vshrl.u32 %v6345, 16
      %v6372 = vrot.slane %v6370, 4
      %v6373 = vor.u32 %v6372, %v6368
      %v6374 = vrot.slane %v6373, 4
      %v6379 = vld [vmem:[#allocation4 + $0x34] sm:$0x8]
      %v6380 = vsel %vm5878, %v6349, %v6379
      %6381 = vst [vmem:[#allocation4 + $0x34] sm:$0x8] %v6380
      %6382 = vst.msk [vmem:[#allocation4 + $0x38] sm:$0xf] %vm263, %v6359
      %6383 = vst.msk [vmem:[#allocation4 + $0x3c] sm:$0xf] %vm263, %v6369
      %v6384 = vld [vmem:[#allocation4 + $0x40] sm:$0x3]
      %v6385 = vsel %vm5885, %v6374, %v6384
      %6386 = vst [vmem:[#allocation4 + $0x40] sm:$0x3] %v6385
      %s6387 = scalar_lea.vmem [#allocation3], 420
      %v6388 = vld [vmem:[%s6387] ss:$2 sm:$0xff]
      %s6389 = scalar_lea.vmem [#allocation3], 436
      %v6390 = vld [vmem:[%s6389] ss:$2 sm:$0xff]
      %s6391 = scalar_lea.vmem [#allocation3], 452
      %v6392 = vld [vmem:[%s6391] ss:$2 sm:$0xf]
      %v6393 = vadd.f32 %v6388, %v5755
      %v6394 = vadd.f32 %v6390, %v5755
      %v6395 = vadd.f32 %v6392, %v5755
      %v6396 = vmax.f32 %v6393, 0.0
      %v6397 = vmax.f32 %v6394, 0.0
      %v6398 = vmax.f32 %v6395, 0.0
      %v6399 = vpack.c.bf16 %v6397, %v6396
      %v6400 = vpack.c.bf16 %v6398, %v6398
      %v6403 = vunpack.c.l.b16 %v6399
      %v6404 = vunpack.c.h.b16 %v6399
      %v6405 = vunpack.c.l.b16 %v6400
      %v6406 = vpack.c.b16 %v6403, %v6403
      %v6407 = vpack.c.b16 %v6404, %v6404
      %v6408 = vpack.c.b16 %v6405, %v6405
      %v6410 = vshrl.u32 %v6406, 16
      %v6412 = vrot.slane %v6410, 7
      %v6413 = vshll.u32 %v6406, 16
      %v6415 = vor.u32 %v6412, %v6413
      %v6416 = vrot.slane %v6412, 4
      %v6418 = vshrl.u32 %v6407, 16
      %v6420 = vrot.slane %v6418, 7
      %v6421 = vshll.u32 %v6407, 16
      %v6423 = vor.u32 %v6420, %v6421
      %v6424 = vsel %vm5912, %v6416, %v6423
      %v6425 = vrot.slane %v6420, 4
      %v6427 = vshrl.u32 %v6408, 16
      %v6429 = vrot.slane %v6427, 7
      %v6430 = vshll.u32 %v6408, 16
      %v6432 = vor.u32 %v6429, %v6430
      %v6433 = vsel %vm5912, %v6425, %v6432
      %v6437 = vld [vmem:[#allocation4 + $0xb0] sm:$0xf]
      %v6438 = vsel %vm5942, %v6415, %v6437
      %6439 = vst [vmem:[#allocation4 + $0xb0] sm:$0xf] %v6438
      %6440 = vst.msk [vmem:[#allocation4 + $0xb4] sm:$0xf] %vm263, %v6424
      %v6441 = vld [vmem:[#allocation4 + $0xb8] sm:$0x7]
      %v6442 = vsel %vm5949, %v6433, %v6441
      %6443 = vst [vmem:[#allocation4 + $0xb8] sm:$0x7] %v6442
      %s6444 = scalar_lea.vmem [#allocation3], 462
      %v6445 = vld [vmem:[%s6444] ss:$2 sm:$0xff]
      %s6446 = scalar_lea.vmem [#allocation3], 478
      %v6447 = vld [vmem:[%s6446] ss:$2 sm:$0xff]
      %s6448 = scalar_lea.vmem [#allocation3], 494
      %v6449 = vld [vmem:[%s6448] ss:$2 sm:$0xf]
      %v6450 = vadd.f32 %v6445, %v5755
      %v6451 = vadd.f32 %v6447, %v5755
      %v6452 = vadd.f32 %v6449, %v5755
      %v6453 = vmax.f32 %v6450, 0.0
      %v6454 = vmax.f32 %v6451, 0.0
      %v6455 = vmax.f32 %v6452, 0.0
      %v6456 = vpack.c.bf16 %v6454, %v6453
      %v6457 = vpack.c.bf16 %v6455, %v6455
      %v6460 = vunpack.c.l.b16 %v6456
      %v6461 = vunpack.c.h.b16 %v6456
      %v6462 = vunpack.c.l.b16 %v6457
      %v6463 = vpack.c.b16 %v6460, %v6460
      %v6464 = vpack.c.b16 %v6461, %v6461
      %v6465 = vpack.c.b16 %v6462, %v6462
      %v6467 = vshrl.u32 %v6463, 16
      %v6469 = vrot.slane %v6467, 5
      %v6470 = vshll.u32 %v6463, 16
      %v6472 = vrot.slane %v6470, 6
      %v6473 = vor.u32 %v6469, %v6472
      %v6474 = vrot.slane %v6473, 4
      %v6476 = vshrl.u32 %v6464, 16
      %v6478 = vrot.slane %v6476, 5
      %v6479 = vshll.u32 %v6464, 16
      %v6481 = vrot.slane %v6479, 6
      %v6482 = vor.u32 %v6478, %v6481
      %v6483 = vsel %vm5976, %v6474, %v6482
      %v6484 = vrot.slane %v6482, 4
      %v6486 = vshrl.u32 %v6465, 16
      %v6488 = vrot.slane %v6486, 5
      %v6489 = vshll.u32 %v6465, 16
      %v6491 = vrot.slane %v6489, 6
      %v6492 = vor.u32 %v6488, %v6491
      %v6493 = vsel %vm5976, %v6484, %v6492
      %v6494 = vrot.slane %v6488, 4
      %v6499 = vld [vmem:[#allocation4 + $0x40] sm:$0xc]
      %v6500 = vsel %vm6012, %v6473, %v6499
      %6501 = vst [vmem:[#allocation4 + $0x40] sm:$0xc] %v6500
      %6502 = vst.msk [vmem:[#allocation4 + $0x44] sm:$0xf] %vm263, %v6483
      %6503 = vst.msk [vmem:[#allocation4 + $0x48] sm:$0xf] %vm263, %v6493
      %v6504 = vld [vmem:[#allocation4 + $0x4c] sm:$0x1]
      %v6505 = vsel %vm352, %v6494, %v6504
      %6506 = vst [vmem:[#allocation4 + $0x4c] sm:$0x1] %v6505
      %s6507 = scalar_lea.vmem [#allocation3], 504
      %v6508 = vld [vmem:[%s6507] ss:$2 sm:$0xff]
      %s6509 = scalar_lea.vmem [#allocation3], 520
      %v6510 = vld [vmem:[%s6509] ss:$2 sm:$0xff]
      %s6511 = scalar_lea.vmem [#allocation3], 536
      %v6512 = vld [vmem:[%s6511] ss:$2 sm:$0xf]
      %v6513 = vadd.f32 %v6508, %v5755
      %v6514 = vadd.f32 %v6510, %v5755
      %v6515 = vadd.f32 %v6512, %v5755
      %v6516 = vmax.f32 %v6513, 0.0
      %v6517 = vmax.f32 %v6514, 0.0
      %v6518 = vmax.f32 %v6515, 0.0
      %v6519 = vpack.c.bf16 %v6517, %v6516
      %v6520 = vpack.c.bf16 %v6518, %v6518
      %v6523 = vunpack.c.l.b16 %v6519
      %v6524 = vunpack.c.h.b16 %v6519
      %v6525 = vunpack.c.l.b16 %v6520
      %v6526 = vpack.c.b16 %v6523, %v6523
      %v6527 = vpack.c.b16 %v6524, %v6524
      %v6528 = vpack.c.b16 %v6525, %v6525
      %v6530 = vshll.u32 %v6526, 16
      %v6532 = vrot.slane %v6530, 5
      %v6533 = vshrl.u32 %v6526, 16
      %v6535 = vrot.slane %v6533, 4
      %v6536 = vor.u32 %v6535, %v6532
      %v6537 = vrot.slane %v6536, 4
      %v6539 = vshll.u32 %v6527, 16
      %v6541 = vrot.slane %v6539, 5
      %v6542 = vsel %vm5842, %v6537, %v6541
      %v6543 = vshrl.u32 %v6527, 16
      %v6545 = vrot.slane %v6543, 4
      %v6546 = vor.u32 %v6545, %v6541
      %v6547 = vrot.slane %v6546, 4
      %v6549 = vshll.u32 %v6528, 16
      %v6551 = vrot.slane %v6549, 5
      %v6552 = vsel %vm5842, %v6547, %v6551
      %v6553 = vshrl.u32 %v6528, 16
      %v6555 = vrot.slane %v6553, 4
      %v6556 = vor.u32 %v6555, %v6551
      %v6557 = vrot.slane %v6556, 4
      %v6562 = vld [vmem:[#allocation4 + $0xb8] sm:$0x8]
      %v6563 = vsel %vm5878, %v6532, %v6562
      %6564 = vst [vmem:[#allocation4 + $0xb8] sm:$0x8] %v6563
      %6565 = vst.msk [vmem:[#allocation4 + $0xbc] sm:$0xf] %vm263, %v6542
      %6566 = vst.msk [vmem:[#allocation4 + $0xc0] sm:$0xf] %vm263, %v6552
      %v6567 = vld [vmem:[#allocation4 + $0xc4] sm:$0x3]
      %v6568 = vsel %vm5885, %v6557, %v6567
      %6569 = vst [vmem:[#allocation4 + $0xc4] sm:$0x3] %v6568
      %s6570 = scalar_lea.vmem [#allocation3], 546
      %v6571 = vld [vmem:[%s6570] ss:$2 sm:$0xff]
      %s6572 = scalar_lea.vmem [#allocation3], 562
      %v6573 = vld [vmem:[%s6572] ss:$2 sm:$0xff]
      %s6574 = scalar_lea.vmem [#allocation3], 578
      %v6575 = vld [vmem:[%s6574] ss:$2 sm:$0xf]
      %v6576 = vadd.f32 %v6571, %v5755
      %v6577 = vadd.f32 %v6573, %v5755
      %v6578 = vadd.f32 %v6575, %v5755
      %v6579 = vmax.f32 %v6576, 0.0
      %v6580 = vmax.f32 %v6577, 0.0
      %v6581 = vmax.f32 %v6578, 0.0
      %v6582 = vpack.c.bf16 %v6580, %v6579
      %v6583 = vpack.c.bf16 %v6581, %v6581
      %v6586 = vunpack.c.l.b16 %v6582
      %v6587 = vunpack.c.h.b16 %v6582
      %v6588 = vunpack.c.l.b16 %v6583
      %v6589 = vpack.c.b16 %v6586, %v6586
      %v6590 = vpack.c.b16 %v6587, %v6587
      %v6591 = vpack.c.b16 %v6588, %v6588
      %v6593 = vshrl.u32 %v6589, 16
      %v6595 = vrot.slane %v6593, 6
      %v6596 = vshll.u32 %v6589, 16
      %v6598 = vrot.slane %v6596, 7
      %v6599 = vor.u32 %v6595, %v6598
      %v6600 = vrot.slane %v6599, 4
      %v6602 = vshrl.u32 %v6590, 16
      %v6604 = vrot.slane %v6602, 6
      %v6605 = vshll.u32 %v6590, 16
      %v6607 = vrot.slane %v6605, 7
      %v6608 = vor.u32 %v6604, %v6607
      %v6609 = vsel %vm5774, %v6600, %v6608
      %v6610 = vrot.slane %v6608, 4
      %v6612 = vshrl.u32 %v6591, 16
      %v6614 = vrot.slane %v6612, 6
      %v6615 = vshll.u32 %v6591, 16
      %v6617 = vrot.slane %v6615, 7
      %v6618 = vor.u32 %v6614, %v6617
      %v6619 = vsel %vm5774, %v6610, %v6618
      %v6623 = vld [vmem:[#allocation4 + $0x4c] sm:$0xe]
      %v6624 = vsel %vm5808, %v6599, %v6623
      %6625 = vst [vmem:[#allocation4 + $0x4c] sm:$0xe] %v6624
      %6626 = vst.msk [vmem:[#allocation4 + $0x50] sm:$0xf] %vm263, %v6609
      %v6627 = vld [vmem:[#allocation4 + $0x54] sm:$0xf]
      %v6628 = vsel %vm5815, %v6619, %v6627
      %6629 = vst [vmem:[#allocation4 + $0x54] sm:$0xf] %v6628
      %s6630 = scalar_lea.vmem [#allocation3], 588
      %v6631 = vld [vmem:[%s6630] ss:$2 sm:$0xff]
      %s6632 = scalar_lea.vmem [#allocation3], 604
      %v6633 = vld [vmem:[%s6632] ss:$2 sm:$0xff]
      %s6634 = scalar_lea.vmem [#allocation3], 620
      %v6635 = vld [vmem:[%s6634] ss:$2 sm:$0xf]
      %v6636 = vadd.f32 %v6631, %v5755
      %v6637 = vadd.f32 %v6633, %v5755
      %v6638 = vadd.f32 %v6635, %v5755
      %v6639 = vmax.f32 %v6636, 0.0
      %v6640 = vmax.f32 %v6637, 0.0
      %v6641 = vmax.f32 %v6638, 0.0
      %v6642 = vpack.c.bf16 %v6640, %v6639
      %v6643 = vpack.c.bf16 %v6641, %v6641
      %v6646 = vunpack.c.l.b16 %v6642
      %v6647 = vunpack.c.h.b16 %v6642
      %v6648 = vunpack.c.l.b16 %v6643
      %v6649 = vpack.c.b16 %v6646, %v6646
      %v6650 = vpack.c.b16 %v6647, %v6647
      %v6651 = vpack.c.b16 %v6648, %v6648
      %v6653 = vshrl.u32 %v6649, 16
      %v6655 = vrot.slane %v6653, 5
      %v6656 = vshll.u32 %v6649, 16
      %v6658 = vrot.slane %v6656, 6
      %v6659 = vor.u32 %v6655, %v6658
      %v6660 = vrot.slane %v6659, 4
      %v6662 = vshrl.u32 %v6650, 16
      %v6664 = vrot.slane %v6662, 5
      %v6665 = vshll.u32 %v6650, 16
      %v6667 = vrot.slane %v6665, 6
      %v6668 = vor.u32 %v6664, %v6667
      %v6669 = vsel %vm5976, %v6660, %v6668
      %v6670 = vrot.slane %v6668, 4
      %v6672 = vshrl.u32 %v6651, 16
      %v6674 = vrot.slane %v6672, 5
      %v6675 = vshll.u32 %v6651, 16
      %v6677 = vrot.slane %v6675, 6
      %v6678 = vor.u32 %v6674, %v6677
      %v6679 = vsel %vm5976, %v6670, %v6678
      %v6680 = vrot.slane %v6674, 4
      %v6685 = vld [vmem:[#allocation4 + $0xc4] sm:$0xc]
      %v6686 = vsel %vm6012, %v6659, %v6685
      %6687 = vst [vmem:[#allocation4 + $0xc4] sm:$0xc] %v6686
      %6688 = vst.msk [vmem:[#allocation4 + $0xc8] sm:$0xf] %vm263, %v6669
      %6689 = vst.msk [vmem:[#allocation4 + $0xcc] sm:$0xf] %vm263, %v6679
      %v6690 = vld [vmem:[#allocation4 + $0xd0] sm:$0x1]
      %v6691 = vsel %vm352, %v6680, %v6690
      %6692 = vst [vmem:[#allocation4 + $0xd0] sm:$0x1] %v6691
      %s6693 = scalar_lea.vmem [#allocation3], 630
      %v6694 = vld [vmem:[%s6693] ss:$2 sm:$0xff]
      %s6695 = scalar_lea.vmem [#allocation3], 646
      %v6696 = vld [vmem:[%s6695] ss:$2 sm:$0xff]
      %s6697 = scalar_lea.vmem [#allocation3], 662
      %v6698 = vld [vmem:[%s6697] ss:$2 sm:$0xf]
      %v6699 = vadd.f32 %v6694, %v5755
      %v6700 = vadd.f32 %v6696, %v5755
      %v6701 = vadd.f32 %v6698, %v5755
      %v6702 = vmax.f32 %v6699, 0.0
      %v6703 = vmax.f32 %v6700, 0.0
      %v6704 = vmax.f32 %v6701, 0.0
      %v6705 = vpack.c.bf16 %v6703, %v6702
      %v6706 = vpack.c.bf16 %v6704, %v6704
      %v6709 = vunpack.c.l.b16 %v6705
      %v6710 = vunpack.c.h.b16 %v6705
      %v6711 = vunpack.c.l.b16 %v6706
      %v6712 = vpack.c.b16 %v6709, %v6709
      %v6713 = vpack.c.b16 %v6710, %v6710
      %v6714 = vpack.c.b16 %v6711, %v6711
      %v6716 = vshrl.u32 %v6712, 16
      %v6718 = vrot.slane %v6716, 7
      %v6719 = vshll.u32 %v6712, 16
      %v6721 = vor.u32 %v6718, %v6719
      %v6722 = vrot.slane %v6718, 4
      %v6724 = vshrl.u32 %v6713, 16
      %v6726 = vrot.slane %v6724, 7
      %v6727 = vshll.u32 %v6713, 16
      %v6729 = vor.u32 %v6726, %v6727
      %v6730 = vsel %vm5912, %v6722, %v6729
      %v6731 = vrot.slane %v6726, 4
      %v6733 = vshrl.u32 %v6714, 16
      %v6735 = vrot.slane %v6733, 7
      %v6736 = vshll.u32 %v6714, 16
      %v6738 = vor.u32 %v6735, %v6736
      %v6739 = vsel %vm5912, %v6731, %v6738
      %v6743 = vld [vmem:[#allocation4 + $0x58] sm:$0xf]
      %v6744 = vsel %vm5942, %v6721, %v6743
      %6745 = vst [vmem:[#allocation4 + $0x58] sm:$0xf] %v6744
      %6746 = vst.msk [vmem:[#allocation4 + $0x5c] sm:$0xf] %vm263, %v6730
      %v6747 = vld [vmem:[#allocation4 + $0x60] sm:$0x7]
      %v6748 = vsel %vm5949, %v6739, %v6747
      %6749 = vst [vmem:[#allocation4 + $0x60] sm:$0x7] %v6748
      %s6750 = scalar_lea.vmem [#allocation3], 672
      %v6751 = vld [vmem:[%s6750] ss:$2 sm:$0xff]
      %s6752 = scalar_lea.vmem [#allocation3], 688
      %v6753 = vld [vmem:[%s6752] ss:$2 sm:$0xff]
      %s6754 = scalar_lea.vmem [#allocation3], 704
      %v6755 = vld [vmem:[%s6754] ss:$2 sm:$0xf]
      %v6756 = vadd.f32 %v6751, %v5755
      %v6757 = vadd.f32 %v6753, %v5755
      %v6758 = vadd.f32 %v6755, %v5755
      %v6759 = vmax.f32 %v6756, 0.0
      %v6760 = vmax.f32 %v6757, 0.0
      %v6761 = vmax.f32 %v6758, 0.0
      %v6762 = vpack.c.bf16 %v6760, %v6759
      %v6763 = vpack.c.bf16 %v6761, %v6761
      %v6766 = vunpack.c.l.b16 %v6762
      %v6767 = vunpack.c.h.b16 %v6762
      %v6768 = vunpack.c.l.b16 %v6763
      %v6769 = vpack.c.b16 %v6766, %v6766
      %v6770 = vpack.c.b16 %v6767, %v6767
      %v6771 = vpack.c.b16 %v6768, %v6768
      %v6773 = vshrl.u32 %v6769, 16
      %v6775 = vrot.slane %v6773, 6
      %v6776 = vshll.u32 %v6769, 16
      %v6778 = vrot.slane %v6776, 7
      %v6779 = vor.u32 %v6775, %v6778
      %v6780 = vrot.slane %v6779, 4
      %v6782 = vshrl.u32 %v6770, 16
      %v6784 = vrot.slane %v6782, 6
      %v6785 = vshll.u32 %v6770, 16
      %v6787 = vrot.slane %v6785, 7
      %v6788 = vor.u32 %v6784, %v6787
      %v6789 = vsel %vm5774, %v6780, %v6788
      %v6790 = vrot.slane %v6788, 4
      %v6792 = vshrl.u32 %v6771, 16
      %v6794 = vrot.slane %v6792, 6
      %v6795 = vshll.u32 %v6771, 16
      %v6797 = vrot.slane %v6795, 7
      %v6798 = vor.u32 %v6794, %v6797
      %v6799 = vsel %vm5774, %v6790, %v6798
      %v6803 = vld [vmem:[#allocation4 + $0xd0] sm:$0xe]
      %v6804 = vsel %vm5808, %v6779, %v6803
      %6805 = vst [vmem:[#allocation4 + $0xd0] sm:$0xe] %v6804
      %6806 = vst.msk [vmem:[#allocation4 + $0xd4] sm:$0xf] %vm263, %v6789
      %v6807 = vld [vmem:[#allocation4 + $0xd8] sm:$0xf]
      %v6808 = vsel %vm5815, %v6799, %v6807
      %6809 = vst [vmem:[#allocation4 + $0xd8] sm:$0xf] %v6808
      %s6810 = scalar_lea.vmem [#allocation3], 714
      %v6811 = vld [vmem:[%s6810] ss:$2 sm:$0xff]
      %s6812 = scalar_lea.vmem [#allocation3], 730
      %v6813 = vld [vmem:[%s6812] ss:$2 sm:$0xff]
      %s6814 = scalar_lea.vmem [#allocation3], 746
      %v6815 = vld [vmem:[%s6814] ss:$2 sm:$0xf]
      %v6816 = vadd.f32 %v6811, %v5755
      %v6817 = vadd.f32 %v6813, %v5755
      %v6818 = vadd.f32 %v6815, %v5755
      %v6819 = vmax.f32 %v6816, 0.0
      %v6820 = vmax.f32 %v6817, 0.0
      %v6821 = vmax.f32 %v6818, 0.0
      %v6822 = vpack.c.bf16 %v6820, %v6819
      %v6823 = vpack.c.bf16 %v6821, %v6821
      %v6826 = vunpack.c.l.b16 %v6822
      %v6827 = vunpack.c.h.b16 %v6822
      %v6828 = vunpack.c.l.b16 %v6823
      %v6829 = vpack.c.b16 %v6826, %v6826
      %v6830 = vpack.c.b16 %v6827, %v6827
      %v6831 = vpack.c.b16 %v6828, %v6828
      %v6833 = vshll.u32 %v6829, 16
      %v6835 = vrot.slane %v6833, 5
      %v6836 = vshrl.u32 %v6829, 16
      %v6838 = vrot.slane %v6836, 4
      %v6839 = vor.u32 %v6838, %v6835
      %v6840 = vrot.slane %v6839, 4
      %v6842 = vshll.u32 %v6830, 16
      %v6844 = vrot.slane %v6842, 5
      %v6845 = vsel %vm5842, %v6840, %v6844
      %v6846 = vshrl.u32 %v6830, 16
      %v6848 = vrot.slane %v6846, 4
      %v6849 = vor.u32 %v6848, %v6844
      %v6850 = vrot.slane %v6849, 4
      %v6852 = vshll.u32 %v6831, 16
      %v6854 = vrot.slane %v6852, 5
      %v6855 = vsel %vm5842, %v6850, %v6854
      %v6856 = vshrl.u32 %v6831, 16
      %v6858 = vrot.slane %v6856, 4
      %v6859 = vor.u32 %v6858, %v6854
      %v6860 = vrot.slane %v6859, 4
      %v6865 = vld [vmem:[#allocation4 + $0x60] sm:$0x8]
      %v6866 = vsel %vm5878, %v6835, %v6865
      %6867 = vst [vmem:[#allocation4 + $0x60] sm:$0x8] %v6866
      %6868 = vst.msk [vmem:[#allocation4 + $0x64] sm:$0xf] %vm263, %v6845
      %6869 = vst.msk [vmem:[#allocation4 + $0x68] sm:$0xf] %vm263, %v6855
      %v6870 = vld [vmem:[#allocation4 + $0x6c] sm:$0x3]
      %v6871 = vsel %vm5885, %v6860, %v6870
      %6872 = vst [vmem:[#allocation4 + $0x6c] sm:$0x3] %v6871
      %s6873 = scalar_lea.vmem [#allocation3], 756
      %v6874 = vld [vmem:[%s6873] ss:$2 sm:$0xff]
      %s6875 = scalar_lea.vmem [#allocation3], 772
      %v6876 = vld [vmem:[%s6875] ss:$2 sm:$0xff]
      %s6877 = scalar_lea.vmem [#allocation3], 788
      %v6878 = vld [vmem:[%s6877] ss:$2 sm:$0xf]
      %v6879 = vadd.f32 %v6874, %v5755
      %v6880 = vadd.f32 %v6876, %v5755
      %v6881 = vadd.f32 %v6878, %v5755
      %v6882 = vmax.f32 %v6879, 0.0
      %v6883 = vmax.f32 %v6880, 0.0
      %v6884 = vmax.f32 %v6881, 0.0
      %v6885 = vpack.c.bf16 %v6883, %v6882
      %v6886 = vpack.c.bf16 %v6884, %v6884
      %v6889 = vunpack.c.l.b16 %v6885
      %v6890 = vunpack.c.h.b16 %v6885
      %v6891 = vunpack.c.l.b16 %v6886
      %v6892 = vpack.c.b16 %v6889, %v6889
      %v6893 = vpack.c.b16 %v6890, %v6890
      %v6894 = vpack.c.b16 %v6891, %v6891
      %v6896 = vshrl.u32 %v6892, 16
      %v6898 = vrot.slane %v6896, 7
      %v6899 = vshll.u32 %v6892, 16
      %v6901 = vor.u32 %v6898, %v6899
      %v6902 = vrot.slane %v6898, 4
      %v6904 = vshrl.u32 %v6893, 16
      %v6906 = vrot.slane %v6904, 7
      %v6907 = vshll.u32 %v6893, 16
      %v6909 = vor.u32 %v6906, %v6907
      %v6910 = vsel %vm5912, %v6902, %v6909
      %v6911 = vrot.slane %v6906, 4
      %v6913 = vshrl.u32 %v6894, 16
      %v6915 = vrot.slane %v6913, 7
      %v6916 = vshll.u32 %v6894, 16
      %v6918 = vor.u32 %v6915, %v6916
      %v6919 = vsel %vm5912, %v6911, %v6918
      %v6923 = vld [vmem:[#allocation4 + $0xdc] sm:$0xf]
      %v6924 = vsel %vm5942, %v6901, %v6923
      %6925 = vst [vmem:[#allocation4 + $0xdc] sm:$0xf] %v6924
      %6926 = vst.msk [vmem:[#allocation4 + $0xe0] sm:$0xf] %vm263, %v6910
      %v6927 = vld [vmem:[#allocation4 + $0xe4] sm:$0x7]
      %v6928 = vsel %vm5949, %v6919, %v6927
      %6929 = vst [vmem:[#allocation4 + $0xe4] sm:$0x7] %v6928
      %s6930 = scalar_lea.vmem [#allocation3], 798
      %v6931 = vld [vmem:[%s6930] ss:$2 sm:$0xff]
      %s6932 = scalar_lea.vmem [#allocation3], 814
      %v6933 = vld [vmem:[%s6932] ss:$2 sm:$0xff]
      %s6934 = scalar_lea.vmem [#allocation3], 830
      %v6935 = vld [vmem:[%s6934] ss:$2 sm:$0xf]
      %v6936 = vadd.f32 %v6931, %v5755
      %v6937 = vadd.f32 %v6933, %v5755
      %v6938 = vadd.f32 %v6935, %v5755
      %v6939 = vmax.f32 %v6936, 0.0
      %v6940 = vmax.f32 %v6937, 0.0
      %v6941 = vmax.f32 %v6938, 0.0
      %v6942 = vpack.c.bf16 %v6940, %v6939
      %v6943 = vpack.c.bf16 %v6941, %v6941
      %v6946 = vunpack.c.l.b16 %v6942
      %v6947 = vunpack.c.h.b16 %v6942
      %v6948 = vunpack.c.l.b16 %v6943
      %v6949 = vpack.c.b16 %v6946, %v6946
      %v6950 = vpack.c.b16 %v6947, %v6947
      %v6951 = vpack.c.b16 %v6948, %v6948
      %v6953 = vshrl.u32 %v6949, 16
      %v6955 = vrot.slane %v6953, 5
      %v6956 = vshll.u32 %v6949, 16
      %v6958 = vrot.slane %v6956, 6
      %v6959 = vor.u32 %v6955, %v6958
      %v6960 = vrot.slane %v6959, 4
      %v6962 = vshrl.u32 %v6950, 16
      %v6964 = vrot.slane %v6962, 5
      %v6965 = vshll.u32 %v6950, 16
      %v6967 = vrot.slane %v6965, 6
      %v6968 = vor.u32 %v6964, %v6967
      %v6969 = vsel %vm5976, %v6960, %v6968
      %v6970 = vrot.slane %v6968, 4
      %v6972 = vshrl.u32 %v6951, 16
      %v6974 = vrot.slane %v6972, 5
      %v6975 = vshll.u32 %v6951, 16
      %v6977 = vrot.slane %v6975, 6
      %v6978 = vor.u32 %v6974, %v6977
      %v6979 = vsel %vm5976, %v6970, %v6978
      %v6980 = vrot.slane %v6974, 4
      %v6985 = vld [vmem:[#allocation4 + $0x6c] sm:$0xc]
      %v6986 = vsel %vm6012, %v6959, %v6985
      %6987 = vst [vmem:[#allocation4 + $0x6c] sm:$0xc] %v6986
      %6988 = vst.msk [vmem:[#allocation4 + $0x70] sm:$0xf] %vm263, %v6969
      %6989 = vst.msk [vmem:[#allocation4 + $0x74] sm:$0xf] %vm263, %v6979
      %v6990 = vld [vmem:[#allocation4 + $0x78] sm:$0x1]
      %v6991 = vsel %vm352, %v6980, %v6990
      %6992 = vst [vmem:[#allocation4 + $0x78] sm:$0x1] %v6991
      %v6993 = vld [vmem:[#allocation4] sm:$0xf]
      %v6994 = vld [vmem:[#allocation4 + $0x4] sm:$0xf]
      %v6995 = vld [vmem:[#allocation4 + $0x8] sm:$0xf]
      %v6996 = vld [vmem:[#allocation4 + $0xc] sm:$0xf]
      %v6997 = vld [vmem:[#allocation4 + $0x10] sm:$0xf]
      %v6998 = vld [vmem:[#allocation4 + $0x14] sm:$0xf]
      %v6999 = vld [vmem:[#allocation4 + $0x18] sm:$0xf]
      %v7000 = vld [vmem:[#allocation4 + $0x1c] sm:$0xf]
      %v7001 = vld [vmem:[#allocation4 + $0x20] sm:$0xf]
      %v7002 = vld [vmem:[#allocation4 + $0x24] sm:$0xf]
      %v7003 = vld [vmem:[#allocation4 + $0x28] sm:$0xf]
      %v7004 = vld [vmem:[#allocation4 + $0x2c] sm:$0xf]
      %v7005 = vld [vmem:[#allocation4 + $0x30] sm:$0xf]
      %v7006 = vld [vmem:[#allocation4 + $0x34] sm:$0xf]
      %v7007 = vld [vmem:[#allocation4 + $0x38] sm:$0xf]
      %v7008 = vld [vmem:[#allocation4 + $0x3c] sm:$0xf]
      %v7009 = vld [vmem:[#allocation4 + $0x40] sm:$0xf]
      %v7010 = vld [vmem:[#allocation4 + $0x44] sm:$0xf]
      %v7011 = vld [vmem:[#allocation4 + $0x48] sm:$0xf]
      %v7012 = vld [vmem:[#allocation4 + $0x4c] sm:$0xf]
      %v7013 = vld [vmem:[#allocation4 + $0x50] sm:$0xf]
      %v7014 = vld [vmem:[#allocation4 + $0x54] sm:$0xf]
      %v7015 = vld [vmem:[#allocation4 + $0x58] sm:$0xf]
      %v7016 = vld [vmem:[#allocation4 + $0x5c] sm:$0xf]
      %v7017 = vld [vmem:[#allocation4 + $0x60] sm:$0xf]
      %v7018 = vld [vmem:[#allocation4 + $0x64] sm:$0xf]
      %v7019 = vld [vmem:[#allocation4 + $0x68] sm:$0xf]
      %v7020 = vld [vmem:[#allocation4 + $0x6c] sm:$0x3]
      %v7021 = vld [vmem:[%s3] sm:$0xf]
      %v7022 = vld [vmem:[%s3 + $0x4] sm:$0xf]
      %v7023 = vld [vmem:[%s3 + $0x8] sm:$0xf]
      %v7024 = vld [vmem:[%s3 + $0xc] sm:$0xf]
      %v7053 = vunpack.c.l.b16 %v6993
      %v7054 = vunpack.c.l.b16 %v6994
      %v7055 = vunpack.c.l.b16 %v6995
      %v7056 = vunpack.c.l.b16 %v6996
      %v7057 = vunpack.c.l.b16 %v6997
      %v7058 = vunpack.c.l.b16 %v6998
      %v7059 = vunpack.c.l.b16 %v6999
      %v7060 = vunpack.c.l.b16 %v7000
      %v7061 = vunpack.c.l.b16 %v7001
      %v7062 = vunpack.c.l.b16 %v7002
      %v7063 = vunpack.c.l.b16 %v7003
      %v7064 = vunpack.c.l.b16 %v7004
      %v7065 = vunpack.c.l.b16 %v7005
      %v7066 = vunpack.c.l.b16 %v7006
      %v7067 = vunpack.c.l.b16 %v7007
      %v7068 = vunpack.c.l.b16 %v7008
      %v7069 = vunpack.c.l.b16 %v7009
      %v7070 = vunpack.c.l.b16 %v7010
      %v7071 = vunpack.c.l.b16 %v7011
      %v7072 = vunpack.c.l.b16 %v7012
      %v7073 = vunpack.c.l.b16 %v7013
      %v7074 = vunpack.c.l.b16 %v7014
      %v7075 = vunpack.c.l.b16 %v7015
      %v7076 = vunpack.c.l.b16 %v7016
      %v7077 = vunpack.c.l.b16 %v7017
      %v7078 = vunpack.c.l.b16 %v7018
      %v7079 = vunpack.c.l.b16 %v7019
      %v7080 = vunpack.c.l.b16 %v7020
      %v7081 = vpack.c.b16 %v7054, %v7053
      %v7082 = vpack.c.b16 %v7056, %v7055
      %v7083 = vpack.c.b16 %v7058, %v7057
      %v7084 = vpack.c.b16 %v7060, %v7059
      %v7085 = vpack.c.b16 %v7062, %v7061
      %v7086 = vpack.c.b16 %v7064, %v7063
      %v7087 = vpack.c.b16 %v7066, %v7065
      %v7088 = vpack.c.b16 %v7068, %v7067
      %v7089 = vpack.c.b16 %v7070, %v7069
      %v7090 = vpack.c.b16 %v7072, %v7071
      %v7091 = vpack.c.b16 %v7074, %v7073
      %v7092 = vpack.c.b16 %v7076, %v7075
      %v7093 = vpack.c.b16 %v7078, %v7077
      %v7094 = vpack.c.b16 %v7080, %v7079
      %v7099 = vunpack.c.l.b16 %v7021
      %v7100 = vunpack.c.l.b16 %v7022
      %v7101 = vunpack.c.l.b16 %v7023
      %v7102 = vunpack.c.l.b16 %v7024
      %v7103 = vpack.c.b16 %v7100, %v7099
      %v7104 = vpack.c.b16 %v7102, %v7101
      %v7108 = vsel %vm5639, %v7081, 0
      %v7111 = vsel %vm5639, %v7082, 0
      %v7114 = vsel %vm5639, %v7083, 0
      %v7117 = vsel %vm5639, %v7084, 0
      %v7120 = vsel %vm5639, %v7085, 0
      %v7123 = vsel %vm5639, %v7086, 0
      %v7126 = vsel %vm5639, %v7087, 0
      %v7129 = vsel %vm5639, %v7088, 0
      %v7132 = vsel %vm5639, %v7089, 0
      %v7135 = vsel %vm5639, %v7090, 0
      %v7138 = vsel %vm5639, %v7091, 0
      %v7141 = vsel %vm5639, %v7092, 0
      %v7144 = vsel %vm5639, %v7093, 0
      %v7147 = vsel %vm5639, %v7094, 0
      %7149 = vmatprep.subr.bf16.mxu0 0
      %7150 = vmatpush1.bf16.msra.mxu0 0
      %7151 = vmatprep.subr.bf16.mxu0 0
      %7152 = vmatpush1.bf16.msra.mxu0 0
      %7153 = vmatprep.subr.bf16.mxu0 0
      %7154 = vmatpush1.bf16.msra.mxu0 0
      %7155 = vmatprep.subr.bf16.mxu0 0
      %7156 = vmatpush1.bf16.msra.mxu0 0
      %7157 = vmatprep.subr.bf16.mxu0 0
      %7158 = vmatpush1.bf16.msra.mxu0 0
      %7159 = vmatprep.subr.bf16.mxu0 0
      %7160 = vmatpush1.bf16.msra.mxu0 0
      %7161 = vmatprep.subr.bf16.mxu0 0
      %7162 = vmatpush1.bf16.msra.mxu0 %v7104
      %7163 = vmatprep.subr.bf16.mxu0 0
      %7164 = vmatpush1.bf16.msra.mxu0 %v7103
      %7165 = vmatprep.subr.bf16.mxu0 0
      %7166 = vmatpush2.bf16.msra.mxu0 0
      %7167 = vmatprep.subr.bf16.mxu0 0
      %7168 = vmatpush2.bf16.msra.mxu0 0
      %7169 = vmatprep.subr.bf16.mxu0 0
      %7170 = vmatpush2.bf16.msra.mxu0 0
      %7171 = vmatprep.subr.bf16.mxu0 0
      %7172 = vmatpush2.bf16.msra.mxu0 0
      %7173 = vmatprep.subr.bf16.mxu0 0
      %7174 = vmatpush2.bf16.msra.mxu0 0
      %7175 = vmatprep.subr.bf16.mxu0 0
      %7176 = vmatpush2.bf16.msra.mxu0 0
      %7177 = vmatprep.subr.bf16.mxu0 0
      %7178 = vmatpush2.bf16.msra.mxu0 0
      %7179 = vmatprep.subr.bf16.mxu0 0
      %7180 = vmatpush2.bf16.msra.mxu0 0
      %7181 = vmatprep.mubr.bf16.mxu0 0
      %7182 = vmatmul.mubr.bf16.gmra.mxu0 %v7108
      %v7183 = vpop.f32.mrf.mxu0
      %v7184 = vadd.f32 0.0, %v7183
      %v7185 = vpop.f32.mrf.mxu0
      %v7186 = vpop.f32.mrf.mxu0
      %v7187 = vadd.f32 0.0, %v7186
      %v7188 = vpop.f32.mrf.mxu0
      %7189 = vmatprep.mubr.bf16.mxu0 0
      %7190 = vmatmul.mubr.bf16.gmra.mxu0 %v7111
      %v7191 = vpop.f32.mrf.mxu0
      %v7192 = vadd.f32 0.0, %v7191
      %v7193 = vpop.f32.mrf.mxu0
      %v7194 = vpop.f32.mrf.mxu0
      %v7195 = vadd.f32 0.0, %v7194
      %v7196 = vpop.f32.mrf.mxu0
      %7197 = vmatprep.mubr.bf16.mxu0 0
      %7198 = vmatmul.mubr.bf16.gmra.mxu0 %v7114
      %v7199 = vpop.f32.mrf.mxu0
      %v7200 = vadd.f32 0.0, %v7199
      %v7201 = vpop.f32.mrf.mxu0
      %v7202 = vpop.f32.mrf.mxu0
      %v7203 = vadd.f32 0.0, %v7202
      %v7204 = vpop.f32.mrf.mxu0
      %7205 = vmatprep.mubr.bf16.mxu0 0
      %7206 = vmatmul.mubr.bf16.gmra.mxu0 %v7117
      %v7207 = vpop.f32.mrf.mxu0
      %v7208 = vadd.f32 0.0, %v7207
      %v7209 = vpop.f32.mrf.mxu0
      %v7210 = vpop.f32.mrf.mxu0
      %v7211 = vadd.f32 0.0, %v7210
      %v7212 = vpop.f32.mrf.mxu0
      %7213 = vmatprep.mubr.bf16.mxu0 0
      %7214 = vmatmul.mubr.bf16.gmra.mxu0 %v7120
      %v7215 = vpop.f32.mrf.mxu0
      %v7216 = vadd.f32 0.0, %v7215
      %v7217 = vpop.f32.mrf.mxu0
      %v7218 = vpop.f32.mrf.mxu0
      %v7219 = vadd.f32 0.0, %v7218
      %v7220 = vpop.f32.mrf.mxu0
      %7221 = vmatprep.mubr.bf16.mxu0 0
      %7222 = vmatmul.mubr.bf16.gmra.mxu0 %v7123
      %v7223 = vpop.f32.mrf.mxu0
      %v7224 = vadd.f32 0.0, %v7223
      %v7225 = vpop.f32.mrf.mxu0
      %v7226 = vpop.f32.mrf.mxu0
      %v7227 = vadd.f32 0.0, %v7226
      %v7228 = vpop.f32.mrf.mxu0
      %7229 = vmatprep.mubr.bf16.mxu0 0
      %7230 = vmatmul.mubr.bf16.gmra.mxu0 %v7126
      %v7231 = vpop.f32.mrf.mxu0
      %v7232 = vadd.f32 0.0, %v7231
      %v7233 = vpop.f32.mrf.mxu0
      %v7234 = vpop.f32.mrf.mxu0
      %v7235 = vadd.f32 0.0, %v7234
      %v7236 = vpop.f32.mrf.mxu0
      %7237 = vmatprep.mubr.bf16.mxu0 0
      %7238 = vmatmul.mubr.bf16.gmra.mxu0 %v7129
      %v7239 = vpop.f32.mrf.mxu0
      %v7240 = vadd.f32 0.0, %v7239
      %v7241 = vpop.f32.mrf.mxu0
      %v7242 = vpop.f32.mrf.mxu0
      %v7243 = vadd.f32 0.0, %v7242
      %v7244 = vpop.f32.mrf.mxu0
      %7245 = vmatprep.mubr.bf16.mxu0 0
      %7246 = vmatmul.mubr.bf16.gmra.mxu0 %v7132
      %v7247 = vpop.f32.mrf.mxu0
      %v7248 = vadd.f32 0.0, %v7247
      %v7249 = vpop.f32.mrf.mxu0
      %v7250 = vpop.f32.mrf.mxu0
      %v7251 = vadd.f32 0.0, %v7250
      %v7252 = vpop.f32.mrf.mxu0
      %7253 = vmatprep.mubr.bf16.mxu0 0
      %7254 = vmatmul.mubr.bf16.gmra.mxu0 %v7135
      %v7255 = vpop.f32.mrf.mxu0
      %v7256 = vadd.f32 0.0, %v7255
      %v7257 = vpop.f32.mrf.mxu0
      %v7258 = vpop.f32.mrf.mxu0
      %v7259 = vadd.f32 0.0, %v7258
      %v7260 = vpop.f32.mrf.mxu0
      %7261 = vmatprep.mubr.bf16.mxu0 0
      %7262 = vmatmul.mubr.bf16.gmra.mxu0 %v7138
      %v7263 = vpop.f32.mrf.mxu0
      %v7264 = vadd.f32 0.0, %v7263
      %v7265 = vpop.f32.mrf.mxu0
      %v7266 = vpop.f32.mrf.mxu0
      %v7267 = vadd.f32 0.0, %v7266
      %v7268 = vpop.f32.mrf.mxu0
      %7269 = vmatprep.mubr.bf16.mxu0 0
      %7270 = vmatmul.mubr.bf16.gmra.mxu0 %v7141
      %v7271 = vpop.f32.mrf.mxu0
      %v7272 = vadd.f32 0.0, %v7271
      %v7273 = vpop.f32.mrf.mxu0
      %v7274 = vpop.f32.mrf.mxu0
      %v7275 = vadd.f32 0.0, %v7274
      %v7276 = vpop.f32.mrf.mxu0
      %7277 = vmatprep.mubr.bf16.mxu0 0
      %7278 = vmatmul.mubr.bf16.gmra.mxu0 %v7144
      %v7279 = vpop.f32.mrf.mxu0
      %v7280 = vadd.f32 0.0, %v7279
      %v7281 = vpop.f32.mrf.mxu0
      %v7282 = vpop.f32.mrf.mxu0
      %v7283 = vadd.f32 0.0, %v7282
      %v7284 = vpop.f32.mrf.mxu0
      %7285 = vmatprep.mubr.bf16.mxu0 0
      %7286 = vmatmul.mubr.bf16.gmra.mxu0 %v7147
      %v7287 = vpop.f32.mrf.mxu0
      %v7288 = vadd.f32 0.0, %v7287
      %v7289 = vpop.f32.mrf.mxu0
      %v7290 = vpop.f32.mrf.mxu0
      %v7291 = vadd.f32 0.0, %v7290
      %v7292 = vpop.f32.mrf.mxu0
      %7293 = vdwg.mxu0
      %7294 = vst.msk [vmem:[#allocation2] sm:$0xff] %vm1345, %v7184
      %7295 = vst.msk [vmem:[#allocation2 + $0x8] sm:$0xff] %vm1345, %v7187
      %7296 = vst.msk [vmem:[#allocation2 + $0x10] sm:$0xff] %vm1345, %v7192
      %7297 = vst.msk [vmem:[#allocation2 + $0x18] sm:$0xff] %vm1345, %v7195
      %7298 = vst.msk [vmem:[#allocation2 + $0x20] sm:$0xff] %vm1345, %v7200
      %7299 = vst.msk [vmem:[#allocation2 + $0x28] sm:$0xff] %vm1345, %v7203
      %7300 = vst.msk [vmem:[#allocation2 + $0x30] sm:$0xff] %vm1345, %v7208
      %7301 = vst.msk [vmem:[#allocation2 + $0x38] sm:$0xff] %vm1345, %v7211
      %7302 = vst.msk [vmem:[#allocation2 + $0x40] sm:$0xff] %vm1345, %v7216
      %7303 = vst.msk [vmem:[#allocation2 + $0x48] sm:$0xff] %vm1345, %v7219
      %7304 = vst.msk [vmem:[#allocation2 + $0x50] sm:$0xff] %vm1345, %v7224
      %7305 = vst.msk [vmem:[#allocation2 + $0x58] sm:$0xff] %vm1345, %v7227
      %7306 = vst.msk [vmem:[#allocation2 + $0x60] sm:$0xff] %vm1345, %v7232
      %7307 = vst.msk [vmem:[#allocation2 + $0x68] sm:$0xff] %vm1345, %v7235
      %7308 = vst.msk [vmem:[#allocation2 + $0x70] sm:$0xff] %vm1345, %v7240
      %7309 = vst.msk [vmem:[#allocation2 + $0x78] sm:$0xff] %vm1345, %v7243
      %7310 = vst.msk [vmem:[#allocation2 + $0x80] sm:$0xff] %vm1345, %v7248
      %7311 = vst.msk [vmem:[#allocation2 + $0x88] sm:$0xff] %vm1345, %v7251
      %7312 = vst.msk [vmem:[#allocation2 + $0x90] sm:$0xff] %vm1345, %v7256
      %7313 = vst.msk [vmem:[#allocation2 + $0x98] sm:$0xff] %vm1345, %v7259
      %7314 = vst.msk [vmem:[#allocation2 + $0xa0] sm:$0xff] %vm1345, %v7264
      %7315 = vst.msk [vmem:[#allocation2 + $0xa8] sm:$0xff] %vm1345, %v7267
      %7316 = vst.msk [vmem:[#allocation2 + $0xb0] sm:$0xff] %vm1345, %v7272
      %7317 = vst.msk [vmem:[#allocation2 + $0xb8] sm:$0xff] %vm1345, %v7275
      %7318 = vst.msk [vmem:[#allocation2 + $0xc0] sm:$0xff] %vm1345, %v7280
      %7319 = vst.msk [vmem:[#allocation2 + $0xc8] sm:$0xff] %vm1345, %v7283
      %7320 = vst.msk [vmem:[#allocation2 + $0xd0] sm:$0xff] %vm1345, %v7288
      %vm7321 = vcmask 781312
      %7322 = vst.msk [vmem:[#allocation2 + $0xd8] sm:$0xf] %vm7321, %v7291
      %v7323 = vld [vmem:[#allocation4 + $0x78] sm:$0xe]
      %v7324 = vld [vmem:[#allocation4 + $0x7c] sm:$0xf]
      %v7325 = vld [vmem:[#allocation4 + $0x80] sm:$0xf]
      %v7326 = vld [vmem:[#allocation4 + $0x84] sm:$0xf]
      %v7327 = vld [vmem:[#allocation4 + $0x88] sm:$0xf]
      %v7328 = vld [vmem:[#allocation4 + $0x8c] sm:$0xf]
      %v7329 = vld [vmem:[#allocation4 + $0x90] sm:$0xf]
      %v7330 = vld [vmem:[#allocation4 + $0x94] sm:$0xf]
      %v7331 = vld [vmem:[#allocation4 + $0x98] sm:$0xf]
      %v7332 = vld [vmem:[#allocation4 + $0x9c] sm:$0xf]
      %v7333 = vld [vmem:[#allocation4 + $0xa0] sm:$0xf]
      %v7334 = vld [vmem:[#allocation4 + $0xa4] sm:$0xf]
      %v7335 = vld [vmem:[#allocation4 + $0xa8] sm:$0xf]
      %v7336 = vld [vmem:[#allocation4 + $0xac] sm:$0xf]
      %v7337 = vld [vmem:[#allocation4 + $0xb0] sm:$0xf]
      %v7338 = vld [vmem:[#allocation4 + $0xb4] sm:$0xf]
      %v7339 = vld [vmem:[#allocation4 + $0xb8] sm:$0xf]
      %v7340 = vld [vmem:[#allocation4 + $0xbc] sm:$0xf]
      %v7341 = vld [vmem:[#allocation4 + $0xc0] sm:$0xf]
      %v7342 = vld [vmem:[#allocation4 + $0xc4] sm:$0xf]
      %v7343 = vld [vmem:[#allocation4 + $0xc8] sm:$0xf]
      %v7344 = vld [vmem:[#allocation4 + $0xcc] sm:$0xf]
      %v7345 = vld [vmem:[#allocation4 + $0xd0] sm:$0xf]
      %v7346 = vld [vmem:[#allocation4 + $0xd4] sm:$0xf]
      %v7347 = vld [vmem:[#allocation4 + $0xd8] sm:$0xf]
      %v7348 = vld [vmem:[#allocation4 + $0xdc] sm:$0xf]
      %v7349 = vld [vmem:[#allocation4 + $0xe0] sm:$0xf]
      %v7350 = vld [vmem:[#allocation4 + $0xe4] sm:$0x7]
      %s7351 = scalar_lea.vmem %s3, 16
      %v7352 = vld [vmem:[%s7351] sm:$0xf]
      %v7353 = vld [vmem:[%s7351 + $0x4] sm:$0xf]
      %v7354 = vld [vmem:[%s7351 + $0x8] sm:$0xf]
      %v7355 = vld [vmem:[%s7351 + $0xc] sm:$0xf]
      %v7384 = vunpack.c.l.b16 %v7323
      %v7385 = vunpack.c.l.b16 %v7324
      %v7386 = vunpack.c.l.b16 %v7325
      %v7387 = vunpack.c.l.b16 %v7326
      %v7388 = vunpack.c.l.b16 %v7327
      %v7389 = vunpack.c.l.b16 %v7328
      %v7390 = vunpack.c.l.b16 %v7329
      %v7391 = vunpack.c.l.b16 %v7330
      %v7392 = vunpack.c.l.b16 %v7331
      %v7393 = vunpack.c.l.b16 %v7332
      %v7394 = vunpack.c.l.b16 %v7333
      %v7395 = vunpack.c.l.b16 %v7334
      %v7396 = vunpack.c.l.b16 %v7335
      %v7397 = vunpack.c.l.b16 %v7336
      %v7398 = vunpack.c.l.b16 %v7337
      %v7399 = vunpack.c.l.b16 %v7338
      %v7400 = vunpack.c.l.b16 %v7339
      %v7401 = vunpack.c.l.b16 %v7340
      %v7402 = vunpack.c.l.b16 %v7341
      %v7403 = vunpack.c.l.b16 %v7342
      %v7404 = vunpack.c.l.b16 %v7343
      %v7405 = vunpack.c.l.b16 %v7344
      %v7406 = vunpack.c.l.b16 %v7345
      %v7407 = vunpack.c.l.b16 %v7346
      %v7408 = vunpack.c.l.b16 %v7347
      %v7409 = vunpack.c.l.b16 %v7348
      %v7410 = vunpack.c.l.b16 %v7349
      %v7411 = vunpack.c.l.b16 %v7350
      %v7412 = vpack.c.b16 %v7385, %v7384
      %v7413 = vpack.c.b16 %v7387, %v7386
      %v7414 = vpack.c.b16 %v7389, %v7388
      %v7415 = vpack.c.b16 %v7391, %v7390
      %v7416 = vpack.c.b16 %v7393, %v7392
      %v7417 = vpack.c.b16 %v7395, %v7394
      %v7418 = vpack.c.b16 %v7397, %v7396
      %v7419 = vpack.c.b16 %v7399, %v7398
      %v7420 = vpack.c.b16 %v7401, %v7400
      %v7421 = vpack.c.b16 %v7403, %v7402
      %v7422 = vpack.c.b16 %v7405, %v7404
      %v7423 = vpack.c.b16 %v7407, %v7406
      %v7424 = vpack.c.b16 %v7409, %v7408
      %v7425 = vpack.c.b16 %v7411, %v7410
      %v7426 = vrot.slane %v7412, 1
      %v7427 = vrot.slane %v7413, 1
      %v7428 = vsel %vm1824, %v7426, %v7427
      %v7429 = vrot.slane %v7414, 1
      %v7430 = vsel %vm1824, %v7427, %v7429
      %v7431 = vrot.slane %v7415, 1
      %v7432 = vsel %vm1824, %v7429, %v7431
      %v7433 = vrot.slane %v7416, 1
      %v7434 = vsel %vm1824, %v7431, %v7433
      %v7435 = vrot.slane %v7417, 1
      %v7436 = vsel %vm1824, %v7433, %v7435
      %v7437 = vrot.slane %v7418, 1
      %v7438 = vsel %vm1824, %v7435, %v7437
      %v7439 = vrot.slane %v7419, 1
      %v7440 = vsel %vm1824, %v7437, %v7439
      %v7441 = vrot.slane %v7420, 1
      %v7442 = vsel %vm1824, %v7439, %v7441
      %v7443 = vrot.slane %v7421, 1
      %v7444 = vsel %vm1824, %v7441, %v7443
      %v7445 = vrot.slane %v7422, 1
      %v7446 = vsel %vm1824, %v7443, %v7445
      %v7447 = vrot.slane %v7423, 1
      %v7448 = vsel %vm1824, %v7445, %v7447
      %v7449 = vrot.slane %v7424, 1
      %v7450 = vsel %vm1824, %v7447, %v7449
      %v7451 = vrot.slane %v7425, 1
      %v7452 = vsel %vm1824, %v7449, %v7451
      %v7457 = vunpack.c.l.b16 %v7352
      %v7458 = vunpack.c.l.b16 %v7353
      %v7459 = vunpack.c.l.b16 %v7354
      %v7460 = vunpack.c.l.b16 %v7355
      %v7461 = vpack.c.b16 %v7458, %v7457
      %v7462 = vpack.c.b16 %v7460, %v7459
      %v7466 = vsel %vm5639, %v7428, 0
      %v7469 = vsel %vm5639, %v7430, 0
      %v7472 = vsel %vm5639, %v7432, 0
      %v7475 = vsel %vm5639, %v7434, 0
      %v7478 = vsel %vm5639, %v7436, 0
      %v7481 = vsel %vm5639, %v7438, 0
      %v7484 = vsel %vm5639, %v7440, 0
      %v7487 = vsel %vm5639, %v7442, 0
      %v7490 = vsel %vm5639, %v7444, 0
      %v7493 = vsel %vm5639, %v7446, 0
      %v7496 = vsel %vm5639, %v7448, 0
      %v7499 = vsel %vm5639, %v7450, 0
      %v7502 = vsel %vm5639, %v7452, 0
      %v7505 = vsel %vm5639, %v7451, 0
      %7507 = vmatprep.subr.bf16.mxu0 0
      %7508 = vmatpush1.bf16.msra.mxu0 0
      %7509 = vmatprep.subr.bf16.mxu0 0
      %7510 = vmatpush1.bf16.msra.mxu0 0
      %7511 = vmatprep.subr.bf16.mxu0 0
      %7512 = vmatpush1.bf16.msra.mxu0 0
      %7513 = vmatprep.subr.bf16.mxu0 0
      %7514 = vmatpush1.bf16.msra.mxu0 0
      %7515 = vmatprep.subr.bf16.mxu0 0
      %7516 = vmatpush1.bf16.msra.mxu0 0
      %7517 = vmatprep.subr.bf16.mxu0 0
      %7518 = vmatpush1.bf16.msra.mxu0 0
      %7519 = vmatprep.subr.bf16.mxu0 0
      %7520 = vmatpush1.bf16.msra.mxu0 %v7462
      %7521 = vmatprep.subr.bf16.mxu0 0
      %7522 = vmatpush1.bf16.msra.mxu0 %v7461
      %7523 = vmatprep.subr.bf16.mxu0 0
      %7524 = vmatpush2.bf16.msra.mxu0 0
      %7525 = vmatprep.subr.bf16.mxu0 0
      %7526 = vmatpush2.bf16.msra.mxu0 0
      %7527 = vmatprep.subr.bf16.mxu0 0
      %7528 = vmatpush2.bf16.msra.mxu0 0
      %7529 = vmatprep.subr.bf16.mxu0 0
      %7530 = vmatpush2.bf16.msra.mxu0 0
      %7531 = vmatprep.subr.bf16.mxu0 0
      %7532 = vmatpush2.bf16.msra.mxu0 0
      %7533 = vmatprep.subr.bf16.mxu0 0
      %7534 = vmatpush2.bf16.msra.mxu0 0
      %7535 = vmatprep.subr.bf16.mxu0 0
      %7536 = vmatpush2.bf16.msra.mxu0 0
      %7537 = vmatprep.subr.bf16.mxu0 0
      %7538 = vmatpush2.bf16.msra.mxu0 0
      %7539 = vmatprep.mubr.bf16.mxu0 0
      %7540 = vmatmul.mubr.bf16.gmra.mxu0 %v7466
      %v7541 = vpop.f32.mrf.mxu0
      %v7542 = vadd.f32 0.0, %v7541
      %v7543 = vpop.f32.mrf.mxu0
      %v7544 = vpop.f32.mrf.mxu0
      %v7545 = vadd.f32 0.0, %v7544
      %v7546 = vpop.f32.mrf.mxu0
      %7547 = vmatprep.mubr.bf16.mxu0 0
      %7548 = vmatmul.mubr.bf16.gmra.mxu0 %v7469
      %v7549 = vpop.f32.mrf.mxu0
      %v7550 = vadd.f32 0.0, %v7549
      %v7551 = vpop.f32.mrf.mxu0
      %v7552 = vpop.f32.mrf.mxu0
      %v7553 = vadd.f32 0.0, %v7552
      %v7554 = vpop.f32.mrf.mxu0
      %7555 = vmatprep.mubr.bf16.mxu0 0
      %7556 = vmatmul.mubr.bf16.gmra.mxu0 %v7472
      %v7557 = vpop.f32.mrf.mxu0
      %v7558 = vadd.f32 0.0, %v7557
      %v7559 = vpop.f32.mrf.mxu0
      %v7560 = vpop.f32.mrf.mxu0
      %v7561 = vadd.f32 0.0, %v7560
      %v7562 = vpop.f32.mrf.mxu0
      %7563 = vmatprep.mubr.bf16.mxu0 0
      %7564 = vmatmul.mubr.bf16.gmra.mxu0 %v7475
      %v7565 = vpop.f32.mrf.mxu0
      %v7566 = vadd.f32 0.0, %v7565
      %v7567 = vpop.f32.mrf.mxu0
      %v7568 = vpop.f32.mrf.mxu0
      %v7569 = vadd.f32 0.0, %v7568
      %v7570 = vpop.f32.mrf.mxu0
      %7571 = vmatprep.mubr.bf16.mxu0 0
      %7572 = vmatmul.mubr.bf16.gmra.mxu0 %v7478
      %v7573 = vpop.f32.mrf.mxu0
      %v7574 = vadd.f32 0.0, %v7573
      %v7575 = vpop.f32.mrf.mxu0
      %v7576 = vpop.f32.mrf.mxu0
      %v7577 = vadd.f32 0.0, %v7576
      %v7578 = vpop.f32.mrf.mxu0
      %7579 = vmatprep.mubr.bf16.mxu0 0
      %7580 = vmatmul.mubr.bf16.gmra.mxu0 %v7481
      %v7581 = vpop.f32.mrf.mxu0
      %v7582 = vadd.f32 0.0, %v7581
      %v7583 = vpop.f32.mrf.mxu0
      %v7584 = vpop.f32.mrf.mxu0
      %v7585 = vadd.f32 0.0, %v7584
      %v7586 = vpop.f32.mrf.mxu0
      %7587 = vmatprep.mubr.bf16.mxu0 0
      %7588 = vmatmul.mubr.bf16.gmra.mxu0 %v7484
      %v7589 = vpop.f32.mrf.mxu0
      %v7590 = vadd.f32 0.0, %v7589
      %v7591 = vpop.f32.mrf.mxu0
      %v7592 = vpop.f32.mrf.mxu0
      %v7593 = vadd.f32 0.0, %v7592
      %v7594 = vpop.f32.mrf.mxu0
      %7595 = vmatprep.mubr.bf16.mxu0 0
      %7596 = vmatmul.mubr.bf16.gmra.mxu0 %v7487
      %v7597 = vpop.f32.mrf.mxu0
      %v7598 = vadd.f32 0.0, %v7597
      %v7599 = vpop.f32.mrf.mxu0
      %v7600 = vpop.f32.mrf.mxu0
      %v7601 = vadd.f32 0.0, %v7600
      %v7602 = vpop.f32.mrf.mxu0
      %7603 = vmatprep.mubr.bf16.mxu0 0
      %7604 = vmatmul.mubr.bf16.gmra.mxu0 %v7490
      %v7605 = vpop.f32.mrf.mxu0
      %v7606 = vadd.f32 0.0, %v7605
      %v7607 = vpop.f32.mrf.mxu0
      %v7608 = vpop.f32.mrf.mxu0
      %v7609 = vadd.f32 0.0, %v7608
      %v7610 = vpop.f32.mrf.mxu0
      %7611 = vmatprep.mubr.bf16.mxu0 0
      %7612 = vmatmul.mubr.bf16.gmra.mxu0 %v7493
      %v7613 = vpop.f32.mrf.mxu0
      %v7614 = vadd.f32 0.0, %v7613
      %v7615 = vpop.f32.mrf.mxu0
      %v7616 = vpop.f32.mrf.mxu0
      %v7617 = vadd.f32 0.0, %v7616
      %v7618 = vpop.f32.mrf.mxu0
      %7619 = vmatprep.mubr.bf16.mxu0 0
      %7620 = vmatmul.mubr.bf16.gmra.mxu0 %v7496
      %v7621 = vpop.f32.mrf.mxu0
      %v7622 = vadd.f32 0.0, %v7621
      %v7623 = vpop.f32.mrf.mxu0
      %v7624 = vpop.f32.mrf.mxu0
      %v7625 = vadd.f32 0.0, %v7624
      %v7626 = vpop.f32.mrf.mxu0
      %7627 = vmatprep.mubr.bf16.mxu0 0
      %7628 = vmatmul.mubr.bf16.gmra.mxu0 %v7499
      %v7629 = vpop.f32.mrf.mxu0
      %v7630 = vadd.f32 0.0, %v7629
      %v7631 = vpop.f32.mrf.mxu0
      %v7632 = vpop.f32.mrf.mxu0
      %v7633 = vadd.f32 0.0, %v7632
      %v7634 = vpop.f32.mrf.mxu0
      %7635 = vmatprep.mubr.bf16.mxu0 0
      %7636 = vmatmul.mubr.bf16.gmra.mxu0 %v7502
      %v7637 = vpop.f32.mrf.mxu0
      %v7638 = vadd.f32 0.0, %v7637
      %v7639 = vpop.f32.mrf.mxu0
      %v7640 = vpop.f32.mrf.mxu0
      %v7641 = vadd.f32 0.0, %v7640
      %v7642 = vpop.f32.mrf.mxu0
      %7643 = vmatprep.mubr.bf16.mxu0 0
      %7644 = vmatmul.mubr.bf16.gmra.mxu0 %v7505
      %v7645 = vpop.f32.mrf.mxu0
      %v7646 = vadd.f32 0.0, %v7645
      %v7647 = vpop.f32.mrf.mxu0
      %v7648 = vpop.f32.mrf.mxu0
      %v7649 = vadd.f32 0.0, %v7648
      %v7650 = vpop.f32.mrf.mxu0
      %7651 = vdwg.mxu0
      %v7652 = vld [vmem:[#allocation2] sm:$0xff]
      %v7653 = vld [vmem:[#allocation2 + $0x8] sm:$0xff]
      %v7654 = vld [vmem:[#allocation2 + $0x10] sm:$0xff]
      %v7655 = vld [vmem:[#allocation2 + $0x18] sm:$0xff]
      %v7656 = vld [vmem:[#allocation2 + $0x20] sm:$0xff]
      %v7657 = vld [vmem:[#allocation2 + $0x28] sm:$0xff]
      %v7658 = vld [vmem:[#allocation2 + $0x30] sm:$0xff]
      %v7659 = vld [vmem:[#allocation2 + $0x38] sm:$0xff]
      %v7660 = vld [vmem:[#allocation2 + $0x40] sm:$0xff]
      %v7661 = vld [vmem:[#allocation2 + $0x48] sm:$0xff]
      %v7662 = vld [vmem:[#allocation2 + $0x50] sm:$0xff]
      %v7663 = vld [vmem:[#allocation2 + $0x58] sm:$0xff]
      %v7664 = vld [vmem:[#allocation2 + $0x60] sm:$0xff]
      %v7665 = vld [vmem:[#allocation2 + $0x68] sm:$0xff]
      %v7666 = vld [vmem:[#allocation2 + $0x70] sm:$0xff]
      %v7667 = vld [vmem:[#allocation2 + $0x78] sm:$0xff]
      %v7668 = vld [vmem:[#allocation2 + $0x80] sm:$0xff]
      %v7669 = vld [vmem:[#allocation2 + $0x88] sm:$0xff]
      %v7670 = vld [vmem:[#allocation2 + $0x90] sm:$0xff]
      %v7671 = vld [vmem:[#allocation2 + $0x98] sm:$0xff]
      %v7672 = vld [vmem:[#allocation2 + $0xa0] sm:$0xff]
      %v7673 = vld [vmem:[#allocation2 + $0xa8] sm:$0xff]
      %v7674 = vld [vmem:[#allocation2 + $0xb0] sm:$0xff]
      %v7675 = vld [vmem:[#allocation2 + $0xb8] sm:$0xff]
      %v7676 = vld [vmem:[#allocation2 + $0xc0] sm:$0xff]
      %v7677 = vld [vmem:[#allocation2 + $0xc8] sm:$0xff]
      %v7678 = vld [vmem:[#allocation2 + $0xd0] sm:$0xff]
      %v7679 = vld [vmem:[#allocation2 + $0xd8] sm:$0xf]
      %v7680 = vadd.f32 %v7652, %v7542
      %v7681 = vadd.f32 %v7653, %v7545
      %v7682 = vadd.f32 %v7654, %v7550
      %v7683 = vadd.f32 %v7655, %v7553
      %v7684 = vadd.f32 %v7656, %v7558
      %v7685 = vadd.f32 %v7657, %v7561
      %v7686 = vadd.f32 %v7658, %v7566
      %v7687 = vadd.f32 %v7659, %v7569
      %v7688 = vadd.f32 %v7660, %v7574
      %v7689 = vadd.f32 %v7661, %v7577
      %v7690 = vadd.f32 %v7662, %v7582
      %v7691 = vadd.f32 %v7663, %v7585
      %v7692 = vadd.f32 %v7664, %v7590
      %v7693 = vadd.f32 %v7665, %v7593
      %v7694 = vadd.f32 %v7666, %v7598
      %v7695 = vadd.f32 %v7667, %v7601
      %v7696 = vadd.f32 %v7668, %v7606
      %v7697 = vadd.f32 %v7669, %v7609
      %v7698 = vadd.f32 %v7670, %v7614
      %v7699 = vadd.f32 %v7671, %v7617
      %v7700 = vadd.f32 %v7672, %v7622
      %v7701 = vadd.f32 %v7673, %v7625
      %v7702 = vadd.f32 %v7674, %v7630
      %v7703 = vadd.f32 %v7675, %v7633
      %v7704 = vadd.f32 %v7676, %v7638
      %v7705 = vadd.f32 %v7677, %v7641
      %v7706 = vadd.f32 %v7678, %v7646
      %v7707 = vadd.f32 %v7679, %v7649
      %7708 = vst.msk [vmem:[#allocation2] sm:$0xff] %vm1345, %v7680
      %7709 = vst.msk [vmem:[#allocation2 + $0x8] sm:$0xff] %vm1345, %v7681
      %7710 = vst.msk [vmem:[#allocation2 + $0x10] sm:$0xff] %vm1345, %v7682
      %7711 = vst.msk [vmem:[#allocation2 + $0x18] sm:$0xff] %vm1345, %v7683
      %7712 = vst.msk [vmem:[#allocation2 + $0x20] sm:$0xff] %vm1345, %v7684
      %7713 = vst.msk [vmem:[#allocation2 + $0x28] sm:$0xff] %vm1345, %v7685
      %7714 = vst.msk [vmem:[#allocation2 + $0x30] sm:$0xff] %vm1345, %v7686
      %7715 = vst.msk [vmem:[#allocation2 + $0x38] sm:$0xff] %vm1345, %v7687
      %7716 = vst.msk [vmem:[#allocation2 + $0x40] sm:$0xff] %vm1345, %v7688
      %7717 = vst.msk [vmem:[#allocation2 + $0x48] sm:$0xff] %vm1345, %v7689
      %7718 = vst.msk [vmem:[#allocation2 + $0x50] sm:$0xff] %vm1345, %v7690
      %7719 = vst.msk [vmem:[#allocation2 + $0x58] sm:$0xff] %vm1345, %v7691
      %7720 = vst.msk [vmem:[#allocation2 + $0x60] sm:$0xff] %vm1345, %v7692
      %7721 = vst.msk [vmem:[#allocation2 + $0x68] sm:$0xff] %vm1345, %v7693
      %7722 = vst.msk [vmem:[#allocation2 + $0x70] sm:$0xff] %vm1345, %v7694
      %7723 = vst.msk [vmem:[#allocation2 + $0x78] sm:$0xff] %vm1345, %v7695
      %7724 = vst.msk [vmem:[#allocation2 + $0x80] sm:$0xff] %vm1345, %v7696
      %7725 = vst.msk [vmem:[#allocation2 + $0x88] sm:$0xff] %vm1345, %v7697
      %7726 = vst.msk [vmem:[#allocation2 + $0x90] sm:$0xff] %vm1345, %v7698
      %7727 = vst.msk [vmem:[#allocation2 + $0x98] sm:$0xff] %vm1345, %v7699
      %7728 = vst.msk [vmem:[#allocation2 + $0xa0] sm:$0xff] %vm1345, %v7700
      %7729 = vst.msk [vmem:[#allocation2 + $0xa8] sm:$0xff] %vm1345, %v7701
      %7730 = vst.msk [vmem:[#allocation2 + $0xb0] sm:$0xff] %vm1345, %v7702
      %7731 = vst.msk [vmem:[#allocation2 + $0xb8] sm:$0xff] %vm1345, %v7703
      %7732 = vst.msk [vmem:[#allocation2 + $0xc0] sm:$0xff] %vm1345, %v7704
      %7733 = vst.msk [vmem:[#allocation2 + $0xc8] sm:$0xff] %vm1345, %v7705
      %7734 = vst.msk [vmem:[#allocation2 + $0xd0] sm:$0xff] %vm1345, %v7706
      %7735 = vst.msk [vmem:[#allocation2 + $0xd8] sm:$0xf] %vm7321, %v7707
      %v7736 = vld [vmem:[#allocation4 + $0x8] sm:$0x8]
      %v7737 = vld [vmem:[#allocation4 + $0xc] sm:$0xf]
      %v7738 = vld [vmem:[#allocation4 + $0x10] sm:$0xf]
      %v7739 = vld [vmem:[#allocation4 + $0x14] sm:$0xf]
      %v7740 = vld [vmem:[#allocation4 + $0x18] sm:$0xf]
      %v7741 = vld [vmem:[#allocation4 + $0x1c] sm:$0xf]
      %v7742 = vld [vmem:[#allocation4 + $0x20] sm:$0xf]
      %v7743 = vld [vmem:[#allocation4 + $0x24] sm:$0xf]
      %v7744 = vld [vmem:[#allocation4 + $0x28] sm:$0xf]
      %v7745 = vld [vmem:[#allocation4 + $0x2c] sm:$0xf]
      %v7746 = vld [vmem:[#allocation4 + $0x30] sm:$0xf]
      %v7747 = vld [vmem:[#allocation4 + $0x34] sm:$0xf]
      %v7748 = vld [vmem:[#allocation4 + $0x38] sm:$0xf]
      %v7749 = vld [vmem:[#allocation4 + $0x3c] sm:$0xf]
      %v7750 = vld [vmem:[#allocation4 + $0x40] sm:$0xf]
      %v7751 = vld [vmem:[#allocation4 + $0x44] sm:$0xf]
      %v7752 = vld [vmem:[#allocation4 + $0x48] sm:$0xf]
      %v7753 = vld [vmem:[#allocation4 + $0x4c] sm:$0xf]
      %v7754 = vld [vmem:[#allocation4 + $0x50] sm:$0xf]
      %v7755 = vld [vmem:[#allocation4 + $0x54] sm:$0xf]
      %v7756 = vld [vmem:[#allocation4 + $0x58] sm:$0xf]
      %v7757 = vld [vmem:[#allocation4 + $0x5c] sm:$0xf]
      %v7758 = vld [vmem:[#allocation4 + $0x60] sm:$0xf]
      %v7759 = vld [vmem:[#allocation4 + $0x64] sm:$0xf]
      %v7760 = vld [vmem:[#allocation4 + $0x68] sm:$0xf]
      %v7761 = vld [vmem:[#allocation4 + $0x6c] sm:$0xf]
      %v7762 = vld [vmem:[#allocation4 + $0x70] sm:$0xf]
      %v7763 = vld [vmem:[#allocation4 + $0x74] sm:$0xf]
      %v7764 = vld [vmem:[#allocation4 + $0x78] sm:$0x1]
      %s7765 = scalar_lea.vmem %s3, 32
      %v7766 = vld [vmem:[%s7765] sm:$0xf]
      %v7767 = vld [vmem:[%s7765 + $0x4] sm:$0xf]
      %v7768 = vld [vmem:[%s7765 + $0x8] sm:$0xf]
      %v7769 = vld [vmem:[%s7765 + $0xc] sm:$0xf]
      %v7799 = vunpack.c.l.b16 %v7736
      %v7800 = vunpack.c.l.b16 %v7737
      %v7801 = vunpack.c.l.b16 %v7738
      %v7802 = vunpack.c.l.b16 %v7739
      %v7803 = vunpack.c.l.b16 %v7740
      %v7804 = vunpack.c.l.b16 %v7741
      %v7805 = vunpack.c.l.b16 %v7742
      %v7806 = vunpack.c.l.b16 %v7743
      %v7807 = vunpack.c.l.b16 %v7744
      %v7808 = vunpack.c.l.b16 %v7745
      %v7809 = vunpack.c.l.b16 %v7746
      %v7810 = vunpack.c.l.b16 %v7747
      %v7811 = vunpack.c.l.b16 %v7748
      %v7812 = vunpack.c.l.b16 %v7749
      %v7813 = vunpack.c.l.b16 %v7750
      %v7814 = vunpack.c.l.b16 %v7751
      %v7815 = vunpack.c.l.b16 %v7752
      %v7816 = vunpack.c.l.b16 %v7753
      %v7817 = vunpack.c.l.b16 %v7754
      %v7818 = vunpack.c.l.b16 %v7755
      %v7819 = vunpack.c.l.b16 %v7756
      %v7820 = vunpack.c.l.b16 %v7757
      %v7821 = vunpack.c.l.b16 %v7758
      %v7822 = vunpack.c.l.b16 %v7759
      %v7823 = vunpack.c.l.b16 %v7760
      %v7824 = vunpack.c.l.b16 %v7761
      %v7825 = vunpack.c.l.b16 %v7762
      %v7826 = vunpack.c.l.b16 %v7763
      %v7827 = vunpack.c.l.b16 %v7764
      %v7828 = vpack.c.b16 %v7800, %v7799
      %v7829 = vpack.c.b16 %v7802, %v7801
      %v7830 = vpack.c.b16 %v7804, %v7803
      %v7831 = vpack.c.b16 %v7806, %v7805
      %v7832 = vpack.c.b16 %v7808, %v7807
      %v7833 = vpack.c.b16 %v7810, %v7809
      %v7834 = vpack.c.b16 %v7812, %v7811
      %v7835 = vpack.c.b16 %v7814, %v7813
      %v7836 = vpack.c.b16 %v7816, %v7815
      %v7837 = vpack.c.b16 %v7818, %v7817
      %v7838 = vpack.c.b16 %v7820, %v7819
      %v7839 = vpack.c.b16 %v7822, %v7821
      %v7840 = vpack.c.b16 %v7824, %v7823
      %v7841 = vpack.c.b16 %v7826, %v7825
      %v7842 = vpack.c.b16 %v7827, %v7827
      %vm7843 = vcmask 1044480
      %v7844 = vrot.slane %v7828, 3
      %v7845 = vrot.slane %v7829, 3
      %v7846 = vsel %vm7843, %v7844, %v7845
      %v7847 = vrot.slane %v7830, 3
      %v7848 = vsel %vm7843, %v7845, %v7847
      %v7849 = vrot.slane %v7831, 3
      %v7850 = vsel %vm7843, %v7847, %v7849
      %v7851 = vrot.slane %v7832, 3
      %v7852 = vsel %vm7843, %v7849, %v7851
      %v7853 = vrot.slane %v7833, 3
      %v7854 = vsel %vm7843, %v7851, %v7853
      %v7855 = vrot.slane %v7834, 3
      %v7856 = vsel %vm7843, %v7853, %v7855
      %v7857 = vrot.slane %v7835, 3
      %v7858 = vsel %vm7843, %v7855, %v7857
      %v7859 = vrot.slane %v7836, 3
      %v7860 = vsel %vm7843, %v7857, %v7859
      %v7861 = vrot.slane %v7837, 3
      %v7862 = vsel %vm7843, %v7859, %v7861
      %v7863 = vrot.slane %v7838, 3
      %v7864 = vsel %vm7843, %v7861, %v7863
      %v7865 = vrot.slane %v7839, 3
      %v7866 = vsel %vm7843, %v7863, %v7865
      %v7867 = vrot.slane %v7840, 3
      %v7868 = vsel %vm7843, %v7865, %v7867
      %v7869 = vrot.slane %v7841, 3
      %v7870 = vsel %vm7843, %v7867, %v7869
      %v7871 = vrot.slane %v7842, 3
      %v7872 = vsel %vm7843, %v7869, %v7871
      %v7877 = vunpack.c.l.b16 %v7766
      %v7878 = vunpack.c.l.b16 %v7767
      %v7879 = vunpack.c.l.b16 %v7768
      %v7880 = vunpack.c.l.b16 %v7769
      %v7881 = vpack.c.b16 %v7878, %v7877
      %v7882 = vpack.c.b16 %v7880, %v7879
      %v7886 = vsel %vm5639, %v7846, 0
      %v7889 = vsel %vm5639, %v7848, 0
      %v7892 = vsel %vm5639, %v7850, 0
      %v7895 = vsel %vm5639, %v7852, 0
      %v7898 = vsel %vm5639, %v7854, 0
      %v7901 = vsel %vm5639, %v7856, 0
      %v7904 = vsel %vm5639, %v7858, 0
      %v7907 = vsel %vm5639, %v7860, 0
      %v7910 = vsel %vm5639, %v7862, 0
      %v7913 = vsel %vm5639, %v7864, 0
      %v7916 = vsel %vm5639, %v7866, 0
      %v7919 = vsel %vm5639, %v7868, 0
      %v7922 = vsel %vm5639, %v7870, 0
      %v7925 = vsel %vm5639, %v7872, 0
      %7927 = vmatprep.subr.bf16.mxu0 0
      %7928 = vmatpush1.bf16.msra.mxu0 0
      %7929 = vmatprep.subr.bf16.mxu0 0
      %7930 = vmatpush1.bf16.msra.mxu0 0
      %7931 = vmatprep.subr.bf16.mxu0 0
      %7932 = vmatpush1.bf16.msra.mxu0 0
      %7933 = vmatprep.subr.bf16.mxu0 0
      %7934 = vmatpush1.bf16.msra.mxu0 0
      %7935 = vmatprep.subr.bf16.mxu0 0
      %7936 = vmatpush1.bf16.msra.mxu0 0
      %7937 = vmatprep.subr.bf16.mxu0 0
      %7938 = vmatpush1.bf16.msra.mxu0 0
      %7939 = vmatprep.subr.bf16.mxu0 0
      %7940 = vmatpush1.bf16.msra.mxu0 %v7882
      %7941 = vmatprep.subr.bf16.mxu0 0
      %7942 = vmatpush1.bf16.msra.mxu0 %v7881
      %7943 = vmatprep.subr.bf16.mxu0 0
      %7944 = vmatpush2.bf16.msra.mxu0 0
      %7945 = vmatprep.subr.bf16.mxu0 0
      %7946 = vmatpush2.bf16.msra.mxu0 0
      %7947 = vmatprep.subr.bf16.mxu0 0
      %7948 = vmatpush2.bf16.msra.mxu0 0
      %7949 = vmatprep.subr.bf16.mxu0 0
      %7950 = vmatpush2.bf16.msra.mxu0 0
      %7951 = vmatprep.subr.bf16.mxu0 0
      %7952 = vmatpush2.bf16.msra.mxu0 0
      %7953 = vmatprep.subr.bf16.mxu0 0
      %7954 = vmatpush2.bf16.msra.mxu0 0
      %7955 = vmatprep.subr.bf16.mxu0 0
      %7956 = vmatpush2.bf16.msra.mxu0 0
      %7957 = vmatprep.subr.bf16.mxu0 0
      %7958 = vmatpush2.bf16.msra.mxu0 0
      %7959 = vmatprep.mubr.bf16.mxu0 0
      %7960 = vmatmul.mubr.bf16.gmra.mxu0 %v7886
      %v7961 = vpop.f32.mrf.mxu0
      %v7962 = vadd.f32 0.0, %v7961
      %v7963 = vpop.f32.mrf.mxu0
      %v7964 = vpop.f32.mrf.mxu0
      %v7965 = vadd.f32 0.0, %v7964
      %v7966 = vpop.f32.mrf.mxu0
      %7967 = vmatprep.mubr.bf16.mxu0 0
      %7968 = vmatmul.mubr.bf16.gmra.mxu0 %v7889
      %v7969 = vpop.f32.mrf.mxu0
      %v7970 = vadd.f32 0.0, %v7969
      %v7971 = vpop.f32.mrf.mxu0
      %v7972 = vpop.f32.mrf.mxu0
      %v7973 = vadd.f32 0.0, %v7972
      %v7974 = vpop.f32.mrf.mxu0
      %7975 = vmatprep.mubr.bf16.mxu0 0
      %7976 = vmatmul.mubr.bf16.gmra.mxu0 %v7892
      %v7977 = vpop.f32.mrf.mxu0
      %v7978 = vadd.f32 0.0, %v7977
      %v7979 = vpop.f32.mrf.mxu0
      %v7980 = vpop.f32.mrf.mxu0
      %v7981 = vadd.f32 0.0, %v7980
      %v7982 = vpop.f32.mrf.mxu0
      %7983 = vmatprep.mubr.bf16.mxu0 0
      %7984 = vmatmul.mubr.bf16.gmra.mxu0 %v7895
      %v7985 = vpop.f32.mrf.mxu0
      %v7986 = vadd.f32 0.0, %v7985
      %v7987 = vpop.f32.mrf.mxu0
      %v7988 = vpop.f32.mrf.mxu0
      %v7989 = vadd.f32 0.0, %v7988
      %v7990 = vpop.f32.mrf.mxu0
      %7991 = vmatprep.mubr.bf16.mxu0 0
      %7992 = vmatmul.mubr.bf16.gmra.mxu0 %v7898
      %v7993 = vpop.f32.mrf.mxu0
      %v7994 = vadd.f32 0.0, %v7993
      %v7995 = vpop.f32.mrf.mxu0
      %v7996 = vpop.f32.mrf.mxu0
      %v7997 = vadd.f32 0.0, %v7996
      %v7998 = vpop.f32.mrf.mxu0
      %7999 = vmatprep.mubr.bf16.mxu0 0
      %8000 = vmatmul.mubr.bf16.gmra.mxu0 %v7901
      %v8001 = vpop.f32.mrf.mxu0
      %v8002 = vadd.f32 0.0, %v8001
      %v8003 = vpop.f32.mrf.mxu0
      %v8004 = vpop.f32.mrf.mxu0
      %v8005 = vadd.f32 0.0, %v8004
      %v8006 = vpop.f32.mrf.mxu0
      %8007 = vmatprep.mubr.bf16.mxu0 0
      %8008 = vmatmul.mubr.bf16.gmra.mxu0 %v7904
      %v8009 = vpop.f32.mrf.mxu0
      %v8010 = vadd.f32 0.0, %v8009
      %v8011 = vpop.f32.mrf.mxu0
      %v8012 = vpop.f32.mrf.mxu0
      %v8013 = vadd.f32 0.0, %v8012
      %v8014 = vpop.f32.mrf.mxu0
      %8015 = vmatprep.mubr.bf16.mxu0 0
      %8016 = vmatmul.mubr.bf16.gmra.mxu0 %v7907
      %v8017 = vpop.f32.mrf.mxu0
      %v8018 = vadd.f32 0.0, %v8017
      %v8019 = vpop.f32.mrf.mxu0
      %v8020 = vpop.f32.mrf.mxu0
      %v8021 = vadd.f32 0.0, %v8020
      %v8022 = vpop.f32.mrf.mxu0
      %8023 = vmatprep.mubr.bf16.mxu0 0
      %8024 = vmatmul.mubr.bf16.gmra.mxu0 %v7910
      %v8025 = vpop.f32.mrf.mxu0
      %v8026 = vadd.f32 0.0, %v8025
      %v8027 = vpop.f32.mrf.mxu0
      %v8028 = vpop.f32.mrf.mxu0
      %v8029 = vadd.f32 0.0, %v8028
      %v8030 = vpop.f32.mrf.mxu0
      %8031 = vmatprep.mubr.bf16.mxu0 0
      %8032 = vmatmul.mubr.bf16.gmra.mxu0 %v7913
      %v8033 = vpop.f32.mrf.mxu0
      %v8034 = vadd.f32 0.0, %v8033
      %v8035 = vpop.f32.mrf.mxu0
      %v8036 = vpop.f32.mrf.mxu0
      %v8037 = vadd.f32 0.0, %v8036
      %v8038 = vpop.f32.mrf.mxu0
      %8039 = vmatprep.mubr.bf16.mxu0 0
      %8040 = vmatmul.mubr.bf16.gmra.mxu0 %v7916
      %v8041 = vpop.f32.mrf.mxu0
      %v8042 = vadd.f32 0.0, %v8041
      %v8043 = vpop.f32.mrf.mxu0
      %v8044 = vpop.f32.mrf.mxu0
      %v8045 = vadd.f32 0.0, %v8044
      %v8046 = vpop.f32.mrf.mxu0
      %8047 = vmatprep.mubr.bf16.mxu0 0
      %8048 = vmatmul.mubr.bf16.gmra.mxu0 %v7919
      %v8049 = vpop.f32.mrf.mxu0
      %v8050 = vadd.f32 0.0, %v8049
      %v8051 = vpop.f32.mrf.mxu0
      %v8052 = vpop.f32.mrf.mxu0
      %v8053 = vadd.f32 0.0, %v8052
      %v8054 = vpop.f32.mrf.mxu0
      %8055 = vmatprep.mubr.bf16.mxu0 0
      %8056 = vmatmul.mubr.bf16.gmra.mxu0 %v7922
      %v8057 = vpop.f32.mrf.mxu0
      %v8058 = vadd.f32 0.0, %v8057
      %v8059 = vpop.f32.mrf.mxu0
      %v8060 = vpop.f32.mrf.mxu0
      %v8061 = vadd.f32 0.0, %v8060
      %v8062 = vpop.f32.mrf.mxu0
      %8063 = vmatprep.mubr.bf16.mxu0 0
      %8064 = vmatmul.mubr.bf16.gmra.mxu0 %v7925
      %v8065 = vpop.f32.mrf.mxu0
      %v8066 = vadd.f32 0.0, %v8065
      %v8067 = vpop.f32.mrf.mxu0
      %v8068 = vpop.f32.mrf.mxu0
      %v8069 = vadd.f32 0.0, %v8068
      %v8070 = vpop.f32.mrf.mxu0
      %8071 = vdwg.mxu0
      %v8072 = vld [vmem:[#allocation2] sm:$0xff]
      %v8073 = vld [vmem:[#allocation2 + $0x8] sm:$0xff]
      %v8074 = vld [vmem:[#allocation2 + $0x10] sm:$0xff]
      %v8075 = vld [vmem:[#allocation2 + $0x18] sm:$0xff]
      %v8076 = vld [vmem:[#allocation2 + $0x20] sm:$0xff]
      %v8077 = vld [vmem:[#allocation2 + $0x28] sm:$0xff]
      %v8078 = vld [vmem:[#allocation2 + $0x30] sm:$0xff]
      %v8079 = vld [vmem:[#allocation2 + $0x38] sm:$0xff]
      %v8080 = vld [vmem:[#allocation2 + $0x40] sm:$0xff]
      %v8081 = vld [vmem:[#allocation2 + $0x48] sm:$0xff]
      %v8082 = vld [vmem:[#allocation2 + $0x50] sm:$0xff]
      %v8083 = vld [vmem:[#allocation2 + $0x58] sm:$0xff]
      %v8084 = vld [vmem:[#allocation2 + $0x60] sm:$0xff]
      %v8085 = vld [vmem:[#allocation2 + $0x68] sm:$0xff]
      %v8086 = vld [vmem:[#allocation2 + $0x70] sm:$0xff]
      %v8087 = vld [vmem:[#allocation2 + $0x78] sm:$0xff]
      %v8088 = vld [vmem:[#allocation2 + $0x80] sm:$0xff]
      %v8089 = vld [vmem:[#allocation2 + $0x88] sm:$0xff]
      %v8090 = vld [vmem:[#allocation2 + $0x90] sm:$0xff]
      %v8091 = vld [vmem:[#allocation2 + $0x98] sm:$0xff]
      %v8092 = vld [vmem:[#allocation2 + $0xa0] sm:$0xff]
      %v8093 = vld [vmem:[#allocation2 + $0xa8] sm:$0xff]
      %v8094 = vld [vmem:[#allocation2 + $0xb0] sm:$0xff]
      %v8095 = vld [vmem:[#allocation2 + $0xb8] sm:$0xff]
      %v8096 = vld [vmem:[#allocation2 + $0xc0] sm:$0xff]
      %v8097 = vld [vmem:[#allocation2 + $0xc8] sm:$0xff]
      %v8098 = vld [vmem:[#allocation2 + $0xd0] sm:$0xff]
      %v8099 = vld [vmem:[#allocation2 + $0xd8] sm:$0xf]
      %v8100 = vadd.f32 %v8072, %v7962
      %v8101 = vadd.f32 %v8073, %v7965
      %v8102 = vadd.f32 %v8074, %v7970
      %v8103 = vadd.f32 %v8075, %v7973
      %v8104 = vadd.f32 %v8076, %v7978
      %v8105 = vadd.f32 %v8077, %v7981
      %v8106 = vadd.f32 %v8078, %v7986
      %v8107 = vadd.f32 %v8079, %v7989
      %v8108 = vadd.f32 %v8080, %v7994
      %v8109 = vadd.f32 %v8081, %v7997
      %v8110 = vadd.f32 %v8082, %v8002
      %v8111 = vadd.f32 %v8083, %v8005
      %v8112 = vadd.f32 %v8084, %v8010
      %v8113 = vadd.f32 %v8085, %v8013
      %v8114 = vadd.f32 %v8086, %v8018
      %v8115 = vadd.f32 %v8087, %v8021
      %v8116 = vadd.f32 %v8088, %v8026
      %v8117 = vadd.f32 %v8089, %v8029
      %v8118 = vadd.f32 %v8090, %v8034
      %v8119 = vadd.f32 %v8091, %v8037
      %v8120 = vadd.f32 %v8092, %v8042
      %v8121 = vadd.f32 %v8093, %v8045
      %v8122 = vadd.f32 %v8094, %v8050
      %v8123 = vadd.f32 %v8095, %v8053
      %v8124 = vadd.f32 %v8096, %v8058
      %v8125 = vadd.f32 %v8097, %v8061
      %v8126 = vadd.f32 %v8098, %v8066
      %v8127 = vadd.f32 %v8099, %v8069
      %8128 = vst.msk [vmem:[#allocation2] sm:$0xff] %vm1345, %v8100
      %8129 = vst.msk [vmem:[#allocation2 + $0x8] sm:$0xff] %vm1345, %v8101
      %8130 = vst.msk [vmem:[#allocation2 + $0x10] sm:$0xff] %vm1345, %v8102
      %8131 = vst.msk [vmem:[#allocation2 + $0x18] sm:$0xff] %vm1345, %v8103
      %8132 = vst.msk [vmem:[#allocation2 + $0x20] sm:$0xff] %vm1345, %v8104
      %8133 = vst.msk [vmem:[#allocation2 + $0x28] sm:$0xff] %vm1345, %v8105
      %8134 = vst.msk [vmem:[#allocation2 + $0x30] sm:$0xff] %vm1345, %v8106
      %8135 = vst.msk [vmem:[#allocation2 + $0x38] sm:$0xff] %vm1345, %v8107
      %8136 = vst.msk [vmem:[#allocation2 + $0x40] sm:$0xff] %vm1345, %v8108
      %8137 = vst.msk [vmem:[#allocation2 + $0x48] sm:$0xff] %vm1345, %v8109
      %8138 = vst.msk [vmem:[#allocation2 + $0x50] sm:$0xff] %vm1345, %v8110
      %8139 = vst.msk [vmem:[#allocation2 + $0x58] sm:$0xff] %vm1345, %v8111
      %8140 = vst.msk [vmem:[#allocation2 + $0x60] sm:$0xff] %vm1345, %v8112
      %8141 = vst.msk [vmem:[#allocation2 + $0x68] sm:$0xff] %vm1345, %v8113
      %8142 = vst.msk [vmem:[#allocation2 + $0x70] sm:$0xff] %vm1345, %v8114
      %8143 = vst.msk [vmem:[#allocation2 + $0x78] sm:$0xff] %vm1345, %v8115
      %8144 = vst.msk [vmem:[#allocation2 + $0x80] sm:$0xff] %vm1345, %v8116
      %8145 = vst.msk [vmem:[#allocation2 + $0x88] sm:$0xff] %vm1345, %v8117
      %8146 = vst.msk [vmem:[#allocation2 + $0x90] sm:$0xff] %vm1345, %v8118
      %8147 = vst.msk [vmem:[#allocation2 + $0x98] sm:$0xff] %vm1345, %v8119
      %8148 = vst.msk [vmem:[#allocation2 + $0xa0] sm:$0xff] %vm1345, %v8120
      %8149 = vst.msk [vmem:[#allocation2 + $0xa8] sm:$0xff] %vm1345, %v8121
      %8150 = vst.msk [vmem:[#allocation2 + $0xb0] sm:$0xff] %vm1345, %v8122
      %8151 = vst.msk [vmem:[#allocation2 + $0xb8] sm:$0xff] %vm1345, %v8123
      %8152 = vst.msk [vmem:[#allocation2 + $0xc0] sm:$0xff] %vm1345, %v8124
      %8153 = vst.msk [vmem:[#allocation2 + $0xc8] sm:$0xff] %vm1345, %v8125
      %8154 = vst.msk [vmem:[#allocation2 + $0xd0] sm:$0xff] %vm1345, %v8126
      %8155 = vst.msk [vmem:[#allocation2 + $0xd8] sm:$0xf] %vm7321, %v8127
      %v8156 = vld [vmem:[#allocation2] sm:$0xff]
      %v8157 = vld [vmem:[#allocation2 + $0x8] sm:$0xff]
      %v8158 = vld [vmem:[#allocation2 + $0x10] sm:$0xff]
      %v8159 = vld [vmem:[#allocation2 + $0x18] sm:$0xff]
      %v8160 = vld [vmem:[#allocation2 + $0x20] sm:$0xff]
      %v8161 = vld [vmem:[#allocation2 + $0x28] sm:$0xff]
      %v8162 = vld [vmem:[#allocation2 + $0x30] sm:$0xff]
      %v8163 = vld [vmem:[#allocation2 + $0x38] sm:$0xff]
      %v8164 = vld [vmem:[#allocation2 + $0x40] sm:$0xff]
      %v8165 = vld [vmem:[#allocation2 + $0x48] sm:$0xff]
      %v8166 = vld [vmem:[#allocation2 + $0x50] sm:$0xff]
      %v8167 = vld [vmem:[#allocation2 + $0x58] sm:$0xff]
      %v8168 = vld [vmem:[#allocation2 + $0x60] sm:$0xff]
      %v8169 = vld [vmem:[#allocation2 + $0x68] sm:$0xff]
      %v8170 = vld [vmem:[#allocation2 + $0x70] sm:$0xff]
      %v8171 = vld [vmem:[#allocation2 + $0x78] sm:$0xff]
      %v8172 = vld [vmem:[#allocation2 + $0x80] sm:$0xff]
      %v8173 = vld [vmem:[#allocation2 + $0x88] sm:$0xff]
      %v8174 = vld [vmem:[#allocation2 + $0x90] sm:$0xff]
      %v8175 = vld [vmem:[#allocation2 + $0x98] sm:$0xff]
      %v8176 = vld [vmem:[#allocation2 + $0xa0] sm:$0xff]
      %v8177 = vld [vmem:[#allocation2 + $0xa8] sm:$0xff]
      %v8178 = vld [vmem:[#allocation2 + $0xb0] sm:$0xff]
      %v8179 = vld [vmem:[#allocation2 + $0xb8] sm:$0xff]
      %v8180 = vld [vmem:[#allocation2 + $0xc0] sm:$0xff]
      %v8181 = vld [vmem:[#allocation2 + $0xc8] sm:$0xff]
      %v8182 = vld [vmem:[#allocation2 + $0xd0] sm:$0xff]
      %v8183 = vld [vmem:[#allocation2 + $0xd8] sm:$0x3]
      %v8184 = vld [vmem:[#allocation2 + $0x1] sm:$0xff]
      %v8185 = vld [vmem:[#allocation2 + $0x9] sm:$0xff]
      %v8186 = vld [vmem:[#allocation2 + $0x11] sm:$0xff]
      %v8187 = vld [vmem:[#allocation2 + $0x19] sm:$0xff]
      %v8188 = vld [vmem:[#allocation2 + $0x21] sm:$0xff]
      %v8189 = vld [vmem:[#allocation2 + $0x29] sm:$0xff]
      %v8190 = vld [vmem:[#allocation2 + $0x31] sm:$0xff]
      %v8191 = vld [vmem:[#allocation2 + $0x39] sm:$0xff]
      %v8192 = vld [vmem:[#allocation2 + $0x41] sm:$0xff]
      %v8193 = vld [vmem:[#allocation2 + $0x49] sm:$0xff]
      %v8194 = vld [vmem:[#allocation2 + $0x51] sm:$0xff]
      %v8195 = vld [vmem:[#allocation2 + $0x59] sm:$0xff]
      %v8196 = vld [vmem:[#allocation2 + $0x61] sm:$0xff]
      %v8197 = vld [vmem:[#allocation2 + $0x69] sm:$0xff]
      %v8198 = vld [vmem:[#allocation2 + $0x71] sm:$0xff]
      %v8199 = vld [vmem:[#allocation2 + $0x79] sm:$0xff]
      %v8200 = vld [vmem:[#allocation2 + $0x81] sm:$0xff]
      %v8201 = vld [vmem:[#allocation2 + $0x89] sm:$0xff]
      %v8202 = vld [vmem:[#allocation2 + $0x91] sm:$0xff]
      %v8203 = vld [vmem:[#allocation2 + $0x99] sm:$0xff]
      %v8204 = vld [vmem:[#allocation2 + $0xa1] sm:$0xff]
      %v8205 = vld [vmem:[#allocation2 + $0xa9] sm:$0xff]
      %v8206 = vld [vmem:[#allocation2 + $0xb1] sm:$0xff]
      %v8207 = vld [vmem:[#allocation2 + $0xb9] sm:$0xff]
      %v8208 = vld [vmem:[#allocation2 + $0xc1] sm:$0xff]
      %v8209 = vld [vmem:[#allocation2 + $0xc9] sm:$0xff]
      %v8210 = vld [vmem:[#allocation2 + $0xd1] sm:$0xff]
      %v8211 = vld [vmem:[#allocation2 + $0xd9] sm:$0x3]
      %8240 = vrot.lane.b32.xlu0 %v8184, 96
      %v8241 = vpop.permute.xlu0 %8240
      %8242 = vrot.lane.b32.xlu0 %v8185, 96
      %v8243 = vpop.permute.xlu0 %8242
      %8244 = vrot.lane.b32.xlu0 %v8186, 96
      %v8245 = vpop.permute.xlu0 %8244
      %8246 = vrot.lane.b32.xlu0 %v8187, 96
      %v8247 = vpop.permute.xlu0 %8246
      %8248 = vrot.lane.b32.xlu0 %v8188, 96
      %v8249 = vpop.permute.xlu0 %8248
      %8250 = vrot.lane.b32.xlu0 %v8189, 96
      %v8251 = vpop.permute.xlu0 %8250
      %8252 = vrot.lane.b32.xlu0 %v8190, 96
      %v8253 = vpop.permute.xlu0 %8252
      %8254 = vrot.lane.b32.xlu0 %v8191, 96
      %v8255 = vpop.permute.xlu0 %8254
      %8256 = vrot.lane.b32.xlu0 %v8192, 96
      %v8257 = vpop.permute.xlu0 %8256
      %8258 = vrot.lane.b32.xlu0 %v8193, 96
      %v8259 = vpop.permute.xlu0 %8258
      %8260 = vrot.lane.b32.xlu0 %v8194, 96
      %v8261 = vpop.permute.xlu0 %8260
      %8262 = vrot.lane.b32.xlu0 %v8195, 96
      %v8263 = vpop.permute.xlu0 %8262
      %8264 = vrot.lane.b32.xlu0 %v8196, 96
      %v8265 = vpop.permute.xlu0 %8264
      %8266 = vrot.lane.b32.xlu0 %v8197, 96
      %v8267 = vpop.permute.xlu0 %8266
      %8268 = vrot.lane.b32.xlu0 %v8198, 96
      %v8269 = vpop.permute.xlu0 %8268
      %8270 = vrot.lane.b32.xlu0 %v8199, 96
      %v8271 = vpop.permute.xlu0 %8270
      %8272 = vrot.lane.b32.xlu0 %v8200, 96
      %v8273 = vpop.permute.xlu0 %8272
      %8274 = vrot.lane.b32.xlu0 %v8201, 96
      %v8275 = vpop.permute.xlu0 %8274
      %8276 = vrot.lane.b32.xlu0 %v8202, 96
      %v8277 = vpop.permute.xlu0 %8276
      %8278 = vrot.lane.b32.xlu0 %v8203, 96
      %v8279 = vpop.permute.xlu0 %8278
      %8280 = vrot.lane.b32.xlu0 %v8204, 96
      %v8281 = vpop.permute.xlu0 %8280
      %8282 = vrot.lane.b32.xlu0 %v8205, 96
      %v8283 = vpop.permute.xlu0 %8282
      %8284 = vrot.lane.b32.xlu0 %v8206, 96
      %v8285 = vpop.permute.xlu0 %8284
      %8286 = vrot.lane.b32.xlu0 %v8207, 96
      %v8287 = vpop.permute.xlu0 %8286
      %8288 = vrot.lane.b32.xlu0 %v8208, 96
      %v8289 = vpop.permute.xlu0 %8288
      %8290 = vrot.lane.b32.xlu0 %v8209, 96
      %v8291 = vpop.permute.xlu0 %8290
      %8292 = vrot.lane.b32.xlu0 %v8210, 96
      %v8293 = vpop.permute.xlu0 %8292
      %8294 = vrot.lane.b32.xlu0 %v8211, 96
      %v8295 = vpop.permute.xlu0 %8294
      %v8324 = vadd.f32 %v8156, %v8241
      %v8325 = vadd.f32 %v8157, %v8243
      %v8326 = vadd.f32 %v8158, %v8245
      %v8327 = vadd.f32 %v8159, %v8247
      %v8328 = vadd.f32 %v8160, %v8249
      %v8329 = vadd.f32 %v8161, %v8251
      %v8330 = vadd.f32 %v8162, %v8253
      %v8331 = vadd.f32 %v8163, %v8255
      %v8332 = vadd.f32 %v8164, %v8257
      %v8333 = vadd.f32 %v8165, %v8259
      %v8334 = vadd.f32 %v8166, %v8261
      %v8335 = vadd.f32 %v8167, %v8263
      %v8336 = vadd.f32 %v8168, %v8265
      %v8337 = vadd.f32 %v8169, %v8267
      %v8338 = vadd.f32 %v8170, %v8269
      %v8339 = vadd.f32 %v8171, %v8271
      %v8340 = vadd.f32 %v8172, %v8273
      %v8341 = vadd.f32 %v8173, %v8275
      %v8342 = vadd.f32 %v8174, %v8277
      %v8343 = vadd.f32 %v8175, %v8279
      %v8344 = vadd.f32 %v8176, %v8281
      %v8345 = vadd.f32 %v8177, %v8283
      %v8346 = vadd.f32 %v8178, %v8285
      %v8347 = vadd.f32 %v8179, %v8287
      %v8348 = vadd.f32 %v8180, %v8289
      %v8349 = vadd.f32 %v8181, %v8291
      %v8350 = vadd.f32 %v8182, %v8293
      %v8351 = vadd.f32 %v8183, %v8295
      %v8352 = vld [vmem:[#allocation2 + $0x2] sm:$0xff]
      %v8353 = vld [vmem:[#allocation2 + $0xa] sm:$0xff]
      %v8354 = vld [vmem:[#allocation2 + $0x12] sm:$0xff]
      %v8355 = vld [vmem:[#allocation2 + $0x1a] sm:$0xff]
      %v8356 = vld [vmem:[#allocation2 + $0x22] sm:$0xff]
      %v8357 = vld [vmem:[#allocation2 + $0x2a] sm:$0xff]
      %v8358 = vld [vmem:[#allocation2 + $0x32] sm:$0xff]
      %v8359 = vld [vmem:[#allocation2 + $0x3a] sm:$0xff]
      %v8360 = vld [vmem:[#allocation2 + $0x42] sm:$0xff]
      %v8361 = vld [vmem:[#allocation2 + $0x4a] sm:$0xff]
      %v8362 = vld [vmem:[#allocation2 + $0x52] sm:$0xff]
      %v8363 = vld [vmem:[#allocation2 + $0x5a] sm:$0xff]
      %v8364 = vld [vmem:[#allocation2 + $0x62] sm:$0xff]
      %v8365 = vld [vmem:[#allocation2 + $0x6a] sm:$0xff]
      %v8366 = vld [vmem:[#allocation2 + $0x72] sm:$0xff]
      %v8367 = vld [vmem:[#allocation2 + $0x7a] sm:$0xff]
      %v8368 = vld [vmem:[#allocation2 + $0x82] sm:$0xff]
      %v8369 = vld [vmem:[#allocation2 + $0x8a] sm:$0xff]
      %v8370 = vld [vmem:[#allocation2 + $0x92] sm:$0xff]
      %v8371 = vld [vmem:[#allocation2 + $0x9a] sm:$0xff]
      %v8372 = vld [vmem:[#allocation2 + $0xa2] sm:$0xff]
      %v8373 = vld [vmem:[#allocation2 + $0xaa] sm:$0xff]
      %v8374 = vld [vmem:[#allocation2 + $0xb2] sm:$0xff]
      %v8375 = vld [vmem:[#allocation2 + $0xba] sm:$0xff]
      %v8376 = vld [vmem:[#allocation2 + $0xc2] sm:$0xff]
      %v8377 = vld [vmem:[#allocation2 + $0xca] sm:$0xff]
      %v8378 = vld [vmem:[#allocation2 + $0xd2] sm:$0xff]
      %v8379 = vld [vmem:[#allocation2 + $0xda] sm:$0x3]
      %8408 = vrot.lane.b32.xlu0 %v8352, 64
      %v8409 = vpop.permute.xlu0 %8408
      %8410 = vrot.lane.b32.xlu0 %v8353, 64
      %v8411 = vpop.permute.xlu0 %8410
      %8412 = vrot.lane.b32.xlu0 %v8354, 64
      %v8413 = vpop.permute.xlu0 %8412
      %8414 = vrot.lane.b32.xlu0 %v8355, 64
      %v8415 = vpop.permute.xlu0 %8414
      %8416 = vrot.lane.b32.xlu0 %v8356, 64
      %v8417 = vpop.permute.xlu0 %8416
      %8418 = vrot.lane.b32.xlu0 %v8357, 64
      %v8419 = vpop.permute.xlu0 %8418
      %8420 = vrot.lane.b32.xlu0 %v8358, 64
      %v8421 = vpop.permute.xlu0 %8420
      %8422 = vrot.lane.b32.xlu0 %v8359, 64
      %v8423 = vpop.permute.xlu0 %8422
      %8424 = vrot.lane.b32.xlu0 %v8360, 64
      %v8425 = vpop.permute.xlu0 %8424
      %8426 = vrot.lane.b32.xlu0 %v8361, 64
      %v8427 = vpop.permute.xlu0 %8426
      %8428 = vrot.lane.b32.xlu0 %v8362, 64
      %v8429 = vpop.permute.xlu0 %8428
      %8430 = vrot.lane.b32.xlu0 %v8363, 64
      %v8431 = vpop.permute.xlu0 %8430
      %8432 = vrot.lane.b32.xlu0 %v8364, 64
      %v8433 = vpop.permute.xlu0 %8432
      %8434 = vrot.lane.b32.xlu0 %v8365, 64
      %v8435 = vpop.permute.xlu0 %8434
      %8436 = vrot.lane.b32.xlu0 %v8366, 64
      %v8437 = vpop.permute.xlu0 %8436
      %8438 = vrot.lane.b32.xlu0 %v8367, 64
      %v8439 = vpop.permute.xlu0 %8438
      %8440 = vrot.lane.b32.xlu0 %v8368, 64
      %v8441 = vpop.permute.xlu0 %8440
      %8442 = vrot.lane.b32.xlu0 %v8369, 64
      %v8443 = vpop.permute.xlu0 %8442
      %8444 = vrot.lane.b32.xlu0 %v8370, 64
      %v8445 = vpop.permute.xlu0 %8444
      %8446 = vrot.lane.b32.xlu0 %v8371, 64
      %v8447 = vpop.permute.xlu0 %8446
      %8448 = vrot.lane.b32.xlu0 %v8372, 64
      %v8449 = vpop.permute.xlu0 %8448
      %8450 = vrot.lane.b32.xlu0 %v8373, 64
      %v8451 = vpop.permute.xlu0 %8450
      %8452 = vrot.lane.b32.xlu0 %v8374, 64
      %v8453 = vpop.permute.xlu0 %8452
      %8454 = vrot.lane.b32.xlu0 %v8375, 64
      %v8455 = vpop.permute.xlu0 %8454
      %8456 = vrot.lane.b32.xlu0 %v8376, 64
      %v8457 = vpop.permute.xlu0 %8456
      %8458 = vrot.lane.b32.xlu0 %v8377, 64
      %v8459 = vpop.permute.xlu0 %8458
      %8460 = vrot.lane.b32.xlu0 %v8378, 64
      %v8461 = vpop.permute.xlu0 %8460
      %8462 = vrot.lane.b32.xlu0 %v8379, 64
      %v8463 = vpop.permute.xlu0 %8462
      %v8492 = vadd.f32 %v8324, %v8409
      %v8493 = vadd.f32 %v8325, %v8411
      %v8494 = vadd.f32 %v8326, %v8413
      %v8495 = vadd.f32 %v8327, %v8415
      %v8496 = vadd.f32 %v8328, %v8417
      %v8497 = vadd.f32 %v8329, %v8419
      %v8498 = vadd.f32 %v8330, %v8421
      %v8499 = vadd.f32 %v8331, %v8423
      %v8500 = vadd.f32 %v8332, %v8425
      %v8501 = vadd.f32 %v8333, %v8427
      %v8502 = vadd.f32 %v8334, %v8429
      %v8503 = vadd.f32 %v8335, %v8431
      %v8504 = vadd.f32 %v8336, %v8433
      %v8505 = vadd.f32 %v8337, %v8435
      %v8506 = vadd.f32 %v8338, %v8437
      %v8507 = vadd.f32 %v8339, %v8439
      %v8508 = vadd.f32 %v8340, %v8441
      %v8509 = vadd.f32 %v8341, %v8443
      %v8510 = vadd.f32 %v8342, %v8445
      %v8511 = vadd.f32 %v8343, %v8447
      %v8512 = vadd.f32 %v8344, %v8449
      %v8513 = vadd.f32 %v8345, %v8451
      %v8514 = vadd.f32 %v8346, %v8453
      %v8515 = vadd.f32 %v8347, %v8455
      %v8516 = vadd.f32 %v8348, %v8457
      %v8517 = vadd.f32 %v8349, %v8459
      %v8518 = vadd.f32 %v8350, %v8461
      %v8519 = vadd.f32 %v8351, %v8463
      %8520 = vst.msk [vmem:[#allocation3] sm:$0xff] %vm5639, %v8492
      %8521 = vst.msk [vmem:[#allocation3 + $0x8] sm:$0xff] %vm5639, %v8493
      %8522 = vst.msk [vmem:[#allocation3 + $0x10] sm:$0xff] %vm5639, %v8494
      %8523 = vst.msk [vmem:[#allocation3 + $0x18] sm:$0xff] %vm5639, %v8495
      %8524 = vst.msk [vmem:[#allocation3 + $0x20] sm:$0xff] %vm5639, %v8496
      %8525 = vst.msk [vmem:[#allocation3 + $0x28] sm:$0xff] %vm5639, %v8497
      %8526 = vst.msk [vmem:[#allocation3 + $0x30] sm:$0xff] %vm5639, %v8498
      %8527 = vst.msk [vmem:[#allocation3 + $0x38] sm:$0xff] %vm5639, %v8499
      %8528 = vst.msk [vmem:[#allocation3 + $0x40] sm:$0xff] %vm5639, %v8500
      %8529 = vst.msk [vmem:[#allocation3 + $0x48] sm:$0xff] %vm5639, %v8501
      %8530 = vst.msk [vmem:[#allocation3 + $0x50] sm:$0xff] %vm5639, %v8502
      %8531 = vst.msk [vmem:[#allocation3 + $0x58] sm:$0xff] %vm5639, %v8503
      %8532 = vst.msk [vmem:[#allocation3 + $0x60] sm:$0xff] %vm5639, %v8504
      %8533 = vst.msk [vmem:[#allocation3 + $0x68] sm:$0xff] %vm5639, %v8505
      %8534 = vst.msk [vmem:[#allocation3 + $0x70] sm:$0xff] %vm5639, %v8506
      %8535 = vst.msk [vmem:[#allocation3 + $0x78] sm:$0xff] %vm5639, %v8507
      %8536 = vst.msk [vmem:[#allocation3 + $0x80] sm:$0xff] %vm5639, %v8508
      %8537 = vst.msk [vmem:[#allocation3 + $0x88] sm:$0xff] %vm5639, %v8509
      %8538 = vst.msk [vmem:[#allocation3 + $0x90] sm:$0xff] %vm5639, %v8510
      %8539 = vst.msk [vmem:[#allocation3 + $0x98] sm:$0xff] %vm5639, %v8511
      %8540 = vst.msk [vmem:[#allocation3 + $0xa0] sm:$0xff] %vm5639, %v8512
      %8541 = vst.msk [vmem:[#allocation3 + $0xa8] sm:$0xff] %vm5639, %v8513
      %8542 = vst.msk [vmem:[#allocation3 + $0xb0] sm:$0xff] %vm5639, %v8514
      %8543 = vst.msk [vmem:[#allocation3 + $0xb8] sm:$0xff] %vm5639, %v8515
      %8544 = vst.msk [vmem:[#allocation3 + $0xc0] sm:$0xff] %vm5639, %v8516
      %8545 = vst.msk [vmem:[#allocation3 + $0xc8] sm:$0xff] %vm5639, %v8517
      %8546 = vst.msk [vmem:[#allocation3 + $0xd0] sm:$0xff] %vm5639, %v8518
      %8547 = vst.msk [vmem:[#allocation3 + $0xd8] sm:$0x3] %vm324, %v8519
      %v8548 = vld [vmem:[%s5 + $0x1] sm:$0x1]
      %v8549 = vld [vmem:[#allocation3] ss:$2 sm:$0xff]
      %v8550 = vld [vmem:[%s5748] ss:$2 sm:$0x3]
      %v8551 = vlaneseq
      %v8552 = vshrl.u32 %v8551, 7
      %v8553 = vsub.s32 0, %v8552
      %v8554 = vrot.slane %v8548, %v8553
      %v8555 = vadd.f32 %v8549, %v8554
      %v8556 = vadd.f32 %v8550, %v8554
      %v8557 = vmax.f32 %v8555, 0.0
      %v8558 = vmax.f32 %v8556, 0.0
      %v8559 = vpack.c.bf16 %v8558, %v8557
      %v8561 = vunpack.c.l.b16 %v8559
      %v8562 = vunpack.c.h.b16 %v8559
      %v8563 = vpack.c.b16 %v8561, %v8561
      %v8564 = vpack.c.b16 %v8562, %v8562
      %v8566 = vshrl.u32 %v8563, 16
      %v8568 = vrot.slane %v8566, 7
      %v8569 = vshll.u32 %v8563, 16
      %v8571 = vor.u32 %v8568, %v8569
      %v8572 = vrot.slane %v8568, 4
      %v8574 = vshrl.u32 %v8564, 16
      %v8576 = vrot.slane %v8574, 7
      %v8577 = vshll.u32 %v8564, 16
      %v8579 = vor.u32 %v8576, %v8577
      %v8580 = vsel %vm5912, %v8572, %v8579
      %v8583 = vld [vmem:[#allocation5 + $0x24] sm:$0xf]
      %v8584 = vsel %vm5942, %v8571, %v8583
      %8585 = vst [vmem:[#allocation5 + $0x24] sm:$0xf] %v8584
      %v8586 = vld [vmem:[#allocation5 + $0x28] sm:$0x3]
      %v8587 = vsel %vm5885, %v8580, %v8586
      %8588 = vst [vmem:[#allocation5 + $0x28] sm:$0x3] %v8587
      %s8589 = scalar_lea.vmem [#allocation3], 22
      %v8590 = vld [vmem:[%s8589] ss:$2 sm:$0xff]
      %s8591 = scalar_lea.vmem [#allocation3], 38
      %v8592 = vld [vmem:[%s8591] ss:$2 sm:$0x3]
      %v8593 = vadd.f32 %v8590, %v8554
      %v8594 = vadd.f32 %v8592, %v8554
      %v8595 = vmax.f32 %v8593, 0.0
      %v8596 = vmax.f32 %v8594, 0.0
      %v8597 = vpack.c.bf16 %v8596, %v8595
      %v8599 = vunpack.c.l.b16 %v8597
      %v8600 = vunpack.c.h.b16 %v8597
      %v8601 = vpack.c.b16 %v8599, %v8599
      %v8602 = vpack.c.b16 %v8600, %v8600
      %v8604 = vshrl.u32 %v8601, 16
      %v8606 = vrot.slane %v8604, 5
      %v8607 = vshll.u32 %v8601, 16
      %v8609 = vrot.slane %v8607, 6
      %v8610 = vor.u32 %v8606, %v8609
      %v8611 = vrot.slane %v8610, 4
      %v8613 = vshrl.u32 %v8602, 16
      %v8615 = vrot.slane %v8613, 5
      %v8616 = vshll.u32 %v8602, 16
      %v8618 = vrot.slane %v8616, 6
      %v8619 = vor.u32 %v8615, %v8618
      %v8620 = vsel %vm5976, %v8611, %v8619
      %v8623 = vld [vmem:[#allocation5 + $0x4] sm:$0xc]
      %v8624 = vsel %vm6012, %v8610, %v8623
      %8625 = vst [vmem:[#allocation5 + $0x4] sm:$0xc] %v8624
      %v8626 = vld [vmem:[#allocation5 + $0x8] sm:$0xf]
      %v8627 = vsel %vm5815, %v8620, %v8626
      %8628 = vst [vmem:[#allocation5 + $0x8] sm:$0xf] %v8627
      %s8629 = scalar_lea.vmem [#allocation3], 44
      %v8630 = vld [vmem:[%s8629] ss:$2 sm:$0xff]
      %s8631 = scalar_lea.vmem [#allocation3], 60
      %v8632 = vld [vmem:[%s8631] ss:$2 sm:$0x3]
      %v8633 = vadd.f32 %v8630, %v8554
      %v8634 = vadd.f32 %v8632, %v8554
      %v8635 = vmax.f32 %v8633, 0.0
      %v8636 = vmax.f32 %v8634, 0.0
      %v8637 = vpack.c.bf16 %v8636, %v8635
      %v8639 = vunpack.c.l.b16 %v8637
      %v8640 = vunpack.c.h.b16 %v8637
      %v8641 = vpack.c.b16 %v8639, %v8639
      %v8642 = vpack.c.b16 %v8640, %v8640
      %v8644 = vshrl.u32 %v8641, 16
      %v8646 = vrot.slane %v8644, 5
      %v8647 = vshll.u32 %v8641, 16
      %v8649 = vrot.slane %v8647, 6
      %v8650 = vor.u32 %v8646, %v8649
      %v8651 = vrot.slane %v8650, 4
      %v8653 = vshrl.u32 %v8642, 16
      %v8655 = vrot.slane %v8653, 5
      %v8656 = vshll.u32 %v8642, 16
      %v8658 = vrot.slane %v8656, 6
      %v8659 = vor.u32 %v8655, %v8658
      %v8660 = vsel %vm5976, %v8651, %v8659
      %v8663 = vld [vmem:[#allocation5 + $0x28] sm:$0xc]
      %v8664 = vsel %vm6012, %v8650, %v8663
      %8665 = vst [vmem:[#allocation5 + $0x28] sm:$0xc] %v8664
      %v8666 = vld [vmem:[#allocation5 + $0x2c] sm:$0xf]
      %v8667 = vsel %vm5815, %v8660, %v8666
      %8668 = vst [vmem:[#allocation5 + $0x2c] sm:$0xf] %v8667
      %s8669 = scalar_lea.vmem [#allocation3], 66
      %v8670 = vld [vmem:[%s8669] ss:$2 sm:$0xff]
      %s8671 = scalar_lea.vmem [#allocation3], 82
      %v8672 = vld [vmem:[%s8671] ss:$2 sm:$0x3]
      %v8673 = vadd.f32 %v8670, %v8554
      %v8674 = vadd.f32 %v8672, %v8554
      %v8675 = vmax.f32 %v8673, 0.0
      %v8676 = vmax.f32 %v8674, 0.0
      %v8677 = vpack.c.bf16 %v8676, %v8675
      %v8679 = vunpack.c.l.b16 %v8677
      %v8680 = vunpack.c.h.b16 %v8677
      %v8681 = vpack.c.b16 %v8679, %v8679
      %v8682 = vpack.c.b16 %v8680, %v8680
      %v8684 = vshrl.u32 %v8681, 16
      %v8686 = vrot.slane %v8684, 7
      %v8687 = vshll.u32 %v8681, 16
      %v8689 = vor.u32 %v8686, %v8687
      %v8690 = vrot.slane %v8686, 4
      %v8692 = vshrl.u32 %v8682, 16
      %v8694 = vrot.slane %v8692, 7
      %v8695 = vshll.u32 %v8682, 16
      %v8697 = vor.u32 %v8694, %v8695
      %v8698 = vsel %vm5912, %v8690, %v8697
      %v8701 = vld [vmem:[#allocation5 + $0xc] sm:$0xf]
      %v8702 = vsel %vm5942, %v8689, %v8701
      %8703 = vst [vmem:[#allocation5 + $0xc] sm:$0xf] %v8702
      %v8704 = vld [vmem:[#allocation5 + $0x10] sm:$0x3]
      %v8705 = vsel %vm5885, %v8698, %v8704
      %8706 = vst [vmem:[#allocation5 + $0x10] sm:$0x3] %v8705
      %s8707 = scalar_lea.vmem [#allocation3], 88
      %v8708 = vld [vmem:[%s8707] ss:$2 sm:$0xff]
      %s8709 = scalar_lea.vmem [#allocation3], 104
      %v8710 = vld [vmem:[%s8709] ss:$2 sm:$0x3]
      %v8711 = vadd.f32 %v8708, %v8554
      %v8712 = vadd.f32 %v8710, %v8554
      %v8713 = vmax.f32 %v8711, 0.0
      %v8714 = vmax.f32 %v8712, 0.0
      %v8715 = vpack.c.bf16 %v8714, %v8713
      %v8717 = vunpack.c.l.b16 %v8715
      %v8718 = vunpack.c.h.b16 %v8715
      %v8719 = vpack.c.b16 %v8717, %v8717
      %v8720 = vpack.c.b16 %v8718, %v8718
      %v8722 = vshrl.u32 %v8719, 16
      %v8724 = vrot.slane %v8722, 7
      %v8725 = vshll.u32 %v8719, 16
      %v8727 = vor.u32 %v8724, %v8725
      %v8728 = vrot.slane %v8724, 4
      %v8730 = vshrl.u32 %v8720, 16
      %v8732 = vrot.slane %v8730, 7
      %v8733 = vshll.u32 %v8720, 16
      %v8735 = vor.u32 %v8732, %v8733
      %v8736 = vsel %vm5912, %v8728, %v8735
      %v8739 = vld [vmem:[#allocation5 + $0x30] sm:$0xf]
      %v8740 = vsel %vm5942, %v8727, %v8739
      %8741 = vst [vmem:[#allocation5 + $0x30] sm:$0xf] %v8740
      %v8742 = vld [vmem:[#allocation5 + $0x34] sm:$0x3]
      %v8743 = vsel %vm5885, %v8736, %v8742
      %8744 = vst [vmem:[#allocation5 + $0x34] sm:$0x3] %v8743
      %s8745 = scalar_lea.vmem [#allocation3], 110
      %v8746 = vld [vmem:[%s8745] ss:$2 sm:$0xff]
      %v8747 = vld [vmem:[%s5953] ss:$2 sm:$0x3]
      %v8748 = vadd.f32 %v8746, %v8554
      %v8749 = vadd.f32 %v8747, %v8554
      %v8750 = vmax.f32 %v8748, 0.0
      %v8751 = vmax.f32 %v8749, 0.0
      %v8752 = vpack.c.bf16 %v8751, %v8750
      %v8754 = vunpack.c.l.b16 %v8752
      %v8755 = vunpack.c.h.b16 %v8752
      %v8756 = vpack.c.b16 %v8754, %v8754
      %v8757 = vpack.c.b16 %v8755, %v8755
      %v8759 = vshrl.u32 %v8756, 16
      %v8761 = vrot.slane %v8759, 5
      %v8762 = vshll.u32 %v8756, 16
      %v8764 = vrot.slane %v8762, 6
      %v8765 = vor.u32 %v8761, %v8764
      %v8766 = vrot.slane %v8765, 4
      %v8768 = vshrl.u32 %v8757, 16
      %v8770 = vrot.slane %v8768, 5
      %v8771 = vshll.u32 %v8757, 16
      %v8773 = vrot.slane %v8771, 6
      %v8774 = vor.u32 %v8770, %v8773
      %v8775 = vsel %vm5976, %v8766, %v8774
      %v8778 = vld [vmem:[#allocation5 + $0x10] sm:$0xc]
      %v8779 = vsel %vm6012, %v8765, %v8778
      %8780 = vst [vmem:[#allocation5 + $0x10] sm:$0xc] %v8779
      %v8781 = vld [vmem:[#allocation5 + $0x14] sm:$0xf]
      %v8782 = vsel %vm5815, %v8775, %v8781
      %8783 = vst [vmem:[#allocation5 + $0x14] sm:$0xf] %v8782
      %s8784 = scalar_lea.vmem [#allocation3], 132
      %v8785 = vld [vmem:[%s8784] ss:$2 sm:$0xff]
      %s8786 = scalar_lea.vmem [#allocation3], 148
      %v8787 = vld [vmem:[%s8786] ss:$2 sm:$0x3]
      %v8788 = vadd.f32 %v8785, %v8554
      %v8789 = vadd.f32 %v8787, %v8554
      %v8790 = vmax.f32 %v8788, 0.0
      %v8791 = vmax.f32 %v8789, 0.0
      %v8792 = vpack.c.bf16 %v8791, %v8790
      %v8794 = vunpack.c.l.b16 %v8792
      %v8795 = vunpack.c.h.b16 %v8792
      %v8796 = vpack.c.b16 %v8794, %v8794
      %v8797 = vpack.c.b16 %v8795, %v8795
      %v8799 = vshrl.u32 %v8796, 16
      %v8801 = vrot.slane %v8799, 5
      %v8802 = vshll.u32 %v8796, 16
      %v8804 = vrot.slane %v8802, 6
      %v8805 = vor.u32 %v8801, %v8804
      %v8806 = vrot.slane %v8805, 4
      %v8808 = vshrl.u32 %v8797, 16
      %v8810 = vrot.slane %v8808, 5
      %v8811 = vshll.u32 %v8797, 16
      %v8813 = vrot.slane %v8811, 6
      %v8814 = vor.u32 %v8810, %v8813
      %v8815 = vsel %vm5976, %v8806, %v8814
      %v8818 = vld [vmem:[#allocation5 + $0x34] sm:$0xc]
      %v8819 = vsel %vm6012, %v8805, %v8818
      %8820 = vst [vmem:[#allocation5 + $0x34] sm:$0xc] %v8819
      %v8821 = vld [vmem:[#allocation5 + $0x38] sm:$0xf]
      %v8822 = vsel %vm5815, %v8815, %v8821
      %8823 = vst [vmem:[#allocation5 + $0x38] sm:$0xf] %v8822
      %s8824 = scalar_lea.vmem [#allocation3], 154
      %v8825 = vld [vmem:[%s8824] ss:$2 sm:$0xff]
      %s8826 = scalar_lea.vmem [#allocation3], 170
      %v8827 = vld [vmem:[%s8826] ss:$2 sm:$0x3]
      %v8828 = vadd.f32 %v8825, %v8554
      %v8829 = vadd.f32 %v8827, %v8554
      %v8830 = vmax.f32 %v8828, 0.0
      %v8831 = vmax.f32 %v8829, 0.0
      %v8832 = vpack.c.bf16 %v8831, %v8830
      %v8834 = vunpack.c.l.b16 %v8832
      %v8835 = vunpack.c.h.b16 %v8832
      %v8836 = vpack.c.b16 %v8834, %v8834
      %v8837 = vpack.c.b16 %v8835, %v8835
      %v8839 = vshrl.u32 %v8836, 16
      %v8841 = vrot.slane %v8839, 7
      %v8842 = vshll.u32 %v8836, 16
      %v8844 = vor.u32 %v8841, %v8842
      %v8845 = vrot.slane %v8841, 4
      %v8847 = vshrl.u32 %v8837, 16
      %v8849 = vrot.slane %v8847, 7
      %v8850 = vshll.u32 %v8837, 16
      %v8852 = vor.u32 %v8849, %v8850
      %v8853 = vsel %vm5912, %v8845, %v8852
      %v8856 = vld [vmem:[#allocation5 + $0x18] sm:$0xf]
      %v8857 = vsel %vm5942, %v8844, %v8856
      %8858 = vst [vmem:[#allocation5 + $0x18] sm:$0xf] %v8857
      %v8859 = vld [vmem:[#allocation5 + $0x1c] sm:$0x3]
      %v8860 = vsel %vm5885, %v8853, %v8859
      %8861 = vst [vmem:[#allocation5 + $0x1c] sm:$0x3] %v8860
      %s8862 = scalar_lea.vmem [#allocation3], 176
      %v8863 = vld [vmem:[%s8862] ss:$2 sm:$0xff]
      %s8864 = scalar_lea.vmem [#allocation3], 192
      %v8865 = vld [vmem:[%s8864] ss:$2 sm:$0x3]
      %v8866 = vadd.f32 %v8863, %v8554
      %v8867 = vadd.f32 %v8865, %v8554
      %v8868 = vmax.f32 %v8866, 0.0
      %v8869 = vmax.f32 %v8867, 0.0
      %v8870 = vpack.c.bf16 %v8869, %v8868
      %v8872 = vunpack.c.l.b16 %v8870
      %v8873 = vunpack.c.h.b16 %v8870
      %v8874 = vpack.c.b16 %v8872, %v8872
      %v8875 = vpack.c.b16 %v8873, %v8873
      %v8877 = vshrl.u32 %v8874, 16
      %v8879 = vrot.slane %v8877, 7
      %v8880 = vshll.u32 %v8874, 16
      %v8882 = vor.u32 %v8879, %v8880
      %v8883 = vrot.slane %v8879, 4
      %v8885 = vshrl.u32 %v8875, 16
      %v8887 = vrot.slane %v8885, 7
      %v8888 = vshll.u32 %v8875, 16
      %v8890 = vor.u32 %v8887, %v8888
      %v8891 = vsel %vm5912, %v8883, %v8890
      %v8894 = vld [vmem:[#allocation5 + $0x3c] sm:$0xf]
      %v8895 = vsel %vm5942, %v8882, %v8894
      %8896 = vst [vmem:[#allocation5 + $0x3c] sm:$0xf] %v8895
      %v8897 = vld [vmem:[#allocation5 + $0x40] sm:$0x3]
      %v8898 = vsel %vm5885, %v8891, %v8897
      %8899 = vst [vmem:[#allocation5 + $0x40] sm:$0x3] %v8898
      %s8900 = scalar_lea.vmem [#allocation3], 198
      %v8901 = vld [vmem:[%s8900] ss:$2 sm:$0xff]
      %s8902 = scalar_lea.vmem [#allocation3], 214
      %v8903 = vld [vmem:[%s8902] ss:$2 sm:$0x3]
      %v8904 = vadd.f32 %v8901, %v8554
      %v8905 = vadd.f32 %v8903, %v8554
      %v8906 = vmax.f32 %v8904, 0.0
      %v8907 = vmax.f32 %v8905, 0.0
      %v8908 = vpack.c.bf16 %v8907, %v8906
      %v8910 = vunpack.c.l.b16 %v8908
      %v8911 = vunpack.c.h.b16 %v8908
      %v8912 = vpack.c.b16 %v8910, %v8910
      %v8913 = vpack.c.b16 %v8911, %v8911
      %v8915 = vshrl.u32 %v8912, 16
      %v8917 = vrot.slane %v8915, 5
      %v8918 = vshll.u32 %v8912, 16
      %v8920 = vrot.slane %v8918, 6
      %v8921 = vor.u32 %v8917, %v8920
      %v8922 = vrot.slane %v8921, 4
      %v8924 = vshrl.u32 %v8913, 16
      %v8926 = vrot.slane %v8924, 5
      %v8927 = vshll.u32 %v8913, 16
      %v8929 = vrot.slane %v8927, 6
      %v8930 = vor.u32 %v8926, %v8929
      %v8931 = vsel %vm5976, %v8922, %v8930
      %v8934 = vld [vmem:[#allocation5 + $0x1c] sm:$0xc]
      %v8935 = vsel %vm6012, %v8921, %v8934
      %8936 = vst [vmem:[#allocation5 + $0x1c] sm:$0xc] %v8935
      %v8937 = vld [vmem:[#allocation5 + $0x20] sm:$0xf]
      %v8938 = vsel %vm5815, %v8931, %v8937
      %8939 = vst [vmem:[#allocation5 + $0x20] sm:$0xf] %v8938
      %v8940 = vld [vmem:[#allocation5] sm:$0xf]
      %v8941 = vld [vmem:[#allocation5 + $0x4] sm:$0xf]
      %v8942 = vld [vmem:[#allocation5 + $0x8] sm:$0xf]
      %v8943 = vld [vmem:[#allocation5 + $0xc] sm:$0xf]
      %v8944 = vld [vmem:[#allocation5 + $0x10] sm:$0xf]
      %v8945 = vld [vmem:[#allocation5 + $0x14] sm:$0xf]
      %v8946 = vld [vmem:[#allocation5 + $0x18] sm:$0xf]
      %v8947 = vld [vmem:[#allocation5 + $0x1c] sm:$0x3]
      %s8948 = scalar_lea.vmem %s3, 48
      %v8949 = vld [vmem:[%s8948] sm:$0xf]
      %v8950 = vld [vmem:[%s8948 + $0x4] sm:$0xf]
      %v8951 = vld [vmem:[%s8948 + $0x8] sm:$0xf]
      %v8952 = vld [vmem:[%s8948 + $0xc] sm:$0xf]
      %v8961 = vunpack.c.l.b16 %v8940
      %v8962 = vunpack.c.l.b16 %v8941
      %v8963 = vunpack.c.l.b16 %v8942
      %v8964 = vunpack.c.l.b16 %v8943
      %v8965 = vunpack.c.l.b16 %v8944
      %v8966 = vunpack.c.l.b16 %v8945
      %v8967 = vunpack.c.l.b16 %v8946
      %v8968 = vunpack.c.l.b16 %v8947
      %v8969 = vpack.c.b16 %v8962, %v8961
      %v8970 = vpack.c.b16 %v8964, %v8963
      %v8971 = vpack.c.b16 %v8966, %v8965
      %v8972 = vpack.c.b16 %v8968, %v8967
      %v8977 = vunpack.c.l.b16 %v8949
      %v8978 = vunpack.c.l.b16 %v8950
      %v8979 = vunpack.c.l.b16 %v8951
      %v8980 = vunpack.c.l.b16 %v8952
      %v8981 = vpack.c.b16 %v8978, %v8977
      %v8982 = vpack.c.b16 %v8980, %v8979
      %v8986 = vsel %vm5639, %v8969, 0
      %v8989 = vsel %vm5639, %v8970, 0
      %v8992 = vsel %vm5639, %v8971, 0
      %v8995 = vsel %vm5639, %v8972, 0
      %8997 = vmatprep.subr.bf16.mxu0 0
      %8998 = vmatpush1.bf16.msra.mxu0 0
      %8999 = vmatprep.subr.bf16.mxu0 0
      %9000 = vmatpush1.bf16.msra.mxu0 0
      %9001 = vmatprep.subr.bf16.mxu0 0
      %9002 = vmatpush1.bf16.msra.mxu0 0
      %9003 = vmatprep.subr.bf16.mxu0 0
      %9004 = vmatpush1.bf16.msra.mxu0 0
      %9005 = vmatprep.subr.bf16.mxu0 0
      %9006 = vmatpush1.bf16.msra.mxu0 0
      %9007 = vmatprep.subr.bf16.mxu0 0
      %9008 = vmatpush1.bf16.msra.mxu0 0
      %9009 = vmatprep.subr.bf16.mxu0 0
      %9010 = vmatpush1.bf16.msra.mxu0 %v8982
      %9011 = vmatprep.subr.bf16.mxu0 0
      %9012 = vmatpush1.bf16.msra.mxu0 %v8981
      %9013 = vmatprep.subr.bf16.mxu0 0
      %9014 = vmatpush2.bf16.msra.mxu0 0
      %9015 = vmatprep.subr.bf16.mxu0 0
      %9016 = vmatpush2.bf16.msra.mxu0 0
      %9017 = vmatprep.subr.bf16.mxu0 0
      %9018 = vmatpush2.bf16.msra.mxu0 0
      %9019 = vmatprep.subr.bf16.mxu0 0
      %9020 = vmatpush2.bf16.msra.mxu0 0
      %9021 = vmatprep.subr.bf16.mxu0 0
      %9022 = vmatpush2.bf16.msra.mxu0 0
      %9023 = vmatprep.subr.bf16.mxu0 0
      %9024 = vmatpush2.bf16.msra.mxu0 0
      %9025 = vmatprep.subr.bf16.mxu0 0
      %9026 = vmatpush2.bf16.msra.mxu0 0
      %9027 = vmatprep.subr.bf16.mxu0 0
      %9028 = vmatpush2.bf16.msra.mxu0 0
      %9029 = vmatprep.mubr.bf16.mxu0 0
      %9030 = vmatmul.mubr.bf16.gmra.mxu0 %v8986
      %v9031 = vpop.f32.mrf.mxu0
      %v9032 = vadd.f32 0.0, %v9031
      %v9033 = vpop.f32.mrf.mxu0
      %v9034 = vpop.f32.mrf.mxu0
      %v9035 = vadd.f32 0.0, %v9034
      %v9036 = vpop.f32.mrf.mxu0
      %9037 = vmatprep.mubr.bf16.mxu0 0
      %9038 = vmatmul.mubr.bf16.gmra.mxu0 %v8989
      %v9039 = vpop.f32.mrf.mxu0
      %v9040 = vadd.f32 0.0, %v9039
      %v9041 = vpop.f32.mrf.mxu0
      %v9042 = vpop.f32.mrf.mxu0
      %v9043 = vadd.f32 0.0, %v9042
      %v9044 = vpop.f32.mrf.mxu0
      %9045 = vmatprep.mubr.bf16.mxu0 0
      %9046 = vmatmul.mubr.bf16.gmra.mxu0 %v8992
      %v9047 = vpop.f32.mrf.mxu0
      %v9048 = vadd.f32 0.0, %v9047
      %v9049 = vpop.f32.mrf.mxu0
      %v9050 = vpop.f32.mrf.mxu0
      %v9051 = vadd.f32 0.0, %v9050
      %v9052 = vpop.f32.mrf.mxu0
      %9053 = vmatprep.mubr.bf16.mxu0 0
      %9054 = vmatmul.mubr.bf16.gmra.mxu0 %v8995
      %v9055 = vpop.f32.mrf.mxu0
      %v9056 = vadd.f32 0.0, %v9055
      %v9057 = vpop.f32.mrf.mxu0
      %v9058 = vpop.f32.mrf.mxu0
      %v9059 = vadd.f32 0.0, %v9058
      %v9060 = vpop.f32.mrf.mxu0
      %9061 = vdwg.mxu0
      %9062 = vst.msk [vmem:[#allocation2] sm:$0xff] %vm1345, %v9032
      %9063 = vst.msk [vmem:[#allocation2 + $0x8] sm:$0xff] %vm1345, %v9035
      %9064 = vst.msk [vmem:[#allocation2 + $0x10] sm:$0xff] %vm1345, %v9040
      %9065 = vst.msk [vmem:[#allocation2 + $0x18] sm:$0xff] %vm1345, %v9043
      %9066 = vst.msk [vmem:[#allocation2 + $0x20] sm:$0xff] %vm1345, %v9048
      %9067 = vst.msk [vmem:[#allocation2 + $0x28] sm:$0xff] %vm1345, %v9051
      %9068 = vst.msk [vmem:[#allocation2 + $0x30] sm:$0xff] %vm1345, %v9056
      %9069 = vst.msk [vmem:[#allocation2 + $0x38] sm:$0xf] %vm7321, %v9059
      %v9070 = vld [vmem:[#allocation5 + $0x24] sm:$0xf]
      %v9071 = vld [vmem:[#allocation5 + $0x28] sm:$0xf]
      %v9072 = vld [vmem:[#allocation5 + $0x2c] sm:$0xf]
      %v9073 = vld [vmem:[#allocation5 + $0x30] sm:$0xf]
      %v9074 = vld [vmem:[#allocation5 + $0x34] sm:$0xf]
      %v9075 = vld [vmem:[#allocation5 + $0x38] sm:$0xf]
      %v9076 = vld [vmem:[#allocation5 + $0x3c] sm:$0xf]
      %v9077 = vld [vmem:[#allocation5 + $0x40] sm:$0x3]
      %s9078 = scalar_lea.vmem %s3, 64
      %v9079 = vld [vmem:[%s9078] sm:$0xf]
      %v9080 = vld [vmem:[%s9078 + $0x4] sm:$0xf]
      %v9081 = vld [vmem:[%s9078 + $0x8] sm:$0xf]
      %v9082 = vld [vmem:[%s9078 + $0xc] sm:$0xf]
      %v9091 = vunpack.c.l.b16 %v9070
      %v9092 = vunpack.c.l.b16 %v9071
      %v9093 = vunpack.c.l.b16 %v9072
      %v9094 = vunpack.c.l.b16 %v9073
      %v9095 = vunpack.c.l.b16 %v9074
      %v9096 = vunpack.c.l.b16 %v9075
      %v9097 = vunpack.c.l.b16 %v9076
      %v9098 = vunpack.c.l.b16 %v9077
      %v9099 = vpack.c.b16 %v9092, %v9091
      %v9100 = vpack.c.b16 %v9094, %v9093
      %v9101 = vpack.c.b16 %v9096, %v9095
      %v9102 = vpack.c.b16 %v9098, %v9097
      %v9107 = vunpack.c.l.b16 %v9079
      %v9108 = vunpack.c.l.b16 %v9080
      %v9109 = vunpack.c.l.b16 %v9081
      %v9110 = vunpack.c.l.b16 %v9082
      %v9111 = vpack.c.b16 %v9108, %v9107
      %v9112 = vpack.c.b16 %v9110, %v9109
      %v9116 = vsel %vm5639, %v9099, 0
      %v9119 = vsel %vm5639, %v9100, 0
      %v9122 = vsel %vm5639, %v9101, 0
      %v9125 = vsel %vm5639, %v9102, 0
      %9127 = vmatprep.subr.bf16.mxu0 0
      %9128 = vmatpush1.bf16.msra.mxu0 0
      %9129 = vmatprep.subr.bf16.mxu0 0
      %9130 = vmatpush1.bf16.msra.mxu0 0
      %9131 = vmatprep.subr.bf16.mxu0 0
      %9132 = vmatpush1.bf16.msra.mxu0 0
      %9133 = vmatprep.subr.bf16.mxu0 0
      %9134 = vmatpush1.bf16.msra.mxu0 0
      %9135 = vmatprep.subr.bf16.mxu0 0
      %9136 = vmatpush1.bf16.msra.mxu0 0
      %9137 = vmatprep.subr.bf16.mxu0 0
      %9138 = vmatpush1.bf16.msra.mxu0 0
      %9139 = vmatprep.subr.bf16.mxu0 0
      %9140 = vmatpush1.bf16.msra.mxu0 %v9112
      %9141 = vmatprep.subr.bf16.mxu0 0
      %9142 = vmatpush1.bf16.msra.mxu0 %v9111
      %9143 = vmatprep.subr.bf16.mxu0 0
      %9144 = vmatpush2.bf16.msra.mxu0 0
      %9145 = vmatprep.subr.bf16.mxu0 0
      %9146 = vmatpush2.bf16.msra.mxu0 0
      %9147 = vmatprep.subr.bf16.mxu0 0
      %9148 = vmatpush2.bf16.msra.mxu0 0
      %9149 = vmatprep.subr.bf16.mxu0 0
      %9150 = vmatpush2.bf16.msra.mxu0 0
      %9151 = vmatprep.subr.bf16.mxu0 0
      %9152 = vmatpush2.bf16.msra.mxu0 0
      %9153 = vmatprep.subr.bf16.mxu0 0
      %9154 = vmatpush2.bf16.msra.mxu0 0
      %9155 = vmatprep.subr.bf16.mxu0 0
      %9156 = vmatpush2.bf16.msra.mxu0 0
      %9157 = vmatprep.subr.bf16.mxu0 0
      %9158 = vmatpush2.bf16.msra.mxu0 0
      %9159 = vmatprep.mubr.bf16.mxu0 0
      %9160 = vmatmul.mubr.bf16.gmra.mxu0 %v9116
      %v9161 = vpop.f32.mrf.mxu0
      %v9162 = vadd.f32 0.0, %v9161
      %v9163 = vpop.f32.mrf.mxu0
      %v9164 = vpop.f32.mrf.mxu0
      %v9165 = vadd.f32 0.0, %v9164
      %v9166 = vpop.f32.mrf.mxu0
      %9167 = vmatprep.mubr.bf16.mxu0 0
      %9168 = vmatmul.mubr.bf16.gmra.mxu0 %v9119
      %v9169 = vpop.f32.mrf.mxu0
      %v9170 = vadd.f32 0.0, %v9169
      %v9171 = vpop.f32.mrf.mxu0
      %v9172 = vpop.f32.mrf.mxu0
      %v9173 = vadd.f32 0.0, %v9172
      %v9174 = vpop.f32.mrf.mxu0
      %9175 = vmatprep.mubr.bf16.mxu0 0
      %9176 = vmatmul.mubr.bf16.gmra.mxu0 %v9122
      %v9177 = vpop.f32.mrf.mxu0
      %v9178 = vadd.f32 0.0, %v9177
      %v9179 = vpop.f32.mrf.mxu0
      %v9180 = vpop.f32.mrf.mxu0
      %v9181 = vadd.f32 0.0, %v9180
      %v9182 = vpop.f32.mrf.mxu0
      %9183 = vmatprep.mubr.bf16.mxu0 0
      %9184 = vmatmul.mubr.bf16.gmra.mxu0 %v9125
      %v9185 = vpop.f32.mrf.mxu0
      %v9186 = vadd.f32 0.0, %v9185
      %v9187 = vpop.f32.mrf.mxu0
      %v9188 = vpop.f32.mrf.mxu0
      %v9189 = vadd.f32 0.0, %v9188
      %v9190 = vpop.f32.mrf.mxu0
      %9191 = vdwg.mxu0
      %v9192 = vld [vmem:[#allocation2] sm:$0xff]
      %v9193 = vld [vmem:[#allocation2 + $0x8] sm:$0xff]
      %v9194 = vld [vmem:[#allocation2 + $0x10] sm:$0xff]
      %v9195 = vld [vmem:[#allocation2 + $0x18] sm:$0xff]
      %v9196 = vld [vmem:[#allocation2 + $0x20] sm:$0xff]
      %v9197 = vld [vmem:[#allocation2 + $0x28] sm:$0xff]
      %v9198 = vld [vmem:[#allocation2 + $0x30] sm:$0xff]
      %v9199 = vld [vmem:[#allocation2 + $0x38] sm:$0xf]
      %v9200 = vadd.f32 %v9192, %v9162
      %v9201 = vadd.f32 %v9193, %v9165
      %v9202 = vadd.f32 %v9194, %v9170
      %v9203 = vadd.f32 %v9195, %v9173
      %v9204 = vadd.f32 %v9196, %v9178
      %v9205 = vadd.f32 %v9197, %v9181
      %v9206 = vadd.f32 %v9198, %v9186
      %v9207 = vadd.f32 %v9199, %v9189
      %9208 = vst.msk [vmem:[#allocation2] sm:$0xff] %vm1345, %v9200
      %9209 = vst.msk [vmem:[#allocation2 + $0x8] sm:$0xff] %vm1345, %v9201
      %9210 = vst.msk [vmem:[#allocation2 + $0x10] sm:$0xff] %vm1345, %v9202
      %9211 = vst.msk [vmem:[#allocation2 + $0x18] sm:$0xff] %vm1345, %v9203
      %9212 = vst.msk [vmem:[#allocation2 + $0x20] sm:$0xff] %vm1345, %v9204
      %9213 = vst.msk [vmem:[#allocation2 + $0x28] sm:$0xff] %vm1345, %v9205
      %9214 = vst.msk [vmem:[#allocation2 + $0x30] sm:$0xff] %vm1345, %v9206
      %9215 = vst.msk [vmem:[#allocation2 + $0x38] sm:$0xf] %vm7321, %v9207
      %v9216 = vld [vmem:[#allocation5 + $0x4] sm:$0xc]
      %v9217 = vld [vmem:[#allocation5 + $0x8] sm:$0xf]
      %v9218 = vld [vmem:[#allocation5 + $0xc] sm:$0xf]
      %v9219 = vld [vmem:[#allocation5 + $0x10] sm:$0xf]
      %v9220 = vld [vmem:[#allocation5 + $0x14] sm:$0xf]
      %v9221 = vld [vmem:[#allocation5 + $0x18] sm:$0xf]
      %v9222 = vld [vmem:[#allocation5 + $0x1c] sm:$0xf]
      %v9223 = vld [vmem:[#allocation5 + $0x20] sm:$0xf]
      %s9224 = scalar_lea.vmem %s3, 80
      %v9225 = vld [vmem:[%s9224] sm:$0xf]
      %v9226 = vld [vmem:[%s9224 + $0x4] sm:$0xf]
      %v9227 = vld [vmem:[%s9224 + $0x8] sm:$0xf]
      %v9228 = vld [vmem:[%s9224 + $0xc] sm:$0xf]
      %v9237 = vunpack.c.l.b16 %v9216
      %v9238 = vunpack.c.l.b16 %v9217
      %v9239 = vunpack.c.l.b16 %v9218
      %v9240 = vunpack.c.l.b16 %v9219
      %v9241 = vunpack.c.l.b16 %v9220
      %v9242 = vunpack.c.l.b16 %v9221
      %v9243 = vunpack.c.l.b16 %v9222
      %v9244 = vunpack.c.l.b16 %v9223
      %v9245 = vpack.c.b16 %v9238, %v9237
      %v9246 = vpack.c.b16 %v9240, %v9239
      %v9247 = vpack.c.b16 %v9242, %v9241
      %v9248 = vpack.c.b16 %v9244, %v9243
      %vm9249 = vcmask 1045504
      %v9250 = vrot.slane %v9245, 2
      %v9251 = vrot.slane %v9246, 2
      %v9252 = vsel %vm9249, %v9250, %v9251
      %v9253 = vrot.slane %v9247, 2
      %v9254 = vsel %vm9249, %v9251, %v9253
      %v9255 = vrot.slane %v9248, 2
      %v9256 = vsel %vm9249, %v9253, %v9255
      %v9261 = vunpack.c.l.b16 %v9225
      %v9262 = vunpack.c.l.b16 %v9226
      %v9263 = vunpack.c.l.b16 %v9227
      %v9264 = vunpack.c.l.b16 %v9228
      %v9265 = vpack.c.b16 %v9262, %v9261
      %v9266 = vpack.c.b16 %v9264, %v9263
      %v9270 = vsel %vm5639, %v9252, 0
      %v9273 = vsel %vm5639, %v9254, 0
      %v9276 = vsel %vm5639, %v9256, 0
      %v9279 = vsel %vm5639, %v9255, 0
      %9281 = vmatprep.subr.bf16.mxu0 0
      %9282 = vmatpush1.bf16.msra.mxu0 0
      %9283 = vmatprep.subr.bf16.mxu0 0
      %9284 = vmatpush1.bf16.msra.mxu0 0
      %9285 = vmatprep.subr.bf16.mxu0 0
      %9286 = vmatpush1.bf16.msra.mxu0 0
      %9287 = vmatprep.subr.bf16.mxu0 0
      %9288 = vmatpush1.bf16.msra.mxu0 0
      %9289 = vmatprep.subr.bf16.mxu0 0
      %9290 = vmatpush1.bf16.msra.mxu0 0
      %9291 = vmatprep.subr.bf16.mxu0 0
      %9292 = vmatpush1.bf16.msra.mxu0 0
      %9293 = vmatprep.subr.bf16.mxu0 0
      %9294 = vmatpush1.bf16.msra.mxu0 %v9266
      %9295 = vmatprep.subr.bf16.mxu0 0
      %9296 = vmatpush1.bf16.msra.mxu0 %v9265
      %9297 = vmatprep.subr.bf16.mxu0 0
      %9298 = vmatpush2.bf16.msra.mxu0 0
      %9299 = vmatprep.subr.bf16.mxu0 0
      %9300 = vmatpush2.bf16.msra.mxu0 0
      %9301 = vmatprep.subr.bf16.mxu0 0
      %9302 = vmatpush2.bf16.msra.mxu0 0
      %9303 = vmatprep.subr.bf16.mxu0 0
      %9304 = vmatpush2.bf16.msra.mxu0 0
      %9305 = vmatprep.subr.bf16.mxu0 0
      %9306 = vmatpush2.bf16.msra.mxu0 0
      %9307 = vmatprep.subr.bf16.mxu0 0
      %9308 = vmatpush2.bf16.msra.mxu0 0
      %9309 = vmatprep.subr.bf16.mxu0 0
      %9310 = vmatpush2.bf16.msra.mxu0 0
      %9311 = vmatprep.subr.bf16.mxu0 0
      %9312 = vmatpush2.bf16.msra.mxu0 0
      %9313 = vmatprep.mubr.bf16.mxu0 0
      %9314 = vmatmul.mubr.bf16.gmra.mxu0 %v9270
      %v9315 = vpop.f32.mrf.mxu0
      %v9316 = vadd.f32 0.0, %v9315
      %v9317 = vpop.f32.mrf.mxu0
      %v9318 = vpop.f32.mrf.mxu0
      %v9319 = vadd.f32 0.0, %v9318
      %v9320 = vpop.f32.mrf.mxu0
      %9321 = vmatprep.mubr.bf16.mxu0 0
      %9322 = vmatmul.mubr.bf16.gmra.mxu0 %v9273
      %v9323 = vpop.f32.mrf.mxu0
      %v9324 = vadd.f32 0.0, %v9323
      %v9325 = vpop.f32.mrf.mxu0
      %v9326 = vpop.f32.mrf.mxu0
      %v9327 = vadd.f32 0.0, %v9326
      %v9328 = vpop.f32.mrf.mxu0
      %9329 = vmatprep.mubr.bf16.mxu0 0
      %9330 = vmatmul.mubr.bf16.gmra.mxu0 %v9276
      %v9331 = vpop.f32.mrf.mxu0
      %v9332 = vadd.f32 0.0, %v9331
      %v9333 = vpop.f32.mrf.mxu0
      %v9334 = vpop.f32.mrf.mxu0
      %v9335 = vadd.f32 0.0, %v9334
      %v9336 = vpop.f32.mrf.mxu0
      %9337 = vmatprep.mubr.bf16.mxu0 0
      %9338 = vmatmul.mubr.bf16.gmra.mxu0 %v9279
      %v9339 = vpop.f32.mrf.mxu0
      %v9340 = vadd.f32 0.0, %v9339
      %v9341 = vpop.f32.mrf.mxu0
      %v9342 = vpop.f32.mrf.mxu0
      %v9343 = vadd.f32 0.0, %v9342
      %v9344 = vpop.f32.mrf.mxu0
      %9345 = vdwg.mxu0
      %v9346 = vld [vmem:[#allocation2] sm:$0xff]
      %v9347 = vld [vmem:[#allocation2 + $0x8] sm:$0xff]
      %v9348 = vld [vmem:[#allocation2 + $0x10] sm:$0xff]
      %v9349 = vld [vmem:[#allocation2 + $0x18] sm:$0xff]
      %v9350 = vld [vmem:[#allocation2 + $0x20] sm:$0xff]
      %v9351 = vld [vmem:[#allocation2 + $0x28] sm:$0xff]
      %v9352 = vld [vmem:[#allocation2 + $0x30] sm:$0xff]
      %v9353 = vld [vmem:[#allocation2 + $0x38] sm:$0xf]
      %v9354 = vadd.f32 %v9346, %v9316
      %v9355 = vadd.f32 %v9347, %v9319
      %v9356 = vadd.f32 %v9348, %v9324
      %v9357 = vadd.f32 %v9349, %v9327
      %v9358 = vadd.f32 %v9350, %v9332
      %v9359 = vadd.f32 %v9351, %v9335
      %v9360 = vadd.f32 %v9352, %v9340
      %v9361 = vadd.f32 %v9353, %v9343
      %9362 = vst.msk [vmem:[#allocation2] sm:$0xff] %vm1345, %v9354
      %9363 = vst.msk [vmem:[#allocation2 + $0x8] sm:$0xff] %vm1345, %v9355
      %9364 = vst.msk [vmem:[#allocation2 + $0x10] sm:$0xff] %vm1345, %v9356
      %9365 = vst.msk [vmem:[#allocation2 + $0x18] sm:$0xff] %vm1345, %v9357
      %9366 = vst.msk [vmem:[#allocation2 + $0x20] sm:$0xff] %vm1345, %v9358
      %9367 = vst.msk [vmem:[#allocation2 + $0x28] sm:$0xff] %vm1345, %v9359
      %9368 = vst.msk [vmem:[#allocation2 + $0x30] sm:$0xff] %vm1345, %v9360
      %9369 = vst.msk [vmem:[#allocation2 + $0x38] sm:$0xf] %vm7321, %v9361
      %v9370 = vld [vmem:[#allocation2] sm:$0xff]
      %v9371 = vld [vmem:[#allocation2 + $0x8] sm:$0xff]
      %v9372 = vld [vmem:[#allocation2 + $0x10] sm:$0xff]
      %v9373 = vld [vmem:[#allocation2 + $0x18] sm:$0xff]
      %v9374 = vld [vmem:[#allocation2 + $0x20] sm:$0xff]
      %v9375 = vld [vmem:[#allocation2 + $0x28] sm:$0xff]
      %v9376 = vld [vmem:[#allocation2 + $0x30] sm:$0xff]
      %v9377 = vld [vmem:[#allocation2 + $0x38] sm:$0x3]
      %v9378 = vld [vmem:[#allocation2 + $0x1] sm:$0xff]
      %v9379 = vld [vmem:[#allocation2 + $0x9] sm:$0xff]
      %v9380 = vld [vmem:[#allocation2 + $0x11] sm:$0xff]
      %v9381 = vld [vmem:[#allocation2 + $0x19] sm:$0xff]
      %v9382 = vld [vmem:[#allocation2 + $0x21] sm:$0xff]
      %v9383 = vld [vmem:[#allocation2 + $0x29] sm:$0xff]
      %v9384 = vld [vmem:[#allocation2 + $0x31] sm:$0xff]
      %v9385 = vld [vmem:[#allocation2 + $0x39] sm:$0x3]
      %9394 = vrot.lane.b32.xlu0 %v9378, 96
      %v9395 = vpop.permute.xlu0 %9394
      %9396 = vrot.lane.b32.xlu0 %v9379, 96
      %v9397 = vpop.permute.xlu0 %9396
      %9398 = vrot.lane.b32.xlu0 %v9380, 96
      %v9399 = vpop.permute.xlu0 %9398
      %9400 = vrot.lane.b32.xlu0 %v9381, 96
      %v9401 = vpop.permute.xlu0 %9400
      %9402 = vrot.lane.b32.xlu0 %v9382, 96
      %v9403 = vpop.permute.xlu0 %9402
      %9404 = vrot.lane.b32.xlu0 %v9383, 96
      %v9405 = vpop.permute.xlu0 %9404
      %9406 = vrot.lane.b32.xlu0 %v9384, 96
      %v9407 = vpop.permute.xlu0 %9406
      %9408 = vrot.lane.b32.xlu0 %v9385, 96
      %v9409 = vpop.permute.xlu0 %9408
      %v9418 = vadd.f32 %v9370, %v9395
      %v9419 = vadd.f32 %v9371, %v9397
      %v9420 = vadd.f32 %v9372, %v9399
      %v9421 = vadd.f32 %v9373, %v9401
      %v9422 = vadd.f32 %v9374, %v9403
      %v9423 = vadd.f32 %v9375, %v9405
      %v9424 = vadd.f32 %v9376, %v9407
      %v9425 = vadd.f32 %v9377, %v9409
      %v9426 = vld [vmem:[#allocation2 + $0x2] sm:$0xff]
      %v9427 = vld [vmem:[#allocation2 + $0xa] sm:$0xff]
      %v9428 = vld [vmem:[#allocation2 + $0x12] sm:$0xff]
      %v9429 = vld [vmem:[#allocation2 + $0x1a] sm:$0xff]
      %v9430 = vld [vmem:[#allocation2 + $0x22] sm:$0xff]
      %v9431 = vld [vmem:[#allocation2 + $0x2a] sm:$0xff]
      %v9432 = vld [vmem:[#allocation2 + $0x32] sm:$0xff]
      %v9433 = vld [vmem:[#allocation2 + $0x3a] sm:$0x3]
      %9442 = vrot.lane.b32.xlu0 %v9426, 64
      %v9443 = vpop.permute.xlu0 %9442
      %9444 = vrot.lane.b32.xlu0 %v9427, 64
      %v9445 = vpop.permute.xlu0 %9444
      %9446 = vrot.lane.b32.xlu0 %v9428, 64
      %v9447 = vpop.permute.xlu0 %9446
      %9448 = vrot.lane.b32.xlu0 %v9429, 64
      %v9449 = vpop.permute.xlu0 %9448
      %9450 = vrot.lane.b32.xlu0 %v9430, 64
      %v9451 = vpop.permute.xlu0 %9450
      %9452 = vrot.lane.b32.xlu0 %v9431, 64
      %v9453 = vpop.permute.xlu0 %9452
      %9454 = vrot.lane.b32.xlu0 %v9432, 64
      %v9455 = vpop.permute.xlu0 %9454
      %9456 = vrot.lane.b32.xlu0 %v9433, 64
      %v9457 = vpop.permute.xlu0 %9456
      %v9466 = vadd.f32 %v9418, %v9443
      %v9467 = vadd.f32 %v9419, %v9445
      %v9468 = vadd.f32 %v9420, %v9447
      %v9469 = vadd.f32 %v9421, %v9449
      %v9470 = vadd.f32 %v9422, %v9451
      %v9471 = vadd.f32 %v9423, %v9453
      %v9472 = vadd.f32 %v9424, %v9455
      %v9473 = vadd.f32 %v9425, %v9457
      %9474 = vst.msk [vmem:[#allocation3] sm:$0xff] %vm5639, %v9466
      %9475 = vst.msk [vmem:[#allocation3 + $0x8] sm:$0xff] %vm5639, %v9467
      %9476 = vst.msk [vmem:[#allocation3 + $0x10] sm:$0xff] %vm5639, %v9468
      %9477 = vst.msk [vmem:[#allocation3 + $0x18] sm:$0xff] %vm5639, %v9469
      %9478 = vst.msk [vmem:[#allocation3 + $0x20] sm:$0xff] %vm5639, %v9470
      %9479 = vst.msk [vmem:[#allocation3 + $0x28] sm:$0xff] %vm5639, %v9471
      %9480 = vst.msk [vmem:[#allocation3 + $0x30] sm:$0xff] %vm5639, %v9472
      %9481 = vst.msk [vmem:[#allocation3 + $0x38] sm:$0x3] %vm324, %v9473
      %v9482 = vld [vmem:[%s5 + $0x2] sm:$0x1]
      %v9483 = vld [vmem:[#allocation3] ss:$2 sm:$0x1f]
      %v9484 = vlaneseq
      %v9485 = vshrl.u32 %v9484, 7
      %v9486 = vsub.s32 0, %v9485
      %v9487 = vrot.slane %v9482, %v9486
      %v9488 = vadd.f32 %v9483, %v9487
      %v9489 = vmax.f32 %v9488, 0.0
      %v9490 = vpack.c.bf16 %v9489, %v9489
      %v9492 = vunpack.c.l.b16 %v9490
      %v9493 = vpack.c.b16 %v9492, %v9492
      %v9495 = vshrl.u32 %v9493, 16
      %v9497 = vrot.slane %v9495, 5
      %v9498 = vshll.u32 %v9493, 16
      %v9500 = vrot.slane %v9498, 6
      %v9501 = vor.u32 %v9497, %v9500
      %v9502 = vrot.slane %v9501, 4
      %v9505 = vld [vmem:[#allocation6 + $0xc] sm:$0xc]
      %v9506 = vsel %vm6012, %v9501, %v9505
      %9507 = vst [vmem:[#allocation6 + $0xc] sm:$0xc] %v9506
      %vm9508 = vcmask 253952
      %9509 = vst.msk [vmem:[#allocation6 + $0x10] sm:$0x1] %vm9508, %v9502
      %s9510 = scalar_lea.vmem [#allocation3], 12
      %v9511 = vld [vmem:[%s9510] ss:$2 sm:$0x1f]
      %v9512 = vadd.f32 %v9511, %v9487
      %v9513 = vmax.f32 %v9512, 0.0
      %v9514 = vpack.c.bf16 %v9513, %v9513
      %v9515 = vld [vmem:[#allocation6 + $0x4] sm:$0x7]
      %v9516 = vsel %vm5949, %v9514, %v9515
      %9517 = vst [vmem:[#allocation6 + $0x4] sm:$0x7] %v9516
      %s9518 = scalar_lea.vmem [#allocation3], 24
      %v9519 = vld [vmem:[%s9518] ss:$2 sm:$0x1f]
      %v9520 = vadd.f32 %v9519, %v9487
      %v9521 = vmax.f32 %v9520, 0.0
      %v9522 = vpack.c.bf16 %v9521, %v9521
      %v9524 = vunpack.c.l.b16 %v9522
      %v9525 = vpack.c.b16 %v9524, %v9524
      %v9526 = vrot.slane %v9525, 6
      %v9527 = vrot.slane %v9526, 4
      %vm9530 = vcmask 257026
      %9531 = vst.msk [vmem:[#allocation6 + $0x10] sm:$0xc] %vm9530, %v9526
      %v9532 = vld [vmem:[#allocation6 + $0x14] sm:$0x1]
      %v9533 = vsel %vm352, %v9527, %v9532
      %9534 = vst [vmem:[#allocation6 + $0x14] sm:$0x1] %v9533
      %s9535 = scalar_lea.vmem [#allocation3], 36
      %v9536 = vld [vmem:[%s9535] ss:$2 sm:$0x1f]
      %v9537 = vadd.f32 %v9536, %v9487
      %v9538 = vmax.f32 %v9537, 0.0
      %v9539 = vpack.c.bf16 %v9538, %v9538
      %v9541 = vunpack.c.l.b16 %v9539
      %v9542 = vpack.c.b16 %v9541, %v9541
      %v9544 = vshll.u32 %v9542, 16
      %v9546 = vrot.slane %v9544, 5
      %v9547 = vshrl.u32 %v9542, 16
      %v9549 = vrot.slane %v9547, 4
      %v9550 = vor.u32 %v9549, %v9546
      %v9551 = vrot.slane %v9550, 4
      %v9554 = vld [vmem:[#allocation6 + $0x4] sm:$0x8]
      %v9555 = vsel %vm5878, %v9546, %v9554
      %9556 = vst [vmem:[#allocation6 + $0x4] sm:$0x8] %v9555
      %9557 = vst.msk [vmem:[#allocation6 + $0x8] sm:$0x3] %vm324, %v9551
      %s9558 = scalar_lea.vmem [#allocation3], 48
      %v9559 = vld [vmem:[%s9558] ss:$2 sm:$0x1f]
      %v9560 = vadd.f32 %v9559, %v9487
      %v9561 = vmax.f32 %v9560, 0.0
      %v9562 = vpack.c.bf16 %v9561, %v9561
      %v9564 = vunpack.c.l.b16 %v9562
      %v9565 = vpack.c.b16 %v9564, %v9564
      %v9567 = vshrl.u32 %v9565, 16
      %v9569 = vrot.slane %v9567, 6
      %v9570 = vshll.u32 %v9565, 16
      %v9572 = vrot.slane %v9570, 7
      %v9573 = vor.u32 %v9569, %v9572
      %v9575 = vld [vmem:[#allocation6 + $0x14] sm:$0xe]
      %v9576 = vsel %vm5808, %v9573, %v9575
      %9577 = vst [vmem:[#allocation6 + $0x14] sm:$0xe] %v9576
      %v9578 = vld [vmem:[#allocation6] sm:$0xf]
      %v9579 = vld [vmem:[#allocation6 + $0x4] sm:$0xf]
      %v9580 = vld [vmem:[#allocation6 + $0x8] sm:$0x7]
      %s9581 = scalar_lea.vmem %s3, 96
      %v9582 = vld [vmem:[%s9581] sm:$0xf]
      %v9583 = vld [vmem:[%s9581 + $0x4] sm:$0xf]
      %v9584 = vld [vmem:[%s9581 + $0x8] sm:$0xf]
      %v9585 = vld [vmem:[%s9581 + $0xc] sm:$0xf]
      %v9589 = vunpack.c.l.b16 %v9578
      %v9590 = vunpack.c.l.b16 %v9579
      %v9591 = vunpack.c.l.b16 %v9580
      %v9592 = vpack.c.b16 %v9590, %v9589
      %v9593 = vpack.c.b16 %v9591, %v9591
      %v9598 = vunpack.c.l.b16 %v9582
      %v9599 = vunpack.c.l.b16 %v9583
      %v9600 = vunpack.c.l.b16 %v9584
      %v9601 = vunpack.c.l.b16 %v9585
      %v9602 = vpack.c.b16 %v9599, %v9598
      %v9603 = vpack.c.b16 %v9601, %v9600
      %v9607 = vsel %vm5639, %v9592, 0
      %v9610 = vsel %vm5639, %v9593, 0
      %9612 = vmatprep.subr.bf16.mxu0 0
      %9613 = vmatpush1.bf16.msra.mxu0 0
      %9614 = vmatprep.subr.bf16.mxu0 0
      %9615 = vmatpush1.bf16.msra.mxu0 0
      %9616 = vmatprep.subr.bf16.mxu0 0
      %9617 = vmatpush1.bf16.msra.mxu0 0
      %9618 = vmatprep.subr.bf16.mxu0 0
      %9619 = vmatpush1.bf16.msra.mxu0 0
      %9620 = vmatprep.subr.bf16.mxu0 0
      %9621 = vmatpush1.bf16.msra.mxu0 0
      %9622 = vmatprep.subr.bf16.mxu0 0
      %9623 = vmatpush1.bf16.msra.mxu0 0
      %9624 = vmatprep.subr.bf16.mxu0 0
      %9625 = vmatpush1.bf16.msra.mxu0 %v9603
      %9626 = vmatprep.subr.bf16.mxu0 0
      %9627 = vmatpush1.bf16.msra.mxu0 %v9602
      %9628 = vmatprep.subr.bf16.mxu0 0
      %9629 = vmatpush2.bf16.msra.mxu0 0
      %9630 = vmatprep.subr.bf16.mxu0 0
      %9631 = vmatpush2.bf16.msra.mxu0 0
      %9632 = vmatprep.subr.bf16.mxu0 0
      %9633 = vmatpush2.bf16.msra.mxu0 0
      %9634 = vmatprep.subr.bf16.mxu0 0
      %9635 = vmatpush2.bf16.msra.mxu0 0
      %9636 = vmatprep.subr.bf16.mxu0 0
      %9637 = vmatpush2.bf16.msra.mxu0 0
      %9638 = vmatprep.subr.bf16.mxu0 0
      %9639 = vmatpush2.bf16.msra.mxu0 0
      %9640 = vmatprep.subr.bf16.mxu0 0
      %9641 = vmatpush2.bf16.msra.mxu0 0
      %9642 = vmatprep.subr.bf16.mxu0 0
      %9643 = vmatpush2.bf16.msra.mxu0 0
      %9644 = vmatprep.mubr.bf16.mxu0 0
      %9645 = vmatmul.mubr.bf16.gmra.mxu0 %v9607
      %v9646 = vpop.f32.mrf.mxu0
      %v9647 = vadd.f32 0.0, %v9646
      %v9648 = vpop.f32.mrf.mxu0
      %v9649 = vpop.f32.mrf.mxu0
      %v9650 = vadd.f32 0.0, %v9649
      %v9651 = vpop.f32.mrf.mxu0
      %9652 = vmatprep.mubr.bf16.mxu0 0
      %9653 = vmatmul.mubr.bf16.gmra.mxu0 %v9610
      %v9654 = vpop.f32.mrf.mxu0
      %v9655 = vadd.f32 0.0, %v9654
      %v9656 = vpop.f32.mrf.mxu0
      %v9657 = vpop.f32.mrf.mxu0
      %v9658 = vpop.f32.mrf.mxu0
      %9659 = vdwg.mxu0
      %9660 = vst.msk [vmem:[#allocation2] sm:$0xff] %vm1345, %v9647
      %9661 = vst.msk [vmem:[#allocation2 + $0x8] sm:$0xff] %vm1345, %v9650
      %vm9662 = vcmask 782336
      %9663 = vst.msk [vmem:[#allocation2 + $0x10] sm:$0x1f] %vm9662, %v9655
      %v9664 = vld [vmem:[#allocation6 + $0xc] sm:$0xc]
      %v9665 = vld [vmem:[#allocation6 + $0x10] sm:$0xf]
      %v9666 = vld [vmem:[#allocation6 + $0x14] sm:$0xf]
      %v9667 = vld [vmem:[#allocation6 + $0x18] sm:$0x1]
      %s9668 = scalar_lea.vmem %s3, 112
      %v9669 = vld [vmem:[%s9668] sm:$0xf]
      %v9670 = vld [vmem:[%s9668 + $0x4] sm:$0xf]
      %v9671 = vld [vmem:[%s9668 + $0x8] sm:$0xf]
      %v9672 = vld [vmem:[%s9668 + $0xc] sm:$0xf]
      %v9677 = vunpack.c.l.b16 %v9664
      %v9678 = vunpack.c.l.b16 %v9665
      %v9679 = vunpack.c.l.b16 %v9666
      %v9680 = vunpack.c.l.b16 %v9667
      %v9681 = vpack.c.b16 %v9678, %v9677
      %v9682 = vpack.c.b16 %v9680, %v9679
      %v9683 = vrot.slane %v9681, 2
      %v9684 = vrot.slane %v9682, 2
      %v9685 = vsel %vm9249, %v9683, %v9684
      %v9690 = vunpack.c.l.b16 %v9669
      %v9691 = vunpack.c.l.b16 %v9670
      %v9692 = vunpack.c.l.b16 %v9671
      %v9693 = vunpack.c.l.b16 %v9672
      %v9694 = vpack.c.b16 %v9691, %v9690
      %v9695 = vpack.c.b16 %v9693, %v9692
      %v9699 = vsel %vm5639, %v9685, 0
      %v9702 = vsel %vm5639, %v9684, 0
      %9704 = vmatprep.subr.bf16.mxu0 0
      %9705 = vmatpush1.bf16.msra.mxu0 0
      %9706 = vmatprep.subr.bf16.mxu0 0
      %9707 = vmatpush1.bf16.msra.mxu0 0
      %9708 = vmatprep.subr.bf16.mxu0 0
      %9709 = vmatpush1.bf16.msra.mxu0 0
      %9710 = vmatprep.subr.bf16.mxu0 0
      %9711 = vmatpush1.bf16.msra.mxu0 0
      %9712 = vmatprep.subr.bf16.mxu0 0
      %9713 = vmatpush1.bf16.msra.mxu0 0
      %9714 = vmatprep.subr.bf16.mxu0 0
      %9715 = vmatpush1.bf16.msra.mxu0 0
      %9716 = vmatprep.subr.bf16.mxu0 0
      %9717 = vmatpush1.bf16.msra.mxu0 %v9695
      %9718 = vmatprep.subr.bf16.mxu0 0
      %9719 = vmatpush1.bf16.msra.mxu0 %v9694
      %9720 = vmatprep.subr.bf16.mxu0 0
      %9721 = vmatpush2.bf16.msra.mxu0 0
      %9722 = vmatprep.subr.bf16.mxu0 0
      %9723 = vmatpush2.bf16.msra.mxu0 0
      %9724 = vmatprep.subr.bf16.mxu0 0
      %9725 = vmatpush2.bf16.msra.mxu0 0
      %9726 = vmatprep.subr.bf16.mxu0 0
      %9727 = vmatpush2.bf16.msra.mxu0 0
      %9728 = vmatprep.subr.bf16.mxu0 0
      %9729 = vmatpush2.bf16.msra.mxu0 0
      %9730 = vmatprep.subr.bf16.mxu0 0
      %9731 = vmatpush2.bf16.msra.mxu0 0
      %9732 = vmatprep.subr.bf16.mxu0 0
      %9733 = vmatpush2.bf16.msra.mxu0 0
      %9734 = vmatprep.subr.bf16.mxu0 0
      %9735 = vmatpush2.bf16.msra.mxu0 0
      %9736 = vmatprep.mubr.bf16.mxu0 0
      %9737 = vmatmul.mubr.bf16.gmra.mxu0 %v9699
      %v9738 = vpop.f32.mrf.mxu0
      %v9739 = vadd.f32 0.0, %v9738
      %v9740 = vpop.f32.mrf.mxu0
      %v9741 = vpop.f32.mrf.mxu0
      %v9742 = vadd.f32 0.0, %v9741
      %v9743 = vpop.f32.mrf.mxu0
      %9744 = vmatprep.mubr.bf16.mxu0 0
      %9745 = vmatmul.mubr.bf16.gmra.mxu0 %v9702
      %v9746 = vpop.f32.mrf.mxu0
      %v9747 = vadd.f32 0.0, %v9746
      %v9748 = vpop.f32.mrf.mxu0
      %v9749 = vpop.f32.mrf.mxu0
      %v9750 = vpop.f32.mrf.mxu0
      %9751 = vdwg.mxu0
      %v9752 = vld [vmem:[#allocation2] sm:$0xff]
      %v9753 = vld [vmem:[#allocation2 + $0x8] sm:$0xff]
      %v9754 = vld [vmem:[#allocation2 + $0x10] sm:$0x1f]
      %v9755 = vadd.f32 %v9752, %v9739
      %v9756 = vadd.f32 %v9753, %v9742
      %v9757 = vadd.f32 %v9754, %v9747
      %9758 = vst.msk [vmem:[#allocation2] sm:$0xff] %vm1345, %v9755
      %9759 = vst.msk [vmem:[#allocation2 + $0x8] sm:$0xff] %vm1345, %v9756
      %9760 = vst.msk [vmem:[#allocation2 + $0x10] sm:$0x1f] %vm9662, %v9757
      %v9761 = vld [vmem:[#allocation6] sm:$0x8]
      %v9762 = vld [vmem:[#allocation6 + $0x4] sm:$0xf]
      %v9763 = vld [vmem:[#allocation6 + $0x8] sm:$0xf]
      %v9764 = vld [vmem:[#allocation6 + $0xc] sm:$0x3]
      %s9765 = scalar_lea.vmem %s3, 128
      %v9766 = vld [vmem:[%s9765] sm:$0xf]
      %v9767 = vld [vmem:[%s9765 + $0x4] sm:$0xf]
      %v9768 = vld [vmem:[%s9765 + $0x8] sm:$0xf]
      %v9769 = vld [vmem:[%s9765 + $0xc] sm:$0xf]
      %v9774 = vunpack.c.l.b16 %v9761
      %v9775 = vunpack.c.l.b16 %v9762
      %v9776 = vunpack.c.l.b16 %v9763
      %v9777 = vunpack.c.l.b16 %v9764
      %v9778 = vpack.c.b16 %v9775, %v9774
      %v9779 = vpack.c.b16 %v9777, %v9776
      %vm9780 = vsmask.f32 4352
      %v9782 = vshrl.u32 %v9778, 16
      %v9784 = vrot.slane %v9782, 3
      %v9785 = vshll.u32 %v9778, 16
      %v9787 = vrot.slane %v9785, 4
      %v9788 = vor.u32 %v9784, %v9787
      %v9790 = vshrl.u32 %v9779, 16
      %v9792 = vrot.slane %v9790, 3
      %v9793 = vshll.u32 %v9779, 16
      %v9795 = vrot.slane %v9793, 4
      %v9796 = vor.u32 %v9792, %v9795
      %v9797 = vsel %vm9780, %v9788, %v9796
      %v9802 = vunpack.c.l.b16 %v9766
      %v9803 = vunpack.c.l.b16 %v9767
      %v9804 = vunpack.c.l.b16 %v9768
      %v9805 = vunpack.c.l.b16 %v9769
      %v9806 = vpack.c.b16 %v9803, %v9802
      %v9807 = vpack.c.b16 %v9805, %v9804
      %v9811 = vsel %vm5639, %v9797, 0
      %v9814 = vsel %vm5639, %v9796, 0
      %9816 = vmatprep.subr.bf16.mxu0 0
      %9817 = vmatpush1.bf16.msra.mxu0 0
      %9818 = vmatprep.subr.bf16.mxu0 0
      %9819 = vmatpush1.bf16.msra.mxu0 0
      %9820 = vmatprep.subr.bf16.mxu0 0
      %9821 = vmatpush1.bf16.msra.mxu0 0
      %9822 = vmatprep.subr.bf16.mxu0 0
      %9823 = vmatpush1.bf16.msra.mxu0 0
      %9824 = vmatprep.subr.bf16.mxu0 0
      %9825 = vmatpush1.bf16.msra.mxu0 0
      %9826 = vmatprep.subr.bf16.mxu0 0
      %9827 = vmatpush1.bf16.msra.mxu0 0
      %9828 = vmatprep.subr.bf16.mxu0 0
      %9829 = vmatpush1.bf16.msra.mxu0 %v9807
      %9830 = vmatprep.subr.bf16.mxu0 0
      %9831 = vmatpush1.bf16.msra.mxu0 %v9806
      %9832 = vmatprep.subr.bf16.mxu0 0
      %9833 = vmatpush2.bf16.msra.mxu0 0
      %9834 = vmatprep.subr.bf16.mxu0 0
      %9835 = vmatpush2.bf16.msra.mxu0 0
      %9836 = vmatprep.subr.bf16.mxu0 0
      %9837 = vmatpush2.bf16.msra.mxu0 0
      %9838 = vmatprep.subr.bf16.mxu0 0
      %9839 = vmatpush2.bf16.msra.mxu0 0
      %9840 = vmatprep.subr.bf16.mxu0 0
      %9841 = vmatpush2.bf16.msra.mxu0 0
      %9842 = vmatprep.subr.bf16.mxu0 0
      %9843 = vmatpush2.bf16.msra.mxu0 0
      %9844 = vmatprep.subr.bf16.mxu0 0
      %9845 = vmatpush2.bf16.msra.mxu0 0
      %9846 = vmatprep.subr.bf16.mxu0 0
      %9847 = vmatpush2.bf16.msra.mxu0 0
      %9848 = vmatprep.mubr.bf16.mxu0 0
      %9849 = vmatmul.mubr.bf16.gmra.mxu0 %v9811
      %v9850 = vpop.f32.mrf.mxu0
      %v9851 = vadd.f32 0.0, %v9850
      %v9852 = vpop.f32.mrf.mxu0
      %v9853 = vpop.f32.mrf.mxu0
      %v9854 = vadd.f32 0.0, %v9853
      %v9855 = vpop.f32.mrf.mxu0
      %9856 = vmatprep.mubr.bf16.mxu0 0
      %9857 = vmatmul.mubr.bf16.gmra.mxu0 %v9814
      %v9858 = vpop.f32.mrf.mxu0
      %v9859 = vadd.f32 0.0, %v9858
      %v9860 = vpop.f32.mrf.mxu0
      %v9861 = vpop.f32.mrf.mxu0
      %v9862 = vpop.f32.mrf.mxu0
      %9863 = vdwg.mxu0
      %v9864 = vld [vmem:[#allocation2] sm:$0xff]
      %v9865 = vld [vmem:[#allocation2 + $0x8] sm:$0xff]
      %v9866 = vld [vmem:[#allocation2 + $0x10] sm:$0x1f]
      %v9867 = vadd.f32 %v9864, %v9851
      %v9868 = vadd.f32 %v9865, %v9854
      %v9869 = vadd.f32 %v9866, %v9859
      %9870 = vst.msk [vmem:[#allocation2] sm:$0xff] %vm1345, %v9867
      %9871 = vst.msk [vmem:[#allocation2 + $0x8] sm:$0xff] %vm1345, %v9868
      %9872 = vst.msk [vmem:[#allocation2 + $0x10] sm:$0x1f] %vm9662, %v9869
      %v9873 = vld [vmem:[#allocation2] sm:$0xff]
      %v9874 = vld [vmem:[#allocation2 + $0x8] sm:$0xff]
      %v9875 = vld [vmem:[#allocation2 + $0x10] sm:$0x7]
      %v9876 = vld [vmem:[#allocation2 + $0x1] sm:$0xff]
      %v9877 = vld [vmem:[#allocation2 + $0x9] sm:$0xff]
      %v9878 = vld [vmem:[#allocation2 + $0x11] sm:$0x7]
      %9882 = vrot.lane.b32.xlu0 %v9876, 96
      %v9883 = vpop.permute.xlu0 %9882
      %9884 = vrot.lane.b32.xlu0 %v9877, 96
      %v9885 = vpop.permute.xlu0 %9884
      %9886 = vrot.lane.b32.xlu0 %v9878, 96
      %v9887 = vpop.permute.xlu0 %9886
      %v9891 = vadd.f32 %v9873, %v9883
      %v9892 = vadd.f32 %v9874, %v9885
      %v9893 = vadd.f32 %v9875, %v9887
      %v9894 = vld [vmem:[#allocation2 + $0x2] sm:$0xff]
      %v9895 = vld [vmem:[#allocation2 + $0xa] sm:$0xff]
      %v9896 = vld [vmem:[#allocation2 + $0x12] sm:$0x7]
      %9900 = vrot.lane.b32.xlu0 %v9894, 64
      %v9901 = vpop.permute.xlu0 %9900
      %9902 = vrot.lane.b32.xlu0 %v9895, 64
      %v9903 = vpop.permute.xlu0 %9902
      %9904 = vrot.lane.b32.xlu0 %v9896, 64
      %v9905 = vpop.permute.xlu0 %9904
      %v9909 = vadd.f32 %v9891, %v9901
      %v9910 = vadd.f32 %v9892, %v9903
      %v9911 = vadd.f32 %v9893, %v9905
      %9912 = vst.msk [vmem:[#allocation3] sm:$0xff] %vm5639, %v9909
      %9913 = vst.msk [vmem:[#allocation3 + $0x8] sm:$0xff] %vm5639, %v9910
      %vm9914 = vcmask 256000
      %9915 = vst.msk [vmem:[#allocation3 + $0x10] sm:$0x7] %vm9914, %v9911
      %v9916 = vld [vmem:[#allocation3] sm:$0xff]
      %v9917 = vld [vmem:[#allocation3 + $0x8] sm:$0xff]
      %v9918 = vld [vmem:[#allocation3 + $0x10] sm:$0x7]
      %v9919 = vld [vmem:[%s5 + $0x3] sm:$0x1]
      %v9920 = vlaneseq
      %v9921 = vshrl.u32 %v9920, 7
      %v9922 = vsub.s32 0, %v9921
      %v9923 = vrot.slane %v9919, %v9922
      %v9924 = vadd.f32 %v9916, %v9923
      %v9925 = vadd.f32 %v9917, %v9923
      %v9926 = vadd.f32 %v9918, %v9923
      %v9927 = vmax.f32 %v9924, 0.0
      %v9928 = vmax.f32 %v9925, 0.0
      %v9929 = vmax.f32 %v9926, 0.0
      %v9930 = vpack.c.bf16 %v9928, %v9927
      %v9931 = vpack.c.bf16 %v9929, %v9929
      %v9932 = vld [vmem:[%s4] sm:$0xff]
      %v9933 = vld [vmem:[%s4 + $0x8] sm:$0xff]
      %v9934 = vld [vmem:[%s4 + $0x10] sm:$0xff]
      %v9935 = vld [vmem:[%s4 + $0x18] sm:$0xff]
      %v9936 = vld [vmem:[%s4 + $0x20] sm:$0xf]
      %v9937 = vld [vmem:[%s4 + $0x2c] sm:$0xff]
      %v9938 = vld [vmem:[%s4 + $0x34] sm:$0xff]
      %v9939 = vld [vmem:[%s4 + $0x3c] sm:$0xff]
      %v9940 = vld [vmem:[%s4 + $0x44] sm:$0xff]
      %v9941 = vld [vmem:[%s4 + $0x4c] sm:$0xf]
      %v9942 = vld [vmem:[%s4 + $0x58] sm:$0xff]
      %v9943 = vld [vmem:[%s4 + $0x60] sm:$0xff]
      %v9944 = vld [vmem:[%s4 + $0x68] sm:$0xff]
      %v9945 = vld [vmem:[%s4 + $0x70] sm:$0xff]
      %v9946 = vld [vmem:[%s4 + $0x78] sm:$0xf]
      %v9947 = vld [vmem:[%s4 + $0x84] sm:$0xff]
      %v9948 = vld [vmem:[%s4 + $0x8c] sm:$0xff]
      %v9949 = vld [vmem:[%s4 + $0x94] sm:$0xff]
      %v9950 = vld [vmem:[%s4 + $0x9c] sm:$0xff]
      %v9951 = vld [vmem:[%s4 + $0xa4] sm:$0xf]
      %v9972 = vunpack.c.l.b16 %v9932
      %v9973 = vunpack.c.h.b16 %v9932
      %v9974 = vunpack.c.l.b16 %v9933
      %v9975 = vunpack.c.h.b16 %v9933
      %v9976 = vunpack.c.l.b16 %v9934
      %v9977 = vunpack.c.h.b16 %v9934
      %v9978 = vunpack.c.l.b16 %v9935
      %v9979 = vunpack.c.h.b16 %v9935
      %v9980 = vunpack.c.l.b16 %v9936
      %v9981 = vunpack.c.l.b16 %v9937
      %v9982 = vunpack.c.h.b16 %v9937
      %v9983 = vunpack.c.l.b16 %v9938
      %v9984 = vunpack.c.h.b16 %v9938
      %v9985 = vunpack.c.l.b16 %v9939
      %v9986 = vunpack.c.h.b16 %v9939
      %v9987 = vunpack.c.l.b16 %v9940
      %v9988 = vunpack.c.h.b16 %v9940
      %v9989 = vunpack.c.l.b16 %v9941
      %v9990 = vunpack.c.l.b16 %v9942
      %v9991 = vunpack.c.h.b16 %v9942
      %v9992 = vunpack.c.l.b16 %v9943
      %v9993 = vunpack.c.h.b16 %v9943
      %v9994 = vunpack.c.l.b16 %v9944
      %v9995 = vunpack.c.h.b16 %v9944
      %v9996 = vunpack.c.l.b16 %v9945
      %v9997 = vunpack.c.h.b16 %v9945
      %v9998 = vunpack.c.l.b16 %v9946
      %v9999 = vunpack.c.l.b16 %v9947
      %v10000 = vunpack.c.h.b16 %v9947
      %v10001 = vunpack.c.l.b16 %v9948
      %v10002 = vunpack.c.h.b16 %v9948
      %v10003 = vunpack.c.l.b16 %v9949
      %v10004 = vunpack.c.h.b16 %v9949
      %v10005 = vunpack.c.l.b16 %v9950
      %v10006 = vunpack.c.h.b16 %v9950
      %v10007 = vunpack.c.l.b16 %v9951
      %v10008 = vpack.c.b16 %v9981, %v9972
      %v10009 = vpack.c.b16 %v9982, %v9973
      %v10010 = vpack.c.b16 %v9983, %v9974
      %v10011 = vpack.c.b16 %v9984, %v9975
      %v10012 = vpack.c.b16 %v9985, %v9976
      %v10013 = vpack.c.b16 %v9986, %v9977
      %v10014 = vpack.c.b16 %v9987, %v9978
      %v10015 = vpack.c.b16 %v9988, %v9979
      %v10016 = vpack.c.b16 %v9989, %v9980
      %v10017 = vpack.c.b16 %v9999, %v9990
      %v10018 = vpack.c.b16 %v10000, %v9991
      %v10019 = vpack.c.b16 %v10001, %v9992
      %v10020 = vpack.c.b16 %v10002, %v9993
      %v10021 = vpack.c.b16 %v10003, %v9994
      %v10022 = vpack.c.b16 %v10004, %v9995
      %v10023 = vpack.c.b16 %v10005, %v9996
      %v10024 = vpack.c.b16 %v10006, %v9997
      %v10025 = vpack.c.b16 %v10007, %v9998
      %v10045 = vsel %vm5639, %v9930, 0
      %v10048 = vsel %vm5639, %v9931, 0
      %10050 = vmatprep.subr.bf16.mxu0 0
      %10051 = vmatpush1.bf16.msra.mxu0 0
      %10052 = vmatprep.subr.bf16.mxu0 0
      %10053 = vmatpush1.bf16.msra.mxu0 0
      %10054 = vmatprep.subr.bf16.mxu0 0
      %10055 = vmatpush1.bf16.msra.mxu0 0
      %10056 = vmatprep.subr.bf16.mxu0 0
      %10057 = vmatpush1.bf16.msra.mxu0 0
      %10058 = vmatprep.subr.bf16.mxu0 0
      %10059 = vmatpush1.bf16.msra.mxu0 0
      %10060 = vmatprep.subr.bf16.mxu0 0
      %10061 = vmatpush1.bf16.msra.mxu0 0
      %10062 = vmatprep.subr.bf16.mxu0 %v10018
      %10063 = vmatpush1.bf16.msra.mxu0 %v10017
      %10064 = vmatprep.subr.bf16.mxu0 %v10009
      %10065 = vmatpush1.bf16.msra.mxu0 %v10008
      %10066 = vmatprep.subr.bf16.mxu0 0
      %10067 = vmatpush2.bf16.msra.mxu0 0
      %10068 = vmatprep.subr.bf16.mxu0 0
      %10069 = vmatpush2.bf16.msra.mxu0 0
      %10070 = vmatprep.subr.bf16.mxu0 0
      %10071 = vmatpush2.bf16.msra.mxu0 0
      %10072 = vmatprep.subr.bf16.mxu0 0
      %10073 = vmatpush2.bf16.msra.mxu0 0
      %10074 = vmatprep.subr.bf16.mxu0 0
      %10075 = vmatpush2.bf16.msra.mxu0 0
      %10076 = vmatprep.subr.bf16.mxu0 0
      %10077 = vmatpush2.bf16.msra.mxu0 0
      %10078 = vmatprep.subr.bf16.mxu0 0
      %10079 = vmatpush2.bf16.msra.mxu0 0
      %10080 = vmatprep.subr.bf16.mxu0 0
      %10081 = vmatpush2.bf16.msra.mxu0 0
      %10082 = vmatprep.mubr.bf16.mxu0 0
      %10083 = vmatmul.mubr.bf16.gmra.mxu0 %v10045
      %v10084 = vpop.f32.mrf.mxu0
      %v10085 = vadd.f32 0.0, %v10084
      %v10086 = vpop.f32.mrf.mxu0
      %v10087 = vadd.f32 0.0, %v10086
      %v10088 = vpop.f32.mrf.mxu0
      %v10089 = vpop.f32.mrf.mxu0
      %10090 = vmatprep.mubr.bf16.mxu0 0
      %10091 = vmatmul.mubr.bf16.gmra.mxu0 %v10048
      %v10092 = vpop.f32.mrf.mxu0
      %v10093 = vpop.f32.mrf.mxu0
      %v10094 = vpop.f32.mrf.mxu0
      %v10095 = vpop.f32.mrf.mxu0
      %10096 = vdwg.mxu0
      %10097 = vmatprep.subr.bf16.mxu0 0
      %10098 = vmatpush1.bf16.msra.mxu0 0
      %10099 = vmatprep.subr.bf16.mxu0 0
      %10100 = vmatpush1.bf16.msra.mxu0 0
      %10101 = vmatprep.subr.bf16.mxu0 0
      %10102 = vmatpush1.bf16.msra.mxu0 0
      %10103 = vmatprep.subr.bf16.mxu0 0
      %10104 = vmatpush1.bf16.msra.mxu0 0
      %10105 = vmatprep.subr.bf16.mxu0 0
      %10106 = vmatpush1.bf16.msra.mxu0 0
      %10107 = vmatprep.subr.bf16.mxu0 0
      %10108 = vmatpush1.bf16.msra.mxu0 0
      %10109 = vmatprep.subr.bf16.mxu0 %v10020
      %10110 = vmatpush1.bf16.msra.mxu0 %v10019
      %10111 = vmatprep.subr.bf16.mxu0 %v10011
      %10112 = vmatpush1.bf16.msra.mxu0 %v10010
      %10113 = vmatprep.subr.bf16.mxu0 0
      %10114 = vmatpush2.bf16.msra.mxu0 0
      %10115 = vmatprep.subr.bf16.mxu0 0
      %10116 = vmatpush2.bf16.msra.mxu0 0
      %10117 = vmatprep.subr.bf16.mxu0 0
      %10118 = vmatpush2.bf16.msra.mxu0 0
      %10119 = vmatprep.subr.bf16.mxu0 0
      %10120 = vmatpush2.bf16.msra.mxu0 0
      %10121 = vmatprep.subr.bf16.mxu0 0
      %10122 = vmatpush2.bf16.msra.mxu0 0
      %10123 = vmatprep.subr.bf16.mxu0 0
      %10124 = vmatpush2.bf16.msra.mxu0 0
      %10125 = vmatprep.subr.bf16.mxu0 0
      %10126 = vmatpush2.bf16.msra.mxu0 0
      %10127 = vmatprep.subr.bf16.mxu0 0
      %10128 = vmatpush2.bf16.msra.mxu0 0
      %10129 = vmatprep.mubr.bf16.mxu0 0
      %10130 = vmatmul.mubr.bf16.gmra.mxu0 %v10045
      %v10131 = vpop.f32.mrf.mxu0
      %v10132 = vadd.f32 0.0, %v10131
      %v10133 = vpop.f32.mrf.mxu0
      %v10134 = vadd.f32 0.0, %v10133
      %v10135 = vpop.f32.mrf.mxu0
      %v10136 = vpop.f32.mrf.mxu0
      %10137 = vmatprep.mubr.bf16.mxu0 0
      %10138 = vmatmul.mubr.bf16.gmra.mxu0 %v10048
      %v10139 = vpop.f32.mrf.mxu0
      %v10140 = vpop.f32.mrf.mxu0
      %v10141 = vpop.f32.mrf.mxu0
      %v10142 = vpop.f32.mrf.mxu0
      %10143 = vdwg.mxu0
      %10144 = vmatprep.subr.bf16.mxu0 0
      %10145 = vmatpush1.bf16.msra.mxu0 0
      %10146 = vmatprep.subr.bf16.mxu0 0
      %10147 = vmatpush1.bf16.msra.mxu0 0
      %10148 = vmatprep.subr.bf16.mxu0 0
      %10149 = vmatpush1.bf16.msra.mxu0 0
      %10150 = vmatprep.subr.bf16.mxu0 0
      %10151 = vmatpush1.bf16.msra.mxu0 0
      %10152 = vmatprep.subr.bf16.mxu0 0
      %10153 = vmatpush1.bf16.msra.mxu0 0
      %10154 = vmatprep.subr.bf16.mxu0 0
      %10155 = vmatpush1.bf16.msra.mxu0 0
      %10156 = vmatprep.subr.bf16.mxu0 %v10022
      %10157 = vmatpush1.bf16.msra.mxu0 %v10021
      %10158 = vmatprep.subr.bf16.mxu0 %v10013
      %10159 = vmatpush1.bf16.msra.mxu0 %v10012
      %10160 = vmatprep.subr.bf16.mxu0 0
      %10161 = vmatpush2.bf16.msra.mxu0 0
      %10162 = vmatprep.subr.bf16.mxu0 0
      %10163 = vmatpush2.bf16.msra.mxu0 0
      %10164 = vmatprep.subr.bf16.mxu0 0
      %10165 = vmatpush2.bf16.msra.mxu0 0
      %10166 = vmatprep.subr.bf16.mxu0 0
      %10167 = vmatpush2.bf16.msra.mxu0 0
      %10168 = vmatprep.subr.bf16.mxu0 0
      %10169 = vmatpush2.bf16.msra.mxu0 0
      %10170 = vmatprep.subr.bf16.mxu0 0
      %10171 = vmatpush2.bf16.msra.mxu0 0
      %10172 = vmatprep.subr.bf16.mxu0 0
      %10173 = vmatpush2.bf16.msra.mxu0 0
      %10174 = vmatprep.subr.bf16.mxu0 0
      %10175 = vmatpush2.bf16.msra.mxu0 0
      %10176 = vmatprep.mubr.bf16.mxu0 0
      %10177 = vmatmul.mubr.bf16.gmra.mxu0 %v10045
      %v10178 = vpop.f32.mrf.mxu0
      %v10179 = vpop.f32.mrf.mxu0
      %v10180 = vpop.f32.mrf.mxu0
      %v10181 = vadd.f32 0.0, %v10180
      %v10182 = vpop.f32.mrf.mxu0
      %v10183 = vadd.f32 0.0, %v10182
      %10184 = vmatprep.mubr.bf16.mxu0 0
      %10185 = vmatmul.mubr.bf16.gmra.mxu0 %v10048
      %v10186 = vpop.f32.mrf.mxu0
      %v10187 = vpop.f32.mrf.mxu0
      %v10188 = vpop.f32.mrf.mxu0
      %v10189 = vpop.f32.mrf.mxu0
      %10190 = vdwg.mxu0
      %10191 = vmatprep.subr.bf16.mxu0 0
      %10192 = vmatpush1.bf16.msra.mxu0 0
      %10193 = vmatprep.subr.bf16.mxu0 0
      %10194 = vmatpush1.bf16.msra.mxu0 0
      %10195 = vmatprep.subr.bf16.mxu0 0
      %10196 = vmatpush1.bf16.msra.mxu0 0
      %10197 = vmatprep.subr.bf16.mxu0 0
      %10198 = vmatpush1.bf16.msra.mxu0 0
      %10199 = vmatprep.subr.bf16.mxu0 0
      %10200 = vmatpush1.bf16.msra.mxu0 0
      %10201 = vmatprep.subr.bf16.mxu0 0
      %10202 = vmatpush1.bf16.msra.mxu0 0
      %10203 = vmatprep.subr.bf16.mxu0 %v10024
      %10204 = vmatpush1.bf16.msra.mxu0 %v10023
      %10205 = vmatprep.subr.bf16.mxu0 %v10015
      %10206 = vmatpush1.bf16.msra.mxu0 %v10014
      %10207 = vmatprep.subr.bf16.mxu0 0
      %10208 = vmatpush2.bf16.msra.mxu0 0
      %10209 = vmatprep.subr.bf16.mxu0 0
      %10210 = vmatpush2.bf16.msra.mxu0 0
      %10211 = vmatprep.subr.bf16.mxu0 0
      %10212 = vmatpush2.bf16.msra.mxu0 0
      %10213 = vmatprep.subr.bf16.mxu0 0
      %10214 = vmatpush2.bf16.msra.mxu0 0
      %10215 = vmatprep.subr.bf16.mxu0 0
      %10216 = vmatpush2.bf16.msra.mxu0 0
      %10217 = vmatprep.subr.bf16.mxu0 0
      %10218 = vmatpush2.bf16.msra.mxu0 0
      %10219 = vmatprep.subr.bf16.mxu0 0
      %10220 = vmatpush2.bf16.msra.mxu0 0
      %10221 = vmatprep.subr.bf16.mxu0 0
      %10222 = vmatpush2.bf16.msra.mxu0 0
      %10223 = vmatprep.mubr.bf16.mxu0 0
      %10224 = vmatmul.mubr.bf16.gmra.mxu0 %v10045
      %v10225 = vpop.f32.mrf.mxu0
      %v10226 = vpop.f32.mrf.mxu0
      %v10227 = vpop.f32.mrf.mxu0
      %v10228 = vadd.f32 0.0, %v10227
      %v10229 = vpop.f32.mrf.mxu0
      %10230 = vmatprep.mubr.bf16.mxu0 0
      %10231 = vmatmul.mubr.bf16.gmra.mxu0 %v10048
      %v10232 = vpop.f32.mrf.mxu0
      %v10233 = vpop.f32.mrf.mxu0
      %v10234 = vadd.f32 0.0, %v10233
      %v10235 = vpop.f32.mrf.mxu0
      %v10236 = vpop.f32.mrf.mxu0
      %10237 = vdwg.mxu0
      %10238 = vmatprep.subr.bf16.mxu0 0
      %10239 = vmatpush1.bf16.msra.mxu0 0
      %10240 = vmatprep.subr.bf16.mxu0 0
      %10241 = vmatpush1.bf16.msra.mxu0 0
      %10242 = vmatprep.subr.bf16.mxu0 0
      %10243 = vmatpush1.bf16.msra.mxu0 0
      %10244 = vmatprep.subr.bf16.mxu0 0
      %10245 = vmatpush1.bf16.msra.mxu0 0
      %10246 = vmatprep.subr.bf16.mxu0 0
      %10247 = vmatpush1.bf16.msra.mxu0 0
      %10248 = vmatprep.subr.bf16.mxu0 0
      %10249 = vmatpush1.bf16.msra.mxu0 0
      %10250 = vmatprep.subr.bf16.mxu0 0
      %10251 = vmatpush1.bf16.msra.mxu0 %v10025
      %10252 = vmatprep.subr.bf16.mxu0 0
      %10253 = vmatpush1.bf16.msra.mxu0 %v10016
      %10254 = vmatprep.subr.bf16.mxu0 0
      %10255 = vmatpush2.bf16.msra.mxu0 0
      %10256 = vmatprep.subr.bf16.mxu0 0
      %10257 = vmatpush2.bf16.msra.mxu0 0
      %10258 = vmatprep.subr.bf16.mxu0 0
      %10259 = vmatpush2.bf16.msra.mxu0 0
      %10260 = vmatprep.subr.bf16.mxu0 0
      %10261 = vmatpush2.bf16.msra.mxu0 0
      %10262 = vmatprep.subr.bf16.mxu0 0
      %10263 = vmatpush2.bf16.msra.mxu0 0
      %10264 = vmatprep.subr.bf16.mxu0 0
      %10265 = vmatpush2.bf16.msra.mxu0 0
      %10266 = vmatprep.subr.bf16.mxu0 0
      %10267 = vmatpush2.bf16.msra.mxu0 0
      %10268 = vmatprep.subr.bf16.mxu0 0
      %10269 = vmatpush2.bf16.msra.mxu0 0
      %10270 = vmatprep.mubr.bf16.mxu0 0
      %10271 = vmatmul.mubr.bf16.gmra.mxu0 %v10045
      %v10272 = vpop.f32.mrf.mxu0
      %v10273 = vpop.f32.mrf.mxu0
      %v10274 = vpop.f32.mrf.mxu0
      %v10275 = vpop.f32.mrf.mxu0
      %10276 = vmatprep.mubr.bf16.mxu0 0
      %10277 = vmatmul.mubr.bf16.gmra.mxu0 %v10048
      %v10278 = vpop.f32.mrf.mxu0
      %v10279 = vadd.f32 0.0, %v10278
      %v10280 = vpop.f32.mrf.mxu0
      %v10281 = vpop.f32.mrf.mxu0
      %v10282 = vpop.f32.mrf.mxu0
      %10283 = vdwg.mxu0
      %v10284 = vld [vmem:[%s5 + $0x4] sm:$0x1]
      %v10285 = vadd.f32 %v10284, %v10085
      %v10287 = vrot.slane %v10087, 2
      %v10289 = vadd.f32 %v10285, %v10287
      %v10291 = vrot.slane %v10132, 4
      %v10293 = vadd.f32 %v10289, %v10291
      %v10295 = vrot.slane %v10134, 7
      %v10297 = vadd.f32 %v10293, %v10295
      %v10299 = vrot.slane %v10181, 1
      %v10301 = vadd.f32 %v10297, %v10299
      %v10303 = vrot.slane %v10183, 3
      %v10305 = vadd.f32 %v10301, %v10303
      %v10307 = vrot.slane %v10228, 6
      %v10309 = vadd.f32 %v10305, %v10307
      %v10310 = vadd.f32 %v10309, %v10234
      %v10312 = vrot.slane %v10279, 2
      %v10314 = vadd.f32 %v10310, %v10312
      %v10315 = vld [vmem:[%s258] sm:$0x1]
      %v10316 = vpack.c.bf16 %v10315, %v10315
      %v10317 = vld [vmem:[%s4 + $0x24] sm:$0xf]
      %v10318 = vld [vmem:[%s4 + $0x50] sm:$0xf]
      %v10319 = vld [vmem:[%s4 + $0x7c] sm:$0xf]
      %v10320 = vld [vmem:[%s4 + $0xa8] sm:$0xf]
      %v10325 = vunpack.c.l.b16 %v10317
      %v10326 = vunpack.c.l.b16 %v10318
      %v10327 = vunpack.c.l.b16 %v10319
      %v10328 = vunpack.c.l.b16 %v10320
      %v10329 = vpack.c.b16 %v10326, %v10325
      %v10330 = vpack.c.b16 %v10328, %v10327
      %v10334 = vsel %vm5639, %v10316, 0
      %10336 = vmatprep.subr.bf16.mxu0 0
      %10337 = vmatpush1.bf16.msra.mxu0 0
      %10338 = vmatprep.subr.bf16.mxu0 0
      %10339 = vmatpush1.bf16.msra.mxu0 0
      %10340 = vmatprep.subr.bf16.mxu0 0
      %10341 = vmatpush1.bf16.msra.mxu0 0
      %10342 = vmatprep.subr.bf16.mxu0 0
      %10343 = vmatpush1.bf16.msra.mxu0 0
      %10344 = vmatprep.subr.bf16.mxu0 0
      %10345 = vmatpush1.bf16.msra.mxu0 0
      %10346 = vmatprep.subr.bf16.mxu0 0
      %10347 = vmatpush1.bf16.msra.mxu0 0
      %10348 = vmatprep.subr.bf16.mxu0 0
      %10349 = vmatpush1.bf16.msra.mxu0 %v10330
      %10350 = vmatprep.subr.bf16.mxu0 0
      %10351 = vmatpush1.bf16.msra.mxu0 %v10329
      %10352 = vmatprep.subr.bf16.mxu0 0
      %10353 = vmatpush2.bf16.msra.mxu0 0
      %10354 = vmatprep.subr.bf16.mxu0 0
      %10355 = vmatpush2.bf16.msra.mxu0 0
      %10356 = vmatprep.subr.bf16.mxu0 0
      %10357 = vmatpush2.bf16.msra.mxu0 0
      %10358 = vmatprep.subr.bf16.mxu0 0
      %10359 = vmatpush2.bf16.msra.mxu0 0
      %10360 = vmatprep.subr.bf16.mxu0 0
      %10361 = vmatpush2.bf16.msra.mxu0 0
      %10362 = vmatprep.subr.bf16.mxu0 0
      %10363 = vmatpush2.bf16.msra.mxu0 0
      %10364 = vmatprep.subr.bf16.mxu0 0
      %10365 = vmatpush2.bf16.msra.mxu0 0
      %10366 = vmatprep.subr.bf16.mxu0 0
      %10367 = vmatpush2.bf16.msra.mxu0 0
      %10368 = vmatprep.mubr.bf16.mxu0 0
      %10369 = vmatmul.mubr.bf16.gmra.mxu0 %v10334
      %v10370 = vpop.f32.mrf.mxu0
      %v10371 = vadd.f32 0.0, %v10370
      %v10372 = vpop.f32.mrf.mxu0
      %v10373 = vpop.f32.mrf.mxu0
      %v10374 = vpop.f32.mrf.mxu0
      %10375 = vdwg.mxu0
      %v10376 = vadd.f32 %v10314, %v10371
      %v10377 = vxor.u32 %v10376, 2147483648
      %v10378 = vmul.f32 %v10377, 1.442695
      %v10379 = vpow.pop %v10378
      %v10380 = vadd.f32 %v10379, 1.0
      %v10381 = vrcp.pop %v10380
      %v10382 = vmul.f32 1.0, %v10381
      %v10383 = vtanh.pop %v10376
      %v10384 = vmul.f32 %v10382, %v10315
      %10386 = vrot.lane.b32.xlu0 %v10383, 64
      %v10387 = vpop.permute.xlu0 %10386
      %v10389 = vmul.f32 %v10382, %v10387
      %10391 = vrot.lane.b32.xlu0 %v10389, 32
      %v10392 = vpop.permute.xlu0 %10391
      %v10394 = vadd.f32 %v10384, %v10392
      %v10395 = vtanh.pop %v10394
      %10397 = vrot.lane.b32.xlu0 %v10395, 64
      %v10398 = vpop.permute.xlu0 %10397
      %v10400 = vmul.f32 %v10382, %v10398
      %v10401 = vpack.c.bf16 %v10400, %v10400
      %v10402 = vld [vmem:[%s4 + $0x28] sm:$0xf]
      %v10403 = vld [vmem:[%s4 + $0x54] sm:$0xf]
      %v10404 = vld [vmem:[%s4 + $0x80] sm:$0xf]
      %v10405 = vld [vmem:[%s4 + $0xac] sm:$0xf]
      %v10406 = vld [vmem:[%s5 + $0x5] sm:$0x1]
      %10408 = vrot.lane.b32.xlu0 %v10401, 32
      %v10409 = vpop.permute.xlu0 %10408
      %v10414 = vunpack.c.l.b16 %v10402
      %v10415 = vunpack.c.l.b16 %v10403
      %v10416 = vunpack.c.l.b16 %v10404
      %v10417 = vunpack.c.l.b16 %v10405
      %v10418 = vpack.c.b16 %v10415, %v10414
      %v10419 = vpack.c.b16 %v10417, %v10416
      %v10423 = vsel %vm5639, %v10409, 0
      %10425 = vmatprep.subr.bf16.mxu0 0
      %10426 = vmatpush1.bf16.msra.mxu0 0
      %10427 = vmatprep.subr.bf16.mxu0 0
      %10428 = vmatpush1.bf16.msra.mxu0 0
      %10429 = vmatprep.subr.bf16.mxu0 0
      %10430 = vmatpush1.bf16.msra.mxu0 0
      %10431 = vmatprep.subr.bf16.mxu0 0
      %10432 = vmatpush1.bf16.msra.mxu0 0
      %10433 = vmatprep.subr.bf16.mxu0 0
      %10434 = vmatpush1.bf16.msra.mxu0 0
      %10435 = vmatprep.subr.bf16.mxu0 0
      %10436 = vmatpush1.bf16.msra.mxu0 0
      %10437 = vmatprep.subr.bf16.mxu0 0
      %10438 = vmatpush1.bf16.msra.mxu0 %v10419
      %10439 = vmatprep.subr.bf16.mxu0 0
      %10440 = vmatpush1.bf16.msra.mxu0 %v10418
      %10441 = vmatprep.subr.bf16.mxu0 0
      %10442 = vmatpush2.bf16.msra.mxu0 0
      %10443 = vmatprep.subr.bf16.mxu0 0
      %10444 = vmatpush2.bf16.msra.mxu0 0
      %10445 = vmatprep.subr.bf16.mxu0 0
      %10446 = vmatpush2.bf16.msra.mxu0 0
      %10447 = vmatprep.subr.bf16.mxu0 0
      %10448 = vmatpush2.bf16.msra.mxu0 0
      %10449 = vmatprep.subr.bf16.mxu0 0
      %10450 = vmatpush2.bf16.msra.mxu0 0
      %10451 = vmatprep.subr.bf16.mxu0 0
      %10452 = vmatpush2.bf16.msra.mxu0 0
      %10453 = vmatprep.subr.bf16.mxu0 0
      %10454 = vmatpush2.bf16.msra.mxu0 0
      %10455 = vmatprep.subr.bf16.mxu0 0
      %10456 = vmatpush2.bf16.msra.mxu0 0
      %10457 = vmatprep.mubr.bf16.mxu0 0
      %10458 = vmatmul.mubr.bf16.gmra.mxu0 %v10423
      %v10459 = vpop.f32.mrf.mxu0
      %v10460 = vadd.f32 %v10406, %v10459
      %v10461 = vpop.f32.mrf.mxu0
      %v10462 = vpop.f32.mrf.mxu0
      %v10463 = vpop.f32.mrf.mxu0
      %10464 = vdwg.mxu0
      %vm10465 = vcmask 24576
      %v10466 = vsel %vm10465, %v10460, -inf
      %10467 = vmax.xlane.f32.xlu0 %v10466
      %v10468 = vpop.xlane.xlu0 %10467
      %v10469 = vsub.f32 %v10460, %v10468
      %v10470 = vmul.f32 %v10469, 1.442695
      %v10471 = vpow.pop %v10470
      %v10472 = vsel %vm10465, %v10471, 0.0
      %10473 = vadd.xlane.f32.xlu0 %v10472
      %v10474 = vpop.xlane.xlu0 %10473
      %v10475 = vrcp.pop %v10474
      %v10476 = vmul.f32 %v10471, %v10475
      %10477 = vst [vmem:[%s261] sm:$0x1] 0.0
      %10478 = vst.msk [vmem:[%s261] sm:$0x1] %vm10465, %v10476
      %vm10479 = vcmask 32800
      %10480 = vst.msk [vmem:[%s261] sm:$0x1] %vm10479, %v10460
      %10482 = vrot.lane.b32.xlu0 %v10400, 64
      %v10483 = vpop.permute.xlu0 %10482
      %vm10485 = vcmask 516352
      %10486 = vst.msk [vmem:[%s261] sm:$0x1] %vm10485, %v10483
      %10488 = vrot.lane.b32.xlu0 %v10394, 32
      %v10489 = vpop.permute.xlu0 %10488
      %vm10491 = vcmask 778752
      %10492 = vst.msk [vmem:[%s261] sm:$0x1] %vm10491, %v10489
      %p10493 = scmp.lt.s32.totalorder %s17, 1
      %s10494 = scalar_select %p10493, %s17, 1
      %s10495 = scalar_lea.vmem %s6, %s10494
      // Predicated region
      $region45: #{a3c_cnn_forward.1} parent=43 // pred_check
        %p10496 = pneg %p171
      $region46: #{a3c_cnn_forward.1} parent=43 // pred_check_branch
        %10498 = sbr.rel (%p10496) target = $region48
      $region47: #{a3c_cnn_forward.1} parent=43 // pred_region
        _
      $region48: #{a3c_cnn_forward.1} parent=43 // pred_fallthru
        _
    $region44: #{a3c_cnn_forward.1} parent=5 // pred_fallthru
      _
    %p10499 = scmp.le.s32.totalorder 2, %s12
    // Predicated region
    $region49: #{a3c_cnn_forward.1} parent=5 // pred_check
      %p10500 = pneg %p10499
    $region50: #{a3c_cnn_forward.1} parent=5 // pred_check_branch
      %10502 = sbr.rel (%p10500) target = $region52
    $region51: #{a3c_cnn_forward.1} parent=5 // pred_region
      %s10503 = ssub.s32 %s12, 2
      // Predicated region
      $region53: #{a3c_cnn_forward.1} parent=51 // pred_check
        %p10504 = pneg %p177
      $region54: #{a3c_cnn_forward.1} parent=51 // pred_check_branch
        %10506 = sbr.rel (%p10504) target = $region56
      $region55: #{a3c_cnn_forward.1} parent=51 // pred_region
        %p10507 = scmp.lt.s32.totalorder %s18, 1
        %s10508 = scalar_select %p10507, %s18, 1
        %s10509 = scalar_lea.vmem %s6, %s10508
      $region56: #{a3c_cnn_forward.1} parent=51 // pred_fallthru
        _
    $region52: #{a3c_cnn_forward.1} parent=5 // pred_fallthru
      _
  $region6: #{a3c_cnn_forward.1} parent=0 // loop_footer
    %s16 = sadd.s32 1, %s12
  $region7: #{a3c_cnn_forward.1} parent=0 // loop_footer_branch
    %11 = sbr.rel target = $region3
  $region8: #{a3c_cnn_forward.1} parent=0 // loop_exit
    _

</llo_original>
